<compile_context>
chip_gen: v7x
topology: tpu7x:2x2x1
jax: 0.10.0
libtpu: 0.0.40
codegen_flags: <defaults>
</compile_context>

<pallas_src>
import functools

import jax
import jax.numpy as jnp
from jax import lax
from jax.experimental import pallas as pl
from jax.experimental.pallas import tpu as pltpu


# ----------------------------------------------------------------------------
# Fused multi-head 3x3 conv kernel (stride 1, pad 1), shared im2col slab.
# ----------------------------------------------------------------------------
def _conv3x3_heads_kernel(*refs, H, W, Cin, n_heads):
    # refs = (x, w_0..w_{h-1}, b_0..b_{h-1}, out_0..out_{h-1}, pad_scratch, col_scratch)
    x_ref = refs[0]
    w_refs = refs[1:1 + n_heads]                 # each (9*Cin, Cout_i)  bf16
    b_refs = refs[1 + n_heads:1 + 2 * n_heads]   # each (1, Cout_i)      f32
    out_refs = refs[1 + 2 * n_heads:1 + 3 * n_heads]   # each (1, H*W, Cout_i) f32
    pad_ref, col_ref = refs[1 + 3 * n_heads:]    # (H+2,W+2,Cin) bf16, (H*W,9*Cin) bf16

    # In-kernel zero-padded halo (no jnp.pad round-trip in HBM). The border of
    # the scratch is (re)zeroed each step; interior is overwritten with the
    # current image, cast to bf16 for the MXU.
    pad_ref[...] = jnp.zeros_like(pad_ref)
    pad_ref[1:H + 1, 1:W + 1, :] = x_ref[0].astype(jnp.bfloat16)

    # im2col: pack the 9 taps along K into one (H*W, 9*Cin) slab.
    # Tap ordering (dy*3+dx, channel-minor) matches the wrapper's weight reshape.
    for dy in range(3):
        for dx in range(3):
            tap = dy * 3 + dx
            col_ref[:, tap * Cin:(tap + 1) * Cin] = (
                pad_ref[dy:dy + H, dx:dx + W, :].reshape(H * W, Cin))

    col = col_ref[...]                           # (H*W, 9*Cin) bf16
    for w_ref, b_ref, o_ref in zip(w_refs, b_refs, out_refs):
        acc = jnp.dot(col, w_ref[...], preferred_element_type=jnp.float32)
        acc = acc + b_ref[0]                     # f32 bias add (VPU, v5e-safe)
        o_ref[0] = acc.astype(o_ref.dtype)       # lane-dense (H*W, Cout) store


def conv3x3_heads(x_nhwc, heads):
    """Apply several 3x3 / stride-1 / pad-1 convs to the SAME input in one
    fused Pallas kernel (shared im2col).

    x_nhwc : (N, H, W, Cin) float32
    heads  : list of (w_hwio (3,3,Cin,Cout_i), bias (Cout_i,) or None)
    returns: list of (N, H, W, Cout_i) float32
    """
    N, H, W, Cin = x_nhwc.shape
    n_heads = len(heads)

    w_packed, b_packed, couts = [], [], []
    for w, b in heads:
        cout = w.shape[-1]
        couts.append(cout)
        # (3,3,Cin,Cout) -> (9*Cin, Cout): row index = (dy*3+dx)*Cin + c,
        # exactly the col_ref layout built in the kernel.
        w_packed.append(w.reshape(9 * Cin, cout).astype(jnp.bfloat16))
        if b is None:
            b = jnp.zeros((cout,), jnp.float32)
        b_packed.append(b.reshape(1, cout).astype(jnp.float32))

    kernel = functools.partial(_conv3x3_heads_kernel,
                               H=H, W=W, Cin=Cin, n_heads=n_heads)

    in_specs = [pl.BlockSpec((1, H, W, Cin), lambda n: (n, 0, 0, 0))]
    # Constant index_maps: weights & biases stay VMEM-resident across grid steps.
    in_specs += [pl.BlockSpec((9 * Cin, c), lambda n: (0, 0)) for c in couts]
    in_specs += [pl.BlockSpec((1, c), lambda n: (0, 0)) for c in couts]

    out_shape = [jax.ShapeDtypeStruct((N, H * W, c), jnp.float32) for c in couts]
    out_specs = [pl.BlockSpec((1, H * W, c), lambda n: (n, 0, 0)) for c in couts]

    outs = pl.pallas_call(
        kernel,
        out_shape=out_shape,
        grid=(N,),
        in_specs=in_specs,
        out_specs=out_specs,
        scratch_shapes=[
            pltpu.VMEM((H + 2, W + 2, Cin), jnp.bfloat16),   # padded image
            pltpu.VMEM((H * W, 9 * Cin), jnp.bfloat16),      # im2col slab
        ],
        compiler_params=pltpu.CompilerParams(
            dimension_semantics=("parallel",)),              # shard batch on v7x megacore
    )(x_nhwc, *w_packed, *b_packed)

    # (N, H*W, Cout) -> (N, H, W, Cout): contiguous, free reshape in XLA.
    return [o.reshape(N, H, W, c) for o, c in zip(outs, couts)]


# ----------------------------------------------------------------------------
# KeyValue module forward (NHWC).
# ----------------------------------------------------------------------------
def key_value_fwd(params, x_nhwc, only_key=False):
    heads = [(params["key_w"], params["key_b"])]
    if not only_key:
        heads.append((params["value_w"], params["value_b"]))
    outs = conv3x3_heads(x_nhwc, heads)
    k = outs[0]
    v = None if only_key else outs[1]
    return k, v


# ----------------------------------------------------------------------------
# Deterministic synthetic parameter initialization (shapes from __init__).
# ----------------------------------------------------------------------------
def init_keyvalue_params(key, indim, keydim, valdim):
    k1, k2, k3, k4 = jax.random.split(key, 4)
    return {
        "key_w": jax.random.normal(k1, (3, 3, indim, keydim), jnp.float32) * 0.05,
        "key_b": jax.random.normal(k2, (keydim,), jnp.float32) * 0.05,
        "value_w": jax.random.normal(k3, (3, 3, indim, valdim), jnp.float32) * 0.05,
        "value_b": jax.random.normal(k4, (valdim,), jnp.float32) * 0.05,
    }


# ----------------------------------------------------------------------------
# main
# ----------------------------------------------------------------------------
if __name__ == "__main__":
    # Small, lane-friendly shapes consistent with the module.
    N, indim, H, W = 2, 128, 16, 16
    keydim, valdim = 128, 256

    key = jax.random.PRNGKey(0)
    kx, kp = jax.random.split(key)

    # Input built in the PyTorch NCHW convention, transposed to NHWC.
    x_nchw = jax.random.normal(kx, (N, indim, H, W), jnp.float32)
    x_nhwc = jnp.transpose(x_nchw, (0, 2, 3, 1))

    params = init_keyvalue_params(kp, indim, keydim, valdim)

    fwd = jax.jit(functools.partial(key_value_fwd, only_key=False))
    k_nhwc, v_nhwc = fwd(params, x_nhwc)
    k_nchw = jnp.transpose(k_nhwc, (0, 3, 1, 2))   # back to PyTorch NCHW
    v_nchw = jnp.transpose(v_nhwc, (0, 3, 1, 2))
    jax.block_until_ready((k_nchw, v_nchw))

    assert k_nchw.shape == (N, keydim, H, W), k_nchw.shape
    assert v_nchw.shape == (N, valdim, H, W), v_nchw.shape
    assert bool(jnp.all(jnp.isfinite(k_nchw))) and bool(jnp.all(jnp.isfinite(v_nchw)))

    # Numerical check vs XLA conv on bf16-rounded operands (matches the kernel's
    # bf16 matmul inputs + f32 accumulation).
    def ref_conv(x, w, b):
        xb = x.astype(jnp.bfloat16).astype(jnp.float32)
        wb = w.astype(jnp.bfloat16).astype(jnp.float32)
        y = lax.conv_general_dilated(
            xb, wb, window_strides=(1, 1), padding="SAME",
            dimension_numbers=("NHWC", "HWIO", "NHWC"),
            precision=lax.Precision.HIGHEST)
        return y + b[None, None, None, :]

    k_ref = ref_conv(x_nhwc, params["key_w"], params["key_b"])
    v_ref = ref_conv(x_nhwc, params["value_w"], params["value_b"])
    assert bool(jnp.allclose(k_nhwc, k_ref, atol=2e-2, rtol=2e-2)), \
        float(jnp.max(jnp.abs(k_nhwc - k_ref)))
    assert bool(jnp.allclose(v_nhwc, v_ref, atol=2e-2, rtol=2e-2)), \
        float(jnp.max(jnp.abs(v_nhwc - v_ref)))

    # only_key=True path (same fused kernel with a single head).
    k_only, v_only = jax.jit(functools.partial(key_value_fwd, only_key=True))(params, x_nhwc)
    jax.block_until_ready(k_only)
    assert v_only is None and k_only.shape == (N, H, W, keydim)

    print("KERNEL_OK")
</pallas_src>

<mosaic_0001>
module attributes {stable_mosaic.version = 11 : i64} {
  func.func @_conv3x3_heads_kernel(%arg0: i32, %arg1: memref<1x16x16x128xf32, #tpu.memory_space<vmem>>, %arg2: memref<1152x128xbf16, #tpu.memory_space<vmem>>, %arg3: memref<1152x256xbf16, #tpu.memory_space<vmem>>, %arg4: memref<1x128xf32, #tpu.memory_space<vmem>>, %arg5: memref<1x256xf32, #tpu.memory_space<vmem>>, %arg6: memref<1x256x128xf32, #tpu.memory_space<vmem>>, %arg7: memref<1x256x256xf32, #tpu.memory_space<vmem>>, %arg8: memref<18x18x128xbf16, #tpu.memory_space<vmem>>, %arg9: memref<256x1152xbf16, #tpu.memory_space<vmem>>) attributes {dimension_semantics = [#tpu.dimension_semantics<parallel>], iteration_bounds = array<i64: 2>, scalar_prefetch = 0 : i64, scratch_operands = 2 : i64, tpu.core_type = #tpu.core_type<tc>, window_params = [{transform_indices = @transform_0, window_bounds = array<i64: 1, 16, 16, 128>}, {pipeline_mode = #tpu.pipeline_mode<synchronous>, transform_indices = @transform_1, window_bounds = array<i64: 1152, 128>}, {pipeline_mode = #tpu.pipeline_mode<synchronous>, transform_indices = @transform_2, window_bounds = array<i64: 1152, 256>}, {pipeline_mode = #tpu.pipeline_mode<synchronous>, transform_indices = @transform_3, window_bounds = array<i64: 1, 128>}, {pipeline_mode = #tpu.pipeline_mode<synchronous>, transform_indices = @transform_4, window_bounds = array<i64: 1, 256>}, {transform_indices = @transform_5, window_bounds = array<i64: 1, 256, 128>}, {transform_indices = @transform_6, window_bounds = array<i64: 1, 256, 256>}]} {
    %cst = arith.constant 0.000000e+00 : bf16
    %0 = vector.broadcast %cst : bf16 to vector<18x18x128xbf16>
    %c0 = arith.constant 0 : index
    %c0_0 = arith.constant 0 : index
    %c0_1 = arith.constant 0 : index
    %1 = vector.load %arg8[%c0, %c0_0, %c0_1] : memref<18x18x128xbf16, #tpu.memory_space<vmem>>, vector<18x18x128xbf16>
    tpu.vector_store %arg8[%c0, %c0_0, %c0_1], %0 {strides = array<i32>} : memref<18x18x128xbf16, #tpu.memory_space<vmem>>, vector<18x18x128xbf16>,
    %c0_2 = arith.constant 0 : index
    %c0_3 = arith.constant 0 : index
    %c0_4 = arith.constant 0 : index
    %c0_5 = arith.constant 0 : index
    %2 = vector.load %arg1[%c0_2, %c0_3, %c0_4, %c0_5] : memref<1x16x16x128xf32, #tpu.memory_space<vmem>>, vector<1x16x16x128xf32>
    %3 = vector.shape_cast %2 : vector<1x16x16x128xf32> to vector<16x16x128xf32>
    %4 = arith.truncf %3 : vector<16x16x128xf32> to vector<16x16x128xbf16>
    %c1 = arith.constant 1 : index
    %c1_6 = arith.constant 1 : index
    %c0_7 = arith.constant 0 : index
    %5 = vector.load %arg8[%c1, %c1_6, %c0_7] : memref<18x18x128xbf16, #tpu.memory_space<vmem>>, vector<16x16x128xbf16>
    tpu.vector_store %arg8[%c1, %c1_6, %c0_7], %4 {strides = array<i32>} : memref<18x18x128xbf16, #tpu.memory_space<vmem>>, vector<16x16x128xbf16>,
    %c0_8 = arith.constant 0 : index
    %c0_9 = arith.constant 0 : index
    %c0_10 = arith.constant 0 : index
    %6 = vector.load %arg8[%c0_8, %c0_9, %c0_10] : memref<18x18x128xbf16, #tpu.memory_space<vmem>>, vector<16x16x128xbf16>
    %7 = vector.shape_cast %6 : vector<16x16x128xbf16> to vector<256x128xbf16>
    %c0_11 = arith.constant 0 : index
    %c0_12 = arith.constant 0 : index
    %8 = vector.load %arg9[%c0_11, %c0_12] : memref<256x1152xbf16, #tpu.memory_space<vmem>>, vector<256x128xbf16>
    tpu.vector_store %arg9[%c0_11, %c0_12], %7 {strides = array<i32>} : memref<256x1152xbf16, #tpu.memory_space<vmem>>, vector<256x128xbf16>,
    %c0_13 = arith.constant 0 : index
    %c1_14 = arith.constant 1 : index
    %c0_15 = arith.constant 0 : index
    %9 = vector.load %arg8[%c0_13, %c1_14, %c0_15] : memref<18x18x128xbf16, #tpu.memory_space<vmem>>, vector<16x16x128xbf16>
    %10 = vector.shape_cast %9 : vector<16x16x128xbf16> to vector<256x128xbf16>
    %c0_16 = arith.constant 0 : index
    %c128 = arith.constant 128 : index
    %11 = vector.load %arg9[%c0_16, %c128] : memref<256x1152xbf16, #tpu.memory_space<vmem>>, vector<256x128xbf16>
    tpu.vector_store %arg9[%c0_16, %c128], %10 {strides = array<i32>} : memref<256x1152xbf16, #tpu.memory_space<vmem>>, vector<256x128xbf16>,
    %c0_17 = arith.constant 0 : index
    %c2 = arith.constant 2 : index
    %c0_18 = arith.constant 0 : index
    %12 = vector.load %arg8[%c0_17, %c2, %c0_18] : memref<18x18x128xbf16, #tpu.memory_space<vmem>>, vector<16x16x128xbf16>
    %13 = vector.shape_cast %12 : vector<16x16x128xbf16> to vector<256x128xbf16>
    %c0_19 = arith.constant 0 : index
    %c256 = arith.constant 256 : index
    %14 = vector.load %arg9[%c0_19, %c256] : memref<256x1152xbf16, #tpu.memory_space<vmem>>, vector<256x128xbf16>
    tpu.vector_store %arg9[%c0_19, %c256], %13 {strides = array<i32>} : memref<256x1152xbf16, #tpu.memory_space<vmem>>, vector<256x128xbf16>,
    %c1_20 = arith.constant 1 : index
    %c0_21 = arith.constant 0 : index
    %c0_22 = arith.constant 0 : index
    %15 = vector.load %arg8[%c1_20, %c0_21, %c0_22] : memref<18x18x128xbf16, #tpu.memory_space<vmem>>, vector<16x16x128xbf16>
    %16 = vector.shape_cast %15 : vector<16x16x128xbf16> to vector<256x128xbf16>
    %c0_23 = arith.constant 0 : index
    %c384 = arith.constant 384 : index
    %17 = vector.load %arg9[%c0_23, %c384] : memref<256x1152xbf16, #tpu.memory_space<vmem>>, vector<256x128xbf16>
    tpu.vector_store %arg9[%c0_23, %c384], %16 {strides = array<i32>} : memref<256x1152xbf16, #tpu.memory_space<vmem>>, vector<256x128xbf16>,
    %c1_24 = arith.constant 1 : index
    %c1_25 = arith.constant 1 : index
    %c0_26 = arith.constant 0 : index
    %18 = vector.load %arg8[%c1_24, %c1_25, %c0_26] : memref<18x18x128xbf16, #tpu.memory_space<vmem>>, vector<16x16x128xbf16>
    %19 = vector.shape_cast %18 : vector<16x16x128xbf16> to vector<256x128xbf16>
    %c0_27 = arith.constant 0 : index
    %c512 = arith.constant 512 : index
    %20 = vector.load %arg9[%c0_27, %c512] : memref<256x1152xbf16, #tpu.memory_space<vmem>>, vector<256x128xbf16>
    tpu.vector_store %arg9[%c0_27, %c512], %19 {strides = array<i32>} : memref<256x1152xbf16, #tpu.memory_space<vmem>>, vector<256x128xbf16>,
    %c1_28 = arith.constant 1 : index
    %c2_29 = arith.constant 2 : index
    %c0_30 = arith.constant 0 : index
    %21 = vector.load %arg8[%c1_28, %c2_29, %c0_30] : memref<18x18x128xbf16, #tpu.memory_space<vmem>>, vector<16x16x128xbf16>
    %22 = vector.shape_cast %21 : vector<16x16x128xbf16> to vector<256x128xbf16>
    %c0_31 = arith.constant 0 : index
    %c640 = arith.constant 640 : index
    %23 = vector.load %arg9[%c0_31, %c640] : memref<256x1152xbf16, #tpu.memory_space<vmem>>, vector<256x128xbf16>
    tpu.vector_store %arg9[%c0_31, %c640], %22 {strides = array<i32>} : memref<256x1152xbf16, #tpu.memory_space<vmem>>, vector<256x128xbf16>,
    %c2_32 = arith.constant 2 : index
    %c0_33 = arith.constant 0 : index
    %c0_34 = arith.constant 0 : index
    %24 = vector.load %arg8[%c2_32, %c0_33, %c0_34] : memref<18x18x128xbf16, #tpu.memory_space<vmem>>, vector<16x16x128xbf16>
    %25 = vector.shape_cast %24 : vector<16x16x128xbf16> to vector<256x128xbf16>
    %c0_35 = arith.constant 0 : index
    %c768 = arith.constant 768 : index
    %26 = vector.load %arg9[%c0_35, %c768] : memref<256x1152xbf16, #tpu.memory_space<vmem>>, vector<256x128xbf16>
    tpu.vector_store %arg9[%c0_35, %c768], %25 {strides = array<i32>} : memref<256x1152xbf16, #tpu.memory_space<vmem>>, vector<256x128xbf16>,
    %c2_36 = arith.constant 2 : index
    %c1_37 = arith.constant 1 : index
    %c0_38 = arith.constant 0 : index
    %27 = vector.load %arg8[%c2_36, %c1_37, %c0_38] : memref<18x18x128xbf16, #tpu.memory_space<vmem>>, vector<16x16x128xbf16>
    %28 = vector.shape_cast %27 : vector<16x16x128xbf16> to vector<256x128xbf16>
    %c0_39 = arith.constant 0 : index
    %c896 = arith.constant 896 : index
    %29 = vector.load %arg9[%c0_39, %c896] : memref<256x1152xbf16, #tpu.memory_space<vmem>>, vector<256x128xbf16>
    tpu.vector_store %arg9[%c0_39, %c896], %28 {strides = array<i32>} : memref<256x1152xbf16, #tpu.memory_space<vmem>>, vector<256x128xbf16>,
    %c2_40 = arith.constant 2 : index
    %c2_41 = arith.constant 2 : index
    %c0_42 = arith.constant 0 : index
    %30 = vector.load %arg8[%c2_40, %c2_41, %c0_42] : memref<18x18x128xbf16, #tpu.memory_space<vmem>>, vector<16x16x128xbf16>
    %31 = vector.shape_cast %30 : vector<16x16x128xbf16> to vector<256x128xbf16>
    %c0_43 = arith.constant 0 : index
    %c1024 = arith.constant 1024 : index
    %32 = vector.load %arg9[%c0_43, %c1024] : memref<256x1152xbf16, #tpu.memory_space<vmem>>, vector<256x128xbf16>
    tpu.vector_store %arg9[%c0_43, %c1024], %31 {strides = array<i32>} : memref<256x1152xbf16, #tpu.memory_space<vmem>>, vector<256x128xbf16>,
    %c0_44 = arith.constant 0 : index
    %c0_45 = arith.constant 0 : index
    %33 = vector.load %arg9[%c0_44, %c0_45] : memref<256x1152xbf16, #tpu.memory_space<vmem>>, vector<256x1152xbf16>
    %c0_46 = arith.constant 0 : index
    %c0_47 = arith.constant 0 : index
    %34 = vector.load %arg2[%c0_46, %c0_47] : memref<1152x128xbf16, #tpu.memory_space<vmem>>, vector<1152x128xbf16>
    %cst_48 = arith.constant dense<0.000000e+00> : vector<256x128xf32>
    %35 = tpu.matmul %33, %34, %cst_48 {dimension_numbers = #tpu.dot_dimension_numbers<[1], [0], [0], [1], [0, 0, 1, 1], [], []>} : vector<256x1152xbf16>, vector<1152x128xbf16>, vector<256x128xf32> -> vector<256x128xf32>
    %c0_49 = arith.constant 0 : index
    %c0_50 = arith.constant 0 : index
    %36 = vector.load %arg4[%c0_49, %c0_50] : memref<1x128xf32, #tpu.memory_space<vmem>>, vector<1x128xf32>
    %37 = vector.shape_cast %36 : vector<1x128xf32> to vector<128xf32>
    %38 = vector.shape_cast %37 : vector<128xf32> to vector<1x128xf32>
    %39 = vector.broadcast %38 : vector<1x128xf32> to vector<256x128xf32>
    %40 = arith.addf %35, %39 : vector<256x128xf32>
    %c0_51 = arith.constant 0 : index
    %c0_52 = arith.constant 0 : index
    %c0_53 = arith.constant 0 : index
    %41 = vector.load %arg6[%c0_51, %c0_52, %c0_53] : memref<1x256x128xf32, #tpu.memory_space<vmem>>, vector<1x256x128xf32>
    %42 = vector.shape_cast %41 : vector<1x256x128xf32> to vector<256x128xf32>
    %43 = vector.shape_cast %40 : vector<256x128xf32> to vector<1x256x128xf32>
    tpu.vector_store %arg6[%c0_51, %c0_52, %c0_53], %43 {strides = array<i32>} : memref<1x256x128xf32, #tpu.memory_space<vmem>>, vector<1x256x128xf32>,
    %c0_54 = arith.constant 0 : index
    %c0_55 = arith.constant 0 : index
    %44 = vector.load %arg3[%c0_54, %c0_55] : memref<1152x256xbf16, #tpu.memory_space<vmem>>, vector<1152x256xbf16>
    %cst_56 = arith.constant dense<0.000000e+00> : vector<256x256xf32>
    %45 = tpu.matmul %33, %44, %cst_56 {dimension_numbers = #tpu.dot_dimension_numbers<[1], [0], [0], [1], [0, 0, 1, 1], [], []>} : vector<256x1152xbf16>, vector<1152x256xbf16>, vector<256x256xf32> -> vector<256x256xf32>
    %c0_57 = arith.constant 0 : index
    %c0_58 = arith.constant 0 : index
    %46 = vector.load %arg5[%c0_57, %c0_58] : memref<1x256xf32, #tpu.memory_space<vmem>>, vector<1x256xf32>
    %47 = vector.shape_cast %46 : vector<1x256xf32> to vector<256xf32>
    %48 = vector.shape_cast %47 : vector<256xf32> to vector<1x256xf32>
    %49 = vector.broadcast %48 : vector<1x256xf32> to vector<256x256xf32>
    %50 = arith.addf %45, %49 : vector<256x256xf32>
    %c0_59 = arith.constant 0 : index
    %c0_60 = arith.constant 0 : index
    %c0_61 = arith.constant 0 : index
    %51 = vector.load %arg7[%c0_59, %c0_60, %c0_61] : memref<1x256x256xf32, #tpu.memory_space<vmem>>, vector<1x256x256xf32>
    %52 = vector.shape_cast %51 : vector<1x256x256xf32> to vector<256x256xf32>
    %53 = vector.shape_cast %50 : vector<256x256xf32> to vector<1x256x256xf32>
    tpu.vector_store %arg7[%c0_59, %c0_60, %c0_61], %53 {strides = array<i32>} : memref<1x256x256xf32, #tpu.memory_space<vmem>>, vector<1x256x256xf32>,
    return
  }
  func.func @transform_0(%arg0: i32) -> (i32, i32, i32, i32) {
    %c0_i32 = arith.constant 0 : i32
    %c0_i32_0 = arith.constant 0 : i32
    %c0_i32_1 = arith.constant 0 : i32
    %c0_i32_2 = arith.constant 0 : i32
    return %arg0, %c0_i32, %c0_i32_0, %c0_i32_1 : i32, i32, i32, i32
  }
  func.func @transform_1(%arg0: i32) -> (i32, i32) {
    %c0_i32 = arith.constant 0 : i32
    %c0_i32_0 = arith.constant 0 : i32
    %c0_i32_1 = arith.constant 0 : i32
    return %c0_i32, %c0_i32_0 : i32, i32
  }
  func.func @transform_2(%arg0: i32) -> (i32, i32) {
    %c0_i32 = arith.constant 0 : i32
    %c0_i32_0 = arith.constant 0 : i32
    %c0_i32_1 = arith.constant 0 : i32
    return %c0_i32, %c0_i32_0 : i32, i32
  }
  func.func @transform_3(%arg0: i32) -> (i32, i32) {
    %c0_i32 = arith.constant 0 : i32
    %c0_i32_0 = arith.constant 0 : i32
    %c0_i32_1 = arith.constant 0 : i32
    return %c0_i32, %c0_i32_0 : i32, i32
  }
  func.func @transform_4(%arg0: i32) -> (i32, i32) {
    %c0_i32 = arith.constant 0 : i32
    %c0_i32_0 = arith.constant 0 : i32
    %c0_i32_1 = arith.constant 0 : i32
    return %c0_i32, %c0_i32_0 : i32, i32
  }
  func.func @transform_5(%arg0: i32) -> (i32, i32, i32) {
    %c0_i32 = arith.constant 0 : i32
    %c0_i32_0 = arith.constant 0 : i32
    %c0_i32_1 = arith.constant 0 : i32
    return %arg0, %c0_i32, %c0_i32_0 : i32, i32, i32
  }
  func.func @transform_6(%arg0: i32) -> (i32, i32, i32) {
    %c0_i32 = arith.constant 0 : i32
    %c0_i32_0 = arith.constant 0 : i32
    %c0_i32_1 = arith.constant 0 : i32
    return %arg0, %c0_i32, %c0_i32_0 : i32, i32, i32
  }
}

</mosaic_0001>

<llo_original>
// kernel: key_value_fwd.1
$region0: #{key_value_fwd.1}
  #allocation0 [shape = 'u32[]', space=smem, size = 0x4, offset = 0x4, fixed_abs, tag = 'smem constant byte address 0x4 - core index']
  #allocation1 [shape = 'u32[144,128]{1,0:T(1,128)}', space=vmem, size = 0x12000, scoped, tag = 'internal scratch']
  #allocation2 [shape = 'bf16[18,18,128]{2,1,0:T(8,128)(2,1)}', space=vmem, size = 0x1b000, scoped, tag = 'scratch operand']
  #allocation3 [shape = 'bf16[256,1152]{1,0:T(16,128)(2,1)}', space=vmem, size = 0x90000, scoped, tag = 'scratch operand']
  %s0 = inlined_call_operand.vmem [shape: f32[2,16,16,128], index: 0, kind: input, shape index: {}]
  %s1 = inlined_call_operand.vmem [shape: bf16[1152,128], index: 1, kind: input, shape index: {}]
  %s2 = inlined_call_operand.vmem [shape: bf16[1152,256], index: 2, kind: input, shape index: {}]
  %s3 = inlined_call_operand.vmem [shape: f32[1,128], index: 3, kind: input, shape index: {}]
  %s4 = inlined_call_operand.vmem [shape: f32[1,256], index: 4, kind: input, shape index: {}]
  %s5 = inlined_call_operand.hbm [shape: f32[2,256,128], index: 5, kind: output, shape index: {0}]
  %s6 = inlined_call_operand.hbm [shape: f32[2,256,256], index: 6, kind: output, shape index: {1}]
  %7 = xla_tuple %s5, %s6
  %s8 = sld [smem:[#allocation0]]
  $region61: #{key_value_fwd.1} parent=0
    _
  %s10 = ssub.s32 1, %s8
  %s11 = scalar_select 0, %s10, %s8
  $region1: #{key_value_fwd.1} parent=0
    #allocation4 [shape = 'u8[262144]{0}', space=vmem, size = 0x40000, scoped, tag = 'output window, operand 0']
    #allocation5 [shape = 's32[2]{0}', space=sflag, size = 0x8, scoped, tag = 'scoped memory for key_value_fwd.1']
    #allocation6 [shape = 'u8[524288]{0}', space=vmem, size = 0x80000, scoped, tag = 'output window, operand 1']
    #allocation7 [shape = 's32[2]{0}', space=sflag, size = 0x8, scoped, tag = 'scoped memory for key_value_fwd.1']
    %12 = vsyncpa [#allocation5], 0
    %s13 = scalar_lea.sflag [#allocation5], 1
    %14 = vsyncpa %s13, 0
    %15 = vsyncpa [#allocation7], 0
    %s16 = scalar_lea.sflag [#allocation7], 1
    %17 = vsyncpa %s16, 0
    loop: start=0, step=1, limit=4
    $region2: #{key_value_fwd.1} parent=1 // loop_pre_header
      _
    $region3: #{key_value_fwd.1} parent=1 // loop_header
      %s19 = sphi 0, %s23
      %p20 = scmp.ge.s32.totalorder %s19, 4
      %s29 = sphi 0, %s31
      %s32 = sphi 0, %s29
      %s33 = sphi 0, %s32
      %s49 = sphi 0, %s33
      %s53 = sphi 0, %s53
      %s55 = sphi 0, %s53
      %s56 = sphi 0, %s55
      %s70 = sphi 0, %s56
      %s74 = sphi 0, %s74
      %s76 = sphi 0, %s74
      %s77 = sphi 0, %s76
      %s91 = sphi 0, %s77
      %s95 = sphi 0, %s95
      %s97 = sphi 0, %s95
      %s98 = sphi 0, %s97
      %s112 = sphi 0, %s98
      %s116 = sphi 0, %s116
      %s118 = sphi 0, %s116
      %s119 = sphi 0, %s118
      %s133 = sphi 0, %s119
      %s139 = sphi 0, %s141
      %s142 = sphi 0, %s139
      %s143 = sphi 0, %s142
      %s159 = sphi 0, %s143
      %s165 = sphi 0, %s167
      %s168 = sphi 0, %s165
      %s169 = sphi 0, %s168
      %s185 = sphi 0, %s169
    $region4: #{key_value_fwd.1} parent=1 // loop_header_branch
      %22 = sbr.rel (%p20) target = $region8
    $region5: #{key_value_fwd.1} parent=1 // loop_body
      %s24 = ssub.s32 %s19, 1
      %s25 = ssub.s32 %s19, 2
      %s26 = sadd.s32 %s19, 1
      %s27 = ssub.s32 %s19, %s26
      %p28 = scmp.eq.s32.totalorder %s27, 0
      %s30 = sadd.s32 %s29, 1
      %s31 = scalar_select %p28, %s29, %s30
      %p34 = pneg %p28
      %p35 = scmp.eq.s32.totalorder %s19, 1
      %p36 = por %p34, %p35
      %p37 = scmp.ne.s32.totalorder %s29, %s32
      %p38 = scmp.eq.s32.totalorder %s19, 0
      %p39 = por %p37, %p38
      %p40 = scmp.ne.s32.totalorder %s29, %s32
      %p41 = scmp.eq.s32.totalorder %s24, 1
      %p42 = por %p40, %p41
      %p43 = scmp.ne.s32.totalorder %s32, %s33
      %p44 = scmp.eq.s32.totalorder %s24, 0
      %p45 = por %p43, %p44
      %p46 = scmp.ne.s32.totalorder %s32, %s33
      %p47 = scmp.eq.s32.totalorder %s25, 1
      %p48 = por %p46, %p47
      %p50 = scmp.ne.s32.totalorder %s33, %s49
      %p51 = scmp.eq.s32.totalorder %s25, 0
      %p52 = por %p50, %p51
      %s54 = sadd.s32 %s53, 1
      %p57 = scmp.eq.s32.totalorder %s19, 1
      %p58 = scmp.ne.s32.totalorder %s53, %s55
      %p59 = scmp.eq.s32.totalorder %s19, 0
      %p60 = por %p58, %p59
      %p61 = scmp.ne.s32.totalorder %s53, %s55
      %p62 = scmp.eq.s32.totalorder %s24, 1
      %p63 = por %p61, %p62
      %p64 = scmp.ne.s32.totalorder %s55, %s56
      %p65 = scmp.eq.s32.totalorder %s24, 0
      %p66 = por %p64, %p65
      %p67 = scmp.ne.s32.totalorder %s55, %s56
      %p68 = scmp.eq.s32.totalorder %s25, 1
      %p69 = por %p67, %p68
      %p71 = scmp.ne.s32.totalorder %s56, %s70
      %p72 = scmp.eq.s32.totalorder %s25, 0
      %p73 = por %p71, %p72
      %s75 = sadd.s32 %s74, 1
      %p78 = scmp.eq.s32.totalorder %s19, 1
      %p79 = scmp.ne.s32.totalorder %s74, %s76
      %p80 = scmp.eq.s32.totalorder %s19, 0
      %p81 = por %p79, %p80
      %p82 = scmp.ne.s32.totalorder %s74, %s76
      %p83 = scmp.eq.s32.totalorder %s24, 1
      %p84 = por %p82, %p83
      %p85 = scmp.ne.s32.totalorder %s76, %s77
      %p86 = scmp.eq.s32.totalorder %s24, 0
      %p87 = por %p85, %p86
      %p88 = scmp.ne.s32.totalorder %s76, %s77
      %p89 = scmp.eq.s32.totalorder %s25, 1
      %p90 = por %p88, %p89
      %p92 = scmp.ne.s32.totalorder %s77, %s91
      %p93 = scmp.eq.s32.totalorder %s25, 0
      %p94 = por %p92, %p93
      %s96 = sadd.s32 %s95, 1
      %p99 = scmp.eq.s32.totalorder %s19, 1
      %p100 = scmp.ne.s32.totalorder %s95, %s97
      %p101 = scmp.eq.s32.totalorder %s19, 0
      %p102 = por %p100, %p101
      %p103 = scmp.ne.s32.totalorder %s95, %s97
      %p104 = scmp.eq.s32.totalorder %s24, 1
      %p105 = por %p103, %p104
      %p106 = scmp.ne.s32.totalorder %s97, %s98
      %p107 = scmp.eq.s32.totalorder %s24, 0
      %p108 = por %p106, %p107
      %p109 = scmp.ne.s32.totalorder %s97, %s98
      %p110 = scmp.eq.s32.totalorder %s25, 1
      %p111 = por %p109, %p110
      %p113 = scmp.ne.s32.totalorder %s98, %s112
      %p114 = scmp.eq.s32.totalorder %s25, 0
      %p115 = por %p113, %p114
      %s117 = sadd.s32 %s116, 1
      %p120 = scmp.eq.s32.totalorder %s19, 1
      %p121 = scmp.ne.s32.totalorder %s116, %s118
      %p122 = scmp.eq.s32.totalorder %s19, 0
      %p123 = por %p121, %p122
      %p124 = scmp.ne.s32.totalorder %s116, %s118
      %p125 = scmp.eq.s32.totalorder %s24, 1
      %p126 = por %p124, %p125
      %p127 = scmp.ne.s32.totalorder %s118, %s119
      %p128 = scmp.eq.s32.totalorder %s24, 0
      %p129 = por %p127, %p128
      %p130 = scmp.ne.s32.totalorder %s118, %s119
      %p131 = scmp.eq.s32.totalorder %s25, 1
      %p132 = por %p130, %p131
      %p134 = scmp.ne.s32.totalorder %s119, %s133
      %p135 = scmp.eq.s32.totalorder %s25, 0
      %p136 = por %p134, %p135
      %s137 = ssub.s32 %s19, %s26
      %p138 = scmp.eq.s32.totalorder %s137, 0
      %s140 = sadd.s32 %s139, 1
      %s141 = scalar_select %p138, %s139, %s140
      %p144 = pneg %p138
      %p145 = scmp.eq.s32.totalorder %s19, 1
      %p146 = por %p144, %p145
      %p147 = scmp.ne.s32.totalorder %s139, %s142
      %p148 = scmp.eq.s32.totalorder %s19, 0
      %p149 = por %p147, %p148
      %p150 = scmp.ne.s32.totalorder %s139, %s142
      %p151 = scmp.eq.s32.totalorder %s24, 1
      %p152 = por %p150, %p151
      %p153 = scmp.ne.s32.totalorder %s142, %s143
      %p154 = scmp.eq.s32.totalorder %s24, 0
      %p155 = por %p153, %p154
      %p156 = scmp.ne.s32.totalorder %s142, %s143
      %p157 = scmp.eq.s32.totalorder %s25, 1
      %p158 = por %p156, %p157
      %p160 = scmp.ne.s32.totalorder %s143, %s159
      %p161 = scmp.eq.s32.totalorder %s25, 0
      %p162 = por %p160, %p161
      %s163 = ssub.s32 %s19, %s26
      %p164 = scmp.eq.s32.totalorder %s163, 0
      %s166 = sadd.s32 %s165, 1
      %s167 = scalar_select %p164, %s165, %s166
      %p170 = pneg %p164
      %p171 = scmp.eq.s32.totalorder %s19, 1
      %p172 = por %p170, %p171
      %p173 = scmp.ne.s32.totalorder %s165, %s168
      %p174 = scmp.eq.s32.totalorder %s19, 0
      %p175 = por %p173, %p174
      %p176 = scmp.ne.s32.totalorder %s165, %s168
      %p177 = scmp.eq.s32.totalorder %s24, 1
      %p178 = por %p176, %p177
      %p179 = scmp.ne.s32.totalorder %s168, %s169
      %p180 = scmp.eq.s32.totalorder %s24, 0
      %p181 = por %p179, %p180
      %p182 = scmp.ne.s32.totalorder %s168, %s169
      %p183 = scmp.eq.s32.totalorder %s25, 1
      %p184 = por %p182, %p183
      %p186 = scmp.ne.s32.totalorder %s169, %s185
      %p187 = scmp.eq.s32.totalorder %s25, 0
      %p188 = por %p186, %p187
      %p189 = scmp.le.s32.totalorder 1, %s19
      %p190 = scmp.lt.s32.totalorder %s19, 3
      %p191 = pnand %p189, %p190
      %p192 = pneg %p191
      // Predicated region
      $region9: #{key_value_fwd.1} parent=5 // pred_check
        _
      $region10: #{key_value_fwd.1} parent=5 // pred_check_branch
        %194 = sbr.rel (%p191) target = $region12
      $region11: #{key_value_fwd.1} parent=5 // pred_region
        %s195 = ssub.s32 %s19, 1
        // Predicated region
        $region13: #{key_value_fwd.1} parent=11 // pred_check
          %p196 = pneg %p66
        $region14: #{key_value_fwd.1} parent=11 // pred_check_branch
          %198 = sbr.rel (%p196) target = $region16
        $region15: #{key_value_fwd.1} parent=11 // pred_region
          _
        $region16: #{key_value_fwd.1} parent=11 // pred_fallthru
          _
        // Predicated region
        $region17: #{key_value_fwd.1} parent=11 // pred_check
          %p199 = pneg %p87
        $region18: #{key_value_fwd.1} parent=11 // pred_check_branch
          %201 = sbr.rel (%p199) target = $region20
        $region19: #{key_value_fwd.1} parent=11 // pred_region
          _
        $region20: #{key_value_fwd.1} parent=11 // pred_fallthru
          _
        // Predicated region
        $region21: #{key_value_fwd.1} parent=11 // pred_check
          %p202 = pneg %p108
        $region22: #{key_value_fwd.1} parent=11 // pred_check_branch
          %204 = sbr.rel (%p202) target = $region24
        $region23: #{key_value_fwd.1} parent=11 // pred_region
          _
        $region24: #{key_value_fwd.1} parent=11 // pred_fallthru
          _
        // Predicated region
        $region25: #{key_value_fwd.1} parent=11 // pred_check
          %p205 = pneg %p129
        $region26: #{key_value_fwd.1} parent=11 // pred_check_branch
          %207 = sbr.rel (%p205) target = $region28
        $region27: #{key_value_fwd.1} parent=11 // pred_region
          _
        $region28: #{key_value_fwd.1} parent=11 // pred_fallthru
          _
      $region12: #{key_value_fwd.1} parent=5 // pred_fallthru
        _
      %p208 = scmp.lt.s32.totalorder %s19, 2
      // Predicated region
      $region29: #{key_value_fwd.1} parent=5 // pred_check
        %p209 = pneg %p208
      $region30: #{key_value_fwd.1} parent=5 // pred_check_branch
        %211 = sbr.rel (%p209) target = $region32
      $region31: #{key_value_fwd.1} parent=5 // pred_region
        // Predicated region
        $region33: #{key_value_fwd.1} parent=31 // pred_check
          %p212 = pneg %p39
        $region34: #{key_value_fwd.1} parent=31 // pred_check_branch
          %214 = sbr.rel (%p212) target = $region36
        $region35: #{key_value_fwd.1} parent=31 // pred_region
          %p215 = scmp.lt.s32.totalorder %s19, 1
          %s216 = scalar_select %p215, %s19, 1
          %s217 = smul.addr %s216, 32
          %s218 = smul.addr %s217, 8
          %s219 = scalar_lea.vmem %s0, %s218
        $region36: #{key_value_fwd.1} parent=31 // pred_fallthru
          _
      $region32: #{key_value_fwd.1} parent=5 // pred_fallthru
        _
      %p220 = scmp.le.s32.totalorder 1, %s19
      %p221 = scmp.lt.s32.totalorder %s19, 3
      %p222 = pnand %p220, %p221
      %p223 = pneg %p222
      // Predicated region
      $region37: #{key_value_fwd.1} parent=5 // pred_check
        _
      $region38: #{key_value_fwd.1} parent=5 // pred_check_branch
        %225 = sbr.rel (%p222) target = $region40
      $region39: #{key_value_fwd.1} parent=5 // pred_region
        %s226 = ssub.s32 %s19, 1
        %p227 = scmp.lt.s32.totalorder %s24, 1
        %s228 = scalar_select %p227, %s24, 1
        %s229 = smul.addr %s228, 32
        %s230 = smul.addr %s229, 8
        %s231 = scalar_lea.vmem %s0, %s230
        %p232 = pneg %p45
        %p233 = pneg %p42
        %p234 = pneg %p66
        %p235 = pneg %p63
        %p236 = pneg %p87
        %p237 = pneg %p84
        %p238 = pneg %p108
        %p239 = pneg %p105
        %p240 = pneg %p129
        %p241 = pneg %p126
        %p242 = pneg %p155
        %p243 = pneg %p152
        %s244 = sand.u32 %s142, 1
        %s245 = scalar_lea.sflag [#allocation5], %s244
        %s246 = sand.u32 %s142, 1
        %s247 = smul.addr %s246, 256
        %s248 = scalar_lea.vmem [#allocation4], %s247
        %p249 = pneg %p181
        %p250 = pneg %p178
        %s251 = sand.u32 %s168, 1
        %s252 = scalar_lea.sflag [#allocation7], %s251
        %s253 = sand.u32 %s168, 1
        %s254 = smul.addr %s253, 512
        %s255 = scalar_lea.vmem [#allocation6], %s254
        %p256 = scmp.lt.s32.totalorder %s24, 1
        %s257 = scalar_select %p256, %s24, 1
        %s258 = smul.addr %s257, 32
        %s259 = smul.addr %s258, 8
        %s260 = scalar_lea.vmem %s0, %s259
        %262 = vst [vmem:[#allocation2] sm:$0xf] 0
        %263 = vst [vmem:[#allocation2 + $0x4] sm:$0xf] 0
        %264 = vst [vmem:[#allocation2 + $0x8] sm:$0x1] 0
        %265 = vst [vmem:[#allocation2 + $0xc] sm:$0xf] 0
        %266 = vst [vmem:[#allocation2 + $0x10] sm:$0xf] 0
        %267 = vst [vmem:[#allocation2 + $0x14] sm:$0x1] 0
        %268 = vst [vmem:[#allocation2 + $0x18] sm:$0xf] 0
        %269 = vst [vmem:[#allocation2 + $0x1c] sm:$0xf] 0
        %270 = vst [vmem:[#allocation2 + $0x20] sm:$0x1] 0
        %271 = vst [vmem:[#allocation2 + $0x24] sm:$0xf] 0
        %272 = vst [vmem:[#allocation2 + $0x28] sm:$0xf] 0
        %273 = vst [vmem:[#allocation2 + $0x2c] sm:$0x1] 0
        %274 = vst [vmem:[#allocation2 + $0x30] sm:$0xf] 0
        %275 = vst [vmem:[#allocation2 + $0x34] sm:$0xf] 0
        %276 = vst [vmem:[#allocation2 + $0x38] sm:$0x1] 0
        %277 = vst [vmem:[#allocation2 + $0x3c] sm:$0xf] 0
        %278 = vst [vmem:[#allocation2 + $0x40] sm:$0xf] 0
        %279 = vst [vmem:[#allocation2 + $0x44] sm:$0x1] 0
        %280 = vst [vmem:[#allocation2 + $0x48] sm:$0xf] 0
        %281 = vst [vmem:[#allocation2 + $0x4c] sm:$0xf] 0
        %282 = vst [vmem:[#allocation2 + $0x50] sm:$0x1] 0
        %283 = vst [vmem:[#allocation2 + $0x54] sm:$0xf] 0
        %284 = vst [vmem:[#allocation2 + $0x58] sm:$0xf] 0
        %285 = vst [vmem:[#allocation2 + $0x5c] sm:$0x1] 0
        %286 = vst [vmem:[#allocation2 + $0x60] sm:$0xf] 0
        %287 = vst [vmem:[#allocation2 + $0x64] sm:$0xf] 0
        %288 = vst [vmem:[#allocation2 + $0x68] sm:$0x1] 0
        %289 = vst [vmem:[#allocation2 + $0x6c] sm:$0xf] 0
        %290 = vst [vmem:[#allocation2 + $0x70] sm:$0xf] 0
        %291 = vst [vmem:[#allocation2 + $0x74] sm:$0x1] 0
        %292 = vst [vmem:[#allocation2 + $0x78] sm:$0xf] 0
        %293 = vst [vmem:[#allocation2 + $0x7c] sm:$0xf] 0
        %294 = vst [vmem:[#allocation2 + $0x80] sm:$0x1] 0
        %295 = vst [vmem:[#allocation2 + $0x84] sm:$0xf] 0
        %296 = vst [vmem:[#allocation2 + $0x88] sm:$0xf] 0
        %297 = vst [vmem:[#allocation2 + $0x8c] sm:$0x1] 0
        %298 = vst [vmem:[#allocation2 + $0x90] sm:$0xf] 0
        %299 = vst [vmem:[#allocation2 + $0x94] sm:$0xf] 0
        %300 = vst [vmem:[#allocation2 + $0x98] sm:$0x1] 0
        %301 = vst [vmem:[#allocation2 + $0x9c] sm:$0xf] 0
        %302 = vst [vmem:[#allocation2 + $0xa0] sm:$0xf] 0
        %303 = vst [vmem:[#allocation2 + $0xa4] sm:$0x1] 0
        %304 = vst [vmem:[#allocation2 + $0xa8] sm:$0xf] 0
        %305 = vst [vmem:[#allocation2 + $0xac] sm:$0xf] 0
        %306 = vst [vmem:[#allocation2 + $0xb0] sm:$0x1] 0
        %307 = vst [vmem:[#allocation2 + $0xb4] sm:$0xf] 0
        %308 = vst [vmem:[#allocation2 + $0xb8] sm:$0xf] 0
        %309 = vst [vmem:[#allocation2 + $0xbc] sm:$0x1] 0
        %310 = vst [vmem:[#allocation2 + $0xc0] sm:$0xf] 0
        %311 = vst [vmem:[#allocation2 + $0xc4] sm:$0xf] 0
        %312 = vst [vmem:[#allocation2 + $0xc8] sm:$0x1] 0
        %313 = vst [vmem:[#allocation2 + $0xcc] sm:$0xf] 0
        %314 = vst [vmem:[#allocation2 + $0xd0] sm:$0xf] 0
        %315 = vst [vmem:[#allocation2 + $0xd4] sm:$0x1] 0
        %v316 = vld [vmem:[%s260] sm:$0xff]
        %v317 = vld [vmem:[%s260 + $0x8] sm:$0xff]
        %v318 = vld [vmem:[%s260 + $0x10] sm:$0xff]
        %v319 = vld [vmem:[%s260 + $0x18] sm:$0xff]
        %v320 = vld [vmem:[%s260 + $0x20] sm:$0xff]
        %v321 = vld [vmem:[%s260 + $0x28] sm:$0xff]
        %v322 = vld [vmem:[%s260 + $0x30] sm:$0xff]
        %v323 = vld [vmem:[%s260 + $0x38] sm:$0xff]
        %v324 = vld [vmem:[%s260 + $0x40] sm:$0xff]
        %v325 = vld [vmem:[%s260 + $0x48] sm:$0xff]
        %v326 = vld [vmem:[%s260 + $0x50] sm:$0xff]
        %v327 = vld [vmem:[%s260 + $0x58] sm:$0xff]
        %v328 = vld [vmem:[%s260 + $0x60] sm:$0xff]
        %v329 = vld [vmem:[%s260 + $0x68] sm:$0xff]
        %v330 = vld [vmem:[%s260 + $0x70] sm:$0xff]
        %v331 = vld [vmem:[%s260 + $0x78] sm:$0xff]
        %v332 = vld [vmem:[%s260 + $0x80] sm:$0xff]
        %v333 = vld [vmem:[%s260 + $0x88] sm:$0xff]
        %v334 = vld [vmem:[%s260 + $0x90] sm:$0xff]
        %v335 = vld [vmem:[%s260 + $0x98] sm:$0xff]
        %v336 = vld [vmem:[%s260 + $0xa0] sm:$0xff]
        %v337 = vld [vmem:[%s260 + $0xa8] sm:$0xff]
        %v338 = vld [vmem:[%s260 + $0xb0] sm:$0xff]
        %v339 = vld [vmem:[%s260 + $0xb8] sm:$0xff]
        %v340 = vld [vmem:[%s260 + $0xc0] sm:$0xff]
        %v341 = vld [vmem:[%s260 + $0xc8] sm:$0xff]
        %v342 = vld [vmem:[%s260 + $0xd0] sm:$0xff]
        %v343 = vld [vmem:[%s260 + $0xd8] sm:$0xff]
        %v344 = vld [vmem:[%s260 + $0xe0] sm:$0xff]
        %v345 = vld [vmem:[%s260 + $0xe8] sm:$0xff]
        %v346 = vld [vmem:[%s260 + $0xf0] sm:$0xff]
        %v347 = vld [vmem:[%s260 + $0xf8] sm:$0xff]
        %v348 = vpack.c.bf16 %v317, %v316
        %v349 = vpack.c.bf16 %v319, %v318
        %v350 = vpack.c.bf16 %v321, %v320
        %v351 = vpack.c.bf16 %v323, %v322
        %v352 = vpack.c.bf16 %v325, %v324
        %v353 = vpack.c.bf16 %v327, %v326
        %v354 = vpack.c.bf16 %v329, %v328
        %v355 = vpack.c.bf16 %v331, %v330
        %v356 = vpack.c.bf16 %v333, %v332
        %v357 = vpack.c.bf16 %v335, %v334
        %v358 = vpack.c.bf16 %v337, %v336
        %v359 = vpack.c.bf16 %v339, %v338
        %v360 = vpack.c.bf16 %v341, %v340
        %v361 = vpack.c.bf16 %v343, %v342
        %v362 = vpack.c.bf16 %v345, %v344
        %v363 = vpack.c.bf16 %v347, %v346
        %v380 = vunpack.c.l.b16 %v348
        %v381 = vunpack.c.h.b16 %v348
        %v382 = vunpack.c.l.b16 %v349
        %v383 = vunpack.c.h.b16 %v349
        %v384 = vunpack.c.l.b16 %v350
        %v385 = vunpack.c.h.b16 %v350
        %v386 = vunpack.c.l.b16 %v351
        %v387 = vunpack.c.h.b16 %v351
        %v388 = vunpack.c.l.b16 %v352
        %v389 = vunpack.c.h.b16 %v352
        %v390 = vunpack.c.l.b16 %v353
        %v391 = vunpack.c.h.b16 %v353
        %v392 = vunpack.c.l.b16 %v354
        %v393 = vunpack.c.h.b16 %v354
        %v394 = vunpack.c.l.b16 %v355
        %v395 = vunpack.c.h.b16 %v355
        %v396 = vunpack.c.l.b16 %v356
        %v397 = vunpack.c.h.b16 %v356
        %v398 = vunpack.c.l.b16 %v357
        %v399 = vunpack.c.h.b16 %v357
        %v400 = vunpack.c.l.b16 %v358
        %v401 = vunpack.c.h.b16 %v358
        %v402 = vunpack.c.l.b16 %v359
        %v403 = vunpack.c.h.b16 %v359
        %v404 = vunpack.c.l.b16 %v360
        %v405 = vunpack.c.h.b16 %v360
        %v406 = vunpack.c.l.b16 %v361
        %v407 = vunpack.c.h.b16 %v361
        %v408 = vunpack.c.l.b16 %v362
        %v409 = vunpack.c.h.b16 %v362
        %v410 = vunpack.c.l.b16 %v363
        %v411 = vunpack.c.h.b16 %v363
        %v412 = vpack.c.b16 %v380, %v380
        %v413 = vpack.c.b16 %v381, %v381
        %v414 = vpack.c.b16 %v382, %v382
        %v415 = vpack.c.b16 %v383, %v383
        %v416 = vpack.c.b16 %v384, %v384
        %v417 = vpack.c.b16 %v385, %v385
        %v418 = vpack.c.b16 %v386, %v386
        %v419 = vpack.c.b16 %v387, %v387
        %v420 = vpack.c.b16 %v388, %v388
        %v421 = vpack.c.b16 %v389, %v389
        %v422 = vpack.c.b16 %v390, %v390
        %v423 = vpack.c.b16 %v391, %v391
        %v424 = vpack.c.b16 %v392, %v392
        %v425 = vpack.c.b16 %v393, %v393
        %v426 = vpack.c.b16 %v394, %v394
        %v427 = vpack.c.b16 %v395, %v395
        %v428 = vpack.c.b16 %v396, %v396
        %v429 = vpack.c.b16 %v397, %v397
        %v430 = vpack.c.b16 %v398, %v398
        %v431 = vpack.c.b16 %v399, %v399
        %v432 = vpack.c.b16 %v400, %v400
        %v433 = vpack.c.b16 %v401, %v401
        %v434 = vpack.c.b16 %v402, %v402
        %v435 = vpack.c.b16 %v403, %v403
        %v436 = vpack.c.b16 %v404, %v404
        %v437 = vpack.c.b16 %v405, %v405
        %v438 = vpack.c.b16 %v406, %v406
        %v439 = vpack.c.b16 %v407, %v407
        %v440 = vpack.c.b16 %v408, %v408
        %v441 = vpack.c.b16 %v409, %v409
        %v442 = vpack.c.b16 %v410, %v410
        %v443 = vpack.c.b16 %v411, %v411
        %vm444 = vsmask.f32 256
        %vm445 = vsmask.f32 4368
        %vm446 = vmor %vm444, %vm445
        %v448 = vshrl.u32 %v412, 16
        %v450 = vrot.slane %v448, 7
        %v451 = vshll.u32 %v412, 16
        %v453 = vor.u32 %v450, %v451
        %v454 = vrot.slane %v450, 4
        %v456 = vshrl.u32 %v413, 16
        %v458 = vrot.slane %v456, 7
        %v459 = vshll.u32 %v413, 16
        %v461 = vor.u32 %v458, %v459
        %v462 = vsel %vm446, %v454, %v461
        %v463 = vrot.slane %v458, 4
        %v465 = vshrl.u32 %v414, 16
        %v467 = vrot.slane %v465, 7
        %v468 = vshll.u32 %v414, 16
        %v470 = vor.u32 %v467, %v468
        %v471 = vrot.slane %v467, 4
        %v473 = vshrl.u32 %v415, 16
        %v475 = vrot.slane %v473, 7
        %v476 = vshll.u32 %v415, 16
        %v478 = vor.u32 %v475, %v476
        %v479 = vsel %vm446, %v471, %v478
        %v480 = vrot.slane %v475, 4
        %v482 = vshrl.u32 %v416, 16
        %v484 = vrot.slane %v482, 7
        %v485 = vshll.u32 %v416, 16
        %v487 = vor.u32 %v484, %v485
        %v488 = vrot.slane %v484, 4
        %v490 = vshrl.u32 %v417, 16
        %v492 = vrot.slane %v490, 7
        %v493 = vshll.u32 %v417, 16
        %v495 = vor.u32 %v492, %v493
        %v496 = vsel %vm446, %v488, %v495
        %v497 = vrot.slane %v492, 4
        %v499 = vshrl.u32 %v418, 16
        %v501 = vrot.slane %v499, 7
        %v502 = vshll.u32 %v418, 16
        %v504 = vor.u32 %v501, %v502
        %v505 = vrot.slane %v501, 4
        %v507 = vshrl.u32 %v419, 16
        %v509 = vrot.slane %v507, 7
        %v510 = vshll.u32 %v419, 16
        %v512 = vor.u32 %v509, %v510
        %v513 = vsel %vm446, %v505, %v512
        %v514 = vrot.slane %v509, 4
        %v516 = vshrl.u32 %v420, 16
        %v518 = vrot.slane %v516, 7
        %v519 = vshll.u32 %v420, 16
        %v521 = vor.u32 %v518, %v519
        %v522 = vrot.slane %v518, 4
        %v524 = vshrl.u32 %v421, 16
        %v526 = vrot.slane %v524, 7
        %v527 = vshll.u32 %v421, 16
        %v529 = vor.u32 %v526, %v527
        %v530 = vsel %vm446, %v522, %v529
        %v531 = vrot.slane %v526, 4
        %v533 = vshrl.u32 %v422, 16
        %v535 = vrot.slane %v533, 7
        %v536 = vshll.u32 %v422, 16
        %v538 = vor.u32 %v535, %v536
        %v539 = vrot.slane %v535, 4
        %v541 = vshrl.u32 %v423, 16
        %v543 = vrot.slane %v541, 7
        %v544 = vshll.u32 %v423, 16
        %v546 = vor.u32 %v543, %v544
        %v547 = vsel %vm446, %v539, %v546
        %v548 = vrot.slane %v543, 4
        %v550 = vshrl.u32 %v424, 16
        %v552 = vrot.slane %v550, 7
        %v553 = vshll.u32 %v424, 16
        %v555 = vor.u32 %v552, %v553
        %v556 = vrot.slane %v552, 4
        %v558 = vshrl.u32 %v425, 16
        %v560 = vrot.slane %v558, 7
        %v561 = vshll.u32 %v425, 16
        %v563 = vor.u32 %v560, %v561
        %v564 = vsel %vm446, %v556, %v563
        %v565 = vrot.slane %v560, 4
        %v567 = vshrl.u32 %v426, 16
        %v569 = vrot.slane %v567, 7
        %v570 = vshll.u32 %v426, 16
        %v572 = vor.u32 %v569, %v570
        %v573 = vrot.slane %v569, 4
        %v575 = vshrl.u32 %v427, 16
        %v577 = vrot.slane %v575, 7
        %v578 = vshll.u32 %v427, 16
        %v580 = vor.u32 %v577, %v578
        %v581 = vsel %vm446, %v573, %v580
        %v582 = vrot.slane %v577, 4
        %v584 = vshrl.u32 %v428, 16
        %v586 = vrot.slane %v584, 7
        %v587 = vshll.u32 %v428, 16
        %v589 = vor.u32 %v586, %v587
        %v590 = vrot.slane %v586, 4
        %v592 = vshrl.u32 %v429, 16
        %v594 = vrot.slane %v592, 7
        %v595 = vshll.u32 %v429, 16
        %v597 = vor.u32 %v594, %v595
        %v598 = vsel %vm446, %v590, %v597
        %v599 = vrot.slane %v594, 4
        %v601 = vshrl.u32 %v430, 16
        %v603 = vrot.slane %v601, 7
        %v604 = vshll.u32 %v430, 16
        %v606 = vor.u32 %v603, %v604
        %v607 = vrot.slane %v603, 4
        %v609 = vshrl.u32 %v431, 16
        %v611 = vrot.slane %v609, 7
        %v612 = vshll.u32 %v431, 16
        %v614 = vor.u32 %v611, %v612
        %v615 = vsel %vm446, %v607, %v614
        %v616 = vrot.slane %v611, 4
        %v618 = vshrl.u32 %v432, 16
        %v620 = vrot.slane %v618, 7
        %v621 = vshll.u32 %v432, 16
        %v623 = vor.u32 %v620, %v621
        %v624 = vrot.slane %v620, 4
        %v626 = vshrl.u32 %v433, 16
        %v628 = vrot.slane %v626, 7
        %v629 = vshll.u32 %v433, 16
        %v631 = vor.u32 %v628, %v629
        %v632 = vsel %vm446, %v624, %v631
        %v633 = vrot.slane %v628, 4
        %v635 = vshrl.u32 %v434, 16
        %v637 = vrot.slane %v635, 7
        %v638 = vshll.u32 %v434, 16
        %v640 = vor.u32 %v637, %v638
        %v641 = vrot.slane %v637, 4
        %v643 = vshrl.u32 %v435, 16
        %v645 = vrot.slane %v643, 7
        %v646 = vshll.u32 %v435, 16
        %v648 = vor.u32 %v645, %v646
        %v649 = vsel %vm446, %v641, %v648
        %v650 = vrot.slane %v645, 4
        %v652 = vshrl.u32 %v436, 16
        %v654 = vrot.slane %v652, 7
        %v655 = vshll.u32 %v436, 16
        %v657 = vor.u32 %v654, %v655
        %v658 = vrot.slane %v654, 4
        %v660 = vshrl.u32 %v437, 16
        %v662 = vrot.slane %v660, 7
        %v663 = vshll.u32 %v437, 16
        %v665 = vor.u32 %v662, %v663
        %v666 = vsel %vm446, %v658, %v665
        %v667 = vrot.slane %v662, 4
        %v669 = vshrl.u32 %v438, 16
        %v671 = vrot.slane %v669, 7
        %v672 = vshll.u32 %v438, 16
        %v674 = vor.u32 %v671, %v672
        %v675 = vrot.slane %v671, 4
        %v677 = vshrl.u32 %v439, 16
        %v679 = vrot.slane %v677, 7
        %v680 = vshll.u32 %v439, 16
        %v682 = vor.u32 %v679, %v680
        %v683 = vsel %vm446, %v675, %v682
        %v684 = vrot.slane %v679, 4
        %v686 = vshrl.u32 %v440, 16
        %v688 = vrot.slane %v686, 7
        %v689 = vshll.u32 %v440, 16
        %v691 = vor.u32 %v688, %v689
        %v692 = vrot.slane %v688, 4
        %v694 = vshrl.u32 %v441, 16
        %v696 = vrot.slane %v694, 7
        %v697 = vshll.u32 %v441, 16
        %v699 = vor.u32 %v696, %v697
        %v700 = vsel %vm446, %v692, %v699
        %v701 = vrot.slane %v696, 4
        %v703 = vshrl.u32 %v442, 16
        %v705 = vrot.slane %v703, 7
        %v706 = vshll.u32 %v442, 16
        %v708 = vor.u32 %v705, %v706
        %v709 = vrot.slane %v705, 4
        %v711 = vshrl.u32 %v443, 16
        %v713 = vrot.slane %v711, 7
        %v714 = vshll.u32 %v443, 16
        %v716 = vor.u32 %v713, %v714
        %v717 = vsel %vm446, %v709, %v716
        %v718 = vrot.slane %v713, 4
        %s767 = scalar_lea.vmem [#allocation2], 12
        %vm768 = vcmask 1043456
        %vm769 = vsmask.f32 7938
        %vm770 = vmand %vm768, %vm769
        %v771 = vld [vmem:[%s767] sm:$0xf]
        %v772 = vsel %vm770, %v453, %v771
        %773 = vst [vmem:[%s767] sm:$0xf] %v772
        %774 = vst [vmem:[%s767 + $0x4] sm:$0xf] %v462
        %vm775 = vcmask 1040384
        %vm776 = vmand %vm775, %vm444
        %v777 = vld [vmem:[%s767 + $0x8] sm:$0x1]
        %v778 = vsel %vm776, %v463, %v777
        %779 = vst [vmem:[%s767 + $0x8] sm:$0x1] %v778
        %v780 = vld [vmem:[%s767 + $0xc] sm:$0xf]
        %v781 = vsel %vm770, %v470, %v780
        %782 = vst [vmem:[%s767 + $0xc] sm:$0xf] %v781
        %783 = vst [vmem:[%s767 + $0x10] sm:$0xf] %v479
        %v784 = vld [vmem:[%s767 + $0x14] sm:$0x1]
        %v785 = vsel %vm776, %v480, %v784
        %786 = vst [vmem:[%s767 + $0x14] sm:$0x1] %v785
        %v787 = vld [vmem:[%s767 + $0x18] sm:$0xf]
        %v788 = vsel %vm770, %v487, %v787
        %789 = vst [vmem:[%s767 + $0x18] sm:$0xf] %v788
        %790 = vst [vmem:[%s767 + $0x1c] sm:$0xf] %v496
        %v791 = vld [vmem:[%s767 + $0x20] sm:$0x1]
        %v792 = vsel %vm776, %v497, %v791
        %793 = vst [vmem:[%s767 + $0x20] sm:$0x1] %v792
        %v794 = vld [vmem:[%s767 + $0x24] sm:$0xf]
        %v795 = vsel %vm770, %v504, %v794
        %796 = vst [vmem:[%s767 + $0x24] sm:$0xf] %v795
        %797 = vst [vmem:[%s767 + $0x28] sm:$0xf] %v513
        %v798 = vld [vmem:[%s767 + $0x2c] sm:$0x1]
        %v799 = vsel %vm776, %v514, %v798
        %800 = vst [vmem:[%s767 + $0x2c] sm:$0x1] %v799
        %v801 = vld [vmem:[%s767 + $0x30] sm:$0xf]
        %v802 = vsel %vm770, %v521, %v801
        %803 = vst [vmem:[%s767 + $0x30] sm:$0xf] %v802
        %804 = vst [vmem:[%s767 + $0x34] sm:$0xf] %v530
        %v805 = vld [vmem:[%s767 + $0x38] sm:$0x1]
        %v806 = vsel %vm776, %v531, %v805
        %807 = vst [vmem:[%s767 + $0x38] sm:$0x1] %v806
        %v808 = vld [vmem:[%s767 + $0x3c] sm:$0xf]
        %v809 = vsel %vm770, %v538, %v808
        %810 = vst [vmem:[%s767 + $0x3c] sm:$0xf] %v809
        %811 = vst [vmem:[%s767 + $0x40] sm:$0xf] %v547
        %v812 = vld [vmem:[%s767 + $0x44] sm:$0x1]
        %v813 = vsel %vm776, %v548, %v812
        %814 = vst [vmem:[%s767 + $0x44] sm:$0x1] %v813
        %v815 = vld [vmem:[%s767 + $0x48] sm:$0xf]
        %v816 = vsel %vm770, %v555, %v815
        %817 = vst [vmem:[%s767 + $0x48] sm:$0xf] %v816
        %818 = vst [vmem:[%s767 + $0x4c] sm:$0xf] %v564
        %v819 = vld [vmem:[%s767 + $0x50] sm:$0x1]
        %v820 = vsel %vm776, %v565, %v819
        %821 = vst [vmem:[%s767 + $0x50] sm:$0x1] %v820
        %v822 = vld [vmem:[%s767 + $0x54] sm:$0xf]
        %v823 = vsel %vm770, %v572, %v822
        %824 = vst [vmem:[%s767 + $0x54] sm:$0xf] %v823
        %825 = vst [vmem:[%s767 + $0x58] sm:$0xf] %v581
        %v826 = vld [vmem:[%s767 + $0x5c] sm:$0x1]
        %v827 = vsel %vm776, %v582, %v826
        %828 = vst [vmem:[%s767 + $0x5c] sm:$0x1] %v827
        %v829 = vld [vmem:[%s767 + $0x60] sm:$0xf]
        %v830 = vsel %vm770, %v589, %v829
        %831 = vst [vmem:[%s767 + $0x60] sm:$0xf] %v830
        %832 = vst [vmem:[%s767 + $0x64] sm:$0xf] %v598
        %v833 = vld [vmem:[%s767 + $0x68] sm:$0x1]
        %v834 = vsel %vm776, %v599, %v833
        %835 = vst [vmem:[%s767 + $0x68] sm:$0x1] %v834
        %v836 = vld [vmem:[%s767 + $0x6c] sm:$0xf]
        %v837 = vsel %vm770, %v606, %v836
        %838 = vst [vmem:[%s767 + $0x6c] sm:$0xf] %v837
        %839 = vst [vmem:[%s767 + $0x70] sm:$0xf] %v615
        %v840 = vld [vmem:[%s767 + $0x74] sm:$0x1]
        %v841 = vsel %vm776, %v616, %v840
        %842 = vst [vmem:[%s767 + $0x74] sm:$0x1] %v841
        %v843 = vld [vmem:[%s767 + $0x78] sm:$0xf]
        %v844 = vsel %vm770, %v623, %v843
        %845 = vst [vmem:[%s767 + $0x78] sm:$0xf] %v844
        %846 = vst [vmem:[%s767 + $0x7c] sm:$0xf] %v632
        %v847 = vld [vmem:[%s767 + $0x80] sm:$0x1]
        %v848 = vsel %vm776, %v633, %v847
        %849 = vst [vmem:[%s767 + $0x80] sm:$0x1] %v848
        %v850 = vld [vmem:[%s767 + $0x84] sm:$0xf]
        %v851 = vsel %vm770, %v640, %v850
        %852 = vst [vmem:[%s767 + $0x84] sm:$0xf] %v851
        %853 = vst [vmem:[%s767 + $0x88] sm:$0xf] %v649
        %v854 = vld [vmem:[%s767 + $0x8c] sm:$0x1]
        %v855 = vsel %vm776, %v650, %v854
        %856 = vst [vmem:[%s767 + $0x8c] sm:$0x1] %v855
        %v857 = vld [vmem:[%s767 + $0x90] sm:$0xf]
        %v858 = vsel %vm770, %v657, %v857
        %859 = vst [vmem:[%s767 + $0x90] sm:$0xf] %v858
        %860 = vst [vmem:[%s767 + $0x94] sm:$0xf] %v666
        %v861 = vld [vmem:[%s767 + $0x98] sm:$0x1]
        %v862 = vsel %vm776, %v667, %v861
        %863 = vst [vmem:[%s767 + $0x98] sm:$0x1] %v862
        %v864 = vld [vmem:[%s767 + $0x9c] sm:$0xf]
        %v865 = vsel %vm770, %v674, %v864
        %866 = vst [vmem:[%s767 + $0x9c] sm:$0xf] %v865
        %867 = vst [vmem:[%s767 + $0xa0] sm:$0xf] %v683
        %v868 = vld [vmem:[%s767 + $0xa4] sm:$0x1]
        %v869 = vsel %vm776, %v684, %v868
        %870 = vst [vmem:[%s767 + $0xa4] sm:$0x1] %v869
        %v871 = vld [vmem:[%s767 + $0xa8] sm:$0xf]
        %v872 = vsel %vm770, %v691, %v871
        %873 = vst [vmem:[%s767 + $0xa8] sm:$0xf] %v872
        %874 = vst [vmem:[%s767 + $0xac] sm:$0xf] %v700
        %v875 = vld [vmem:[%s767 + $0xb0] sm:$0x1]
        %v876 = vsel %vm776, %v701, %v875
        %877 = vst [vmem:[%s767 + $0xb0] sm:$0x1] %v876
        %v878 = vld [vmem:[%s767 + $0xb4] sm:$0xf]
        %v879 = vsel %vm770, %v708, %v878
        %880 = vst [vmem:[%s767 + $0xb4] sm:$0xf] %v879
        %881 = vst [vmem:[%s767 + $0xb8] sm:$0xf] %v717
        %v882 = vld [vmem:[%s767 + $0xbc] sm:$0x1]
        %v883 = vsel %vm776, %v718, %v882
        %884 = vst [vmem:[%s767 + $0xbc] sm:$0x1] %v883
        %v885 = vld [vmem:[#allocation2] sm:$0xf]
        %v886 = vld [vmem:[#allocation2 + $0x4] sm:$0xf]
        %v887 = vld [vmem:[#allocation2 + $0xc] sm:$0xf]
        %v888 = vld [vmem:[#allocation2 + $0x10] sm:$0xf]
        %v889 = vld [vmem:[#allocation2 + $0x18] sm:$0xf]
        %v890 = vld [vmem:[#allocation2 + $0x1c] sm:$0xf]
        %v891 = vld [vmem:[#allocation2 + $0x24] sm:$0xf]
        %v892 = vld [vmem:[#allocation2 + $0x28] sm:$0xf]
        %v893 = vld [vmem:[#allocation2 + $0x30] sm:$0xf]
        %v894 = vld [vmem:[#allocation2 + $0x34] sm:$0xf]
        %v895 = vld [vmem:[#allocation2 + $0x3c] sm:$0xf]
        %v896 = vld [vmem:[#allocation2 + $0x40] sm:$0xf]
        %v897 = vld [vmem:[#allocation2 + $0x48] sm:$0xf]
        %v898 = vld [vmem:[#allocation2 + $0x4c] sm:$0xf]
        %v899 = vld [vmem:[#allocation2 + $0x54] sm:$0xf]
        %v900 = vld [vmem:[#allocation2 + $0x58] sm:$0xf]
        %v901 = vld [vmem:[#allocation2 + $0x60] sm:$0xf]
        %v902 = vld [vmem:[#allocation2 + $0x64] sm:$0xf]
        %v903 = vld [vmem:[#allocation2 + $0x6c] sm:$0xf]
        %v904 = vld [vmem:[#allocation2 + $0x70] sm:$0xf]
        %v905 = vld [vmem:[#allocation2 + $0x78] sm:$0xf]
        %v906 = vld [vmem:[#allocation2 + $0x7c] sm:$0xf]
        %v907 = vld [vmem:[#allocation2 + $0x84] sm:$0xf]
        %v908 = vld [vmem:[#allocation2 + $0x88] sm:$0xf]
        %v909 = vld [vmem:[#allocation2 + $0x90] sm:$0xf]
        %v910 = vld [vmem:[#allocation2 + $0x94] sm:$0xf]
        %v911 = vld [vmem:[#allocation2 + $0x9c] sm:$0xf]
        %v912 = vld [vmem:[#allocation2 + $0xa0] sm:$0xf]
        %v913 = vld [vmem:[#allocation2 + $0xa8] sm:$0xf]
        %v914 = vld [vmem:[#allocation2 + $0xac] sm:$0xf]
        %v915 = vld [vmem:[#allocation2 + $0xb4] sm:$0xf]
        %v916 = vld [vmem:[#allocation2 + $0xb8] sm:$0xf]
        %v949 = vunpack.c.l.b16 %v885
        %v950 = vunpack.c.l.b16 %v886
        %v951 = vunpack.c.l.b16 %v887
        %v952 = vunpack.c.l.b16 %v888
        %v953 = vunpack.c.l.b16 %v889
        %v954 = vunpack.c.l.b16 %v890
        %v955 = vunpack.c.l.b16 %v891
        %v956 = vunpack.c.l.b16 %v892
        %v957 = vunpack.c.l.b16 %v893
        %v958 = vunpack.c.l.b16 %v894
        %v959 = vunpack.c.l.b16 %v895
        %v960 = vunpack.c.l.b16 %v896
        %v961 = vunpack.c.l.b16 %v897
        %v962 = vunpack.c.l.b16 %v898
        %v963 = vunpack.c.l.b16 %v899
        %v964 = vunpack.c.l.b16 %v900
        %v965 = vunpack.c.l.b16 %v901
        %v966 = vunpack.c.l.b16 %v902
        %v967 = vunpack.c.l.b16 %v903
        %v968 = vunpack.c.l.b16 %v904
        %v969 = vunpack.c.l.b16 %v905
        %v970 = vunpack.c.l.b16 %v906
        %v971 = vunpack.c.l.b16 %v907
        %v972 = vunpack.c.l.b16 %v908
        %v973 = vunpack.c.l.b16 %v909
        %v974 = vunpack.c.l.b16 %v910
        %v975 = vunpack.c.l.b16 %v911
        %v976 = vunpack.c.l.b16 %v912
        %v977 = vunpack.c.l.b16 %v913
        %v978 = vunpack.c.l.b16 %v914
        %v979 = vunpack.c.l.b16 %v915
        %v980 = vunpack.c.l.b16 %v916
        %v981 = vpack.c.b16 %v950, %v949
        %v982 = vpack.c.b16 %v952, %v951
        %v983 = vpack.c.b16 %v954, %v953
        %v984 = vpack.c.b16 %v956, %v955
        %v985 = vpack.c.b16 %v958, %v957
        %v986 = vpack.c.b16 %v960, %v959
        %v987 = vpack.c.b16 %v962, %v961
        %v988 = vpack.c.b16 %v964, %v963
        %v989 = vpack.c.b16 %v966, %v965
        %v990 = vpack.c.b16 %v968, %v967
        %v991 = vpack.c.b16 %v970, %v969
        %v992 = vpack.c.b16 %v972, %v971
        %v993 = vpack.c.b16 %v974, %v973
        %v994 = vpack.c.b16 %v976, %v975
        %v995 = vpack.c.b16 %v978, %v977
        %v996 = vpack.c.b16 %v980, %v979
        %1013 = vst [vmem:[#allocation3] sm:$0xff] %v981
        %1014 = vst [vmem:[#allocation3 + $0x48] sm:$0xff] %v982
        %1015 = vst [vmem:[#allocation3 + $0x90] sm:$0xff] %v983
        %1016 = vst [vmem:[#allocation3 + $0xd8] sm:$0xff] %v984
        %1017 = vst [vmem:[#allocation3 + $0x120] sm:$0xff] %v985
        %1018 = vst [vmem:[#allocation3 + $0x168] sm:$0xff] %v986
        %1019 = vst [vmem:[#allocation3 + $0x1b0] sm:$0xff] %v987
        %1020 = vst [vmem:[#allocation3 + $0x1f8] sm:$0xff] %v988
        %1021 = vst [vmem:[#allocation3 + $0x240] sm:$0xff] %v989
        %1022 = vst [vmem:[#allocation3 + $0x288] sm:$0xff] %v990
        %1023 = vst [vmem:[#allocation3 + $0x2d0] sm:$0xff] %v991
        %1024 = vst [vmem:[#allocation3 + $0x318] sm:$0xff] %v992
        %1025 = vst [vmem:[#allocation3 + $0x360] sm:$0xff] %v993
        %1026 = vst [vmem:[#allocation3 + $0x3a8] sm:$0xff] %v994
        %1027 = vst [vmem:[#allocation3 + $0x3f0] sm:$0xff] %v995
        %1028 = vst [vmem:[#allocation3 + $0x438] sm:$0xff] %v996
        %v1029 = vld [vmem:[#allocation2] sm:$0xf]
        %v1030 = vld [vmem:[#allocation2 + $0x4] sm:$0xf]
        %v1031 = vld [vmem:[#allocation2 + $0x8] sm:$0x1]
        %v1032 = vld [vmem:[#allocation2 + $0xc] sm:$0xf]
        %v1033 = vld [vmem:[#allocation2 + $0x10] sm:$0xf]
        %v1034 = vld [vmem:[#allocation2 + $0x14] sm:$0x1]
        %v1035 = vld [vmem:[#allocation2 + $0x18] sm:$0xf]
        %v1036 = vld [vmem:[#allocation2 + $0x1c] sm:$0xf]
        %v1037 = vld [vmem:[#allocation2 + $0x20] sm:$0x1]
        %v1038 = vld [vmem:[#allocation2 + $0x24] sm:$0xf]
        %v1039 = vld [vmem:[#allocation2 + $0x28] sm:$0xf]
        %v1040 = vld [vmem:[#allocation2 + $0x2c] sm:$0x1]
        %v1041 = vld [vmem:[#allocation2 + $0x30] sm:$0xf]
        %v1042 = vld [vmem:[#allocation2 + $0x34] sm:$0xf]
        %v1043 = vld [vmem:[#allocation2 + $0x38] sm:$0x1]
        %v1044 = vld [vmem:[#allocation2 + $0x3c] sm:$0xf]
        %v1045 = vld [vmem:[#allocation2 + $0x40] sm:$0xf]
        %v1046 = vld [vmem:[#allocation2 + $0x44] sm:$0x1]
        %v1047 = vld [vmem:[#allocation2 + $0x48] sm:$0xf]
        %v1048 = vld [vmem:[#allocation2 + $0x4c] sm:$0xf]
        %v1049 = vld [vmem:[#allocation2 + $0x50] sm:$0x1]
        %v1050 = vld [vmem:[#allocation2 + $0x54] sm:$0xf]
        %v1051 = vld [vmem:[#allocation2 + $0x58] sm:$0xf]
        %v1052 = vld [vmem:[#allocation2 + $0x5c] sm:$0x1]
        %v1053 = vld [vmem:[#allocation2 + $0x60] sm:$0xf]
        %v1054 = vld [vmem:[#allocation2 + $0x64] sm:$0xf]
        %v1055 = vld [vmem:[#allocation2 + $0x68] sm:$0x1]
        %v1056 = vld [vmem:[#allocation2 + $0x6c] sm:$0xf]
        %v1057 = vld [vmem:[#allocation2 + $0x70] sm:$0xf]
        %v1058 = vld [vmem:[#allocation2 + $0x74] sm:$0x1]
        %v1059 = vld [vmem:[#allocation2 + $0x78] sm:$0xf]
        %v1060 = vld [vmem:[#allocation2 + $0x7c] sm:$0xf]
        %v1061 = vld [vmem:[#allocation2 + $0x80] sm:$0x1]
        %v1062 = vld [vmem:[#allocation2 + $0x84] sm:$0xf]
        %v1063 = vld [vmem:[#allocation2 + $0x88] sm:$0xf]
        %v1064 = vld [vmem:[#allocation2 + $0x8c] sm:$0x1]
        %v1065 = vld [vmem:[#allocation2 + $0x90] sm:$0xf]
        %v1066 = vld [vmem:[#allocation2 + $0x94] sm:$0xf]
        %v1067 = vld [vmem:[#allocation2 + $0x98] sm:$0x1]
        %v1068 = vld [vmem:[#allocation2 + $0x9c] sm:$0xf]
        %v1069 = vld [vmem:[#allocation2 + $0xa0] sm:$0xf]
        %v1070 = vld [vmem:[#allocation2 + $0xa4] sm:$0x1]
        %v1071 = vld [vmem:[#allocation2 + $0xa8] sm:$0xf]
        %v1072 = vld [vmem:[#allocation2 + $0xac] sm:$0xf]
        %v1073 = vld [vmem:[#allocation2 + $0xb0] sm:$0x1]
        %v1074 = vld [vmem:[#allocation2 + $0xb4] sm:$0xf]
        %v1075 = vld [vmem:[#allocation2 + $0xb8] sm:$0xf]
        %v1076 = vld [vmem:[#allocation2 + $0xbc] sm:$0x1]
        %vm1077 = vsmask.f32 3328
        %vm1078 = vsmask.f32 7440
        %vm1079 = vmor %vm1077, %vm1078
        %v1081 = vshrl.u32 %v1029, 16
        %v1083 = vrot.slane %v1081, 4
        %v1084 = vshll.u32 %v1029, 16
        %v1086 = vrot.slane %v1084, 5
        %v1087 = vor.u32 %v1083, %v1086
        %v1088 = vrot.slane %v1087, 4
        %v1090 = vshll.u32 %v1030, 16
        %v1092 = vrot.slane %v1090, 5
        %v1093 = vsel %vm1079, %v1088, %v1092
        %v1094 = vshrl.u32 %v1030, 16
        %v1096 = vrot.slane %v1094, 4
        %v1097 = vor.u32 %v1096, %v1092
        %v1098 = vrot.slane %v1097, 4
        %v1100 = vshll.u32 %v1031, 16
        %v1102 = vrot.slane %v1100, 5
        %v1103 = vsel %vm1079, %v1098, %v1102
        %v1105 = vshrl.u32 %v1032, 16
        %v1107 = vrot.slane %v1105, 4
        %v1108 = vshll.u32 %v1032, 16
        %v1110 = vrot.slane %v1108, 5
        %v1111 = vor.u32 %v1107, %v1110
        %v1112 = vrot.slane %v1111, 4
        %v1114 = vshll.u32 %v1033, 16
        %v1116 = vrot.slane %v1114, 5
        %v1117 = vsel %vm1079, %v1112, %v1116
        %v1118 = vshrl.u32 %v1033, 16
        %v1120 = vrot.slane %v1118, 4
        %v1121 = vor.u32 %v1120, %v1116
        %v1122 = vrot.slane %v1121, 4
        %v1124 = vshll.u32 %v1034, 16
        %v1126 = vrot.slane %v1124, 5
        %v1127 = vsel %vm1079, %v1122, %v1126
        %v1129 = vshrl.u32 %v1035, 16
        %v1131 = vrot.slane %v1129, 4
        %v1132 = vshll.u32 %v1035, 16
        %v1134 = vrot.slane %v1132, 5
        %v1135 = vor.u32 %v1131, %v1134
        %v1136 = vrot.slane %v1135, 4
        %v1138 = vshll.u32 %v1036, 16
        %v1140 = vrot.slane %v1138, 5
        %v1141 = vsel %vm1079, %v1136, %v1140
        %v1142 = vshrl.u32 %v1036, 16
        %v1144 = vrot.slane %v1142, 4
        %v1145 = vor.u32 %v1144, %v1140
        %v1146 = vrot.slane %v1145, 4
        %v1148 = vshll.u32 %v1037, 16
        %v1150 = vrot.slane %v1148, 5
        %v1151 = vsel %vm1079, %v1146, %v1150
        %v1153 = vshrl.u32 %v1038, 16
        %v1155 = vrot.slane %v1153, 4
        %v1156 = vshll.u32 %v1038, 16
        %v1158 = vrot.slane %v1156, 5
        %v1159 = vor.u32 %v1155, %v1158
        %v1160 = vrot.slane %v1159, 4
        %v1162 = vshll.u32 %v1039, 16
        %v1164 = vrot.slane %v1162, 5
        %v1165 = vsel %vm1079, %v1160, %v1164
        %v1166 = vshrl.u32 %v1039, 16
        %v1168 = vrot.slane %v1166, 4
        %v1169 = vor.u32 %v1168, %v1164
        %v1170 = vrot.slane %v1169, 4
        %v1172 = vshll.u32 %v1040, 16
        %v1174 = vrot.slane %v1172, 5
        %v1175 = vsel %vm1079, %v1170, %v1174
        %v1177 = vshrl.u32 %v1041, 16
        %v1179 = vrot.slane %v1177, 4
        %v1180 = vshll.u32 %v1041, 16
        %v1182 = vrot.slane %v1180, 5
        %v1183 = vor.u32 %v1179, %v1182
        %v1184 = vrot.slane %v1183, 4
        %v1186 = vshll.u32 %v1042, 16
        %v1188 = vrot.slane %v1186, 5
        %v1189 = vsel %vm1079, %v1184, %v1188
        %v1190 = vshrl.u32 %v1042, 16
        %v1192 = vrot.slane %v1190, 4
        %v1193 = vor.u32 %v1192, %v1188
        %v1194 = vrot.slane %v1193, 4
        %v1196 = vshll.u32 %v1043, 16
        %v1198 = vrot.slane %v1196, 5
        %v1199 = vsel %vm1079, %v1194, %v1198
        %v1201 = vshrl.u32 %v1044, 16
        %v1203 = vrot.slane %v1201, 4
        %v1204 = vshll.u32 %v1044, 16
        %v1206 = vrot.slane %v1204, 5
        %v1207 = vor.u32 %v1203, %v1206
        %v1208 = vrot.slane %v1207, 4
        %v1210 = vshll.u32 %v1045, 16
        %v1212 = vrot.slane %v1210, 5
        %v1213 = vsel %vm1079, %v1208, %v1212
        %v1214 = vshrl.u32 %v1045, 16
        %v1216 = vrot.slane %v1214, 4
        %v1217 = vor.u32 %v1216, %v1212
        %v1218 = vrot.slane %v1217, 4
        %v1220 = vshll.u32 %v1046, 16
        %v1222 = vrot.slane %v1220, 5
        %v1223 = vsel %vm1079, %v1218, %v1222
        %v1225 = vshrl.u32 %v1047, 16
        %v1227 = vrot.slane %v1225, 4
        %v1228 = vshll.u32 %v1047, 16
        %v1230 = vrot.slane %v1228, 5
        %v1231 = vor.u32 %v1227, %v1230
        %v1232 = vrot.slane %v1231, 4
        %v1234 = vshll.u32 %v1048, 16
        %v1236 = vrot.slane %v1234, 5
        %v1237 = vsel %vm1079, %v1232, %v1236
        %v1238 = vshrl.u32 %v1048, 16
        %v1240 = vrot.slane %v1238, 4
        %v1241 = vor.u32 %v1240, %v1236
        %v1242 = vrot.slane %v1241, 4
        %v1244 = vshll.u32 %v1049, 16
        %v1246 = vrot.slane %v1244, 5
        %v1247 = vsel %vm1079, %v1242, %v1246
        %v1249 = vshrl.u32 %v1050, 16
        %v1251 = vrot.slane %v1249, 4
        %v1252 = vshll.u32 %v1050, 16
        %v1254 = vrot.slane %v1252, 5
        %v1255 = vor.u32 %v1251, %v1254
        %v1256 = vrot.slane %v1255, 4
        %v1258 = vshll.u32 %v1051, 16
        %v1260 = vrot.slane %v1258, 5
        %v1261 = vsel %vm1079, %v1256, %v1260
        %v1262 = vshrl.u32 %v1051, 16
        %v1264 = vrot.slane %v1262, 4
        %v1265 = vor.u32 %v1264, %v1260
        %v1266 = vrot.slane %v1265, 4
        %v1268 = vshll.u32 %v1052, 16
        %v1270 = vrot.slane %v1268, 5
        %v1271 = vsel %vm1079, %v1266, %v1270
        %v1273 = vshrl.u32 %v1053, 16
        %v1275 = vrot.slane %v1273, 4
        %v1276 = vshll.u32 %v1053, 16
        %v1278 = vrot.slane %v1276, 5
        %v1279 = vor.u32 %v1275, %v1278
        %v1280 = vrot.slane %v1279, 4
        %v1282 = vshll.u32 %v1054, 16
        %v1284 = vrot.slane %v1282, 5
        %v1285 = vsel %vm1079, %v1280, %v1284
        %v1286 = vshrl.u32 %v1054, 16
        %v1288 = vrot.slane %v1286, 4
        %v1289 = vor.u32 %v1288, %v1284
        %v1290 = vrot.slane %v1289, 4
        %v1292 = vshll.u32 %v1055, 16
        %v1294 = vrot.slane %v1292, 5
        %v1295 = vsel %vm1079, %v1290, %v1294
        %v1297 = vshrl.u32 %v1056, 16
        %v1299 = vrot.slane %v1297, 4
        %v1300 = vshll.u32 %v1056, 16
        %v1302 = vrot.slane %v1300, 5
        %v1303 = vor.u32 %v1299, %v1302
        %v1304 = vrot.slane %v1303, 4
        %v1306 = vshll.u32 %v1057, 16
        %v1308 = vrot.slane %v1306, 5
        %v1309 = vsel %vm1079, %v1304, %v1308
        %v1310 = vshrl.u32 %v1057, 16
        %v1312 = vrot.slane %v1310, 4
        %v1313 = vor.u32 %v1312, %v1308
        %v1314 = vrot.slane %v1313, 4
        %v1316 = vshll.u32 %v1058, 16
        %v1318 = vrot.slane %v1316, 5
        %v1319 = vsel %vm1079, %v1314, %v1318
        %v1321 = vshrl.u32 %v1059, 16
        %v1323 = vrot.slane %v1321, 4
        %v1324 = vshll.u32 %v1059, 16
        %v1326 = vrot.slane %v1324, 5
        %v1327 = vor.u32 %v1323, %v1326
        %v1328 = vrot.slane %v1327, 4
        %v1330 = vshll.u32 %v1060, 16
        %v1332 = vrot.slane %v1330, 5
        %v1333 = vsel %vm1079, %v1328, %v1332
        %v1334 = vshrl.u32 %v1060, 16
        %v1336 = vrot.slane %v1334, 4
        %v1337 = vor.u32 %v1336, %v1332
        %v1338 = vrot.slane %v1337, 4
        %v1340 = vshll.u32 %v1061, 16
        %v1342 = vrot.slane %v1340, 5
        %v1343 = vsel %vm1079, %v1338, %v1342
        %v1345 = vshrl.u32 %v1062, 16
        %v1347 = vrot.slane %v1345, 4
        %v1348 = vshll.u32 %v1062, 16
        %v1350 = vrot.slane %v1348, 5
        %v1351 = vor.u32 %v1347, %v1350
        %v1352 = vrot.slane %v1351, 4
        %v1354 = vshll.u32 %v1063, 16
        %v1356 = vrot.slane %v1354, 5
        %v1357 = vsel %vm1079, %v1352, %v1356
        %v1358 = vshrl.u32 %v1063, 16
        %v1360 = vrot.slane %v1358, 4
        %v1361 = vor.u32 %v1360, %v1356
        %v1362 = vrot.slane %v1361, 4
        %v1364 = vshll.u32 %v1064, 16
        %v1366 = vrot.slane %v1364, 5
        %v1367 = vsel %vm1079, %v1362, %v1366
        %v1369 = vshrl.u32 %v1065, 16
        %v1371 = vrot.slane %v1369, 4
        %v1372 = vshll.u32 %v1065, 16
        %v1374 = vrot.slane %v1372, 5
        %v1375 = vor.u32 %v1371, %v1374
        %v1376 = vrot.slane %v1375, 4
        %v1378 = vshll.u32 %v1066, 16
        %v1380 = vrot.slane %v1378, 5
        %v1381 = vsel %vm1079, %v1376, %v1380
        %v1382 = vshrl.u32 %v1066, 16
        %v1384 = vrot.slane %v1382, 4
        %v1385 = vor.u32 %v1384, %v1380
        %v1386 = vrot.slane %v1385, 4
        %v1388 = vshll.u32 %v1067, 16
        %v1390 = vrot.slane %v1388, 5
        %v1391 = vsel %vm1079, %v1386, %v1390
        %v1393 = vshrl.u32 %v1068, 16
        %v1395 = vrot.slane %v1393, 4
        %v1396 = vshll.u32 %v1068, 16
        %v1398 = vrot.slane %v1396, 5
        %v1399 = vor.u32 %v1395, %v1398
        %v1400 = vrot.slane %v1399, 4
        %v1402 = vshll.u32 %v1069, 16
        %v1404 = vrot.slane %v1402, 5
        %v1405 = vsel %vm1079, %v1400, %v1404
        %v1406 = vshrl.u32 %v1069, 16
        %v1408 = vrot.slane %v1406, 4
        %v1409 = vor.u32 %v1408, %v1404
        %v1410 = vrot.slane %v1409, 4
        %v1412 = vshll.u32 %v1070, 16
        %v1414 = vrot.slane %v1412, 5
        %v1415 = vsel %vm1079, %v1410, %v1414
        %v1417 = vshrl.u32 %v1071, 16
        %v1419 = vrot.slane %v1417, 4
        %v1420 = vshll.u32 %v1071, 16
        %v1422 = vrot.slane %v1420, 5
        %v1423 = vor.u32 %v1419, %v1422
        %v1424 = vrot.slane %v1423, 4
        %v1426 = vshll.u32 %v1072, 16
        %v1428 = vrot.slane %v1426, 5
        %v1429 = vsel %vm1079, %v1424, %v1428
        %v1430 = vshrl.u32 %v1072, 16
        %v1432 = vrot.slane %v1430, 4
        %v1433 = vor.u32 %v1432, %v1428
        %v1434 = vrot.slane %v1433, 4
        %v1436 = vshll.u32 %v1073, 16
        %v1438 = vrot.slane %v1436, 5
        %v1439 = vsel %vm1079, %v1434, %v1438
        %v1441 = vshrl.u32 %v1074, 16
        %v1443 = vrot.slane %v1441, 4
        %v1444 = vshll.u32 %v1074, 16
        %v1446 = vrot.slane %v1444, 5
        %v1447 = vor.u32 %v1443, %v1446
        %v1448 = vrot.slane %v1447, 4
        %v1450 = vshll.u32 %v1075, 16
        %v1452 = vrot.slane %v1450, 5
        %v1453 = vsel %vm1079, %v1448, %v1452
        %v1454 = vshrl.u32 %v1075, 16
        %v1456 = vrot.slane %v1454, 4
        %v1457 = vor.u32 %v1456, %v1452
        %v1458 = vrot.slane %v1457, 4
        %v1460 = vshll.u32 %v1076, 16
        %v1462 = vrot.slane %v1460, 5
        %v1463 = vsel %vm1079, %v1458, %v1462
        %v1464 = vunpack.c.l.b16 %v1093
        %v1465 = vunpack.c.l.b16 %v1103
        %v1466 = vunpack.c.l.b16 %v1117
        %v1467 = vunpack.c.l.b16 %v1127
        %v1468 = vunpack.c.l.b16 %v1141
        %v1469 = vunpack.c.l.b16 %v1151
        %v1470 = vunpack.c.l.b16 %v1165
        %v1471 = vunpack.c.l.b16 %v1175
        %v1472 = vunpack.c.l.b16 %v1189
        %v1473 = vunpack.c.l.b16 %v1199
        %v1474 = vunpack.c.l.b16 %v1213
        %v1475 = vunpack.c.l.b16 %v1223
        %v1476 = vunpack.c.l.b16 %v1237
        %v1477 = vunpack.c.l.b16 %v1247
        %v1478 = vunpack.c.l.b16 %v1261
        %v1479 = vunpack.c.l.b16 %v1271
        %v1480 = vunpack.c.l.b16 %v1285
        %v1481 = vunpack.c.l.b16 %v1295
        %v1482 = vunpack.c.l.b16 %v1309
        %v1483 = vunpack.c.l.b16 %v1319
        %v1484 = vunpack.c.l.b16 %v1333
        %v1485 = vunpack.c.l.b16 %v1343
        %v1486 = vunpack.c.l.b16 %v1357
        %v1487 = vunpack.c.l.b16 %v1367
        %v1488 = vunpack.c.l.b16 %v1381
        %v1489 = vunpack.c.l.b16 %v1391
        %v1490 = vunpack.c.l.b16 %v1405
        %v1491 = vunpack.c.l.b16 %v1415
        %v1492 = vunpack.c.l.b16 %v1429
        %v1493 = vunpack.c.l.b16 %v1439
        %v1494 = vunpack.c.l.b16 %v1453
        %v1495 = vunpack.c.l.b16 %v1463
        %v1496 = vpack.c.b16 %v1465, %v1464
        %v1497 = vpack.c.b16 %v1467, %v1466
        %v1498 = vpack.c.b16 %v1469, %v1468
        %v1499 = vpack.c.b16 %v1471, %v1470
        %v1500 = vpack.c.b16 %v1473, %v1472
        %v1501 = vpack.c.b16 %v1475, %v1474
        %v1502 = vpack.c.b16 %v1477, %v1476
        %v1503 = vpack.c.b16 %v1479, %v1478
        %v1504 = vpack.c.b16 %v1481, %v1480
        %v1505 = vpack.c.b16 %v1483, %v1482
        %v1506 = vpack.c.b16 %v1485, %v1484
        %v1507 = vpack.c.b16 %v1487, %v1486
        %v1508 = vpack.c.b16 %v1489, %v1488
        %v1509 = vpack.c.b16 %v1491, %v1490
        %v1510 = vpack.c.b16 %v1493, %v1492
        %v1511 = vpack.c.b16 %v1495, %v1494
        %1528 = vst [vmem:[#allocation3 + $0x8] sm:$0xff] %v1496
        %1529 = vst [vmem:[#allocation3 + $0x50] sm:$0xff] %v1497
        %1530 = vst [vmem:[#allocation3 + $0x98] sm:$0xff] %v1498
        %1531 = vst [vmem:[#allocation3 + $0xe0] sm:$0xff] %v1499
        %1532 = vst [vmem:[#allocation3 + $0x128] sm:$0xff] %v1500
        %1533 = vst [vmem:[#allocation3 + $0x170] sm:$0xff] %v1501
        %1534 = vst [vmem:[#allocation3 + $0x1b8] sm:$0xff] %v1502
        %1535 = vst [vmem:[#allocation3 + $0x200] sm:$0xff] %v1503
        %1536 = vst [vmem:[#allocation3 + $0x248] sm:$0xff] %v1504
        %1537 = vst [vmem:[#allocation3 + $0x290] sm:$0xff] %v1505
        %1538 = vst [vmem:[#allocation3 + $0x2d8] sm:$0xff] %v1506
        %1539 = vst [vmem:[#allocation3 + $0x320] sm:$0xff] %v1507
        %1540 = vst [vmem:[#allocation3 + $0x368] sm:$0xff] %v1508
        %1541 = vst [vmem:[#allocation3 + $0x3b0] sm:$0xff] %v1509
        %1542 = vst [vmem:[#allocation3 + $0x3f8] sm:$0xff] %v1510
        %1543 = vst [vmem:[#allocation3 + $0x440] sm:$0xff] %v1511
        %v1544 = vld [vmem:[#allocation2] sm:$0xe]
        %v1545 = vld [vmem:[#allocation2 + $0x4] sm:$0xf]
        %v1546 = vld [vmem:[#allocation2 + $0x8] sm:$0x1]
        %v1547 = vld [vmem:[#allocation2 + $0xc] sm:$0xe]
        %v1548 = vld [vmem:[#allocation2 + $0x10] sm:$0xf]
        %v1549 = vld [vmem:[#allocation2 + $0x14] sm:$0x1]
        %v1550 = vld [vmem:[#allocation2 + $0x18] sm:$0xe]
        %v1551 = vld [vmem:[#allocation2 + $0x1c] sm:$0xf]
        %v1552 = vld [vmem:[#allocation2 + $0x20] sm:$0x1]
        %v1553 = vld [vmem:[#allocation2 + $0x24] sm:$0xe]
        %v1554 = vld [vmem:[#allocation2 + $0x28] sm:$0xf]
        %v1555 = vld [vmem:[#allocation2 + $0x2c] sm:$0x1]
        %v1556 = vld [vmem:[#allocation2 + $0x30] sm:$0xe]
        %v1557 = vld [vmem:[#allocation2 + $0x34] sm:$0xf]
        %v1558 = vld [vmem:[#allocation2 + $0x38] sm:$0x1]
        %v1559 = vld [vmem:[#allocation2 + $0x3c] sm:$0xe]
        %v1560 = vld [vmem:[#allocation2 + $0x40] sm:$0xf]
        %v1561 = vld [vmem:[#allocation2 + $0x44] sm:$0x1]
        %v1562 = vld [vmem:[#allocation2 + $0x48] sm:$0xe]
        %v1563 = vld [vmem:[#allocation2 + $0x4c] sm:$0xf]
        %v1564 = vld [vmem:[#allocation2 + $0x50] sm:$0x1]
        %v1565 = vld [vmem:[#allocation2 + $0x54] sm:$0xe]
        %v1566 = vld [vmem:[#allocation2 + $0x58] sm:$0xf]
        %v1567 = vld [vmem:[#allocation2 + $0x5c] sm:$0x1]
        %v1568 = vld [vmem:[#allocation2 + $0x60] sm:$0xe]
        %v1569 = vld [vmem:[#allocation2 + $0x64] sm:$0xf]
        %v1570 = vld [vmem:[#allocation2 + $0x68] sm:$0x1]
        %v1571 = vld [vmem:[#allocation2 + $0x6c] sm:$0xe]
        %v1572 = vld [vmem:[#allocation2 + $0x70] sm:$0xf]
        %v1573 = vld [vmem:[#allocation2 + $0x74] sm:$0x1]
        %v1574 = vld [vmem:[#allocation2 + $0x78] sm:$0xe]
        %v1575 = vld [vmem:[#allocation2 + $0x7c] sm:$0xf]
        %v1576 = vld [vmem:[#allocation2 + $0x80] sm:$0x1]
        %v1577 = vld [vmem:[#allocation2 + $0x84] sm:$0xe]
        %v1578 = vld [vmem:[#allocation2 + $0x88] sm:$0xf]
        %v1579 = vld [vmem:[#allocation2 + $0x8c] sm:$0x1]
        %v1580 = vld [vmem:[#allocation2 + $0x90] sm:$0xe]
        %v1581 = vld [vmem:[#allocation2 + $0x94] sm:$0xf]
        %v1582 = vld [vmem:[#allocation2 + $0x98] sm:$0x1]
        %v1583 = vld [vmem:[#allocation2 + $0x9c] sm:$0xe]
        %v1584 = vld [vmem:[#allocation2 + $0xa0] sm:$0xf]
        %v1585 = vld [vmem:[#allocation2 + $0xa4] sm:$0x1]
        %v1586 = vld [vmem:[#allocation2 + $0xa8] sm:$0xe]
        %v1587 = vld [vmem:[#allocation2 + $0xac] sm:$0xf]
        %v1588 = vld [vmem:[#allocation2 + $0xb0] sm:$0x1]
        %v1589 = vld [vmem:[#allocation2 + $0xb4] sm:$0xe]
        %v1590 = vld [vmem:[#allocation2 + $0xb8] sm:$0xf]
        %v1591 = vld [vmem:[#allocation2 + $0xbc] sm:$0x1]
        %vm1640 = vcmask 1042432
        %vm1641 = vcmask 1046532
        %vm1642 = vmor %vm1640, %vm1641
        %v1643 = vrot.slane %v1544, 5
        %v1644 = vrot.slane %v1643, 4
        %v1645 = vrot.slane %v1545, 5
        %v1646 = vsel %vm1642, %v1644, %v1645
        %v1647 = vrot.slane %v1645, 4
        %v1648 = vrot.slane %v1546, 5
        %v1649 = vsel %vm1642, %v1647, %v1648
        %v1650 = vrot.slane %v1547, 5
        %v1651 = vrot.slane %v1650, 4
        %v1652 = vrot.slane %v1548, 5
        %v1653 = vsel %vm1642, %v1651, %v1652
        %v1654 = vrot.slane %v1652, 4
        %v1655 = vrot.slane %v1549, 5
        %v1656 = vsel %vm1642, %v1654, %v1655
        %v1657 = vrot.slane %v1550, 5
        %v1658 = vrot.slane %v1657, 4
        %v1659 = vrot.slane %v1551, 5
        %v1660 = vsel %vm1642, %v1658, %v1659
        %v1661 = vrot.slane %v1659, 4
        %v1662 = vrot.slane %v1552, 5
        %v1663 = vsel %vm1642, %v1661, %v1662
        %v1664 = vrot.slane %v1553, 5
        %v1665 = vrot.slane %v1664, 4
        %v1666 = vrot.slane %v1554, 5
        %v1667 = vsel %vm1642, %v1665, %v1666
        %v1668 = vrot.slane %v1666, 4
        %v1669 = vrot.slane %v1555, 5
        %v1670 = vsel %vm1642, %v1668, %v1669
        %v1671 = vrot.slane %v1556, 5
        %v1672 = vrot.slane %v1671, 4
        %v1673 = vrot.slane %v1557, 5
        %v1674 = vsel %vm1642, %v1672, %v1673
        %v1675 = vrot.slane %v1673, 4
        %v1676 = vrot.slane %v1558, 5
        %v1677 = vsel %vm1642, %v1675, %v1676
        %v1678 = vrot.slane %v1559, 5
        %v1679 = vrot.slane %v1678, 4
        %v1680 = vrot.slane %v1560, 5
        %v1681 = vsel %vm1642, %v1679, %v1680
        %v1682 = vrot.slane %v1680, 4
        %v1683 = vrot.slane %v1561, 5
        %v1684 = vsel %vm1642, %v1682, %v1683
        %v1685 = vrot.slane %v1562, 5
        %v1686 = vrot.slane %v1685, 4
        %v1687 = vrot.slane %v1563, 5
        %v1688 = vsel %vm1642, %v1686, %v1687
        %v1689 = vrot.slane %v1687, 4
        %v1690 = vrot.slane %v1564, 5
        %v1691 = vsel %vm1642, %v1689, %v1690
        %v1692 = vrot.slane %v1565, 5
        %v1693 = vrot.slane %v1692, 4
        %v1694 = vrot.slane %v1566, 5
        %v1695 = vsel %vm1642, %v1693, %v1694
        %v1696 = vrot.slane %v1694, 4
        %v1697 = vrot.slane %v1567, 5
        %v1698 = vsel %vm1642, %v1696, %v1697
        %v1699 = vrot.slane %v1568, 5
        %v1700 = vrot.slane %v1699, 4
        %v1701 = vrot.slane %v1569, 5
        %v1702 = vsel %vm1642, %v1700, %v1701
        %v1703 = vrot.slane %v1701, 4
        %v1704 = vrot.slane %v1570, 5
        %v1705 = vsel %vm1642, %v1703, %v1704
        %v1706 = vrot.slane %v1571, 5
        %v1707 = vrot.slane %v1706, 4
        %v1708 = vrot.slane %v1572, 5
        %v1709 = vsel %vm1642, %v1707, %v1708
        %v1710 = vrot.slane %v1708, 4
        %v1711 = vrot.slane %v1573, 5
        %v1712 = vsel %vm1642, %v1710, %v1711
        %v1713 = vrot.slane %v1574, 5
        %v1714 = vrot.slane %v1713, 4
        %v1715 = vrot.slane %v1575, 5
        %v1716 = vsel %vm1642, %v1714, %v1715
        %v1717 = vrot.slane %v1715, 4
        %v1718 = vrot.slane %v1576, 5
        %v1719 = vsel %vm1642, %v1717, %v1718
        %v1720 = vrot.slane %v1577, 5
        %v1721 = vrot.slane %v1720, 4
        %v1722 = vrot.slane %v1578, 5
        %v1723 = vsel %vm1642, %v1721, %v1722
        %v1724 = vrot.slane %v1722, 4
        %v1725 = vrot.slane %v1579, 5
        %v1726 = vsel %vm1642, %v1724, %v1725
        %v1727 = vrot.slane %v1580, 5
        %v1728 = vrot.slane %v1727, 4
        %v1729 = vrot.slane %v1581, 5
        %v1730 = vsel %vm1642, %v1728, %v1729
        %v1731 = vrot.slane %v1729, 4
        %v1732 = vrot.slane %v1582, 5
        %v1733 = vsel %vm1642, %v1731, %v1732
        %v1734 = vrot.slane %v1583, 5
        %v1735 = vrot.slane %v1734, 4
        %v1736 = vrot.slane %v1584, 5
        %v1737 = vsel %vm1642, %v1735, %v1736
        %v1738 = vrot.slane %v1736, 4
        %v1739 = vrot.slane %v1585, 5
        %v1740 = vsel %vm1642, %v1738, %v1739
        %v1741 = vrot.slane %v1586, 5
        %v1742 = vrot.slane %v1741, 4
        %v1743 = vrot.slane %v1587, 5
        %v1744 = vsel %vm1642, %v1742, %v1743
        %v1745 = vrot.slane %v1743, 4
        %v1746 = vrot.slane %v1588, 5
        %v1747 = vsel %vm1642, %v1745, %v1746
        %v1748 = vrot.slane %v1589, 5
        %v1749 = vrot.slane %v1748, 4
        %v1750 = vrot.slane %v1590, 5
        %v1751 = vsel %vm1642, %v1749, %v1750
        %v1752 = vrot.slane %v1750, 4
        %v1753 = vrot.slane %v1591, 5
        %v1754 = vsel %vm1642, %v1752, %v1753
        %v1755 = vunpack.c.l.b16 %v1646
        %v1756 = vunpack.c.l.b16 %v1649
        %v1757 = vunpack.c.l.b16 %v1653
        %v1758 = vunpack.c.l.b16 %v1656
        %v1759 = vunpack.c.l.b16 %v1660
        %v1760 = vunpack.c.l.b16 %v1663
        %v1761 = vunpack.c.l.b16 %v1667
        %v1762 = vunpack.c.l.b16 %v1670
        %v1763 = vunpack.c.l.b16 %v1674
        %v1764 = vunpack.c.l.b16 %v1677
        %v1765 = vunpack.c.l.b16 %v1681
        %v1766 = vunpack.c.l.b16 %v1684
        %v1767 = vunpack.c.l.b16 %v1688
        %v1768 = vunpack.c.l.b16 %v1691
        %v1769 = vunpack.c.l.b16 %v1695
        %v1770 = vunpack.c.l.b16 %v1698
        %v1771 = vunpack.c.l.b16 %v1702
        %v1772 = vunpack.c.l.b16 %v1705
        %v1773 = vunpack.c.l.b16 %v1709
        %v1774 = vunpack.c.l.b16 %v1712
        %v1775 = vunpack.c.l.b16 %v1716
        %v1776 = vunpack.c.l.b16 %v1719
        %v1777 = vunpack.c.l.b16 %v1723
        %v1778 = vunpack.c.l.b16 %v1726
        %v1779 = vunpack.c.l.b16 %v1730
        %v1780 = vunpack.c.l.b16 %v1733
        %v1781 = vunpack.c.l.b16 %v1737
        %v1782 = vunpack.c.l.b16 %v1740
        %v1783 = vunpack.c.l.b16 %v1744
        %v1784 = vunpack.c.l.b16 %v1747
        %v1785 = vunpack.c.l.b16 %v1751
        %v1786 = vunpack.c.l.b16 %v1754
        %v1787 = vpack.c.b16 %v1756, %v1755
        %v1788 = vpack.c.b16 %v1758, %v1757
        %v1789 = vpack.c.b16 %v1760, %v1759
        %v1790 = vpack.c.b16 %v1762, %v1761
        %v1791 = vpack.c.b16 %v1764, %v1763
        %v1792 = vpack.c.b16 %v1766, %v1765
        %v1793 = vpack.c.b16 %v1768, %v1767
        %v1794 = vpack.c.b16 %v1770, %v1769
        %v1795 = vpack.c.b16 %v1772, %v1771
        %v1796 = vpack.c.b16 %v1774, %v1773
        %v1797 = vpack.c.b16 %v1776, %v1775
        %v1798 = vpack.c.b16 %v1778, %v1777
        %v1799 = vpack.c.b16 %v1780, %v1779
        %v1800 = vpack.c.b16 %v1782, %v1781
        %v1801 = vpack.c.b16 %v1784, %v1783
        %v1802 = vpack.c.b16 %v1786, %v1785
        %1819 = vst [vmem:[#allocation3 + $0x10] sm:$0xff] %v1787
        %1820 = vst [vmem:[#allocation3 + $0x58] sm:$0xff] %v1788
        %1821 = vst [vmem:[#allocation3 + $0xa0] sm:$0xff] %v1789
        %1822 = vst [vmem:[#allocation3 + $0xe8] sm:$0xff] %v1790
        %1823 = vst [vmem:[#allocation3 + $0x130] sm:$0xff] %v1791
        %1824 = vst [vmem:[#allocation3 + $0x178] sm:$0xff] %v1792
        %1825 = vst [vmem:[#allocation3 + $0x1c0] sm:$0xff] %v1793
        %1826 = vst [vmem:[#allocation3 + $0x208] sm:$0xff] %v1794
        %1827 = vst [vmem:[#allocation3 + $0x250] sm:$0xff] %v1795
        %1828 = vst [vmem:[#allocation3 + $0x298] sm:$0xff] %v1796
        %1829 = vst [vmem:[#allocation3 + $0x2e0] sm:$0xff] %v1797
        %1830 = vst [vmem:[#allocation3 + $0x328] sm:$0xff] %v1798
        %1831 = vst [vmem:[#allocation3 + $0x370] sm:$0xff] %v1799
        %1832 = vst [vmem:[#allocation3 + $0x3b8] sm:$0xff] %v1800
        %1833 = vst [vmem:[#allocation3 + $0x400] sm:$0xff] %v1801
        %1834 = vst [vmem:[#allocation3 + $0x448] sm:$0xff] %v1802
        %v1835 = vld [vmem:[%s767] sm:$0xf]
        %v1836 = vld [vmem:[%s767 + $0x4] sm:$0xf]
        %v1837 = vld [vmem:[%s767 + $0xc] sm:$0xf]
        %v1838 = vld [vmem:[%s767 + $0x10] sm:$0xf]
        %v1839 = vld [vmem:[%s767 + $0x18] sm:$0xf]
        %v1840 = vld [vmem:[%s767 + $0x1c] sm:$0xf]
        %v1841 = vld [vmem:[%s767 + $0x24] sm:$0xf]
        %v1842 = vld [vmem:[%s767 + $0x28] sm:$0xf]
        %v1843 = vld [vmem:[%s767 + $0x30] sm:$0xf]
        %v1844 = vld [vmem:[%s767 + $0x34] sm:$0xf]
        %v1845 = vld [vmem:[%s767 + $0x3c] sm:$0xf]
        %v1846 = vld [vmem:[%s767 + $0x40] sm:$0xf]
        %v1847 = vld [vmem:[%s767 + $0x48] sm:$0xf]
        %v1848 = vld [vmem:[%s767 + $0x4c] sm:$0xf]
        %v1849 = vld [vmem:[%s767 + $0x54] sm:$0xf]
        %v1850 = vld [vmem:[%s767 + $0x58] sm:$0xf]
        %v1851 = vld [vmem:[%s767 + $0x60] sm:$0xf]
        %v1852 = vld [vmem:[%s767 + $0x64] sm:$0xf]
        %v1853 = vld [vmem:[%s767 + $0x6c] sm:$0xf]
        %v1854 = vld [vmem:[%s767 + $0x70] sm:$0xf]
        %v1855 = vld [vmem:[%s767 + $0x78] sm:$0xf]
        %v1856 = vld [vmem:[%s767 + $0x7c] sm:$0xf]
        %v1857 = vld [vmem:[%s767 + $0x84] sm:$0xf]
        %v1858 = vld [vmem:[%s767 + $0x88] sm:$0xf]
        %v1859 = vld [vmem:[%s767 + $0x90] sm:$0xf]
        %v1860 = vld [vmem:[%s767 + $0x94] sm:$0xf]
        %v1861 = vld [vmem:[%s767 + $0x9c] sm:$0xf]
        %v1862 = vld [vmem:[%s767 + $0xa0] sm:$0xf]
        %v1863 = vld [vmem:[%s767 + $0xa8] sm:$0xf]
        %v1864 = vld [vmem:[%s767 + $0xac] sm:$0xf]
        %v1865 = vld [vmem:[%s767 + $0xb4] sm:$0xf]
        %v1866 = vld [vmem:[%s767 + $0xb8] sm:$0xf]
        %v1899 = vunpack.c.l.b16 %v1835
        %v1900 = vunpack.c.l.b16 %v1836
        %v1901 = vunpack.c.l.b16 %v1837
        %v1902 = vunpack.c.l.b16 %v1838
        %v1903 = vunpack.c.l.b16 %v1839
        %v1904 = vunpack.c.l.b16 %v1840
        %v1905 = vunpack.c.l.b16 %v1841
        %v1906 = vunpack.c.l.b16 %v1842
        %v1907 = vunpack.c.l.b16 %v1843
        %v1908 = vunpack.c.l.b16 %v1844
        %v1909 = vunpack.c.l.b16 %v1845
        %v1910 = vunpack.c.l.b16 %v1846
        %v1911 = vunpack.c.l.b16 %v1847
        %v1912 = vunpack.c.l.b16 %v1848
        %v1913 = vunpack.c.l.b16 %v1849
        %v1914 = vunpack.c.l.b16 %v1850
        %v1915 = vunpack.c.l.b16 %v1851
        %v1916 = vunpack.c.l.b16 %v1852
        %v1917 = vunpack.c.l.b16 %v1853
        %v1918 = vunpack.c.l.b16 %v1854
        %v1919 = vunpack.c.l.b16 %v1855
        %v1920 = vunpack.c.l.b16 %v1856
        %v1921 = vunpack.c.l.b16 %v1857
        %v1922 = vunpack.c.l.b16 %v1858
        %v1923 = vunpack.c.l.b16 %v1859
        %v1924 = vunpack.c.l.b16 %v1860
        %v1925 = vunpack.c.l.b16 %v1861
        %v1926 = vunpack.c.l.b16 %v1862
        %v1927 = vunpack.c.l.b16 %v1863
        %v1928 = vunpack.c.l.b16 %v1864
        %v1929 = vunpack.c.l.b16 %v1865
        %v1930 = vunpack.c.l.b16 %v1866
        %v1931 = vpack.c.b16 %v1900, %v1899
        %v1932 = vpack.c.b16 %v1902, %v1901
        %v1933 = vpack.c.b16 %v1904, %v1903
        %v1934 = vpack.c.b16 %v1906, %v1905
        %v1935 = vpack.c.b16 %v1908, %v1907
        %v1936 = vpack.c.b16 %v1910, %v1909
        %v1937 = vpack.c.b16 %v1912, %v1911
        %v1938 = vpack.c.b16 %v1914, %v1913
        %v1939 = vpack.c.b16 %v1916, %v1915
        %v1940 = vpack.c.b16 %v1918, %v1917
        %v1941 = vpack.c.b16 %v1920, %v1919
        %v1942 = vpack.c.b16 %v1922, %v1921
        %v1943 = vpack.c.b16 %v1924, %v1923
        %v1944 = vpack.c.b16 %v1926, %v1925
        %v1945 = vpack.c.b16 %v1928, %v1927
        %v1946 = vpack.c.b16 %v1930, %v1929
        %1963 = vst [vmem:[#allocation3 + $0x18] sm:$0xff] %v1931
        %1964 = vst [vmem:[#allocation3 + $0x60] sm:$0xff] %v1932
        %1965 = vst [vmem:[#allocation3 + $0xa8] sm:$0xff] %v1933
        %1966 = vst [vmem:[#allocation3 + $0xf0] sm:$0xff] %v1934
        %1967 = vst [vmem:[#allocation3 + $0x138] sm:$0xff] %v1935
        %1968 = vst [vmem:[#allocation3 + $0x180] sm:$0xff] %v1936
        %1969 = vst [vmem:[#allocation3 + $0x1c8] sm:$0xff] %v1937
        %1970 = vst [vmem:[#allocation3 + $0x210] sm:$0xff] %v1938
        %1971 = vst [vmem:[#allocation3 + $0x258] sm:$0xff] %v1939
        %1972 = vst [vmem:[#allocation3 + $0x2a0] sm:$0xff] %v1940
        %1973 = vst [vmem:[#allocation3 + $0x2e8] sm:$0xff] %v1941
        %1974 = vst [vmem:[#allocation3 + $0x330] sm:$0xff] %v1942
        %1975 = vst [vmem:[#allocation3 + $0x378] sm:$0xff] %v1943
        %1976 = vst [vmem:[#allocation3 + $0x3c0] sm:$0xff] %v1944
        %1977 = vst [vmem:[#allocation3 + $0x408] sm:$0xff] %v1945
        %1978 = vst [vmem:[#allocation3 + $0x450] sm:$0xff] %v1946
        %v1979 = vld [vmem:[%s767] sm:$0xf]
        %v1980 = vld [vmem:[%s767 + $0x4] sm:$0xf]
        %v1981 = vld [vmem:[%s767 + $0x8] sm:$0x1]
        %v1982 = vld [vmem:[%s767 + $0xc] sm:$0xf]
        %v1983 = vld [vmem:[%s767 + $0x10] sm:$0xf]
        %v1984 = vld [vmem:[%s767 + $0x14] sm:$0x1]
        %v1985 = vld [vmem:[%s767 + $0x18] sm:$0xf]
        %v1986 = vld [vmem:[%s767 + $0x1c] sm:$0xf]
        %v1987 = vld [vmem:[%s767 + $0x20] sm:$0x1]
        %v1988 = vld [vmem:[%s767 + $0x24] sm:$0xf]
        %v1989 = vld [vmem:[%s767 + $0x28] sm:$0xf]
        %v1990 = vld [vmem:[%s767 + $0x2c] sm:$0x1]
        %v1991 = vld [vmem:[%s767 + $0x30] sm:$0xf]
        %v1992 = vld [vmem:[%s767 + $0x34] sm:$0xf]
        %v1993 = vld [vmem:[%s767 + $0x38] sm:$0x1]
        %v1994 = vld [vmem:[%s767 + $0x3c] sm:$0xf]
        %v1995 = vld [vmem:[%s767 + $0x40] sm:$0xf]
        %v1996 = vld [vmem:[%s767 + $0x44] sm:$0x1]
        %v1997 = vld [vmem:[%s767 + $0x48] sm:$0xf]
        %v1998 = vld [vmem:[%s767 + $0x4c] sm:$0xf]
        %v1999 = vld [vmem:[%s767 + $0x50] sm:$0x1]
        %v2000 = vld [vmem:[%s767 + $0x54] sm:$0xf]
        %v2001 = vld [vmem:[%s767 + $0x58] sm:$0xf]
        %v2002 = vld [vmem:[%s767 + $0x5c] sm:$0x1]
        %v2003 = vld [vmem:[%s767 + $0x60] sm:$0xf]
        %v2004 = vld [vmem:[%s767 + $0x64] sm:$0xf]
        %v2005 = vld [vmem:[%s767 + $0x68] sm:$0x1]
        %v2006 = vld [vmem:[%s767 + $0x6c] sm:$0xf]
        %v2007 = vld [vmem:[%s767 + $0x70] sm:$0xf]
        %v2008 = vld [vmem:[%s767 + $0x74] sm:$0x1]
        %v2009 = vld [vmem:[%s767 + $0x78] sm:$0xf]
        %v2010 = vld [vmem:[%s767 + $0x7c] sm:$0xf]
        %v2011 = vld [vmem:[%s767 + $0x80] sm:$0x1]
        %v2012 = vld [vmem:[%s767 + $0x84] sm:$0xf]
        %v2013 = vld [vmem:[%s767 + $0x88] sm:$0xf]
        %v2014 = vld [vmem:[%s767 + $0x8c] sm:$0x1]
        %v2015 = vld [vmem:[%s767 + $0x90] sm:$0xf]
        %v2016 = vld [vmem:[%s767 + $0x94] sm:$0xf]
        %v2017 = vld [vmem:[%s767 + $0x98] sm:$0x1]
        %v2018 = vld [vmem:[%s767 + $0x9c] sm:$0xf]
        %v2019 = vld [vmem:[%s767 + $0xa0] sm:$0xf]
        %v2020 = vld [vmem:[%s767 + $0xa4] sm:$0x1]
        %v2021 = vld [vmem:[%s767 + $0xa8] sm:$0xf]
        %v2022 = vld [vmem:[%s767 + $0xac] sm:$0xf]
        %v2023 = vld [vmem:[%s767 + $0xb0] sm:$0x1]
        %v2024 = vld [vmem:[%s767 + $0xb4] sm:$0xf]
        %v2025 = vld [vmem:[%s767 + $0xb8] sm:$0xf]
        %v2026 = vld [vmem:[%s767 + $0xbc] sm:$0x1]
        %v2028 = vshrl.u32 %v1979, 16
        %v2030 = vrot.slane %v2028, 4
        %v2031 = vshll.u32 %v1979, 16
        %v2033 = vrot.slane %v2031, 5
        %v2034 = vor.u32 %v2030, %v2033
        %v2035 = vrot.slane %v2034, 4
        %v2037 = vshll.u32 %v1980, 16
        %v2039 = vrot.slane %v2037, 5
        %v2040 = vsel %vm1079, %v2035, %v2039
        %v2041 = vshrl.u32 %v1980, 16
        %v2043 = vrot.slane %v2041, 4
        %v2044 = vor.u32 %v2043, %v2039
        %v2045 = vrot.slane %v2044, 4
        %v2047 = vshll.u32 %v1981, 16
        %v2049 = vrot.slane %v2047, 5
        %v2050 = vsel %vm1079, %v2045, %v2049
        %v2052 = vshrl.u32 %v1982, 16
        %v2054 = vrot.slane %v2052, 4
        %v2055 = vshll.u32 %v1982, 16
        %v2057 = vrot.slane %v2055, 5
        %v2058 = vor.u32 %v2054, %v2057
        %v2059 = vrot.slane %v2058, 4
        %v2061 = vshll.u32 %v1983, 16
        %v2063 = vrot.slane %v2061, 5
        %v2064 = vsel %vm1079, %v2059, %v2063
        %v2065 = vshrl.u32 %v1983, 16
        %v2067 = vrot.slane %v2065, 4
        %v2068 = vor.u32 %v2067, %v2063
        %v2069 = vrot.slane %v2068, 4
        %v2071 = vshll.u32 %v1984, 16
        %v2073 = vrot.slane %v2071, 5
        %v2074 = vsel %vm1079, %v2069, %v2073
        %v2076 = vshrl.u32 %v1985, 16
        %v2078 = vrot.slane %v2076, 4
        %v2079 = vshll.u32 %v1985, 16
        %v2081 = vrot.slane %v2079, 5
        %v2082 = vor.u32 %v2078, %v2081
        %v2083 = vrot.slane %v2082, 4
        %v2085 = vshll.u32 %v1986, 16
        %v2087 = vrot.slane %v2085, 5
        %v2088 = vsel %vm1079, %v2083, %v2087
        %v2089 = vshrl.u32 %v1986, 16
        %v2091 = vrot.slane %v2089, 4
        %v2092 = vor.u32 %v2091, %v2087
        %v2093 = vrot.slane %v2092, 4
        %v2095 = vshll.u32 %v1987, 16
        %v2097 = vrot.slane %v2095, 5
        %v2098 = vsel %vm1079, %v2093, %v2097
        %v2100 = vshrl.u32 %v1988, 16
        %v2102 = vrot.slane %v2100, 4
        %v2103 = vshll.u32 %v1988, 16
        %v2105 = vrot.slane %v2103, 5
        %v2106 = vor.u32 %v2102, %v2105
        %v2107 = vrot.slane %v2106, 4
        %v2109 = vshll.u32 %v1989, 16
        %v2111 = vrot.slane %v2109, 5
        %v2112 = vsel %vm1079, %v2107, %v2111
        %v2113 = vshrl.u32 %v1989, 16
        %v2115 = vrot.slane %v2113, 4
        %v2116 = vor.u32 %v2115, %v2111
        %v2117 = vrot.slane %v2116, 4
        %v2119 = vshll.u32 %v1990, 16
        %v2121 = vrot.slane %v2119, 5
        %v2122 = vsel %vm1079, %v2117, %v2121
        %v2124 = vshrl.u32 %v1991, 16
        %v2126 = vrot.slane %v2124, 4
        %v2127 = vshll.u32 %v1991, 16
        %v2129 = vrot.slane %v2127, 5
        %v2130 = vor.u32 %v2126, %v2129
        %v2131 = vrot.slane %v2130, 4
        %v2133 = vshll.u32 %v1992, 16
        %v2135 = vrot.slane %v2133, 5
        %v2136 = vsel %vm1079, %v2131, %v2135
        %v2137 = vshrl.u32 %v1992, 16
        %v2139 = vrot.slane %v2137, 4
        %v2140 = vor.u32 %v2139, %v2135
        %v2141 = vrot.slane %v2140, 4
        %v2143 = vshll.u32 %v1993, 16
        %v2145 = vrot.slane %v2143, 5
        %v2146 = vsel %vm1079, %v2141, %v2145
        %v2148 = vshrl.u32 %v1994, 16
        %v2150 = vrot.slane %v2148, 4
        %v2151 = vshll.u32 %v1994, 16
        %v2153 = vrot.slane %v2151, 5
        %v2154 = vor.u32 %v2150, %v2153
        %v2155 = vrot.slane %v2154, 4
        %v2157 = vshll.u32 %v1995, 16
        %v2159 = vrot.slane %v2157, 5
        %v2160 = vsel %vm1079, %v2155, %v2159
        %v2161 = vshrl.u32 %v1995, 16
        %v2163 = vrot.slane %v2161, 4
        %v2164 = vor.u32 %v2163, %v2159
        %v2165 = vrot.slane %v2164, 4
        %v2167 = vshll.u32 %v1996, 16
        %v2169 = vrot.slane %v2167, 5
        %v2170 = vsel %vm1079, %v2165, %v2169
        %v2172 = vshrl.u32 %v1997, 16
        %v2174 = vrot.slane %v2172, 4
        %v2175 = vshll.u32 %v1997, 16
        %v2177 = vrot.slane %v2175, 5
        %v2178 = vor.u32 %v2174, %v2177
        %v2179 = vrot.slane %v2178, 4
        %v2181 = vshll.u32 %v1998, 16
        %v2183 = vrot.slane %v2181, 5
        %v2184 = vsel %vm1079, %v2179, %v2183
        %v2185 = vshrl.u32 %v1998, 16
        %v2187 = vrot.slane %v2185, 4
        %v2188 = vor.u32 %v2187, %v2183
        %v2189 = vrot.slane %v2188, 4
        %v2191 = vshll.u32 %v1999, 16
        %v2193 = vrot.slane %v2191, 5
        %v2194 = vsel %vm1079, %v2189, %v2193
        %v2196 = vshrl.u32 %v2000, 16
        %v2198 = vrot.slane %v2196, 4
        %v2199 = vshll.u32 %v2000, 16
        %v2201 = vrot.slane %v2199, 5
        %v2202 = vor.u32 %v2198, %v2201
        %v2203 = vrot.slane %v2202, 4
        %v2205 = vshll.u32 %v2001, 16
        %v2207 = vrot.slane %v2205, 5
        %v2208 = vsel %vm1079, %v2203, %v2207
        %v2209 = vshrl.u32 %v2001, 16
        %v2211 = vrot.slane %v2209, 4
        %v2212 = vor.u32 %v2211, %v2207
        %v2213 = vrot.slane %v2212, 4
        %v2215 = vshll.u32 %v2002, 16
        %v2217 = vrot.slane %v2215, 5
        %v2218 = vsel %vm1079, %v2213, %v2217
        %v2220 = vshrl.u32 %v2003, 16
        %v2222 = vrot.slane %v2220, 4
        %v2223 = vshll.u32 %v2003, 16
        %v2225 = vrot.slane %v2223, 5
        %v2226 = vor.u32 %v2222, %v2225
        %v2227 = vrot.slane %v2226, 4
        %v2229 = vshll.u32 %v2004, 16
        %v2231 = vrot.slane %v2229, 5
        %v2232 = vsel %vm1079, %v2227, %v2231
        %v2233 = vshrl.u32 %v2004, 16
        %v2235 = vrot.slane %v2233, 4
        %v2236 = vor.u32 %v2235, %v2231
        %v2237 = vrot.slane %v2236, 4
        %v2239 = vshll.u32 %v2005, 16
        %v2241 = vrot.slane %v2239, 5
        %v2242 = vsel %vm1079, %v2237, %v2241
        %v2244 = vshrl.u32 %v2006, 16
        %v2246 = vrot.slane %v2244, 4
        %v2247 = vshll.u32 %v2006, 16
        %v2249 = vrot.slane %v2247, 5
        %v2250 = vor.u32 %v2246, %v2249
        %v2251 = vrot.slane %v2250, 4
        %v2253 = vshll.u32 %v2007, 16
        %v2255 = vrot.slane %v2253, 5
        %v2256 = vsel %vm1079, %v2251, %v2255
        %v2257 = vshrl.u32 %v2007, 16
        %v2259 = vrot.slane %v2257, 4
        %v2260 = vor.u32 %v2259, %v2255
        %v2261 = vrot.slane %v2260, 4
        %v2263 = vshll.u32 %v2008, 16
        %v2265 = vrot.slane %v2263, 5
        %v2266 = vsel %vm1079, %v2261, %v2265
        %v2268 = vshrl.u32 %v2009, 16
        %v2270 = vrot.slane %v2268, 4
        %v2271 = vshll.u32 %v2009, 16
        %v2273 = vrot.slane %v2271, 5
        %v2274 = vor.u32 %v2270, %v2273
        %v2275 = vrot.slane %v2274, 4
        %v2277 = vshll.u32 %v2010, 16
        %v2279 = vrot.slane %v2277, 5
        %v2280 = vsel %vm1079, %v2275, %v2279
        %v2281 = vshrl.u32 %v2010, 16
        %v2283 = vrot.slane %v2281, 4
        %v2284 = vor.u32 %v2283, %v2279
        %v2285 = vrot.slane %v2284, 4
        %v2287 = vshll.u32 %v2011, 16
        %v2289 = vrot.slane %v2287, 5
        %v2290 = vsel %vm1079, %v2285, %v2289
        %v2292 = vshrl.u32 %v2012, 16
        %v2294 = vrot.slane %v2292, 4
        %v2295 = vshll.u32 %v2012, 16
        %v2297 = vrot.slane %v2295, 5
        %v2298 = vor.u32 %v2294, %v2297
        %v2299 = vrot.slane %v2298, 4
        %v2301 = vshll.u32 %v2013, 16
        %v2303 = vrot.slane %v2301, 5
        %v2304 = vsel %vm1079, %v2299, %v2303
        %v2305 = vshrl.u32 %v2013, 16
        %v2307 = vrot.slane %v2305, 4
        %v2308 = vor.u32 %v2307, %v2303
        %v2309 = vrot.slane %v2308, 4
        %v2311 = vshll.u32 %v2014, 16
        %v2313 = vrot.slane %v2311, 5
        %v2314 = vsel %vm1079, %v2309, %v2313
        %v2316 = vshrl.u32 %v2015, 16
        %v2318 = vrot.slane %v2316, 4
        %v2319 = vshll.u32 %v2015, 16
        %v2321 = vrot.slane %v2319, 5
        %v2322 = vor.u32 %v2318, %v2321
        %v2323 = vrot.slane %v2322, 4
        %v2325 = vshll.u32 %v2016, 16
        %v2327 = vrot.slane %v2325, 5
        %v2328 = vsel %vm1079, %v2323, %v2327
        %v2329 = vshrl.u32 %v2016, 16
        %v2331 = vrot.slane %v2329, 4
        %v2332 = vor.u32 %v2331, %v2327
        %v2333 = vrot.slane %v2332, 4
        %v2335 = vshll.u32 %v2017, 16
        %v2337 = vrot.slane %v2335, 5
        %v2338 = vsel %vm1079, %v2333, %v2337
        %v2340 = vshrl.u32 %v2018, 16
        %v2342 = vrot.slane %v2340, 4
        %v2343 = vshll.u32 %v2018, 16
        %v2345 = vrot.slane %v2343, 5
        %v2346 = vor.u32 %v2342, %v2345
        %v2347 = vrot.slane %v2346, 4
        %v2349 = vshll.u32 %v2019, 16
        %v2351 = vrot.slane %v2349, 5
        %v2352 = vsel %vm1079, %v2347, %v2351
        %v2353 = vshrl.u32 %v2019, 16
        %v2355 = vrot.slane %v2353, 4
        %v2356 = vor.u32 %v2355, %v2351
        %v2357 = vrot.slane %v2356, 4
        %v2359 = vshll.u32 %v2020, 16
        %v2361 = vrot.slane %v2359, 5
        %v2362 = vsel %vm1079, %v2357, %v2361
        %v2364 = vshrl.u32 %v2021, 16
        %v2366 = vrot.slane %v2364, 4
        %v2367 = vshll.u32 %v2021, 16
        %v2369 = vrot.slane %v2367, 5
        %v2370 = vor.u32 %v2366, %v2369
        %v2371 = vrot.slane %v2370, 4
        %v2373 = vshll.u32 %v2022, 16
        %v2375 = vrot.slane %v2373, 5
        %v2376 = vsel %vm1079, %v2371, %v2375
        %v2377 = vshrl.u32 %v2022, 16
        %v2379 = vrot.slane %v2377, 4
        %v2380 = vor.u32 %v2379, %v2375
        %v2381 = vrot.slane %v2380, 4
        %v2383 = vshll.u32 %v2023, 16
        %v2385 = vrot.slane %v2383, 5
        %v2386 = vsel %vm1079, %v2381, %v2385
        %v2388 = vshrl.u32 %v2024, 16
        %v2390 = vrot.slane %v2388, 4
        %v2391 = vshll.u32 %v2024, 16
        %v2393 = vrot.slane %v2391, 5
        %v2394 = vor.u32 %v2390, %v2393
        %v2395 = vrot.slane %v2394, 4
        %v2397 = vshll.u32 %v2025, 16
        %v2399 = vrot.slane %v2397, 5
        %v2400 = vsel %vm1079, %v2395, %v2399
        %v2401 = vshrl.u32 %v2025, 16
        %v2403 = vrot.slane %v2401, 4
        %v2404 = vor.u32 %v2403, %v2399
        %v2405 = vrot.slane %v2404, 4
        %v2407 = vshll.u32 %v2026, 16
        %v2409 = vrot.slane %v2407, 5
        %v2410 = vsel %vm1079, %v2405, %v2409
        %v2411 = vunpack.c.l.b16 %v2040
        %v2412 = vunpack.c.l.b16 %v2050
        %v2413 = vunpack.c.l.b16 %v2064
        %v2414 = vunpack.c.l.b16 %v2074
        %v2415 = vunpack.c.l.b16 %v2088
        %v2416 = vunpack.c.l.b16 %v2098
        %v2417 = vunpack.c.l.b16 %v2112
        %v2418 = vunpack.c.l.b16 %v2122
        %v2419 = vunpack.c.l.b16 %v2136
        %v2420 = vunpack.c.l.b16 %v2146
        %v2421 = vunpack.c.l.b16 %v2160
        %v2422 = vunpack.c.l.b16 %v2170
        %v2423 = vunpack.c.l.b16 %v2184
        %v2424 = vunpack.c.l.b16 %v2194
        %v2425 = vunpack.c.l.b16 %v2208
        %v2426 = vunpack.c.l.b16 %v2218
        %v2427 = vunpack.c.l.b16 %v2232
        %v2428 = vunpack.c.l.b16 %v2242
        %v2429 = vunpack.c.l.b16 %v2256
        %v2430 = vunpack.c.l.b16 %v2266
        %v2431 = vunpack.c.l.b16 %v2280
        %v2432 = vunpack.c.l.b16 %v2290
        %v2433 = vunpack.c.l.b16 %v2304
        %v2434 = vunpack.c.l.b16 %v2314
        %v2435 = vunpack.c.l.b16 %v2328
        %v2436 = vunpack.c.l.b16 %v2338
        %v2437 = vunpack.c.l.b16 %v2352
        %v2438 = vunpack.c.l.b16 %v2362
        %v2439 = vunpack.c.l.b16 %v2376
        %v2440 = vunpack.c.l.b16 %v2386
        %v2441 = vunpack.c.l.b16 %v2400
        %v2442 = vunpack.c.l.b16 %v2410
        %v2443 = vpack.c.b16 %v2412, %v2411
        %v2444 = vpack.c.b16 %v2414, %v2413
        %v2445 = vpack.c.b16 %v2416, %v2415
        %v2446 = vpack.c.b16 %v2418, %v2417
        %v2447 = vpack.c.b16 %v2420, %v2419
        %v2448 = vpack.c.b16 %v2422, %v2421
        %v2449 = vpack.c.b16 %v2424, %v2423
        %v2450 = vpack.c.b16 %v2426, %v2425
        %v2451 = vpack.c.b16 %v2428, %v2427
        %v2452 = vpack.c.b16 %v2430, %v2429
        %v2453 = vpack.c.b16 %v2432, %v2431
        %v2454 = vpack.c.b16 %v2434, %v2433
        %v2455 = vpack.c.b16 %v2436, %v2435
        %v2456 = vpack.c.b16 %v2438, %v2437
        %v2457 = vpack.c.b16 %v2440, %v2439
        %v2458 = vpack.c.b16 %v2442, %v2441
        %2475 = vst [vmem:[#allocation3 + $0x20] sm:$0xff] %v2443
        %2476 = vst [vmem:[#allocation3 + $0x68] sm:$0xff] %v2444
        %2477 = vst [vmem:[#allocation3 + $0xb0] sm:$0xff] %v2445
        %2478 = vst [vmem:[#allocation3 + $0xf8] sm:$0xff] %v2446
        %2479 = vst [vmem:[#allocation3 + $0x140] sm:$0xff] %v2447
        %2480 = vst [vmem:[#allocation3 + $0x188] sm:$0xff] %v2448
        %2481 = vst [vmem:[#allocation3 + $0x1d0] sm:$0xff] %v2449
        %2482 = vst [vmem:[#allocation3 + $0x218] sm:$0xff] %v2450
        %2483 = vst [vmem:[#allocation3 + $0x260] sm:$0xff] %v2451
        %2484 = vst [vmem:[#allocation3 + $0x2a8] sm:$0xff] %v2452
        %2485 = vst [vmem:[#allocation3 + $0x2f0] sm:$0xff] %v2453
        %2486 = vst [vmem:[#allocation3 + $0x338] sm:$0xff] %v2454
        %2487 = vst [vmem:[#allocation3 + $0x380] sm:$0xff] %v2455
        %2488 = vst [vmem:[#allocation3 + $0x3c8] sm:$0xff] %v2456
        %2489 = vst [vmem:[#allocation3 + $0x410] sm:$0xff] %v2457
        %2490 = vst [vmem:[#allocation3 + $0x458] sm:$0xff] %v2458
        %v2491 = vld [vmem:[%s767] sm:$0xe]
        %v2492 = vld [vmem:[%s767 + $0x4] sm:$0xf]
        %v2493 = vld [vmem:[%s767 + $0x8] sm:$0x1]
        %v2494 = vld [vmem:[%s767 + $0xc] sm:$0xe]
        %v2495 = vld [vmem:[%s767 + $0x10] sm:$0xf]
        %v2496 = vld [vmem:[%s767 + $0x14] sm:$0x1]
        %v2497 = vld [vmem:[%s767 + $0x18] sm:$0xe]
        %v2498 = vld [vmem:[%s767 + $0x1c] sm:$0xf]
        %v2499 = vld [vmem:[%s767 + $0x20] sm:$0x1]
        %v2500 = vld [vmem:[%s767 + $0x24] sm:$0xe]
        %v2501 = vld [vmem:[%s767 + $0x28] sm:$0xf]
        %v2502 = vld [vmem:[%s767 + $0x2c] sm:$0x1]
        %v2503 = vld [vmem:[%s767 + $0x30] sm:$0xe]
        %v2504 = vld [vmem:[%s767 + $0x34] sm:$0xf]
        %v2505 = vld [vmem:[%s767 + $0x38] sm:$0x1]
        %v2506 = vld [vmem:[%s767 + $0x3c] sm:$0xe]
        %v2507 = vld [vmem:[%s767 + $0x40] sm:$0xf]
        %v2508 = vld [vmem:[%s767 + $0x44] sm:$0x1]
        %v2509 = vld [vmem:[%s767 + $0x48] sm:$0xe]
        %v2510 = vld [vmem:[%s767 + $0x4c] sm:$0xf]
        %v2511 = vld [vmem:[%s767 + $0x50] sm:$0x1]
        %v2512 = vld [vmem:[%s767 + $0x54] sm:$0xe]
        %v2513 = vld [vmem:[%s767 + $0x58] sm:$0xf]
        %v2514 = vld [vmem:[%s767 + $0x5c] sm:$0x1]
        %v2515 = vld [vmem:[%s767 + $0x60] sm:$0xe]
        %v2516 = vld [vmem:[%s767 + $0x64] sm:$0xf]
        %v2517 = vld [vmem:[%s767 + $0x68] sm:$0x1]
        %v2518 = vld [vmem:[%s767 + $0x6c] sm:$0xe]
        %v2519 = vld [vmem:[%s767 + $0x70] sm:$0xf]
        %v2520 = vld [vmem:[%s767 + $0x74] sm:$0x1]
        %v2521 = vld [vmem:[%s767 + $0x78] sm:$0xe]
        %v2522 = vld [vmem:[%s767 + $0x7c] sm:$0xf]
        %v2523 = vld [vmem:[%s767 + $0x80] sm:$0x1]
        %v2524 = vld [vmem:[%s767 + $0x84] sm:$0xe]
        %v2525 = vld [vmem:[%s767 + $0x88] sm:$0xf]
        %v2526 = vld [vmem:[%s767 + $0x8c] sm:$0x1]
        %v2527 = vld [vmem:[%s767 + $0x90] sm:$0xe]
        %v2528 = vld [vmem:[%s767 + $0x94] sm:$0xf]
        %v2529 = vld [vmem:[%s767 + $0x98] sm:$0x1]
        %v2530 = vld [vmem:[%s767 + $0x9c] sm:$0xe]
        %v2531 = vld [vmem:[%s767 + $0xa0] sm:$0xf]
        %v2532 = vld [vmem:[%s767 + $0xa4] sm:$0x1]
        %v2533 = vld [vmem:[%s767 + $0xa8] sm:$0xe]
        %v2534 = vld [vmem:[%s767 + $0xac] sm:$0xf]
        %v2535 = vld [vmem:[%s767 + $0xb0] sm:$0x1]
        %v2536 = vld [vmem:[%s767 + $0xb4] sm:$0xe]
        %v2537 = vld [vmem:[%s767 + $0xb8] sm:$0xf]
        %v2538 = vld [vmem:[%s767 + $0xbc] sm:$0x1]
        %v2587 = vrot.slane %v2491, 5
        %v2588 = vrot.slane %v2587, 4
        %v2589 = vrot.slane %v2492, 5
        %v2590 = vsel %vm1642, %v2588, %v2589
        %v2591 = vrot.slane %v2589, 4
        %v2592 = vrot.slane %v2493, 5
        %v2593 = vsel %vm1642, %v2591, %v2592
        %v2594 = vrot.slane %v2494, 5
        %v2595 = vrot.slane %v2594, 4
        %v2596 = vrot.slane %v2495, 5
        %v2597 = vsel %vm1642, %v2595, %v2596
        %v2598 = vrot.slane %v2596, 4
        %v2599 = vrot.slane %v2496, 5
        %v2600 = vsel %vm1642, %v2598, %v2599
        %v2601 = vrot.slane %v2497, 5
        %v2602 = vrot.slane %v2601, 4
        %v2603 = vrot.slane %v2498, 5
        %v2604 = vsel %vm1642, %v2602, %v2603
        %v2605 = vrot.slane %v2603, 4
        %v2606 = vrot.slane %v2499, 5
        %v2607 = vsel %vm1642, %v2605, %v2606
        %v2608 = vrot.slane %v2500, 5
        %v2609 = vrot.slane %v2608, 4
        %v2610 = vrot.slane %v2501, 5
        %v2611 = vsel %vm1642, %v2609, %v2610
        %v2612 = vrot.slane %v2610, 4
        %v2613 = vrot.slane %v2502, 5
        %v2614 = vsel %vm1642, %v2612, %v2613
        %v2615 = vrot.slane %v2503, 5
        %v2616 = vrot.slane %v2615, 4
        %v2617 = vrot.slane %v2504, 5
        %v2618 = vsel %vm1642, %v2616, %v2617
        %v2619 = vrot.slane %v2617, 4
        %v2620 = vrot.slane %v2505, 5
        %v2621 = vsel %vm1642, %v2619, %v2620
        %v2622 = vrot.slane %v2506, 5
        %v2623 = vrot.slane %v2622, 4
        %v2624 = vrot.slane %v2507, 5
        %v2625 = vsel %vm1642, %v2623, %v2624
        %v2626 = vrot.slane %v2624, 4
        %v2627 = vrot.slane %v2508, 5
        %v2628 = vsel %vm1642, %v2626, %v2627
        %v2629 = vrot.slane %v2509, 5
        %v2630 = vrot.slane %v2629, 4
        %v2631 = vrot.slane %v2510, 5
        %v2632 = vsel %vm1642, %v2630, %v2631
        %v2633 = vrot.slane %v2631, 4
        %v2634 = vrot.slane %v2511, 5
        %v2635 = vsel %vm1642, %v2633, %v2634
        %v2636 = vrot.slane %v2512, 5
        %v2637 = vrot.slane %v2636, 4
        %v2638 = vrot.slane %v2513, 5
        %v2639 = vsel %vm1642, %v2637, %v2638
        %v2640 = vrot.slane %v2638, 4
        %v2641 = vrot.slane %v2514, 5
        %v2642 = vsel %vm1642, %v2640, %v2641
        %v2643 = vrot.slane %v2515, 5
        %v2644 = vrot.slane %v2643, 4
        %v2645 = vrot.slane %v2516, 5
        %v2646 = vsel %vm1642, %v2644, %v2645
        %v2647 = vrot.slane %v2645, 4
        %v2648 = vrot.slane %v2517, 5
        %v2649 = vsel %vm1642, %v2647, %v2648
        %v2650 = vrot.slane %v2518, 5
        %v2651 = vrot.slane %v2650, 4
        %v2652 = vrot.slane %v2519, 5
        %v2653 = vsel %vm1642, %v2651, %v2652
        %v2654 = vrot.slane %v2652, 4
        %v2655 = vrot.slane %v2520, 5
        %v2656 = vsel %vm1642, %v2654, %v2655
        %v2657 = vrot.slane %v2521, 5
        %v2658 = vrot.slane %v2657, 4
        %v2659 = vrot.slane %v2522, 5
        %v2660 = vsel %vm1642, %v2658, %v2659
        %v2661 = vrot.slane %v2659, 4
        %v2662 = vrot.slane %v2523, 5
        %v2663 = vsel %vm1642, %v2661, %v2662
        %v2664 = vrot.slane %v2524, 5
        %v2665 = vrot.slane %v2664, 4
        %v2666 = vrot.slane %v2525, 5
        %v2667 = vsel %vm1642, %v2665, %v2666
        %v2668 = vrot.slane %v2666, 4
        %v2669 = vrot.slane %v2526, 5
        %v2670 = vsel %vm1642, %v2668, %v2669
        %v2671 = vrot.slane %v2527, 5
        %v2672 = vrot.slane %v2671, 4
        %v2673 = vrot.slane %v2528, 5
        %v2674 = vsel %vm1642, %v2672, %v2673
        %v2675 = vrot.slane %v2673, 4
        %v2676 = vrot.slane %v2529, 5
        %v2677 = vsel %vm1642, %v2675, %v2676
        %v2678 = vrot.slane %v2530, 5
        %v2679 = vrot.slane %v2678, 4
        %v2680 = vrot.slane %v2531, 5
        %v2681 = vsel %vm1642, %v2679, %v2680
        %v2682 = vrot.slane %v2680, 4
        %v2683 = vrot.slane %v2532, 5
        %v2684 = vsel %vm1642, %v2682, %v2683
        %v2685 = vrot.slane %v2533, 5
        %v2686 = vrot.slane %v2685, 4
        %v2687 = vrot.slane %v2534, 5
        %v2688 = vsel %vm1642, %v2686, %v2687
        %v2689 = vrot.slane %v2687, 4
        %v2690 = vrot.slane %v2535, 5
        %v2691 = vsel %vm1642, %v2689, %v2690
        %v2692 = vrot.slane %v2536, 5
        %v2693 = vrot.slane %v2692, 4
        %v2694 = vrot.slane %v2537, 5
        %v2695 = vsel %vm1642, %v2693, %v2694
        %v2696 = vrot.slane %v2694, 4
        %v2697 = vrot.slane %v2538, 5
        %v2698 = vsel %vm1642, %v2696, %v2697
        %v2699 = vunpack.c.l.b16 %v2590
        %v2700 = vunpack.c.l.b16 %v2593
        %v2701 = vunpack.c.l.b16 %v2597
        %v2702 = vunpack.c.l.b16 %v2600
        %v2703 = vunpack.c.l.b16 %v2604
        %v2704 = vunpack.c.l.b16 %v2607
        %v2705 = vunpack.c.l.b16 %v2611
        %v2706 = vunpack.c.l.b16 %v2614
        %v2707 = vunpack.c.l.b16 %v2618
        %v2708 = vunpack.c.l.b16 %v2621
        %v2709 = vunpack.c.l.b16 %v2625
        %v2710 = vunpack.c.l.b16 %v2628
        %v2711 = vunpack.c.l.b16 %v2632
        %v2712 = vunpack.c.l.b16 %v2635
        %v2713 = vunpack.c.l.b16 %v2639
        %v2714 = vunpack.c.l.b16 %v2642
        %v2715 = vunpack.c.l.b16 %v2646
        %v2716 = vunpack.c.l.b16 %v2649
        %v2717 = vunpack.c.l.b16 %v2653
        %v2718 = vunpack.c.l.b16 %v2656
        %v2719 = vunpack.c.l.b16 %v2660
        %v2720 = vunpack.c.l.b16 %v2663
        %v2721 = vunpack.c.l.b16 %v2667
        %v2722 = vunpack.c.l.b16 %v2670
        %v2723 = vunpack.c.l.b16 %v2674
        %v2724 = vunpack.c.l.b16 %v2677
        %v2725 = vunpack.c.l.b16 %v2681
        %v2726 = vunpack.c.l.b16 %v2684
        %v2727 = vunpack.c.l.b16 %v2688
        %v2728 = vunpack.c.l.b16 %v2691
        %v2729 = vunpack.c.l.b16 %v2695
        %v2730 = vunpack.c.l.b16 %v2698
        %v2731 = vpack.c.b16 %v2700, %v2699
        %v2732 = vpack.c.b16 %v2702, %v2701
        %v2733 = vpack.c.b16 %v2704, %v2703
        %v2734 = vpack.c.b16 %v2706, %v2705
        %v2735 = vpack.c.b16 %v2708, %v2707
        %v2736 = vpack.c.b16 %v2710, %v2709
        %v2737 = vpack.c.b16 %v2712, %v2711
        %v2738 = vpack.c.b16 %v2714, %v2713
        %v2739 = vpack.c.b16 %v2716, %v2715
        %v2740 = vpack.c.b16 %v2718, %v2717
        %v2741 = vpack.c.b16 %v2720, %v2719
        %v2742 = vpack.c.b16 %v2722, %v2721
        %v2743 = vpack.c.b16 %v2724, %v2723
        %v2744 = vpack.c.b16 %v2726, %v2725
        %v2745 = vpack.c.b16 %v2728, %v2727
        %v2746 = vpack.c.b16 %v2730, %v2729
        %2763 = vst [vmem:[#allocation3 + $0x28] sm:$0xff] %v2731
        %2764 = vst [vmem:[#allocation3 + $0x70] sm:$0xff] %v2732
        %2765 = vst [vmem:[#allocation3 + $0xb8] sm:$0xff] %v2733
        %2766 = vst [vmem:[#allocation3 + $0x100] sm:$0xff] %v2734
        %2767 = vst [vmem:[#allocation3 + $0x148] sm:$0xff] %v2735
        %2768 = vst [vmem:[#allocation3 + $0x190] sm:$0xff] %v2736
        %2769 = vst [vmem:[#allocation3 + $0x1d8] sm:$0xff] %v2737
        %2770 = vst [vmem:[#allocation3 + $0x220] sm:$0xff] %v2738
        %2771 = vst [vmem:[#allocation3 + $0x268] sm:$0xff] %v2739
        %2772 = vst [vmem:[#allocation3 + $0x2b0] sm:$0xff] %v2740
        %2773 = vst [vmem:[#allocation3 + $0x2f8] sm:$0xff] %v2741
        %2774 = vst [vmem:[#allocation3 + $0x340] sm:$0xff] %v2742
        %2775 = vst [vmem:[#allocation3 + $0x388] sm:$0xff] %v2743
        %2776 = vst [vmem:[#allocation3 + $0x3d0] sm:$0xff] %v2744
        %2777 = vst [vmem:[#allocation3 + $0x418] sm:$0xff] %v2745
        %2778 = vst [vmem:[#allocation3 + $0x460] sm:$0xff] %v2746
        %s2779 = scalar_lea.vmem [#allocation2], 24
        %v2780 = vld [vmem:[%s2779] sm:$0xf]
        %v2781 = vld [vmem:[%s2779 + $0x4] sm:$0xf]
        %v2782 = vld [vmem:[%s2779 + $0xc] sm:$0xf]
        %v2783 = vld [vmem:[%s2779 + $0x10] sm:$0xf]
        %v2784 = vld [vmem:[%s2779 + $0x18] sm:$0xf]
        %v2785 = vld [vmem:[%s2779 + $0x1c] sm:$0xf]
        %v2786 = vld [vmem:[%s2779 + $0x24] sm:$0xf]
        %v2787 = vld [vmem:[%s2779 + $0x28] sm:$0xf]
        %v2788 = vld [vmem:[%s2779 + $0x30] sm:$0xf]
        %v2789 = vld [vmem:[%s2779 + $0x34] sm:$0xf]
        %v2790 = vld [vmem:[%s2779 + $0x3c] sm:$0xf]
        %v2791 = vld [vmem:[%s2779 + $0x40] sm:$0xf]
        %v2792 = vld [vmem:[%s2779 + $0x48] sm:$0xf]
        %v2793 = vld [vmem:[%s2779 + $0x4c] sm:$0xf]
        %v2794 = vld [vmem:[%s2779 + $0x54] sm:$0xf]
        %v2795 = vld [vmem:[%s2779 + $0x58] sm:$0xf]
        %v2796 = vld [vmem:[%s2779 + $0x60] sm:$0xf]
        %v2797 = vld [vmem:[%s2779 + $0x64] sm:$0xf]
        %v2798 = vld [vmem:[%s2779 + $0x6c] sm:$0xf]
        %v2799 = vld [vmem:[%s2779 + $0x70] sm:$0xf]
        %v2800 = vld [vmem:[%s2779 + $0x78] sm:$0xf]
        %v2801 = vld [vmem:[%s2779 + $0x7c] sm:$0xf]
        %v2802 = vld [vmem:[%s2779 + $0x84] sm:$0xf]
        %v2803 = vld [vmem:[%s2779 + $0x88] sm:$0xf]
        %v2804 = vld [vmem:[%s2779 + $0x90] sm:$0xf]
        %v2805 = vld [vmem:[%s2779 + $0x94] sm:$0xf]
        %v2806 = vld [vmem:[%s2779 + $0x9c] sm:$0xf]
        %v2807 = vld [vmem:[%s2779 + $0xa0] sm:$0xf]
        %v2808 = vld [vmem:[%s2779 + $0xa8] sm:$0xf]
        %v2809 = vld [vmem:[%s2779 + $0xac] sm:$0xf]
        %v2810 = vld [vmem:[%s2779 + $0xb4] sm:$0xf]
        %v2811 = vld [vmem:[%s2779 + $0xb8] sm:$0xf]
        %v2844 = vunpack.c.l.b16 %v2780
        %v2845 = vunpack.c.l.b16 %v2781
        %v2846 = vunpack.c.l.b16 %v2782
        %v2847 = vunpack.c.l.b16 %v2783
        %v2848 = vunpack.c.l.b16 %v2784
        %v2849 = vunpack.c.l.b16 %v2785
        %v2850 = vunpack.c.l.b16 %v2786
        %v2851 = vunpack.c.l.b16 %v2787
        %v2852 = vunpack.c.l.b16 %v2788
        %v2853 = vunpack.c.l.b16 %v2789
        %v2854 = vunpack.c.l.b16 %v2790
        %v2855 = vunpack.c.l.b16 %v2791
        %v2856 = vunpack.c.l.b16 %v2792
        %v2857 = vunpack.c.l.b16 %v2793
        %v2858 = vunpack.c.l.b16 %v2794
        %v2859 = vunpack.c.l.b16 %v2795
        %v2860 = vunpack.c.l.b16 %v2796
        %v2861 = vunpack.c.l.b16 %v2797
        %v2862 = vunpack.c.l.b16 %v2798
        %v2863 = vunpack.c.l.b16 %v2799
        %v2864 = vunpack.c.l.b16 %v2800
        %v2865 = vunpack.c.l.b16 %v2801
        %v2866 = vunpack.c.l.b16 %v2802
        %v2867 = vunpack.c.l.b16 %v2803
        %v2868 = vunpack.c.l.b16 %v2804
        %v2869 = vunpack.c.l.b16 %v2805
        %v2870 = vunpack.c.l.b16 %v2806
        %v2871 = vunpack.c.l.b16 %v2807
        %v2872 = vunpack.c.l.b16 %v2808
        %v2873 = vunpack.c.l.b16 %v2809
        %v2874 = vunpack.c.l.b16 %v2810
        %v2875 = vunpack.c.l.b16 %v2811
        %v2876 = vpack.c.b16 %v2845, %v2844
        %v2877 = vpack.c.b16 %v2847, %v2846
        %v2878 = vpack.c.b16 %v2849, %v2848
        %v2879 = vpack.c.b16 %v2851, %v2850
        %v2880 = vpack.c.b16 %v2853, %v2852
        %v2881 = vpack.c.b16 %v2855, %v2854
        %v2882 = vpack.c.b16 %v2857, %v2856
        %v2883 = vpack.c.b16 %v2859, %v2858
        %v2884 = vpack.c.b16 %v2861, %v2860
        %v2885 = vpack.c.b16 %v2863, %v2862
        %v2886 = vpack.c.b16 %v2865, %v2864
        %v2887 = vpack.c.b16 %v2867, %v2866
        %v2888 = vpack.c.b16 %v2869, %v2868
        %v2889 = vpack.c.b16 %v2871, %v2870
        %v2890 = vpack.c.b16 %v2873, %v2872
        %v2891 = vpack.c.b16 %v2875, %v2874
        %2908 = vst [vmem:[#allocation3 + $0x30] sm:$0xff] %v2876
        %2909 = vst [vmem:[#allocation3 + $0x78] sm:$0xff] %v2877
        %2910 = vst [vmem:[#allocation3 + $0xc0] sm:$0xff] %v2878
        %2911 = vst [vmem:[#allocation3 + $0x108] sm:$0xff] %v2879
        %2912 = vst [vmem:[#allocation3 + $0x150] sm:$0xff] %v2880
        %2913 = vst [vmem:[#allocation3 + $0x198] sm:$0xff] %v2881
        %2914 = vst [vmem:[#allocation3 + $0x1e0] sm:$0xff] %v2882
        %2915 = vst [vmem:[#allocation3 + $0x228] sm:$0xff] %v2883
        %2916 = vst [vmem:[#allocation3 + $0x270] sm:$0xff] %v2884
        %2917 = vst [vmem:[#allocation3 + $0x2b8] sm:$0xff] %v2885
        %2918 = vst [vmem:[#allocation3 + $0x300] sm:$0xff] %v2886
        %2919 = vst [vmem:[#allocation3 + $0x348] sm:$0xff] %v2887
        %2920 = vst [vmem:[#allocation3 + $0x390] sm:$0xff] %v2888
        %2921 = vst [vmem:[#allocation3 + $0x3d8] sm:$0xff] %v2889
        %2922 = vst [vmem:[#allocation3 + $0x420] sm:$0xff] %v2890
        %2923 = vst [vmem:[#allocation3 + $0x468] sm:$0xff] %v2891
        %v2924 = vld [vmem:[%s2779] sm:$0xf]
        %v2925 = vld [vmem:[%s2779 + $0x4] sm:$0xf]
        %v2926 = vld [vmem:[%s2779 + $0x8] sm:$0x1]
        %v2927 = vld [vmem:[%s2779 + $0xc] sm:$0xf]
        %v2928 = vld [vmem:[%s2779 + $0x10] sm:$0xf]
        %v2929 = vld [vmem:[%s2779 + $0x14] sm:$0x1]
        %v2930 = vld [vmem:[%s2779 + $0x18] sm:$0xf]
        %v2931 = vld [vmem:[%s2779 + $0x1c] sm:$0xf]
        %v2932 = vld [vmem:[%s2779 + $0x20] sm:$0x1]
        %v2933 = vld [vmem:[%s2779 + $0x24] sm:$0xf]
        %v2934 = vld [vmem:[%s2779 + $0x28] sm:$0xf]
        %v2935 = vld [vmem:[%s2779 + $0x2c] sm:$0x1]
        %v2936 = vld [vmem:[%s2779 + $0x30] sm:$0xf]
        %v2937 = vld [vmem:[%s2779 + $0x34] sm:$0xf]
        %v2938 = vld [vmem:[%s2779 + $0x38] sm:$0x1]
        %v2939 = vld [vmem:[%s2779 + $0x3c] sm:$0xf]
        %v2940 = vld [vmem:[%s2779 + $0x40] sm:$0xf]
        %v2941 = vld [vmem:[%s2779 + $0x44] sm:$0x1]
        %v2942 = vld [vmem:[%s2779 + $0x48] sm:$0xf]
        %v2943 = vld [vmem:[%s2779 + $0x4c] sm:$0xf]
        %v2944 = vld [vmem:[%s2779 + $0x50] sm:$0x1]
        %v2945 = vld [vmem:[%s2779 + $0x54] sm:$0xf]
        %v2946 = vld [vmem:[%s2779 + $0x58] sm:$0xf]
        %v2947 = vld [vmem:[%s2779 + $0x5c] sm:$0x1]
        %v2948 = vld [vmem:[%s2779 + $0x60] sm:$0xf]
        %v2949 = vld [vmem:[%s2779 + $0x64] sm:$0xf]
        %v2950 = vld [vmem:[%s2779 + $0x68] sm:$0x1]
        %v2951 = vld [vmem:[%s2779 + $0x6c] sm:$0xf]
        %v2952 = vld [vmem:[%s2779 + $0x70] sm:$0xf]
        %v2953 = vld [vmem:[%s2779 + $0x74] sm:$0x1]
        %v2954 = vld [vmem:[%s2779 + $0x78] sm:$0xf]
        %v2955 = vld [vmem:[%s2779 + $0x7c] sm:$0xf]
        %v2956 = vld [vmem:[%s2779 + $0x80] sm:$0x1]
        %v2957 = vld [vmem:[%s2779 + $0x84] sm:$0xf]
        %v2958 = vld [vmem:[%s2779 + $0x88] sm:$0xf]
        %v2959 = vld [vmem:[%s2779 + $0x8c] sm:$0x1]
        %v2960 = vld [vmem:[%s2779 + $0x90] sm:$0xf]
        %v2961 = vld [vmem:[%s2779 + $0x94] sm:$0xf]
        %v2962 = vld [vmem:[%s2779 + $0x98] sm:$0x1]
        %v2963 = vld [vmem:[%s2779 + $0x9c] sm:$0xf]
        %v2964 = vld [vmem:[%s2779 + $0xa0] sm:$0xf]
        %v2965 = vld [vmem:[%s2779 + $0xa4] sm:$0x1]
        %v2966 = vld [vmem:[%s2779 + $0xa8] sm:$0xf]
        %v2967 = vld [vmem:[%s2779 + $0xac] sm:$0xf]
        %v2968 = vld [vmem:[%s2779 + $0xb0] sm:$0x1]
        %v2969 = vld [vmem:[%s2779 + $0xb4] sm:$0xf]
        %v2970 = vld [vmem:[%s2779 + $0xb8] sm:$0xf]
        %v2971 = vld [vmem:[%s2779 + $0xbc] sm:$0x1]
        %v2973 = vshrl.u32 %v2924, 16
        %v2975 = vrot.slane %v2973, 4
        %v2976 = vshll.u32 %v2924, 16
        %v2978 = vrot.slane %v2976, 5
        %v2979 = vor.u32 %v2975, %v2978
        %v2980 = vrot.slane %v2979, 4
        %v2982 = vshll.u32 %v2925, 16
        %v2984 = vrot.slane %v2982, 5
        %v2985 = vsel %vm1079, %v2980, %v2984
        %v2986 = vshrl.u32 %v2925, 16
        %v2988 = vrot.slane %v2986, 4
        %v2989 = vor.u32 %v2988, %v2984
        %v2990 = vrot.slane %v2989, 4
        %v2992 = vshll.u32 %v2926, 16
        %v2994 = vrot.slane %v2992, 5
        %v2995 = vsel %vm1079, %v2990, %v2994
        %v2997 = vshrl.u32 %v2927, 16
        %v2999 = vrot.slane %v2997, 4
        %v3000 = vshll.u32 %v2927, 16
        %v3002 = vrot.slane %v3000, 5
        %v3003 = vor.u32 %v2999, %v3002
        %v3004 = vrot.slane %v3003, 4
        %v3006 = vshll.u32 %v2928, 16
        %v3008 = vrot.slane %v3006, 5
        %v3009 = vsel %vm1079, %v3004, %v3008
        %v3010 = vshrl.u32 %v2928, 16
        %v3012 = vrot.slane %v3010, 4
        %v3013 = vor.u32 %v3012, %v3008
        %v3014 = vrot.slane %v3013, 4
        %v3016 = vshll.u32 %v2929, 16
        %v3018 = vrot.slane %v3016, 5
        %v3019 = vsel %vm1079, %v3014, %v3018
        %v3021 = vshrl.u32 %v2930, 16
        %v3023 = vrot.slane %v3021, 4
        %v3024 = vshll.u32 %v2930, 16
        %v3026 = vrot.slane %v3024, 5
        %v3027 = vor.u32 %v3023, %v3026
        %v3028 = vrot.slane %v3027, 4
        %v3030 = vshll.u32 %v2931, 16
        %v3032 = vrot.slane %v3030, 5
        %v3033 = vsel %vm1079, %v3028, %v3032
        %v3034 = vshrl.u32 %v2931, 16
        %v3036 = vrot.slane %v3034, 4
        %v3037 = vor.u32 %v3036, %v3032
        %v3038 = vrot.slane %v3037, 4
        %v3040 = vshll.u32 %v2932, 16
        %v3042 = vrot.slane %v3040, 5
        %v3043 = vsel %vm1079, %v3038, %v3042
        %v3045 = vshrl.u32 %v2933, 16
        %v3047 = vrot.slane %v3045, 4
        %v3048 = vshll.u32 %v2933, 16
        %v3050 = vrot.slane %v3048, 5
        %v3051 = vor.u32 %v3047, %v3050
        %v3052 = vrot.slane %v3051, 4
        %v3054 = vshll.u32 %v2934, 16
        %v3056 = vrot.slane %v3054, 5
        %v3057 = vsel %vm1079, %v3052, %v3056
        %v3058 = vshrl.u32 %v2934, 16
        %v3060 = vrot.slane %v3058, 4
        %v3061 = vor.u32 %v3060, %v3056
        %v3062 = vrot.slane %v3061, 4
        %v3064 = vshll.u32 %v2935, 16
        %v3066 = vrot.slane %v3064, 5
        %v3067 = vsel %vm1079, %v3062, %v3066
        %v3069 = vshrl.u32 %v2936, 16
        %v3071 = vrot.slane %v3069, 4
        %v3072 = vshll.u32 %v2936, 16
        %v3074 = vrot.slane %v3072, 5
        %v3075 = vor.u32 %v3071, %v3074
        %v3076 = vrot.slane %v3075, 4
        %v3078 = vshll.u32 %v2937, 16
        %v3080 = vrot.slane %v3078, 5
        %v3081 = vsel %vm1079, %v3076, %v3080
        %v3082 = vshrl.u32 %v2937, 16
        %v3084 = vrot.slane %v3082, 4
        %v3085 = vor.u32 %v3084, %v3080
        %v3086 = vrot.slane %v3085, 4
        %v3088 = vshll.u32 %v2938, 16
        %v3090 = vrot.slane %v3088, 5
        %v3091 = vsel %vm1079, %v3086, %v3090
        %v3093 = vshrl.u32 %v2939, 16
        %v3095 = vrot.slane %v3093, 4
        %v3096 = vshll.u32 %v2939, 16
        %v3098 = vrot.slane %v3096, 5
        %v3099 = vor.u32 %v3095, %v3098
        %v3100 = vrot.slane %v3099, 4
        %v3102 = vshll.u32 %v2940, 16
        %v3104 = vrot.slane %v3102, 5
        %v3105 = vsel %vm1079, %v3100, %v3104
        %v3106 = vshrl.u32 %v2940, 16
        %v3108 = vrot.slane %v3106, 4
        %v3109 = vor.u32 %v3108, %v3104
        %v3110 = vrot.slane %v3109, 4
        %v3112 = vshll.u32 %v2941, 16
        %v3114 = vrot.slane %v3112, 5
        %v3115 = vsel %vm1079, %v3110, %v3114
        %v3117 = vshrl.u32 %v2942, 16
        %v3119 = vrot.slane %v3117, 4
        %v3120 = vshll.u32 %v2942, 16
        %v3122 = vrot.slane %v3120, 5
        %v3123 = vor.u32 %v3119, %v3122
        %v3124 = vrot.slane %v3123, 4
        %v3126 = vshll.u32 %v2943, 16
        %v3128 = vrot.slane %v3126, 5
        %v3129 = vsel %vm1079, %v3124, %v3128
        %v3130 = vshrl.u32 %v2943, 16
        %v3132 = vrot.slane %v3130, 4
        %v3133 = vor.u32 %v3132, %v3128
        %v3134 = vrot.slane %v3133, 4
        %v3136 = vshll.u32 %v2944, 16
        %v3138 = vrot.slane %v3136, 5
        %v3139 = vsel %vm1079, %v3134, %v3138
        %v3141 = vshrl.u32 %v2945, 16
        %v3143 = vrot.slane %v3141, 4
        %v3144 = vshll.u32 %v2945, 16
        %v3146 = vrot.slane %v3144, 5
        %v3147 = vor.u32 %v3143, %v3146
        %v3148 = vrot.slane %v3147, 4
        %v3150 = vshll.u32 %v2946, 16
        %v3152 = vrot.slane %v3150, 5
        %v3153 = vsel %vm1079, %v3148, %v3152
        %v3154 = vshrl.u32 %v2946, 16
        %v3156 = vrot.slane %v3154, 4
        %v3157 = vor.u32 %v3156, %v3152
        %v3158 = vrot.slane %v3157, 4
        %v3160 = vshll.u32 %v2947, 16
        %v3162 = vrot.slane %v3160, 5
        %v3163 = vsel %vm1079, %v3158, %v3162
        %v3165 = vshrl.u32 %v2948, 16
        %v3167 = vrot.slane %v3165, 4
        %v3168 = vshll.u32 %v2948, 16
        %v3170 = vrot.slane %v3168, 5
        %v3171 = vor.u32 %v3167, %v3170
        %v3172 = vrot.slane %v3171, 4
        %v3174 = vshll.u32 %v2949, 16
        %v3176 = vrot.slane %v3174, 5
        %v3177 = vsel %vm1079, %v3172, %v3176
        %v3178 = vshrl.u32 %v2949, 16
        %v3180 = vrot.slane %v3178, 4
        %v3181 = vor.u32 %v3180, %v3176
        %v3182 = vrot.slane %v3181, 4
        %v3184 = vshll.u32 %v2950, 16
        %v3186 = vrot.slane %v3184, 5
        %v3187 = vsel %vm1079, %v3182, %v3186
        %v3189 = vshrl.u32 %v2951, 16
        %v3191 = vrot.slane %v3189, 4
        %v3192 = vshll.u32 %v2951, 16
        %v3194 = vrot.slane %v3192, 5
        %v3195 = vor.u32 %v3191, %v3194
        %v3196 = vrot.slane %v3195, 4
        %v3198 = vshll.u32 %v2952, 16
        %v3200 = vrot.slane %v3198, 5
        %v3201 = vsel %vm1079, %v3196, %v3200
        %v3202 = vshrl.u32 %v2952, 16
        %v3204 = vrot.slane %v3202, 4
        %v3205 = vor.u32 %v3204, %v3200
        %v3206 = vrot.slane %v3205, 4
        %v3208 = vshll.u32 %v2953, 16
        %v3210 = vrot.slane %v3208, 5
        %v3211 = vsel %vm1079, %v3206, %v3210
        %v3213 = vshrl.u32 %v2954, 16
        %v3215 = vrot.slane %v3213, 4
        %v3216 = vshll.u32 %v2954, 16
        %v3218 = vrot.slane %v3216, 5
        %v3219 = vor.u32 %v3215, %v3218
        %v3220 = vrot.slane %v3219, 4
        %v3222 = vshll.u32 %v2955, 16
        %v3224 = vrot.slane %v3222, 5
        %v3225 = vsel %vm1079, %v3220, %v3224
        %v3226 = vshrl.u32 %v2955, 16
        %v3228 = vrot.slane %v3226, 4
        %v3229 = vor.u32 %v3228, %v3224
        %v3230 = vrot.slane %v3229, 4
        %v3232 = vshll.u32 %v2956, 16
        %v3234 = vrot.slane %v3232, 5
        %v3235 = vsel %vm1079, %v3230, %v3234
        %v3237 = vshrl.u32 %v2957, 16
        %v3239 = vrot.slane %v3237, 4
        %v3240 = vshll.u32 %v2957, 16
        %v3242 = vrot.slane %v3240, 5
        %v3243 = vor.u32 %v3239, %v3242
        %v3244 = vrot.slane %v3243, 4
        %v3246 = vshll.u32 %v2958, 16
        %v3248 = vrot.slane %v3246, 5
        %v3249 = vsel %vm1079, %v3244, %v3248
        %v3250 = vshrl.u32 %v2958, 16
        %v3252 = vrot.slane %v3250, 4
        %v3253 = vor.u32 %v3252, %v3248
        %v3254 = vrot.slane %v3253, 4
        %v3256 = vshll.u32 %v2959, 16
        %v3258 = vrot.slane %v3256, 5
        %v3259 = vsel %vm1079, %v3254, %v3258
        %v3261 = vshrl.u32 %v2960, 16
        %v3263 = vrot.slane %v3261, 4
        %v3264 = vshll.u32 %v2960, 16
        %v3266 = vrot.slane %v3264, 5
        %v3267 = vor.u32 %v3263, %v3266
        %v3268 = vrot.slane %v3267, 4
        %v3270 = vshll.u32 %v2961, 16
        %v3272 = vrot.slane %v3270, 5
        %v3273 = vsel %vm1079, %v3268, %v3272
        %v3274 = vshrl.u32 %v2961, 16
        %v3276 = vrot.slane %v3274, 4
        %v3277 = vor.u32 %v3276, %v3272
        %v3278 = vrot.slane %v3277, 4
        %v3280 = vshll.u32 %v2962, 16
        %v3282 = vrot.slane %v3280, 5
        %v3283 = vsel %vm1079, %v3278, %v3282
        %v3285 = vshrl.u32 %v2963, 16
        %v3287 = vrot.slane %v3285, 4
        %v3288 = vshll.u32 %v2963, 16
        %v3290 = vrot.slane %v3288, 5
        %v3291 = vor.u32 %v3287, %v3290
        %v3292 = vrot.slane %v3291, 4
        %v3294 = vshll.u32 %v2964, 16
        %v3296 = vrot.slane %v3294, 5
        %v3297 = vsel %vm1079, %v3292, %v3296
        %v3298 = vshrl.u32 %v2964, 16
        %v3300 = vrot.slane %v3298, 4
        %v3301 = vor.u32 %v3300, %v3296
        %v3302 = vrot.slane %v3301, 4
        %v3304 = vshll.u32 %v2965, 16
        %v3306 = vrot.slane %v3304, 5
        %v3307 = vsel %vm1079, %v3302, %v3306
        %v3309 = vshrl.u32 %v2966, 16
        %v3311 = vrot.slane %v3309, 4
        %v3312 = vshll.u32 %v2966, 16
        %v3314 = vrot.slane %v3312, 5
        %v3315 = vor.u32 %v3311, %v3314
        %v3316 = vrot.slane %v3315, 4
        %v3318 = vshll.u32 %v2967, 16
        %v3320 = vrot.slane %v3318, 5
        %v3321 = vsel %vm1079, %v3316, %v3320
        %v3322 = vshrl.u32 %v2967, 16
        %v3324 = vrot.slane %v3322, 4
        %v3325 = vor.u32 %v3324, %v3320
        %v3326 = vrot.slane %v3325, 4
        %v3328 = vshll.u32 %v2968, 16
        %v3330 = vrot.slane %v3328, 5
        %v3331 = vsel %vm1079, %v3326, %v3330
        %v3333 = vshrl.u32 %v2969, 16
        %v3335 = vrot.slane %v3333, 4
        %v3336 = vshll.u32 %v2969, 16
        %v3338 = vrot.slane %v3336, 5
        %v3339 = vor.u32 %v3335, %v3338
        %v3340 = vrot.slane %v3339, 4
        %v3342 = vshll.u32 %v2970, 16
        %v3344 = vrot.slane %v3342, 5
        %v3345 = vsel %vm1079, %v3340, %v3344
        %v3346 = vshrl.u32 %v2970, 16
        %v3348 = vrot.slane %v3346, 4
        %v3349 = vor.u32 %v3348, %v3344
        %v3350 = vrot.slane %v3349, 4
        %v3352 = vshll.u32 %v2971, 16
        %v3354 = vrot.slane %v3352, 5
        %v3355 = vsel %vm1079, %v3350, %v3354
        %v3356 = vunpack.c.l.b16 %v2985
        %v3357 = vunpack.c.l.b16 %v2995
        %v3358 = vunpack.c.l.b16 %v3009
        %v3359 = vunpack.c.l.b16 %v3019
        %v3360 = vunpack.c.l.b16 %v3033
        %v3361 = vunpack.c.l.b16 %v3043
        %v3362 = vunpack.c.l.b16 %v3057
        %v3363 = vunpack.c.l.b16 %v3067
        %v3364 = vunpack.c.l.b16 %v3081
        %v3365 = vunpack.c.l.b16 %v3091
        %v3366 = vunpack.c.l.b16 %v3105
        %v3367 = vunpack.c.l.b16 %v3115
        %v3368 = vunpack.c.l.b16 %v3129
        %v3369 = vunpack.c.l.b16 %v3139
        %v3370 = vunpack.c.l.b16 %v3153
        %v3371 = vunpack.c.l.b16 %v3163
        %v3372 = vunpack.c.l.b16 %v3177
        %v3373 = vunpack.c.l.b16 %v3187
        %v3374 = vunpack.c.l.b16 %v3201
        %v3375 = vunpack.c.l.b16 %v3211
        %v3376 = vunpack.c.l.b16 %v3225
        %v3377 = vunpack.c.l.b16 %v3235
        %v3378 = vunpack.c.l.b16 %v3249
        %v3379 = vunpack.c.l.b16 %v3259
        %v3380 = vunpack.c.l.b16 %v3273
        %v3381 = vunpack.c.l.b16 %v3283
        %v3382 = vunpack.c.l.b16 %v3297
        %v3383 = vunpack.c.l.b16 %v3307
        %v3384 = vunpack.c.l.b16 %v3321
        %v3385 = vunpack.c.l.b16 %v3331
        %v3386 = vunpack.c.l.b16 %v3345
        %v3387 = vunpack.c.l.b16 %v3355
        %v3388 = vpack.c.b16 %v3357, %v3356
        %v3389 = vpack.c.b16 %v3359, %v3358
        %v3390 = vpack.c.b16 %v3361, %v3360
        %v3391 = vpack.c.b16 %v3363, %v3362
        %v3392 = vpack.c.b16 %v3365, %v3364
        %v3393 = vpack.c.b16 %v3367, %v3366
        %v3394 = vpack.c.b16 %v3369, %v3368
        %v3395 = vpack.c.b16 %v3371, %v3370
        %v3396 = vpack.c.b16 %v3373, %v3372
        %v3397 = vpack.c.b16 %v3375, %v3374
        %v3398 = vpack.c.b16 %v3377, %v3376
        %v3399 = vpack.c.b16 %v3379, %v3378
        %v3400 = vpack.c.b16 %v3381, %v3380
        %v3401 = vpack.c.b16 %v3383, %v3382
        %v3402 = vpack.c.b16 %v3385, %v3384
        %v3403 = vpack.c.b16 %v3387, %v3386
        %3420 = vst [vmem:[#allocation3 + $0x38] sm:$0xff] %v3388
        %3421 = vst [vmem:[#allocation3 + $0x80] sm:$0xff] %v3389
        %3422 = vst [vmem:[#allocation3 + $0xc8] sm:$0xff] %v3390
        %3423 = vst [vmem:[#allocation3 + $0x110] sm:$0xff] %v3391
        %3424 = vst [vmem:[#allocation3 + $0x158] sm:$0xff] %v3392
        %3425 = vst [vmem:[#allocation3 + $0x1a0] sm:$0xff] %v3393
        %3426 = vst [vmem:[#allocation3 + $0x1e8] sm:$0xff] %v3394
        %3427 = vst [vmem:[#allocation3 + $0x230] sm:$0xff] %v3395
        %3428 = vst [vmem:[#allocation3 + $0x278] sm:$0xff] %v3396
        %3429 = vst [vmem:[#allocation3 + $0x2c0] sm:$0xff] %v3397
        %3430 = vst [vmem:[#allocation3 + $0x308] sm:$0xff] %v3398
        %3431 = vst [vmem:[#allocation3 + $0x350] sm:$0xff] %v3399
        %3432 = vst [vmem:[#allocation3 + $0x398] sm:$0xff] %v3400
        %3433 = vst [vmem:[#allocation3 + $0x3e0] sm:$0xff] %v3401
        %3434 = vst [vmem:[#allocation3 + $0x428] sm:$0xff] %v3402
        %3435 = vst [vmem:[#allocation3 + $0x470] sm:$0xff] %v3403
        %v3436 = vld [vmem:[%s2779] sm:$0xe]
        %v3437 = vld [vmem:[%s2779 + $0x4] sm:$0xf]
        %v3438 = vld [vmem:[%s2779 + $0x8] sm:$0x1]
        %v3439 = vld [vmem:[%s2779 + $0xc] sm:$0xe]
        %v3440 = vld [vmem:[%s2779 + $0x10] sm:$0xf]
        %v3441 = vld [vmem:[%s2779 + $0x14] sm:$0x1]
        %v3442 = vld [vmem:[%s2779 + $0x18] sm:$0xe]
        %v3443 = vld [vmem:[%s2779 + $0x1c] sm:$0xf]
        %v3444 = vld [vmem:[%s2779 + $0x20] sm:$0x1]
        %v3445 = vld [vmem:[%s2779 + $0x24] sm:$0xe]
        %v3446 = vld [vmem:[%s2779 + $0x28] sm:$0xf]
        %v3447 = vld [vmem:[%s2779 + $0x2c] sm:$0x1]
        %v3448 = vld [vmem:[%s2779 + $0x30] sm:$0xe]
        %v3449 = vld [vmem:[%s2779 + $0x34] sm:$0xf]
        %v3450 = vld [vmem:[%s2779 + $0x38] sm:$0x1]
        %v3451 = vld [vmem:[%s2779 + $0x3c] sm:$0xe]
        %v3452 = vld [vmem:[%s2779 + $0x40] sm:$0xf]
        %v3453 = vld [vmem:[%s2779 + $0x44] sm:$0x1]
        %v3454 = vld [vmem:[%s2779 + $0x48] sm:$0xe]
        %v3455 = vld [vmem:[%s2779 + $0x4c] sm:$0xf]
        %v3456 = vld [vmem:[%s2779 + $0x50] sm:$0x1]
        %v3457 = vld [vmem:[%s2779 + $0x54] sm:$0xe]
        %v3458 = vld [vmem:[%s2779 + $0x58] sm:$0xf]
        %v3459 = vld [vmem:[%s2779 + $0x5c] sm:$0x1]
        %v3460 = vld [vmem:[%s2779 + $0x60] sm:$0xe]
        %v3461 = vld [vmem:[%s2779 + $0x64] sm:$0xf]
        %v3462 = vld [vmem:[%s2779 + $0x68] sm:$0x1]
        %v3463 = vld [vmem:[%s2779 + $0x6c] sm:$0xe]
        %v3464 = vld [vmem:[%s2779 + $0x70] sm:$0xf]
        %v3465 = vld [vmem:[%s2779 + $0x74] sm:$0x1]
        %v3466 = vld [vmem:[%s2779 + $0x78] sm:$0xe]
        %v3467 = vld [vmem:[%s2779 + $0x7c] sm:$0xf]
        %v3468 = vld [vmem:[%s2779 + $0x80] sm:$0x1]
        %v3469 = vld [vmem:[%s2779 + $0x84] sm:$0xe]
        %v3470 = vld [vmem:[%s2779 + $0x88] sm:$0xf]
        %v3471 = vld [vmem:[%s2779 + $0x8c] sm:$0x1]
        %v3472 = vld [vmem:[%s2779 + $0x90] sm:$0xe]
        %v3473 = vld [vmem:[%s2779 + $0x94] sm:$0xf]
        %v3474 = vld [vmem:[%s2779 + $0x98] sm:$0x1]
        %v3475 = vld [vmem:[%s2779 + $0x9c] sm:$0xe]
        %v3476 = vld [vmem:[%s2779 + $0xa0] sm:$0xf]
        %v3477 = vld [vmem:[%s2779 + $0xa4] sm:$0x1]
        %v3478 = vld [vmem:[%s2779 + $0xa8] sm:$0xe]
        %v3479 = vld [vmem:[%s2779 + $0xac] sm:$0xf]
        %v3480 = vld [vmem:[%s2779 + $0xb0] sm:$0x1]
        %v3481 = vld [vmem:[%s2779 + $0xb4] sm:$0xe]
        %v3482 = vld [vmem:[%s2779 + $0xb8] sm:$0xf]
        %v3483 = vld [vmem:[%s2779 + $0xbc] sm:$0x1]
        %v3532 = vrot.slane %v3436, 5
        %v3533 = vrot.slane %v3532, 4
        %v3534 = vrot.slane %v3437, 5
        %v3535 = vsel %vm1642, %v3533, %v3534
        %v3536 = vrot.slane %v3534, 4
        %v3537 = vrot.slane %v3438, 5
        %v3538 = vsel %vm1642, %v3536, %v3537
        %v3539 = vrot.slane %v3439, 5
        %v3540 = vrot.slane %v3539, 4
        %v3541 = vrot.slane %v3440, 5
        %v3542 = vsel %vm1642, %v3540, %v3541
        %v3543 = vrot.slane %v3541, 4
        %v3544 = vrot.slane %v3441, 5
        %v3545 = vsel %vm1642, %v3543, %v3544
        %v3546 = vrot.slane %v3442, 5
        %v3547 = vrot.slane %v3546, 4
        %v3548 = vrot.slane %v3443, 5
        %v3549 = vsel %vm1642, %v3547, %v3548
        %v3550 = vrot.slane %v3548, 4
        %v3551 = vrot.slane %v3444, 5
        %v3552 = vsel %vm1642, %v3550, %v3551
        %v3553 = vrot.slane %v3445, 5
        %v3554 = vrot.slane %v3553, 4
        %v3555 = vrot.slane %v3446, 5
        %v3556 = vsel %vm1642, %v3554, %v3555
        %v3557 = vrot.slane %v3555, 4
        %v3558 = vrot.slane %v3447, 5
        %v3559 = vsel %vm1642, %v3557, %v3558
        %v3560 = vrot.slane %v3448, 5
        %v3561 = vrot.slane %v3560, 4
        %v3562 = vrot.slane %v3449, 5
        %v3563 = vsel %vm1642, %v3561, %v3562
        %v3564 = vrot.slane %v3562, 4
        %v3565 = vrot.slane %v3450, 5
        %v3566 = vsel %vm1642, %v3564, %v3565
        %v3567 = vrot.slane %v3451, 5
        %v3568 = vrot.slane %v3567, 4
        %v3569 = vrot.slane %v3452, 5
        %v3570 = vsel %vm1642, %v3568, %v3569
        %v3571 = vrot.slane %v3569, 4
        %v3572 = vrot.slane %v3453, 5
        %v3573 = vsel %vm1642, %v3571, %v3572
        %v3574 = vrot.slane %v3454, 5
        %v3575 = vrot.slane %v3574, 4
        %v3576 = vrot.slane %v3455, 5
        %v3577 = vsel %vm1642, %v3575, %v3576
        %v3578 = vrot.slane %v3576, 4
        %v3579 = vrot.slane %v3456, 5
        %v3580 = vsel %vm1642, %v3578, %v3579
        %v3581 = vrot.slane %v3457, 5
        %v3582 = vrot.slane %v3581, 4
        %v3583 = vrot.slane %v3458, 5
        %v3584 = vsel %vm1642, %v3582, %v3583
        %v3585 = vrot.slane %v3583, 4
        %v3586 = vrot.slane %v3459, 5
        %v3587 = vsel %vm1642, %v3585, %v3586
        %v3588 = vrot.slane %v3460, 5
        %v3589 = vrot.slane %v3588, 4
        %v3590 = vrot.slane %v3461, 5
        %v3591 = vsel %vm1642, %v3589, %v3590
        %v3592 = vrot.slane %v3590, 4
        %v3593 = vrot.slane %v3462, 5
        %v3594 = vsel %vm1642, %v3592, %v3593
        %v3595 = vrot.slane %v3463, 5
        %v3596 = vrot.slane %v3595, 4
        %v3597 = vrot.slane %v3464, 5
        %v3598 = vsel %vm1642, %v3596, %v3597
        %v3599 = vrot.slane %v3597, 4
        %v3600 = vrot.slane %v3465, 5
        %v3601 = vsel %vm1642, %v3599, %v3600
        %v3602 = vrot.slane %v3466, 5
        %v3603 = vrot.slane %v3602, 4
        %v3604 = vrot.slane %v3467, 5
        %v3605 = vsel %vm1642, %v3603, %v3604
        %v3606 = vrot.slane %v3604, 4
        %v3607 = vrot.slane %v3468, 5
        %v3608 = vsel %vm1642, %v3606, %v3607
        %v3609 = vrot.slane %v3469, 5
        %v3610 = vrot.slane %v3609, 4
        %v3611 = vrot.slane %v3470, 5
        %v3612 = vsel %vm1642, %v3610, %v3611
        %v3613 = vrot.slane %v3611, 4
        %v3614 = vrot.slane %v3471, 5
        %v3615 = vsel %vm1642, %v3613, %v3614
        %v3616 = vrot.slane %v3472, 5
        %v3617 = vrot.slane %v3616, 4
        %v3618 = vrot.slane %v3473, 5
        %v3619 = vsel %vm1642, %v3617, %v3618
        %v3620 = vrot.slane %v3618, 4
        %v3621 = vrot.slane %v3474, 5
        %v3622 = vsel %vm1642, %v3620, %v3621
        %v3623 = vrot.slane %v3475, 5
        %v3624 = vrot.slane %v3623, 4
        %v3625 = vrot.slane %v3476, 5
        %v3626 = vsel %vm1642, %v3624, %v3625
        %v3627 = vrot.slane %v3625, 4
        %v3628 = vrot.slane %v3477, 5
        %v3629 = vsel %vm1642, %v3627, %v3628
        %v3630 = vrot.slane %v3478, 5
        %v3631 = vrot.slane %v3630, 4
        %v3632 = vrot.slane %v3479, 5
        %v3633 = vsel %vm1642, %v3631, %v3632
        %v3634 = vrot.slane %v3632, 4
        %v3635 = vrot.slane %v3480, 5
        %v3636 = vsel %vm1642, %v3634, %v3635
        %v3637 = vrot.slane %v3481, 5
        %v3638 = vrot.slane %v3637, 4
        %v3639 = vrot.slane %v3482, 5
        %v3640 = vsel %vm1642, %v3638, %v3639
        %v3641 = vrot.slane %v3639, 4
        %v3642 = vrot.slane %v3483, 5
        %v3643 = vsel %vm1642, %v3641, %v3642
        %v3644 = vunpack.c.l.b16 %v3535
        %v3645 = vunpack.c.l.b16 %v3538
        %v3646 = vunpack.c.l.b16 %v3542
        %v3647 = vunpack.c.l.b16 %v3545
        %v3648 = vunpack.c.l.b16 %v3549
        %v3649 = vunpack.c.l.b16 %v3552
        %v3650 = vunpack.c.l.b16 %v3556
        %v3651 = vunpack.c.l.b16 %v3559
        %v3652 = vunpack.c.l.b16 %v3563
        %v3653 = vunpack.c.l.b16 %v3566
        %v3654 = vunpack.c.l.b16 %v3570
        %v3655 = vunpack.c.l.b16 %v3573
        %v3656 = vunpack.c.l.b16 %v3577
        %v3657 = vunpack.c.l.b16 %v3580
        %v3658 = vunpack.c.l.b16 %v3584
        %v3659 = vunpack.c.l.b16 %v3587
        %v3660 = vunpack.c.l.b16 %v3591
        %v3661 = vunpack.c.l.b16 %v3594
        %v3662 = vunpack.c.l.b16 %v3598
        %v3663 = vunpack.c.l.b16 %v3601
        %v3664 = vunpack.c.l.b16 %v3605
        %v3665 = vunpack.c.l.b16 %v3608
        %v3666 = vunpack.c.l.b16 %v3612
        %v3667 = vunpack.c.l.b16 %v3615
        %v3668 = vunpack.c.l.b16 %v3619
        %v3669 = vunpack.c.l.b16 %v3622
        %v3670 = vunpack.c.l.b16 %v3626
        %v3671 = vunpack.c.l.b16 %v3629
        %v3672 = vunpack.c.l.b16 %v3633
        %v3673 = vunpack.c.l.b16 %v3636
        %v3674 = vunpack.c.l.b16 %v3640
        %v3675 = vunpack.c.l.b16 %v3643
        %v3676 = vpack.c.b16 %v3645, %v3644
        %v3677 = vpack.c.b16 %v3647, %v3646
        %v3678 = vpack.c.b16 %v3649, %v3648
        %v3679 = vpack.c.b16 %v3651, %v3650
        %v3680 = vpack.c.b16 %v3653, %v3652
        %v3681 = vpack.c.b16 %v3655, %v3654
        %v3682 = vpack.c.b16 %v3657, %v3656
        %v3683 = vpack.c.b16 %v3659, %v3658
        %v3684 = vpack.c.b16 %v3661, %v3660
        %v3685 = vpack.c.b16 %v3663, %v3662
        %v3686 = vpack.c.b16 %v3665, %v3664
        %v3687 = vpack.c.b16 %v3667, %v3666
        %v3688 = vpack.c.b16 %v3669, %v3668
        %v3689 = vpack.c.b16 %v3671, %v3670
        %v3690 = vpack.c.b16 %v3673, %v3672
        %v3691 = vpack.c.b16 %v3675, %v3674
        %3708 = vst [vmem:[#allocation3 + $0x40] sm:$0xff] %v3676
        %3709 = vst [vmem:[#allocation3 + $0x88] sm:$0xff] %v3677
        %3710 = vst [vmem:[#allocation3 + $0xd0] sm:$0xff] %v3678
        %3711 = vst [vmem:[#allocation3 + $0x118] sm:$0xff] %v3679
        %3712 = vst [vmem:[#allocation3 + $0x160] sm:$0xff] %v3680
        %3713 = vst [vmem:[#allocation3 + $0x1a8] sm:$0xff] %v3681
        %3714 = vst [vmem:[#allocation3 + $0x1f0] sm:$0xff] %v3682
        %3715 = vst [vmem:[#allocation3 + $0x238] sm:$0xff] %v3683
        %3716 = vst [vmem:[#allocation3 + $0x280] sm:$0xff] %v3684
        %3717 = vst [vmem:[#allocation3 + $0x2c8] sm:$0xff] %v3685
        %3718 = vst [vmem:[#allocation3 + $0x310] sm:$0xff] %v3686
        %3719 = vst [vmem:[#allocation3 + $0x358] sm:$0xff] %v3687
        %3720 = vst [vmem:[#allocation3 + $0x3a0] sm:$0xff] %v3688
        %3721 = vst [vmem:[#allocation3 + $0x3e8] sm:$0xff] %v3689
        %3722 = vst [vmem:[#allocation3 + $0x430] sm:$0xff] %v3690
        %3723 = vst [vmem:[#allocation3 + $0x478] sm:$0xff] %v3691
        %v3724 = vld [vmem:[#allocation3] sm:$0xff]
        %v3725 = vld [vmem:[#allocation3 + $0x8] sm:$0xff]
        %v3726 = vld [vmem:[#allocation3 + $0x10] sm:$0xff]
        %v3727 = vld [vmem:[#allocation3 + $0x18] sm:$0xff]
        %v3728 = vld [vmem:[#allocation3 + $0x20] sm:$0xff]
        %v3729 = vld [vmem:[#allocation3 + $0x28] sm:$0xff]
        %v3730 = vld [vmem:[#allocation3 + $0x30] sm:$0xff]
        %v3731 = vld [vmem:[#allocation3 + $0x38] sm:$0xff]
        %v3732 = vld [vmem:[#allocation3 + $0x40] sm:$0xff]
        %v3733 = vld [vmem:[#allocation3 + $0x48] sm:$0xff]
        %v3734 = vld [vmem:[#allocation3 + $0x50] sm:$0xff]
        %v3735 = vld [vmem:[#allocation3 + $0x58] sm:$0xff]
        %v3736 = vld [vmem:[#allocation3 + $0x60] sm:$0xff]
        %v3737 = vld [vmem:[#allocation3 + $0x68] sm:$0xff]
        %v3738 = vld [vmem:[#allocation3 + $0x70] sm:$0xff]
        %v3739 = vld [vmem:[#allocation3 + $0x78] sm:$0xff]
        %v3740 = vld [vmem:[#allocation3 + $0x80] sm:$0xff]
        %v3741 = vld [vmem:[#allocation3 + $0x88] sm:$0xff]
        %v3742 = vld [vmem:[#allocation3 + $0x90] sm:$0xff]
        %v3743 = vld [vmem:[#allocation3 + $0x98] sm:$0xff]
        %v3744 = vld [vmem:[#allocation3 + $0xa0] sm:$0xff]
        %v3745 = vld [vmem:[#allocation3 + $0xa8] sm:$0xff]
        %v3746 = vld [vmem:[#allocation3 + $0xb0] sm:$0xff]
        %v3747 = vld [vmem:[#allocation3 + $0xb8] sm:$0xff]
        %v3748 = vld [vmem:[#allocation3 + $0xc0] sm:$0xff]
        %v3749 = vld [vmem:[#allocation3 + $0xc8] sm:$0xff]
        %v3750 = vld [vmem:[#allocation3 + $0xd0] sm:$0xff]
        %v3751 = vld [vmem:[#allocation3 + $0xd8] sm:$0xff]
        %v3752 = vld [vmem:[#allocation3 + $0xe0] sm:$0xff]
        %v3753 = vld [vmem:[#allocation3 + $0xe8] sm:$0xff]
        %v3754 = vld [vmem:[#allocation3 + $0xf0] sm:$0xff]
        %v3755 = vld [vmem:[#allocation3 + $0xf8] sm:$0xff]
        %v3756 = vld [vmem:[#allocation3 + $0x100] sm:$0xff]
        %v3757 = vld [vmem:[#allocation3 + $0x108] sm:$0xff]
        %v3758 = vld [vmem:[#allocation3 + $0x110] sm:$0xff]
        %v3759 = vld [vmem:[#allocation3 + $0x118] sm:$0xff]
        %v3760 = vld [vmem:[#allocation3 + $0x120] sm:$0xff]
        %v3761 = vld [vmem:[#allocation3 + $0x128] sm:$0xff]
        %v3762 = vld [vmem:[#allocation3 + $0x130] sm:$0xff]
        %v3763 = vld [vmem:[#allocation3 + $0x138] sm:$0xff]
        %v3764 = vld [vmem:[#allocation3 + $0x140] sm:$0xff]
        %v3765 = vld [vmem:[#allocation3 + $0x148] sm:$0xff]
        %v3766 = vld [vmem:[#allocation3 + $0x150] sm:$0xff]
        %v3767 = vld [vmem:[#allocation3 + $0x158] sm:$0xff]
        %v3768 = vld [vmem:[#allocation3 + $0x160] sm:$0xff]
        %v3769 = vld [vmem:[#allocation3 + $0x168] sm:$0xff]
        %v3770 = vld [vmem:[#allocation3 + $0x170] sm:$0xff]
        %v3771 = vld [vmem:[#allocation3 + $0x178] sm:$0xff]
        %v3772 = vld [vmem:[#allocation3 + $0x180] sm:$0xff]
        %v3773 = vld [vmem:[#allocation3 + $0x188] sm:$0xff]
        %v3774 = vld [vmem:[#allocation3 + $0x190] sm:$0xff]
        %v3775 = vld [vmem:[#allocation3 + $0x198] sm:$0xff]
        %v3776 = vld [vmem:[#allocation3 + $0x1a0] sm:$0xff]
        %v3777 = vld [vmem:[#allocation3 + $0x1a8] sm:$0xff]
        %v3778 = vld [vmem:[#allocation3 + $0x1b0] sm:$0xff]
        %v3779 = vld [vmem:[#allocation3 + $0x1b8] sm:$0xff]
        %v3780 = vld [vmem:[#allocation3 + $0x1c0] sm:$0xff]
        %v3781 = vld [vmem:[#allocation3 + $0x1c8] sm:$0xff]
        %v3782 = vld [vmem:[#allocation3 + $0x1d0] sm:$0xff]
        %v3783 = vld [vmem:[#allocation3 + $0x1d8] sm:$0xff]
        %v3784 = vld [vmem:[#allocation3 + $0x1e0] sm:$0xff]
        %v3785 = vld [vmem:[#allocation3 + $0x1e8] sm:$0xff]
        %v3786 = vld [vmem:[#allocation3 + $0x1f0] sm:$0xff]
        %v3787 = vld [vmem:[#allocation3 + $0x1f8] sm:$0xff]
        %v3788 = vld [vmem:[#allocation3 + $0x200] sm:$0xff]
        %v3789 = vld [vmem:[#allocation3 + $0x208] sm:$0xff]
        %v3790 = vld [vmem:[#allocation3 + $0x210] sm:$0xff]
        %v3791 = vld [vmem:[#allocation3 + $0x218] sm:$0xff]
        %v3792 = vld [vmem:[#allocation3 + $0x220] sm:$0xff]
        %v3793 = vld [vmem:[#allocation3 + $0x228] sm:$0xff]
        %v3794 = vld [vmem:[#allocation3 + $0x230] sm:$0xff]
        %v3795 = vld [vmem:[#allocation3 + $0x238] sm:$0xff]
        %v3796 = vld [vmem:[#allocation3 + $0x240] sm:$0xff]
        %v3797 = vld [vmem:[#allocation3 + $0x248] sm:$0xff]
        %v3798 = vld [vmem:[#allocation3 + $0x250] sm:$0xff]
        %v3799 = vld [vmem:[#allocation3 + $0x258] sm:$0xff]
        %v3800 = vld [vmem:[#allocation3 + $0x260] sm:$0xff]
        %v3801 = vld [vmem:[#allocation3 + $0x268] sm:$0xff]
        %v3802 = vld [vmem:[#allocation3 + $0x270] sm:$0xff]
        %v3803 = vld [vmem:[#allocation3 + $0x278] sm:$0xff]
        %v3804 = vld [vmem:[#allocation3 + $0x280] sm:$0xff]
        %v3805 = vld [vmem:[#allocation3 + $0x288] sm:$0xff]
        %v3806 = vld [vmem:[#allocation3 + $0x290] sm:$0xff]
        %v3807 = vld [vmem:[#allocation3 + $0x298] sm:$0xff]
        %v3808 = vld [vmem:[#allocation3 + $0x2a0] sm:$0xff]
        %v3809 = vld [vmem:[#allocation3 + $0x2a8] sm:$0xff]
        %v3810 = vld [vmem:[#allocation3 + $0x2b0] sm:$0xff]
        %v3811 = vld [vmem:[#allocation3 + $0x2b8] sm:$0xff]
        %v3812 = vld [vmem:[#allocation3 + $0x2c0] sm:$0xff]
        %v3813 = vld [vmem:[#allocation3 + $0x2c8] sm:$0xff]
        %v3814 = vld [vmem:[#allocation3 + $0x2d0] sm:$0xff]
        %v3815 = vld [vmem:[#allocation3 + $0x2d8] sm:$0xff]
        %v3816 = vld [vmem:[#allocation3 + $0x2e0] sm:$0xff]
        %v3817 = vld [vmem:[#allocation3 + $0x2e8] sm:$0xff]
        %v3818 = vld [vmem:[#allocation3 + $0x2f0] sm:$0xff]
        %v3819 = vld [vmem:[#allocation3 + $0x2f8] sm:$0xff]
        %v3820 = vld [vmem:[#allocation3 + $0x300] sm:$0xff]
        %v3821 = vld [vmem:[#allocation3 + $0x308] sm:$0xff]
        %v3822 = vld [vmem:[#allocation3 + $0x310] sm:$0xff]
        %v3823 = vld [vmem:[#allocation3 + $0x318] sm:$0xff]
        %v3824 = vld [vmem:[#allocation3 + $0x320] sm:$0xff]
        %v3825 = vld [vmem:[#allocation3 + $0x328] sm:$0xff]
        %v3826 = vld [vmem:[#allocation3 + $0x330] sm:$0xff]
        %v3827 = vld [vmem:[#allocation3 + $0x338] sm:$0xff]
        %v3828 = vld [vmem:[#allocation3 + $0x340] sm:$0xff]
        %v3829 = vld [vmem:[#allocation3 + $0x348] sm:$0xff]
        %v3830 = vld [vmem:[#allocation3 + $0x350] sm:$0xff]
        %v3831 = vld [vmem:[#allocation3 + $0x358] sm:$0xff]
        %v3832 = vld [vmem:[#allocation3 + $0x360] sm:$0xff]
        %v3833 = vld [vmem:[#allocation3 + $0x368] sm:$0xff]
        %v3834 = vld [vmem:[#allocation3 + $0x370] sm:$0xff]
        %v3835 = vld [vmem:[#allocation3 + $0x378] sm:$0xff]
        %v3836 = vld [vmem:[#allocation3 + $0x380] sm:$0xff]
        %v3837 = vld [vmem:[#allocation3 + $0x388] sm:$0xff]
        %v3838 = vld [vmem:[#allocation3 + $0x390] sm:$0xff]
        %v3839 = vld [vmem:[#allocation3 + $0x398] sm:$0xff]
        %v3840 = vld [vmem:[#allocation3 + $0x3a0] sm:$0xff]
        %v3841 = vld [vmem:[#allocation3 + $0x3a8] sm:$0xff]
        %v3842 = vld [vmem:[#allocation3 + $0x3b0] sm:$0xff]
        %v3843 = vld [vmem:[#allocation3 + $0x3b8] sm:$0xff]
        %v3844 = vld [vmem:[#allocation3 + $0x3c0] sm:$0xff]
        %v3845 = vld [vmem:[#allocation3 + $0x3c8] sm:$0xff]
        %v3846 = vld [vmem:[#allocation3 + $0x3d0] sm:$0xff]
        %v3847 = vld [vmem:[#allocation3 + $0x3d8] sm:$0xff]
        %v3848 = vld [vmem:[#allocation3 + $0x3e0] sm:$0xff]
        %v3849 = vld [vmem:[#allocation3 + $0x3e8] sm:$0xff]
        %v3850 = vld [vmem:[#allocation3 + $0x3f0] sm:$0xff]
        %v3851 = vld [vmem:[#allocation3 + $0x3f8] sm:$0xff]
        %v3852 = vld [vmem:[#allocation3 + $0x400] sm:$0xff]
        %v3853 = vld [vmem:[#allocation3 + $0x408] sm:$0xff]
        %v3854 = vld [vmem:[#allocation3 + $0x410] sm:$0xff]
        %v3855 = vld [vmem:[#allocation3 + $0x418] sm:$0xff]
        %v3856 = vld [vmem:[#allocation3 + $0x420] sm:$0xff]
        %v3857 = vld [vmem:[#allocation3 + $0x428] sm:$0xff]
        %v3858 = vld [vmem:[#allocation3 + $0x430] sm:$0xff]
        %v3859 = vld [vmem:[#allocation3 + $0x438] sm:$0xff]
        %v3860 = vld [vmem:[#allocation3 + $0x440] sm:$0xff]
        %v3861 = vld [vmem:[#allocation3 + $0x448] sm:$0xff]
        %v3862 = vld [vmem:[#allocation3 + $0x450] sm:$0xff]
        %v3863 = vld [vmem:[#allocation3 + $0x458] sm:$0xff]
        %v3864 = vld [vmem:[#allocation3 + $0x460] sm:$0xff]
        %v3865 = vld [vmem:[#allocation3 + $0x468] sm:$0xff]
        %v3866 = vld [vmem:[#allocation3 + $0x470] sm:$0xff]
        %v3867 = vld [vmem:[#allocation3 + $0x478] sm:$0xff]
        %v3868 = vld [vmem:[%s1] sm:$0xf]
        %v3869 = vld [vmem:[%s1 + $0x4] sm:$0xf]
        %v3870 = vld [vmem:[%s1 + $0x8] sm:$0xf]
        %v3871 = vld [vmem:[%s1 + $0xc] sm:$0xf]
        %v3872 = vld [vmem:[%s1 + $0x10] sm:$0xf]
        %v3873 = vld [vmem:[%s1 + $0x14] sm:$0xf]
        %v3874 = vld [vmem:[%s1 + $0x18] sm:$0xf]
        %v3875 = vld [vmem:[%s1 + $0x1c] sm:$0xf]
        %v3876 = vld [vmem:[%s1 + $0x20] sm:$0xf]
        %v3877 = vld [vmem:[%s1 + $0x24] sm:$0xf]
        %v3878 = vld [vmem:[%s1 + $0x28] sm:$0xf]
        %v3879 = vld [vmem:[%s1 + $0x2c] sm:$0xf]
        %v3880 = vld [vmem:[%s1 + $0x30] sm:$0xf]
        %v3881 = vld [vmem:[%s1 + $0x34] sm:$0xf]
        %v3882 = vld [vmem:[%s1 + $0x38] sm:$0xf]
        %v3883 = vld [vmem:[%s1 + $0x3c] sm:$0xf]
        %v3884 = vld [vmem:[%s1 + $0x40] sm:$0xf]
        %v3885 = vld [vmem:[%s1 + $0x44] sm:$0xf]
        %v3886 = vld [vmem:[%s1 + $0x48] sm:$0xf]
        %v3887 = vld [vmem:[%s1 + $0x4c] sm:$0xf]
        %v3888 = vld [vmem:[%s1 + $0x50] sm:$0xf]
        %v3889 = vld [vmem:[%s1 + $0x54] sm:$0xf]
        %v3890 = vld [vmem:[%s1 + $0x58] sm:$0xf]
        %v3891 = vld [vmem:[%s1 + $0x5c] sm:$0xf]
        %v3892 = vld [vmem:[%s1 + $0x60] sm:$0xf]
        %v3893 = vld [vmem:[%s1 + $0x64] sm:$0xf]
        %v3894 = vld [vmem:[%s1 + $0x68] sm:$0xf]
        %v3895 = vld [vmem:[%s1 + $0x6c] sm:$0xf]
        %v3896 = vld [vmem:[%s1 + $0x70] sm:$0xf]
        %v3897 = vld [vmem:[%s1 + $0x74] sm:$0xf]
        %v3898 = vld [vmem:[%s1 + $0x78] sm:$0xf]
        %v3899 = vld [vmem:[%s1 + $0x7c] sm:$0xf]
        %v3900 = vld [vmem:[%s1 + $0x80] sm:$0xf]
        %v3901 = vld [vmem:[%s1 + $0x84] sm:$0xf]
        %v3902 = vld [vmem:[%s1 + $0x88] sm:$0xf]
        %v3903 = vld [vmem:[%s1 + $0x8c] sm:$0xf]
        %v3904 = vld [vmem:[%s1 + $0x90] sm:$0xf]
        %v3905 = vld [vmem:[%s1 + $0x94] sm:$0xf]
        %v3906 = vld [vmem:[%s1 + $0x98] sm:$0xf]
        %v3907 = vld [vmem:[%s1 + $0x9c] sm:$0xf]
        %v3908 = vld [vmem:[%s1 + $0xa0] sm:$0xf]
        %v3909 = vld [vmem:[%s1 + $0xa4] sm:$0xf]
        %v3910 = vld [vmem:[%s1 + $0xa8] sm:$0xf]
        %v3911 = vld [vmem:[%s1 + $0xac] sm:$0xf]
        %v3912 = vld [vmem:[%s1 + $0xb0] sm:$0xf]
        %v3913 = vld [vmem:[%s1 + $0xb4] sm:$0xf]
        %v3914 = vld [vmem:[%s1 + $0xb8] sm:$0xf]
        %v3915 = vld [vmem:[%s1 + $0xbc] sm:$0xf]
        %v3916 = vld [vmem:[%s1 + $0xc0] sm:$0xf]
        %v3917 = vld [vmem:[%s1 + $0xc4] sm:$0xf]
        %v3918 = vld [vmem:[%s1 + $0xc8] sm:$0xf]
        %v3919 = vld [vmem:[%s1 + $0xcc] sm:$0xf]
        %v3920 = vld [vmem:[%s1 + $0xd0] sm:$0xf]
        %v3921 = vld [vmem:[%s1 + $0xd4] sm:$0xf]
        %v3922 = vld [vmem:[%s1 + $0xd8] sm:$0xf]
        %v3923 = vld [vmem:[%s1 + $0xdc] sm:$0xf]
        %v3924 = vld [vmem:[%s1 + $0xe0] sm:$0xf]
        %v3925 = vld [vmem:[%s1 + $0xe4] sm:$0xf]
        %v3926 = vld [vmem:[%s1 + $0xe8] sm:$0xf]
        %v3927 = vld [vmem:[%s1 + $0xec] sm:$0xf]
        %v3928 = vld [vmem:[%s1 + $0xf0] sm:$0xf]
        %v3929 = vld [vmem:[%s1 + $0xf4] sm:$0xf]
        %v3930 = vld [vmem:[%s1 + $0xf8] sm:$0xf]
        %v3931 = vld [vmem:[%s1 + $0xfc] sm:$0xf]
        %v3932 = vld [vmem:[%s1 + $0x100] sm:$0xf]
        %v3933 = vld [vmem:[%s1 + $0x104] sm:$0xf]
        %v3934 = vld [vmem:[%s1 + $0x108] sm:$0xf]
        %v3935 = vld [vmem:[%s1 + $0x10c] sm:$0xf]
        %v3936 = vld [vmem:[%s1 + $0x110] sm:$0xf]
        %v3937 = vld [vmem:[%s1 + $0x114] sm:$0xf]
        %v3938 = vld [vmem:[%s1 + $0x118] sm:$0xf]
        %v3939 = vld [vmem:[%s1 + $0x11c] sm:$0xf]
        %v3940 = vld [vmem:[%s1 + $0x120] sm:$0xf]
        %v3941 = vld [vmem:[%s1 + $0x124] sm:$0xf]
        %v3942 = vld [vmem:[%s1 + $0x128] sm:$0xf]
        %v3943 = vld [vmem:[%s1 + $0x12c] sm:$0xf]
        %v3944 = vld [vmem:[%s1 + $0x130] sm:$0xf]
        %v3945 = vld [vmem:[%s1 + $0x134] sm:$0xf]
        %v3946 = vld [vmem:[%s1 + $0x138] sm:$0xf]
        %v3947 = vld [vmem:[%s1 + $0x13c] sm:$0xf]
        %v3948 = vld [vmem:[%s1 + $0x140] sm:$0xf]
        %v3949 = vld [vmem:[%s1 + $0x144] sm:$0xf]
        %v3950 = vld [vmem:[%s1 + $0x148] sm:$0xf]
        %v3951 = vld [vmem:[%s1 + $0x14c] sm:$0xf]
        %v3952 = vld [vmem:[%s1 + $0x150] sm:$0xf]
        %v3953 = vld [vmem:[%s1 + $0x154] sm:$0xf]
        %v3954 = vld [vmem:[%s1 + $0x158] sm:$0xf]
        %v3955 = vld [vmem:[%s1 + $0x15c] sm:$0xf]
        %v3956 = vld [vmem:[%s1 + $0x160] sm:$0xf]
        %v3957 = vld [vmem:[%s1 + $0x164] sm:$0xf]
        %v3958 = vld [vmem:[%s1 + $0x168] sm:$0xf]
        %v3959 = vld [vmem:[%s1 + $0x16c] sm:$0xf]
        %v3960 = vld [vmem:[%s1 + $0x170] sm:$0xf]
        %v3961 = vld [vmem:[%s1 + $0x174] sm:$0xf]
        %v3962 = vld [vmem:[%s1 + $0x178] sm:$0xf]
        %v3963 = vld [vmem:[%s1 + $0x17c] sm:$0xf]
        %v3964 = vld [vmem:[%s1 + $0x180] sm:$0xf]
        %v3965 = vld [vmem:[%s1 + $0x184] sm:$0xf]
        %v3966 = vld [vmem:[%s1 + $0x188] sm:$0xf]
        %v3967 = vld [vmem:[%s1 + $0x18c] sm:$0xf]
        %v3968 = vld [vmem:[%s1 + $0x190] sm:$0xf]
        %v3969 = vld [vmem:[%s1 + $0x194] sm:$0xf]
        %v3970 = vld [vmem:[%s1 + $0x198] sm:$0xf]
        %v3971 = vld [vmem:[%s1 + $0x19c] sm:$0xf]
        %v3972 = vld [vmem:[%s1 + $0x1a0] sm:$0xf]
        %v3973 = vld [vmem:[%s1 + $0x1a4] sm:$0xf]
        %v3974 = vld [vmem:[%s1 + $0x1a8] sm:$0xf]
        %v3975 = vld [vmem:[%s1 + $0x1ac] sm:$0xf]
        %v3976 = vld [vmem:[%s1 + $0x1b0] sm:$0xf]
        %v3977 = vld [vmem:[%s1 + $0x1b4] sm:$0xf]
        %v3978 = vld [vmem:[%s1 + $0x1b8] sm:$0xf]
        %v3979 = vld [vmem:[%s1 + $0x1bc] sm:$0xf]
        %v3980 = vld [vmem:[%s1 + $0x1c0] sm:$0xf]
        %v3981 = vld [vmem:[%s1 + $0x1c4] sm:$0xf]
        %v3982 = vld [vmem:[%s1 + $0x1c8] sm:$0xf]
        %v3983 = vld [vmem:[%s1 + $0x1cc] sm:$0xf]
        %v3984 = vld [vmem:[%s1 + $0x1d0] sm:$0xf]
        %v3985 = vld [vmem:[%s1 + $0x1d4] sm:$0xf]
        %v3986 = vld [vmem:[%s1 + $0x1d8] sm:$0xf]
        %v3987 = vld [vmem:[%s1 + $0x1dc] sm:$0xf]
        %v3988 = vld [vmem:[%s1 + $0x1e0] sm:$0xf]
        %v3989 = vld [vmem:[%s1 + $0x1e4] sm:$0xf]
        %v3990 = vld [vmem:[%s1 + $0x1e8] sm:$0xf]
        %v3991 = vld [vmem:[%s1 + $0x1ec] sm:$0xf]
        %v3992 = vld [vmem:[%s1 + $0x1f0] sm:$0xf]
        %v3993 = vld [vmem:[%s1 + $0x1f4] sm:$0xf]
        %v3994 = vld [vmem:[%s1 + $0x1f8] sm:$0xf]
        %v3995 = vld [vmem:[%s1 + $0x1fc] sm:$0xf]
        %v3996 = vld [vmem:[%s1 + $0x200] sm:$0xf]
        %v3997 = vld [vmem:[%s1 + $0x204] sm:$0xf]
        %v3998 = vld [vmem:[%s1 + $0x208] sm:$0xf]
        %v3999 = vld [vmem:[%s1 + $0x20c] sm:$0xf]
        %v4000 = vld [vmem:[%s1 + $0x210] sm:$0xf]
        %v4001 = vld [vmem:[%s1 + $0x214] sm:$0xf]
        %v4002 = vld [vmem:[%s1 + $0x218] sm:$0xf]
        %v4003 = vld [vmem:[%s1 + $0x21c] sm:$0xf]
        %v4004 = vld [vmem:[%s1 + $0x220] sm:$0xf]
        %v4005 = vld [vmem:[%s1 + $0x224] sm:$0xf]
        %v4006 = vld [vmem:[%s1 + $0x228] sm:$0xf]
        %v4007 = vld [vmem:[%s1 + $0x22c] sm:$0xf]
        %v4008 = vld [vmem:[%s1 + $0x230] sm:$0xf]
        %v4009 = vld [vmem:[%s1 + $0x234] sm:$0xf]
        %v4010 = vld [vmem:[%s1 + $0x238] sm:$0xf]
        %v4011 = vld [vmem:[%s1 + $0x23c] sm:$0xf]
        %v4012 = vld [vmem:[%s3] sm:$0x1]
        %v4014 = vlaneseq
        %v4015 = vshrl.u32 %v4014, 7
        %v4016 = vsub.s32 0, %v4015
        %v4017 = vrot.slane %v4012, %v4016
        %v4163 = vunpack.c.l.b16 %v3868
        %v4164 = vunpack.c.l.b16 %v3869
        %v4165 = vunpack.c.l.b16 %v3870
        %v4166 = vunpack.c.l.b16 %v3871
        %v4167 = vunpack.c.l.b16 %v3872
        %v4168 = vunpack.c.l.b16 %v3873
        %v4169 = vunpack.c.l.b16 %v3874
        %v4170 = vunpack.c.l.b16 %v3875
        %v4171 = vunpack.c.l.b16 %v3876
        %v4172 = vunpack.c.l.b16 %v3877
        %v4173 = vunpack.c.l.b16 %v3878
        %v4174 = vunpack.c.l.b16 %v3879
        %v4175 = vunpack.c.l.b16 %v3880
        %v4176 = vunpack.c.l.b16 %v3881
        %v4177 = vunpack.c.l.b16 %v3882
        %v4178 = vunpack.c.l.b16 %v3883
        %v4179 = vunpack.c.l.b16 %v3884
        %v4180 = vunpack.c.l.b16 %v3885
        %v4181 = vunpack.c.l.b16 %v3886
        %v4182 = vunpack.c.l.b16 %v3887
        %v4183 = vunpack.c.l.b16 %v3888
        %v4184 = vunpack.c.l.b16 %v3889
        %v4185 = vunpack.c.l.b16 %v3890
        %v4186 = vunpack.c.l.b16 %v3891
        %v4187 = vunpack.c.l.b16 %v3892
        %v4188 = vunpack.c.l.b16 %v3893
        %v4189 = vunpack.c.l.b16 %v3894
        %v4190 = vunpack.c.l.b16 %v3895
        %v4191 = vunpack.c.l.b16 %v3896
        %v4192 = vunpack.c.l.b16 %v3897
        %v4193 = vunpack.c.l.b16 %v3898
        %v4194 = vunpack.c.l.b16 %v3899
        %v4195 = vunpack.c.l.b16 %v3900
        %v4196 = vunpack.c.l.b16 %v3901
        %v4197 = vunpack.c.l.b16 %v3902
        %v4198 = vunpack.c.l.b16 %v3903
        %v4199 = vunpack.c.l.b16 %v3904
        %v4200 = vunpack.c.l.b16 %v3905
        %v4201 = vunpack.c.l.b16 %v3906
        %v4202 = vunpack.c.l.b16 %v3907
        %v4203 = vunpack.c.l.b16 %v3908
        %v4204 = vunpack.c.l.b16 %v3909
        %v4205 = vunpack.c.l.b16 %v3910
        %v4206 = vunpack.c.l.b16 %v3911
        %v4207 = vunpack.c.l.b16 %v3912
        %v4208 = vunpack.c.l.b16 %v3913
        %v4209 = vunpack.c.l.b16 %v3914
        %v4210 = vunpack.c.l.b16 %v3915
        %v4211 = vunpack.c.l.b16 %v3916
        %v4212 = vunpack.c.l.b16 %v3917
        %v4213 = vunpack.c.l.b16 %v3918
        %v4214 = vunpack.c.l.b16 %v3919
        %v4215 = vunpack.c.l.b16 %v3920
        %v4216 = vunpack.c.l.b16 %v3921
        %v4217 = vunpack.c.l.b16 %v3922
        %v4218 = vunpack.c.l.b16 %v3923
        %v4219 = vunpack.c.l.b16 %v3924
        %v4220 = vunpack.c.l.b16 %v3925
        %v4221 = vunpack.c.l.b16 %v3926
        %v4222 = vunpack.c.l.b16 %v3927
        %v4223 = vunpack.c.l.b16 %v3928
        %v4224 = vunpack.c.l.b16 %v3929
        %v4225 = vunpack.c.l.b16 %v3930
        %v4226 = vunpack.c.l.b16 %v3931
        %v4227 = vunpack.c.l.b16 %v3932
        %v4228 = vunpack.c.l.b16 %v3933
        %v4229 = vunpack.c.l.b16 %v3934
        %v4230 = vunpack.c.l.b16 %v3935
        %v4231 = vunpack.c.l.b16 %v3936
        %v4232 = vunpack.c.l.b16 %v3937
        %v4233 = vunpack.c.l.b16 %v3938
        %v4234 = vunpack.c.l.b16 %v3939
        %v4235 = vunpack.c.l.b16 %v3940
        %v4236 = vunpack.c.l.b16 %v3941
        %v4237 = vunpack.c.l.b16 %v3942
        %v4238 = vunpack.c.l.b16 %v3943
        %v4239 = vunpack.c.l.b16 %v3944
        %v4240 = vunpack.c.l.b16 %v3945
        %v4241 = vunpack.c.l.b16 %v3946
        %v4242 = vunpack.c.l.b16 %v3947
        %v4243 = vunpack.c.l.b16 %v3948
        %v4244 = vunpack.c.l.b16 %v3949
        %v4245 = vunpack.c.l.b16 %v3950
        %v4246 = vunpack.c.l.b16 %v3951
        %v4247 = vunpack.c.l.b16 %v3952
        %v4248 = vunpack.c.l.b16 %v3953
        %v4249 = vunpack.c.l.b16 %v3954
        %v4250 = vunpack.c.l.b16 %v3955
        %v4251 = vunpack.c.l.b16 %v3956
        %v4252 = vunpack.c.l.b16 %v3957
        %v4253 = vunpack.c.l.b16 %v3958
        %v4254 = vunpack.c.l.b16 %v3959
        %v4255 = vunpack.c.l.b16 %v3960
        %v4256 = vunpack.c.l.b16 %v3961
        %v4257 = vunpack.c.l.b16 %v3962
        %v4258 = vunpack.c.l.b16 %v3963
        %v4259 = vunpack.c.l.b16 %v3964
        %v4260 = vunpack.c.l.b16 %v3965
        %v4261 = vunpack.c.l.b16 %v3966
        %v4262 = vunpack.c.l.b16 %v3967
        %v4263 = vunpack.c.l.b16 %v3968
        %v4264 = vunpack.c.l.b16 %v3969
        %v4265 = vunpack.c.l.b16 %v3970
        %v4266 = vunpack.c.l.b16 %v3971
        %v4267 = vunpack.c.l.b16 %v3972
        %v4268 = vunpack.c.l.b16 %v3973
        %v4269 = vunpack.c.l.b16 %v3974
        %v4270 = vunpack.c.l.b16 %v3975
        %v4271 = vunpack.c.l.b16 %v3976
        %v4272 = vunpack.c.l.b16 %v3977
        %v4273 = vunpack.c.l.b16 %v3978
        %v4274 = vunpack.c.l.b16 %v3979
        %v4275 = vunpack.c.l.b16 %v3980
        %v4276 = vunpack.c.l.b16 %v3981
        %v4277 = vunpack.c.l.b16 %v3982
        %v4278 = vunpack.c.l.b16 %v3983
        %v4279 = vunpack.c.l.b16 %v3984
        %v4280 = vunpack.c.l.b16 %v3985
        %v4281 = vunpack.c.l.b16 %v3986
        %v4282 = vunpack.c.l.b16 %v3987
        %v4283 = vunpack.c.l.b16 %v3988
        %v4284 = vunpack.c.l.b16 %v3989
        %v4285 = vunpack.c.l.b16 %v3990
        %v4286 = vunpack.c.l.b16 %v3991
        %v4287 = vunpack.c.l.b16 %v3992
        %v4288 = vunpack.c.l.b16 %v3993
        %v4289 = vunpack.c.l.b16 %v3994
        %v4290 = vunpack.c.l.b16 %v3995
        %v4291 = vunpack.c.l.b16 %v3996
        %v4292 = vunpack.c.l.b16 %v3997
        %v4293 = vunpack.c.l.b16 %v3998
        %v4294 = vunpack.c.l.b16 %v3999
        %v4295 = vunpack.c.l.b16 %v4000
        %v4296 = vunpack.c.l.b16 %v4001
        %v4297 = vunpack.c.l.b16 %v4002
        %v4298 = vunpack.c.l.b16 %v4003
        %v4299 = vunpack.c.l.b16 %v4004
        %v4300 = vunpack.c.l.b16 %v4005
        %v4301 = vunpack.c.l.b16 %v4006
        %v4302 = vunpack.c.l.b16 %v4007
        %v4303 = vunpack.c.l.b16 %v4008
        %v4304 = vunpack.c.l.b16 %v4009
        %v4305 = vunpack.c.l.b16 %v4010
        %v4306 = vunpack.c.l.b16 %v4011
        %v4307 = vpack.c.b16 %v4164, %v4163
        %v4308 = vpack.c.b16 %v4166, %v4165
        %v4309 = vpack.c.b16 %v4168, %v4167
        %v4310 = vpack.c.b16 %v4170, %v4169
        %v4311 = vpack.c.b16 %v4172, %v4171
        %v4312 = vpack.c.b16 %v4174, %v4173
        %v4313 = vpack.c.b16 %v4176, %v4175
        %v4314 = vpack.c.b16 %v4178, %v4177
        %v4315 = vpack.c.b16 %v4180, %v4179
        %v4316 = vpack.c.b16 %v4182, %v4181
        %v4317 = vpack.c.b16 %v4184, %v4183
        %v4318 = vpack.c.b16 %v4186, %v4185
        %v4319 = vpack.c.b16 %v4188, %v4187
        %v4320 = vpack.c.b16 %v4190, %v4189
        %v4321 = vpack.c.b16 %v4192, %v4191
        %v4322 = vpack.c.b16 %v4194, %v4193
        %v4323 = vpack.c.b16 %v4196, %v4195
        %v4324 = vpack.c.b16 %v4198, %v4197
        %v4325 = vpack.c.b16 %v4200, %v4199
        %v4326 = vpack.c.b16 %v4202, %v4201
        %v4327 = vpack.c.b16 %v4204, %v4203
        %v4328 = vpack.c.b16 %v4206, %v4205
        %v4329 = vpack.c.b16 %v4208, %v4207
        %v4330 = vpack.c.b16 %v4210, %v4209
        %v4331 = vpack.c.b16 %v4212, %v4211
        %v4332 = vpack.c.b16 %v4214, %v4213
        %v4333 = vpack.c.b16 %v4216, %v4215
        %v4334 = vpack.c.b16 %v4218, %v4217
        %v4335 = vpack.c.b16 %v4220, %v4219
        %v4336 = vpack.c.b16 %v4222, %v4221
        %v4337 = vpack.c.b16 %v4224, %v4223
        %v4338 = vpack.c.b16 %v4226, %v4225
        %v4339 = vpack.c.b16 %v4228, %v4227
        %v4340 = vpack.c.b16 %v4230, %v4229
        %v4341 = vpack.c.b16 %v4232, %v4231
        %v4342 = vpack.c.b16 %v4234, %v4233
        %v4343 = vpack.c.b16 %v4236, %v4235
        %v4344 = vpack.c.b16 %v4238, %v4237
        %v4345 = vpack.c.b16 %v4240, %v4239
        %v4346 = vpack.c.b16 %v4242, %v4241
        %v4347 = vpack.c.b16 %v4244, %v4243
        %v4348 = vpack.c.b16 %v4246, %v4245
        %v4349 = vpack.c.b16 %v4248, %v4247
        %v4350 = vpack.c.b16 %v4250, %v4249
        %v4351 = vpack.c.b16 %v4252, %v4251
        %v4352 = vpack.c.b16 %v4254, %v4253
        %v4353 = vpack.c.b16 %v4256, %v4255
        %v4354 = vpack.c.b16 %v4258, %v4257
        %v4355 = vpack.c.b16 %v4260, %v4259
        %v4356 = vpack.c.b16 %v4262, %v4261
        %v4357 = vpack.c.b16 %v4264, %v4263
        %v4358 = vpack.c.b16 %v4266, %v4265
        %v4359 = vpack.c.b16 %v4268, %v4267
        %v4360 = vpack.c.b16 %v4270, %v4269
        %v4361 = vpack.c.b16 %v4272, %v4271
        %v4362 = vpack.c.b16 %v4274, %v4273
        %v4363 = vpack.c.b16 %v4276, %v4275
        %v4364 = vpack.c.b16 %v4278, %v4277
        %v4365 = vpack.c.b16 %v4280, %v4279
        %v4366 = vpack.c.b16 %v4282, %v4281
        %v4367 = vpack.c.b16 %v4284, %v4283
        %v4368 = vpack.c.b16 %v4286, %v4285
        %v4369 = vpack.c.b16 %v4288, %v4287
        %v4370 = vpack.c.b16 %v4290, %v4289
        %v4371 = vpack.c.b16 %v4292, %v4291
        %v4372 = vpack.c.b16 %v4294, %v4293
        %v4373 = vpack.c.b16 %v4296, %v4295
        %v4374 = vpack.c.b16 %v4298, %v4297
        %v4375 = vpack.c.b16 %v4300, %v4299
        %v4376 = vpack.c.b16 %v4302, %v4301
        %v4377 = vpack.c.b16 %v4304, %v4303
        %v4378 = vpack.c.b16 %v4306, %v4305
        %4451 = vmatprep.subr.bf16.mxu0 0
        %4452 = vmatpush1.bf16.msra.mxu0 %v4307
        %4453 = vmatprep.subr.bf16.mxu0 0
        %4454 = vmatpush1.bf16.msra.mxu0 %v4308
        %4455 = vmatprep.subr.bf16.mxu0 0
        %4456 = vmatpush1.bf16.msra.mxu0 %v4309
        %4457 = vmatprep.subr.bf16.mxu0 0
        %4458 = vmatpush1.bf16.msra.mxu0 %v4310
        %4459 = vmatprep.subr.bf16.mxu0 0
        %4460 = vmatpush1.bf16.msra.mxu0 %v4311
        %4461 = vmatprep.subr.bf16.mxu0 0
        %4462 = vmatpush1.bf16.msra.mxu0 %v4312
        %4463 = vmatprep.subr.bf16.mxu0 0
        %4464 = vmatpush1.bf16.msra.mxu0 %v4313
        %4465 = vmatprep.subr.bf16.mxu0 0
        %4466 = vmatpush1.bf16.msra.mxu0 %v4314
        %4467 = vmatprep.subr.bf16.mxu0 0
        %4468 = vmatpush1.bf16.msra.mxu0 %v4315
        %4469 = vmatprep.subr.bf16.mxu0 0
        %4470 = vmatpush1.bf16.msra.mxu0 %v4316
        %4471 = vmatprep.subr.bf16.mxu0 0
        %4472 = vmatpush1.bf16.msra.mxu0 %v4317
        %4473 = vmatprep.subr.bf16.mxu0 0
        %4474 = vmatpush1.bf16.msra.mxu0 %v4318
        %4475 = vmatprep.subr.bf16.mxu0 0
        %4476 = vmatpush1.bf16.msra.mxu0 %v4319
        %4477 = vmatprep.subr.bf16.mxu0 0
        %4478 = vmatpush1.bf16.msra.mxu0 %v4320
        %4479 = vmatprep.subr.bf16.mxu0 0
        %4480 = vmatpush1.bf16.msra.mxu0 %v4321
        %4481 = vmatprep.subr.bf16.mxu0 0
        %4482 = vmatpush1.bf16.msra.mxu0 %v4322
        %4483 = vmatprep.mubr.bf16.mxu0 %v3725
        %4484 = vmatmul.mubr.bf16.gmra.mrb[0].mxu0 %v3724
        %v4485 = vpop.f32.mrb[0].mxu0
        %v4486 = vadd.f32 %v4017, %v4485
        %v4487 = vpop.f32.mrb[0].mxu0
        %v4488 = vpop.f32.mrb[0].mxu0
        %v4489 = vadd.f32 %v4017, %v4488
        %v4490 = vpop.f32.mrb[0].mxu0
        %4491 = vmatprep.mubr.bf16.mxu0 %v3734
        %4492 = vmatmul.mubr.bf16.gmra.mrb[0].mxu0 %v3733
        %v4493 = vpop.f32.mrb[0].mxu0
        %v4494 = vadd.f32 %v4017, %v4493
        %v4495 = vpop.f32.mrb[0].mxu0
        %v4496 = vpop.f32.mrb[0].mxu0
        %v4497 = vadd.f32 %v4017, %v4496
        %v4498 = vpop.f32.mrb[0].mxu0
        %4499 = vmatprep.mubr.bf16.mxu0 %v3743
        %4500 = vmatmul.mubr.bf16.gmra.mrb[0].mxu0 %v3742
        %v4501 = vpop.f32.mrb[0].mxu0
        %v4502 = vadd.f32 %v4017, %v4501
        %v4503 = vpop.f32.mrb[0].mxu0
        %v4504 = vpop.f32.mrb[0].mxu0
        %v4505 = vadd.f32 %v4017, %v4504
        %v4506 = vpop.f32.mrb[0].mxu0
        %4507 = vmatprep.mubr.bf16.mxu0 %v3752
        %4508 = vmatmul.mubr.bf16.gmra.mrb[0].mxu0 %v3751
        %v4509 = vpop.f32.mrb[0].mxu0
        %v4510 = vadd.f32 %v4017, %v4509
        %v4511 = vpop.f32.mrb[0].mxu0
        %v4512 = vpop.f32.mrb[0].mxu0
        %v4513 = vadd.f32 %v4017, %v4512
        %v4514 = vpop.f32.mrb[0].mxu0
        %4515 = vmatprep.mubr.bf16.mxu0 %v3761
        %4516 = vmatmul.mubr.bf16.gmra.mrb[0].mxu0 %v3760
        %v4517 = vpop.f32.mrb[0].mxu0
        %v4518 = vadd.f32 %v4017, %v4517
        %v4519 = vpop.f32.mrb[0].mxu0
        %v4520 = vpop.f32.mrb[0].mxu0
        %v4521 = vadd.f32 %v4017, %v4520
        %v4522 = vpop.f32.mrb[0].mxu0
        %4523 = vmatprep.mubr.bf16.mxu0 %v3770
        %4524 = vmatmul.mubr.bf16.gmra.mrb[0].mxu0 %v3769
        %v4525 = vpop.f32.mrb[0].mxu0
        %v4526 = vadd.f32 %v4017, %v4525
        %v4527 = vpop.f32.mrb[0].mxu0
        %v4528 = vpop.f32.mrb[0].mxu0
        %v4529 = vadd.f32 %v4017, %v4528
        %v4530 = vpop.f32.mrb[0].mxu0
        %4531 = vmatprep.mubr.bf16.mxu0 %v3779
        %4532 = vmatmul.mubr.bf16.gmra.mrb[0].mxu0 %v3778
        %v4533 = vpop.f32.mrb[0].mxu0
        %v4534 = vadd.f32 %v4017, %v4533
        %v4535 = vpop.f32.mrb[0].mxu0
        %v4536 = vpop.f32.mrb[0].mxu0
        %v4537 = vadd.f32 %v4017, %v4536
        %v4538 = vpop.f32.mrb[0].mxu0
        %4539 = vmatprep.mubr.bf16.mxu0 %v3788
        %4540 = vmatmul.mubr.bf16.gmra.mrb[0].mxu0 %v3787
        %v4541 = vpop.f32.mrb[0].mxu0
        %v4542 = vadd.f32 %v4017, %v4541
        %v4543 = vpop.f32.mrb[0].mxu0
        %v4544 = vpop.f32.mrb[0].mxu0
        %v4545 = vadd.f32 %v4017, %v4544
        %v4546 = vpop.f32.mrb[0].mxu0
        %4547 = vmatprep.mubr.bf16.mxu0 %v3797
        %4548 = vmatmul.mubr.bf16.gmra.mrb[0].mxu0 %v3796
        %v4549 = vpop.f32.mrb[0].mxu0
        %v4550 = vadd.f32 %v4017, %v4549
        %v4551 = vpop.f32.mrb[0].mxu0
        %v4552 = vpop.f32.mrb[0].mxu0
        %v4553 = vadd.f32 %v4017, %v4552
        %v4554 = vpop.f32.mrb[0].mxu0
        %4555 = vmatprep.mubr.bf16.mxu0 %v3806
        %4556 = vmatmul.mubr.bf16.gmra.mrb[0].mxu0 %v3805
        %v4557 = vpop.f32.mrb[0].mxu0
        %v4558 = vadd.f32 %v4017, %v4557
        %v4559 = vpop.f32.mrb[0].mxu0
        %v4560 = vpop.f32.mrb[0].mxu0
        %v4561 = vadd.f32 %v4017, %v4560
        %v4562 = vpop.f32.mrb[0].mxu0
        %4563 = vmatprep.mubr.bf16.mxu0 %v3815
        %4564 = vmatmul.mubr.bf16.gmra.mrb[0].mxu0 %v3814
        %v4565 = vpop.f32.mrb[0].mxu0
        %v4566 = vadd.f32 %v4017, %v4565
        %v4567 = vpop.f32.mrb[0].mxu0
        %v4568 = vpop.f32.mrb[0].mxu0
        %v4569 = vadd.f32 %v4017, %v4568
        %v4570 = vpop.f32.mrb[0].mxu0
        %4571 = vmatprep.mubr.bf16.mxu0 %v3824
        %4572 = vmatmul.mubr.bf16.gmra.mrb[0].mxu0 %v3823
        %v4573 = vpop.f32.mrb[0].mxu0
        %v4574 = vadd.f32 %v4017, %v4573
        %v4575 = vpop.f32.mrb[0].mxu0
        %v4576 = vpop.f32.mrb[0].mxu0
        %v4577 = vadd.f32 %v4017, %v4576
        %v4578 = vpop.f32.mrb[0].mxu0
        %4579 = vmatprep.mubr.bf16.mxu0 %v3833
        %4580 = vmatmul.mubr.bf16.gmra.mrb[0].mxu0 %v3832
        %v4581 = vpop.f32.mrb[0].mxu0
        %v4582 = vadd.f32 %v4017, %v4581
        %v4583 = vpop.f32.mrb[0].mxu0
        %v4584 = vpop.f32.mrb[0].mxu0
        %v4585 = vadd.f32 %v4017, %v4584
        %v4586 = vpop.f32.mrb[0].mxu0
        %4587 = vmatprep.mubr.bf16.mxu0 %v3842
        %4588 = vmatmul.mubr.bf16.gmra.mrb[0].mxu0 %v3841
        %v4589 = vpop.f32.mrb[0].mxu0
        %v4590 = vadd.f32 %v4017, %v4589
        %v4591 = vpop.f32.mrb[0].mxu0
        %v4592 = vpop.f32.mrb[0].mxu0
        %v4593 = vadd.f32 %v4017, %v4592
        %v4594 = vpop.f32.mrb[0].mxu0
        %4595 = vmatprep.mubr.bf16.mxu0 %v3851
        %4596 = vmatmul.mubr.bf16.gmra.mrb[0].mxu0 %v3850
        %v4597 = vpop.f32.mrb[0].mxu0
        %v4598 = vadd.f32 %v4017, %v4597
        %v4599 = vpop.f32.mrb[0].mxu0
        %v4600 = vpop.f32.mrb[0].mxu0
        %v4601 = vadd.f32 %v4017, %v4600
        %v4602 = vpop.f32.mrb[0].mxu0
        %4603 = vmatprep.mubr.bf16.mxu0 %v3860
        %4604 = vmatmul.mubr.bf16.gmra.mrb[0].mxu0 %v3859
        %v4605 = vpop.f32.mrb[0].mxu0
        %v4606 = vadd.f32 %v4017, %v4605
        %v4607 = vpop.f32.mrb[0].mxu0
        %v4608 = vpop.f32.mrb[0].mxu0
        %v4609 = vadd.f32 %v4017, %v4608
        %v4610 = vpop.f32.mrb[0].mxu0
        %4611 = vdwg.mxu0
        %4612 = vmatprep.subr.bf16.mxu0 0
        %4613 = vmatpush1.bf16.msra.mxu0 %v4323
        %4614 = vmatprep.subr.bf16.mxu0 0
        %4615 = vmatpush1.bf16.msra.mxu0 %v4324
        %4616 = vmatprep.subr.bf16.mxu0 0
        %4617 = vmatpush1.bf16.msra.mxu0 %v4325
        %4618 = vmatprep.subr.bf16.mxu0 0
        %4619 = vmatpush1.bf16.msra.mxu0 %v4326
        %4620 = vmatprep.subr.bf16.mxu0 0
        %4621 = vmatpush1.bf16.msra.mxu0 %v4327
        %4622 = vmatprep.subr.bf16.mxu0 0
        %4623 = vmatpush1.bf16.msra.mxu0 %v4328
        %4624 = vmatprep.subr.bf16.mxu0 0
        %4625 = vmatpush1.bf16.msra.mxu0 %v4329
        %4626 = vmatprep.subr.bf16.mxu0 0
        %4627 = vmatpush1.bf16.msra.mxu0 %v4330
        %4628 = vmatprep.subr.bf16.mxu0 0
        %4629 = vmatpush1.bf16.msra.mxu0 %v4331
        %4630 = vmatprep.subr.bf16.mxu0 0
        %4631 = vmatpush1.bf16.msra.mxu0 %v4332
        %4632 = vmatprep.subr.bf16.mxu0 0
        %4633 = vmatpush1.bf16.msra.mxu0 %v4333
        %4634 = vmatprep.subr.bf16.mxu0 0
        %4635 = vmatpush1.bf16.msra.mxu0 %v4334
        %4636 = vmatprep.subr.bf16.mxu0 0
        %4637 = vmatpush1.bf16.msra.mxu0 %v4335
        %4638 = vmatprep.subr.bf16.mxu0 0
        %4639 = vmatpush1.bf16.msra.mxu0 %v4336
        %4640 = vmatprep.subr.bf16.mxu0 0
        %4641 = vmatpush1.bf16.msra.mxu0 %v4337
        %4642 = vmatprep.subr.bf16.mxu0 0
        %4643 = vmatpush1.bf16.msra.mxu0 %v4338
        %4644 = vmatprep.mubr.bf16.mxu0 %v3727
        %4645 = vmatmul.mubr.bf16.gmra.mrb[0].mxu0 %v3726
        %v4646 = vpop.f32.mrb[0].mxu0
        %v4647 = vadd.f32 %v4486, %v4646
        %v4648 = vpop.f32.mrb[0].mxu0
        %v4649 = vpop.f32.mrb[0].mxu0
        %v4650 = vadd.f32 %v4489, %v4649
        %v4651 = vpop.f32.mrb[0].mxu0
        %4652 = vmatprep.mubr.bf16.mxu0 %v3736
        %4653 = vmatmul.mubr.bf16.gmra.mrb[0].mxu0 %v3735
        %v4654 = vpop.f32.mrb[0].mxu0
        %v4655 = vadd.f32 %v4494, %v4654
        %v4656 = vpop.f32.mrb[0].mxu0
        %v4657 = vpop.f32.mrb[0].mxu0
        %v4658 = vadd.f32 %v4497, %v4657
        %v4659 = vpop.f32.mrb[0].mxu0
        %4660 = vmatprep.mubr.bf16.mxu0 %v3745
        %4661 = vmatmul.mubr.bf16.gmra.mrb[0].mxu0 %v3744
        %v4662 = vpop.f32.mrb[0].mxu0
        %v4663 = vadd.f32 %v4502, %v4662
        %v4664 = vpop.f32.mrb[0].mxu0
        %v4665 = vpop.f32.mrb[0].mxu0
        %v4666 = vadd.f32 %v4505, %v4665
        %v4667 = vpop.f32.mrb[0].mxu0
        %4668 = vmatprep.mubr.bf16.mxu0 %v3754
        %4669 = vmatmul.mubr.bf16.gmra.mrb[0].mxu0 %v3753
        %v4670 = vpop.f32.mrb[0].mxu0
        %v4671 = vadd.f32 %v4510, %v4670
        %v4672 = vpop.f32.mrb[0].mxu0
        %v4673 = vpop.f32.mrb[0].mxu0
        %v4674 = vadd.f32 %v4513, %v4673
        %v4675 = vpop.f32.mrb[0].mxu0
        %4676 = vmatprep.mubr.bf16.mxu0 %v3763
        %4677 = vmatmul.mubr.bf16.gmra.mrb[0].mxu0 %v3762
        %v4678 = vpop.f32.mrb[0].mxu0
        %v4679 = vadd.f32 %v4518, %v4678
        %v4680 = vpop.f32.mrb[0].mxu0
        %v4681 = vpop.f32.mrb[0].mxu0
        %v4682 = vadd.f32 %v4521, %v4681
        %v4683 = vpop.f32.mrb[0].mxu0
        %4684 = vmatprep.mubr.bf16.mxu0 %v3772
        %4685 = vmatmul.mubr.bf16.gmra.mrb[0].mxu0 %v3771
        %v4686 = vpop.f32.mrb[0].mxu0
        %v4687 = vadd.f32 %v4526, %v4686
        %v4688 = vpop.f32.mrb[0].mxu0
        %v4689 = vpop.f32.mrb[0].mxu0
        %v4690 = vadd.f32 %v4529, %v4689
        %v4691 = vpop.f32.mrb[0].mxu0
        %4692 = vmatprep.mubr.bf16.mxu0 %v3781
        %4693 = vmatmul.mubr.bf16.gmra.mrb[0].mxu0 %v3780
        %v4694 = vpop.f32.mrb[0].mxu0
        %v4695 = vadd.f32 %v4534, %v4694
        %v4696 = vpop.f32.mrb[0].mxu0
        %v4697 = vpop.f32.mrb[0].mxu0
        %v4698 = vadd.f32 %v4537, %v4697
        %v4699 = vpop.f32.mrb[0].mxu0
        %4700 = vmatprep.mubr.bf16.mxu0 %v3790
        %4701 = vmatmul.mubr.bf16.gmra.mrb[0].mxu0 %v3789
        %v4702 = vpop.f32.mrb[0].mxu0
        %v4703 = vadd.f32 %v4542, %v4702
        %v4704 = vpop.f32.mrb[0].mxu0
        %v4705 = vpop.f32.mrb[0].mxu0
        %v4706 = vadd.f32 %v4545, %v4705
        %v4707 = vpop.f32.mrb[0].mxu0
        %4708 = vmatprep.mubr.bf16.mxu0 %v3799
        %4709 = vmatmul.mubr.bf16.gmra.mrb[0].mxu0 %v3798
        %v4710 = vpop.f32.mrb[0].mxu0
        %v4711 = vadd.f32 %v4550, %v4710
        %v4712 = vpop.f32.mrb[0].mxu0
        %v4713 = vpop.f32.mrb[0].mxu0
        %v4714 = vadd.f32 %v4553, %v4713
        %v4715 = vpop.f32.mrb[0].mxu0
        %4716 = vmatprep.mubr.bf16.mxu0 %v3808
        %4717 = vmatmul.mubr.bf16.gmra.mrb[0].mxu0 %v3807
        %v4718 = vpop.f32.mrb[0].mxu0
        %v4719 = vadd.f32 %v4558, %v4718
        %v4720 = vpop.f32.mrb[0].mxu0
        %v4721 = vpop.f32.mrb[0].mxu0
        %v4722 = vadd.f32 %v4561, %v4721
        %v4723 = vpop.f32.mrb[0].mxu0
        %4724 = vmatprep.mubr.bf16.mxu0 %v3817
        %4725 = vmatmul.mubr.bf16.gmra.mrb[0].mxu0 %v3816
        %v4726 = vpop.f32.mrb[0].mxu0
        %v4727 = vadd.f32 %v4566, %v4726
        %v4728 = vpop.f32.mrb[0].mxu0
        %v4729 = vpop.f32.mrb[0].mxu0
        %v4730 = vadd.f32 %v4569, %v4729
        %v4731 = vpop.f32.mrb[0].mxu0
        %4732 = vmatprep.mubr.bf16.mxu0 %v3826
        %4733 = vmatmul.mubr.bf16.gmra.mrb[0].mxu0 %v3825
        %v4734 = vpop.f32.mrb[0].mxu0
        %v4735 = vadd.f32 %v4574, %v4734
        %v4736 = vpop.f32.mrb[0].mxu0
        %v4737 = vpop.f32.mrb[0].mxu0
        %v4738 = vadd.f32 %v4577, %v4737
        %v4739 = vpop.f32.mrb[0].mxu0
        %4740 = vmatprep.mubr.bf16.mxu0 %v3835
        %4741 = vmatmul.mubr.bf16.gmra.mrb[0].mxu0 %v3834
        %v4742 = vpop.f32.mrb[0].mxu0
        %v4743 = vadd.f32 %v4582, %v4742
        %v4744 = vpop.f32.mrb[0].mxu0
        %v4745 = vpop.f32.mrb[0].mxu0
        %v4746 = vadd.f32 %v4585, %v4745
        %v4747 = vpop.f32.mrb[0].mxu0
        %4748 = vmatprep.mubr.bf16.mxu0 %v3844
        %4749 = vmatmul.mubr.bf16.gmra.mrb[0].mxu0 %v3843
        %v4750 = vpop.f32.mrb[0].mxu0
        %v4751 = vadd.f32 %v4590, %v4750
        %v4752 = vpop.f32.mrb[0].mxu0
        %v4753 = vpop.f32.mrb[0].mxu0
        %v4754 = vadd.f32 %v4593, %v4753
        %v4755 = vpop.f32.mrb[0].mxu0
        %4756 = vmatprep.mubr.bf16.mxu0 %v3853
        %4757 = vmatmul.mubr.bf16.gmra.mrb[0].mxu0 %v3852
        %v4758 = vpop.f32.mrb[0].mxu0
        %v4759 = vadd.f32 %v4598, %v4758
        %v4760 = vpop.f32.mrb[0].mxu0
        %v4761 = vpop.f32.mrb[0].mxu0
        %v4762 = vadd.f32 %v4601, %v4761
        %v4763 = vpop.f32.mrb[0].mxu0
        %4764 = vmatprep.mubr.bf16.mxu0 %v3862
        %4765 = vmatmul.mubr.bf16.gmra.mrb[0].mxu0 %v3861
        %v4766 = vpop.f32.mrb[0].mxu0
        %v4767 = vadd.f32 %v4606, %v4766
        %v4768 = vpop.f32.mrb[0].mxu0
        %v4769 = vpop.f32.mrb[0].mxu0
        %v4770 = vadd.f32 %v4609, %v4769
        %v4771 = vpop.f32.mrb[0].mxu0
        %4772 = vdwg.mxu0
        %4773 = vmatprep.subr.bf16.mxu0 0
        %4774 = vmatpush1.bf16.msra.mxu0 %v4339
        %4775 = vmatprep.subr.bf16.mxu0 0
        %4776 = vmatpush1.bf16.msra.mxu0 %v4340
        %4777 = vmatprep.subr.bf16.mxu0 0
        %4778 = vmatpush1.bf16.msra.mxu0 %v4341
        %4779 = vmatprep.subr.bf16.mxu0 0
        %4780 = vmatpush1.bf16.msra.mxu0 %v4342
        %4781 = vmatprep.subr.bf16.mxu0 0
        %4782 = vmatpush1.bf16.msra.mxu0 %v4343
        %4783 = vmatprep.subr.bf16.mxu0 0
        %4784 = vmatpush1.bf16.msra.mxu0 %v4344
        %4785 = vmatprep.subr.bf16.mxu0 0
        %4786 = vmatpush1.bf16.msra.mxu0 %v4345
        %4787 = vmatprep.subr.bf16.mxu0 0
        %4788 = vmatpush1.bf16.msra.mxu0 %v4346
        %4789 = vmatprep.subr.bf16.mxu0 0
        %4790 = vmatpush1.bf16.msra.mxu0 %v4347
        %4791 = vmatprep.subr.bf16.mxu0 0
        %4792 = vmatpush1.bf16.msra.mxu0 %v4348
        %4793 = vmatprep.subr.bf16.mxu0 0
        %4794 = vmatpush1.bf16.msra.mxu0 %v4349
        %4795 = vmatprep.subr.bf16.mxu0 0
        %4796 = vmatpush1.bf16.msra.mxu0 %v4350
        %4797 = vmatprep.subr.bf16.mxu0 0
        %4798 = vmatpush1.bf16.msra.mxu0 %v4351
        %4799 = vmatprep.subr.bf16.mxu0 0
        %4800 = vmatpush1.bf16.msra.mxu0 %v4352
        %4801 = vmatprep.subr.bf16.mxu0 0
        %4802 = vmatpush1.bf16.msra.mxu0 %v4353
        %4803 = vmatprep.subr.bf16.mxu0 0
        %4804 = vmatpush1.bf16.msra.mxu0 %v4354
        %4805 = vmatprep.mubr.bf16.mxu0 %v3729
        %4806 = vmatmul.mubr.bf16.gmra.mrb[0].mxu0 %v3728
        %v4807 = vpop.f32.mrb[0].mxu0
        %v4808 = vadd.f32 %v4647, %v4807
        %v4809 = vpop.f32.mrb[0].mxu0
        %v4810 = vpop.f32.mrb[0].mxu0
        %v4811 = vadd.f32 %v4650, %v4810
        %v4812 = vpop.f32.mrb[0].mxu0
        %4813 = vmatprep.mubr.bf16.mxu0 %v3738
        %4814 = vmatmul.mubr.bf16.gmra.mrb[0].mxu0 %v3737
        %v4815 = vpop.f32.mrb[0].mxu0
        %v4816 = vadd.f32 %v4655, %v4815
        %v4817 = vpop.f32.mrb[0].mxu0
        %v4818 = vpop.f32.mrb[0].mxu0
        %v4819 = vadd.f32 %v4658, %v4818
        %v4820 = vpop.f32.mrb[0].mxu0
        %4821 = vmatprep.mubr.bf16.mxu0 %v3747
        %4822 = vmatmul.mubr.bf16.gmra.mrb[0].mxu0 %v3746
        %v4823 = vpop.f32.mrb[0].mxu0
        %v4824 = vadd.f32 %v4663, %v4823
        %v4825 = vpop.f32.mrb[0].mxu0
        %v4826 = vpop.f32.mrb[0].mxu0
        %v4827 = vadd.f32 %v4666, %v4826
        %v4828 = vpop.f32.mrb[0].mxu0
        %4829 = vmatprep.mubr.bf16.mxu0 %v3756
        %4830 = vmatmul.mubr.bf16.gmra.mrb[0].mxu0 %v3755
        %v4831 = vpop.f32.mrb[0].mxu0
        %v4832 = vadd.f32 %v4671, %v4831
        %v4833 = vpop.f32.mrb[0].mxu0
        %v4834 = vpop.f32.mrb[0].mxu0
        %v4835 = vadd.f32 %v4674, %v4834
        %v4836 = vpop.f32.mrb[0].mxu0
        %4837 = vmatprep.mubr.bf16.mxu0 %v3765
        %4838 = vmatmul.mubr.bf16.gmra.mrb[0].mxu0 %v3764
        %v4839 = vpop.f32.mrb[0].mxu0
        %v4840 = vadd.f32 %v4679, %v4839
        %v4841 = vpop.f32.mrb[0].mxu0
        %v4842 = vpop.f32.mrb[0].mxu0
        %v4843 = vadd.f32 %v4682, %v4842
        %v4844 = vpop.f32.mrb[0].mxu0
        %4845 = vmatprep.mubr.bf16.mxu0 %v3774
        %4846 = vmatmul.mubr.bf16.gmra.mrb[0].mxu0 %v3773
        %v4847 = vpop.f32.mrb[0].mxu0
        %v4848 = vadd.f32 %v4687, %v4847
        %v4849 = vpop.f32.mrb[0].mxu0
        %v4850 = vpop.f32.mrb[0].mxu0
        %v4851 = vadd.f32 %v4690, %v4850
        %v4852 = vpop.f32.mrb[0].mxu0
        %4853 = vmatprep.mubr.bf16.mxu0 %v3783
        %4854 = vmatmul.mubr.bf16.gmra.mrb[0].mxu0 %v3782
        %v4855 = vpop.f32.mrb[0].mxu0
        %v4856 = vadd.f32 %v4695, %v4855
        %v4857 = vpop.f32.mrb[0].mxu0
        %v4858 = vpop.f32.mrb[0].mxu0
        %v4859 = vadd.f32 %v4698, %v4858
        %v4860 = vpop.f32.mrb[0].mxu0
        %4861 = vmatprep.mubr.bf16.mxu0 %v3792
        %4862 = vmatmul.mubr.bf16.gmra.mrb[0].mxu0 %v3791
        %v4863 = vpop.f32.mrb[0].mxu0
        %v4864 = vadd.f32 %v4703, %v4863
        %v4865 = vpop.f32.mrb[0].mxu0
        %v4866 = vpop.f32.mrb[0].mxu0
        %v4867 = vadd.f32 %v4706, %v4866
        %v4868 = vpop.f32.mrb[0].mxu0
        %4869 = vmatprep.mubr.bf16.mxu0 %v3801
        %4870 = vmatmul.mubr.bf16.gmra.mrb[0].mxu0 %v3800
        %v4871 = vpop.f32.mrb[0].mxu0
        %v4872 = vadd.f32 %v4711, %v4871
        %v4873 = vpop.f32.mrb[0].mxu0
        %v4874 = vpop.f32.mrb[0].mxu0
        %v4875 = vadd.f32 %v4714, %v4874
        %v4876 = vpop.f32.mrb[0].mxu0
        %4877 = vmatprep.mubr.bf16.mxu0 %v3810
        %4878 = vmatmul.mubr.bf16.gmra.mrb[0].mxu0 %v3809
        %v4879 = vpop.f32.mrb[0].mxu0
        %v4880 = vadd.f32 %v4719, %v4879
        %v4881 = vpop.f32.mrb[0].mxu0
        %v4882 = vpop.f32.mrb[0].mxu0
        %v4883 = vadd.f32 %v4722, %v4882
        %v4884 = vpop.f32.mrb[0].mxu0
        %4885 = vmatprep.mubr.bf16.mxu0 %v3819
        %4886 = vmatmul.mubr.bf16.gmra.mrb[0].mxu0 %v3818
        %v4887 = vpop.f32.mrb[0].mxu0
        %v4888 = vadd.f32 %v4727, %v4887
        %v4889 = vpop.f32.mrb[0].mxu0
        %v4890 = vpop.f32.mrb[0].mxu0
        %v4891 = vadd.f32 %v4730, %v4890
        %v4892 = vpop.f32.mrb[0].mxu0
        %4893 = vmatprep.mubr.bf16.mxu0 %v3828
        %4894 = vmatmul.mubr.bf16.gmra.mrb[0].mxu0 %v3827
        %v4895 = vpop.f32.mrb[0].mxu0
        %v4896 = vadd.f32 %v4735, %v4895
        %v4897 = vpop.f32.mrb[0].mxu0
        %v4898 = vpop.f32.mrb[0].mxu0
        %v4899 = vadd.f32 %v4738, %v4898
        %v4900 = vpop.f32.mrb[0].mxu0
        %4901 = vmatprep.mubr.bf16.mxu0 %v3837
        %4902 = vmatmul.mubr.bf16.gmra.mrb[0].mxu0 %v3836
        %v4903 = vpop.f32.mrb[0].mxu0
        %v4904 = vadd.f32 %v4743, %v4903
        %v4905 = vpop.f32.mrb[0].mxu0
        %v4906 = vpop.f32.mrb[0].mxu0
        %v4907 = vadd.f32 %v4746, %v4906
        %v4908 = vpop.f32.mrb[0].mxu0
        %4909 = vmatprep.mubr.bf16.mxu0 %v3846
        %4910 = vmatmul.mubr.bf16.gmra.mrb[0].mxu0 %v3845
        %v4911 = vpop.f32.mrb[0].mxu0
        %v4912 = vadd.f32 %v4751, %v4911
        %v4913 = vpop.f32.mrb[0].mxu0
        %v4914 = vpop.f32.mrb[0].mxu0
        %v4915 = vadd.f32 %v4754, %v4914
        %v4916 = vpop.f32.mrb[0].mxu0
        %4917 = vmatprep.mubr.bf16.mxu0 %v3855
        %4918 = vmatmul.mubr.bf16.gmra.mrb[0].mxu0 %v3854
        %v4919 = vpop.f32.mrb[0].mxu0
        %v4920 = vadd.f32 %v4759, %v4919
        %v4921 = vpop.f32.mrb[0].mxu0
        %v4922 = vpop.f32.mrb[0].mxu0
        %v4923 = vadd.f32 %v4762, %v4922
        %v4924 = vpop.f32.mrb[0].mxu0
        %4925 = vmatprep.mubr.bf16.mxu0 %v3864
        %4926 = vmatmul.mubr.bf16.gmra.mrb[0].mxu0 %v3863
        %v4927 = vpop.f32.mrb[0].mxu0
        %v4928 = vadd.f32 %v4767, %v4927
        %v4929 = vpop.f32.mrb[0].mxu0
        %v4930 = vpop.f32.mrb[0].mxu0
        %v4931 = vadd.f32 %v4770, %v4930
        %v4932 = vpop.f32.mrb[0].mxu0
        %4933 = vdwg.mxu0
        %4934 = vmatprep.subr.bf16.mxu0 0
        %4935 = vmatpush1.bf16.msra.mxu0 %v4355
        %4936 = vmatprep.subr.bf16.mxu0 0
        %4937 = vmatpush1.bf16.msra.mxu0 %v4356
        %4938 = vmatprep.subr.bf16.mxu0 0
        %4939 = vmatpush1.bf16.msra.mxu0 %v4357
        %4940 = vmatprep.subr.bf16.mxu0 0
        %4941 = vmatpush1.bf16.msra.mxu0 %v4358
        %4942 = vmatprep.subr.bf16.mxu0 0
        %4943 = vmatpush1.bf16.msra.mxu0 %v4359
        %4944 = vmatprep.subr.bf16.mxu0 0
        %4945 = vmatpush1.bf16.msra.mxu0 %v4360
        %4946 = vmatprep.subr.bf16.mxu0 0
        %4947 = vmatpush1.bf16.msra.mxu0 %v4361
        %4948 = vmatprep.subr.bf16.mxu0 0
        %4949 = vmatpush1.bf16.msra.mxu0 %v4362
        %4950 = vmatprep.subr.bf16.mxu0 0
        %4951 = vmatpush1.bf16.msra.mxu0 %v4363
        %4952 = vmatprep.subr.bf16.mxu0 0
        %4953 = vmatpush1.bf16.msra.mxu0 %v4364
        %4954 = vmatprep.subr.bf16.mxu0 0
        %4955 = vmatpush1.bf16.msra.mxu0 %v4365
        %4956 = vmatprep.subr.bf16.mxu0 0
        %4957 = vmatpush1.bf16.msra.mxu0 %v4366
        %4958 = vmatprep.subr.bf16.mxu0 0
        %4959 = vmatpush1.bf16.msra.mxu0 %v4367
        %4960 = vmatprep.subr.bf16.mxu0 0
        %4961 = vmatpush1.bf16.msra.mxu0 %v4368
        %4962 = vmatprep.subr.bf16.mxu0 0
        %4963 = vmatpush1.bf16.msra.mxu0 %v4369
        %4964 = vmatprep.subr.bf16.mxu0 0
        %4965 = vmatpush1.bf16.msra.mxu0 %v4370
        %4966 = vmatprep.mubr.bf16.mxu0 %v3731
        %4967 = vmatmul.mubr.bf16.gmra.mrb[0].mxu0 %v3730
        %v4968 = vpop.f32.mrb[0].mxu0
        %v4969 = vadd.f32 %v4808, %v4968
        %v4970 = vpop.f32.mrb[0].mxu0
        %v4971 = vpop.f32.mrb[0].mxu0
        %v4972 = vadd.f32 %v4811, %v4971
        %v4973 = vpop.f32.mrb[0].mxu0
        %4974 = vmatprep.mubr.bf16.mxu0 %v3740
        %4975 = vmatmul.mubr.bf16.gmra.mrb[0].mxu0 %v3739
        %v4976 = vpop.f32.mrb[0].mxu0
        %v4977 = vadd.f32 %v4816, %v4976
        %v4978 = vpop.f32.mrb[0].mxu0
        %v4979 = vpop.f32.mrb[0].mxu0
        %v4980 = vadd.f32 %v4819, %v4979
        %v4981 = vpop.f32.mrb[0].mxu0
        %4982 = vmatprep.mubr.bf16.mxu0 %v3749
        %4983 = vmatmul.mubr.bf16.gmra.mrb[0].mxu0 %v3748
        %v4984 = vpop.f32.mrb[0].mxu0
        %v4985 = vadd.f32 %v4824, %v4984
        %v4986 = vpop.f32.mrb[0].mxu0
        %v4987 = vpop.f32.mrb[0].mxu0
        %v4988 = vadd.f32 %v4827, %v4987
        %v4989 = vpop.f32.mrb[0].mxu0
        %4990 = vmatprep.mubr.bf16.mxu0 %v3758
        %4991 = vmatmul.mubr.bf16.gmra.mrb[0].mxu0 %v3757
        %v4992 = vpop.f32.mrb[0].mxu0
        %v4993 = vadd.f32 %v4832, %v4992
        %v4994 = vpop.f32.mrb[0].mxu0
        %v4995 = vpop.f32.mrb[0].mxu0
        %v4996 = vadd.f32 %v4835, %v4995
        %v4997 = vpop.f32.mrb[0].mxu0
        %4998 = vmatprep.mubr.bf16.mxu0 %v3767
        %4999 = vmatmul.mubr.bf16.gmra.mrb[0].mxu0 %v3766
        %v5000 = vpop.f32.mrb[0].mxu0
        %v5001 = vadd.f32 %v4840, %v5000
        %v5002 = vpop.f32.mrb[0].mxu0
        %v5003 = vpop.f32.mrb[0].mxu0
        %v5004 = vadd.f32 %v4843, %v5003
        %v5005 = vpop.f32.mrb[0].mxu0
        %5006 = vmatprep.mubr.bf16.mxu0 %v3776
        %5007 = vmatmul.mubr.bf16.gmra.mrb[0].mxu0 %v3775
        %v5008 = vpop.f32.mrb[0].mxu0
        %v5009 = vadd.f32 %v4848, %v5008
        %v5010 = vpop.f32.mrb[0].mxu0
        %v5011 = vpop.f32.mrb[0].mxu0
        %v5012 = vadd.f32 %v4851, %v5011
        %v5013 = vpop.f32.mrb[0].mxu0
        %5014 = vmatprep.mubr.bf16.mxu0 %v3785
        %5015 = vmatmul.mubr.bf16.gmra.mrb[0].mxu0 %v3784
        %v5016 = vpop.f32.mrb[0].mxu0
        %v5017 = vadd.f32 %v4856, %v5016
        %v5018 = vpop.f32.mrb[0].mxu0
        %v5019 = vpop.f32.mrb[0].mxu0
        %v5020 = vadd.f32 %v4859, %v5019
        %v5021 = vpop.f32.mrb[0].mxu0
        %5022 = vmatprep.mubr.bf16.mxu0 %v3794
        %5023 = vmatmul.mubr.bf16.gmra.mrb[0].mxu0 %v3793
        %v5024 = vpop.f32.mrb[0].mxu0
        %v5025 = vadd.f32 %v4864, %v5024
        %v5026 = vpop.f32.mrb[0].mxu0
        %v5027 = vpop.f32.mrb[0].mxu0
        %v5028 = vadd.f32 %v4867, %v5027
        %v5029 = vpop.f32.mrb[0].mxu0
        %5030 = vmatprep.mubr.bf16.mxu0 %v3803
        %5031 = vmatmul.mubr.bf16.gmra.mrb[0].mxu0 %v3802
        %v5032 = vpop.f32.mrb[0].mxu0
        %v5033 = vadd.f32 %v4872, %v5032
        %v5034 = vpop.f32.mrb[0].mxu0
        %v5035 = vpop.f32.mrb[0].mxu0
        %v5036 = vadd.f32 %v4875, %v5035
        %v5037 = vpop.f32.mrb[0].mxu0
        %5038 = vmatprep.mubr.bf16.mxu0 %v3812
        %5039 = vmatmul.mubr.bf16.gmra.mrb[0].mxu0 %v3811
        %v5040 = vpop.f32.mrb[0].mxu0
        %v5041 = vadd.f32 %v4880, %v5040
        %v5042 = vpop.f32.mrb[0].mxu0
        %v5043 = vpop.f32.mrb[0].mxu0
        %v5044 = vadd.f32 %v4883, %v5043
        %v5045 = vpop.f32.mrb[0].mxu0
        %5046 = vmatprep.mubr.bf16.mxu0 %v3821
        %5047 = vmatmul.mubr.bf16.gmra.mrb[0].mxu0 %v3820
        %v5048 = vpop.f32.mrb[0].mxu0
        %v5049 = vadd.f32 %v4888, %v5048
        %v5050 = vpop.f32.mrb[0].mxu0
        %v5051 = vpop.f32.mrb[0].mxu0
        %v5052 = vadd.f32 %v4891, %v5051
        %v5053 = vpop.f32.mrb[0].mxu0
        %5054 = vmatprep.mubr.bf16.mxu0 %v3830
        %5055 = vmatmul.mubr.bf16.gmra.mrb[0].mxu0 %v3829
        %v5056 = vpop.f32.mrb[0].mxu0
        %v5057 = vadd.f32 %v4896, %v5056
        %v5058 = vpop.f32.mrb[0].mxu0
        %v5059 = vpop.f32.mrb[0].mxu0
        %v5060 = vadd.f32 %v4899, %v5059
        %v5061 = vpop.f32.mrb[0].mxu0
        %5062 = vmatprep.mubr.bf16.mxu0 %v3839
        %5063 = vmatmul.mubr.bf16.gmra.mrb[0].mxu0 %v3838
        %v5064 = vpop.f32.mrb[0].mxu0
        %v5065 = vadd.f32 %v4904, %v5064
        %v5066 = vpop.f32.mrb[0].mxu0
        %v5067 = vpop.f32.mrb[0].mxu0
        %v5068 = vadd.f32 %v4907, %v5067
        %v5069 = vpop.f32.mrb[0].mxu0
        %5070 = vmatprep.mubr.bf16.mxu0 %v3848
        %5071 = vmatmul.mubr.bf16.gmra.mrb[0].mxu0 %v3847
        %v5072 = vpop.f32.mrb[0].mxu0
        %v5073 = vadd.f32 %v4912, %v5072
        %v5074 = vpop.f32.mrb[0].mxu0
        %v5075 = vpop.f32.mrb[0].mxu0
        %v5076 = vadd.f32 %v4915, %v5075
        %v5077 = vpop.f32.mrb[0].mxu0
        %5078 = vmatprep.mubr.bf16.mxu0 %v3857
        %5079 = vmatmul.mubr.bf16.gmra.mrb[0].mxu0 %v3856
        %v5080 = vpop.f32.mrb[0].mxu0
        %v5081 = vadd.f32 %v4920, %v5080
        %v5082 = vpop.f32.mrb[0].mxu0
        %v5083 = vpop.f32.mrb[0].mxu0
        %v5084 = vadd.f32 %v4923, %v5083
        %v5085 = vpop.f32.mrb[0].mxu0
        %5086 = vmatprep.mubr.bf16.mxu0 %v3866
        %5087 = vmatmul.mubr.bf16.gmra.mrb[0].mxu0 %v3865
        %v5088 = vpop.f32.mrb[0].mxu0
        %v5089 = vadd.f32 %v4928, %v5088
        %v5090 = vpop.f32.mrb[0].mxu0
        %v5091 = vpop.f32.mrb[0].mxu0
        %v5092 = vadd.f32 %v4931, %v5091
        %v5093 = vpop.f32.mrb[0].mxu0
        %5094 = vdwg.mxu0
        %5095 = vmatprep.subr.bf16.mxu0 0
        %5096 = vmatpush1.bf16.msra.mxu0 %v4371
        %5097 = vmatprep.subr.bf16.mxu0 0
        %5098 = vmatpush1.bf16.msra.mxu0 %v4372
        %5099 = vmatprep.subr.bf16.mxu0 0
        %5100 = vmatpush1.bf16.msra.mxu0 %v4373
        %5101 = vmatprep.subr.bf16.mxu0 0
        %5102 = vmatpush1.bf16.msra.mxu0 %v4374
        %5103 = vmatprep.subr.bf16.mxu0 0
        %5104 = vmatpush1.bf16.msra.mxu0 %v4375
        %5105 = vmatprep.subr.bf16.mxu0 0
        %5106 = vmatpush1.bf16.msra.mxu0 %v4376
        %5107 = vmatprep.subr.bf16.mxu0 0
        %5108 = vmatpush1.bf16.msra.mxu0 %v4377
        %5109 = vmatprep.subr.bf16.mxu0 0
        %5110 = vmatpush1.bf16.msra.mxu0 %v4378
        %5111 = vmatprep.subr.bf16.mxu0 0
        %5112 = vmatpush1.bf16.msra.mxu0 0
        %5113 = vmatprep.subr.bf16.mxu0 0
        %5114 = vmatpush1.bf16.msra.mxu0 0
        %5115 = vmatprep.subr.bf16.mxu0 0
        %5116 = vmatpush1.bf16.msra.mxu0 0
        %5117 = vmatprep.subr.bf16.mxu0 0
        %5118 = vmatpush1.bf16.msra.mxu0 0
        %5119 = vmatprep.subr.bf16.mxu0 0
        %5120 = vmatpush1.bf16.msra.mxu0 0
        %5121 = vmatprep.subr.bf16.mxu0 0
        %5122 = vmatpush1.bf16.msra.mxu0 0
        %5123 = vmatprep.subr.bf16.mxu0 0
        %5124 = vmatpush1.bf16.msra.mxu0 0
        %5125 = vmatprep.subr.bf16.mxu0 0
        %5126 = vmatpush1.bf16.msra.mxu0 0
        %5127 = vmatprep.mubr.bf16.mxu0 0
        %5128 = vmatmul.mubr.bf16.gmra.mrb[0].mxu0 %v3732
        %v5129 = vpop.f32.mrb[0].mxu0
        %v5130 = vadd.f32 %v4969, %v5129
        %v5131 = vpop.f32.mrb[0].mxu0
        %v5132 = vpop.f32.mrb[0].mxu0
        %v5133 = vadd.f32 %v4972, %v5132
        %v5134 = vpop.f32.mrb[0].mxu0
        %5135 = vmatprep.mubr.bf16.mxu0 0
        %5136 = vmatmul.mubr.bf16.gmra.mrb[0].mxu0 %v3741
        %v5137 = vpop.f32.mrb[0].mxu0
        %v5138 = vadd.f32 %v4977, %v5137
        %v5139 = vpop.f32.mrb[0].mxu0
        %v5140 = vpop.f32.mrb[0].mxu0
        %v5141 = vadd.f32 %v4980, %v5140
        %v5142 = vpop.f32.mrb[0].mxu0
        %5143 = vmatprep.mubr.bf16.mxu0 0
        %5144 = vmatmul.mubr.bf16.gmra.mrb[0].mxu0 %v3750
        %v5145 = vpop.f32.mrb[0].mxu0
        %v5146 = vadd.f32 %v4985, %v5145
        %v5147 = vpop.f32.mrb[0].mxu0
        %v5148 = vpop.f32.mrb[0].mxu0
        %v5149 = vadd.f32 %v4988, %v5148
        %v5150 = vpop.f32.mrb[0].mxu0
        %5151 = vmatprep.mubr.bf16.mxu0 0
        %5152 = vmatmul.mubr.bf16.gmra.mrb[0].mxu0 %v3759
        %v5153 = vpop.f32.mrb[0].mxu0
        %v5154 = vadd.f32 %v4993, %v5153
        %v5155 = vpop.f32.mrb[0].mxu0
        %v5156 = vpop.f32.mrb[0].mxu0
        %v5157 = vadd.f32 %v4996, %v5156
        %v5158 = vpop.f32.mrb[0].mxu0
        %5159 = vmatprep.mubr.bf16.mxu0 0
        %5160 = vmatmul.mubr.bf16.gmra.mrb[0].mxu0 %v3768
        %v5161 = vpop.f32.mrb[0].mxu0
        %v5162 = vadd.f32 %v5001, %v5161
        %v5163 = vpop.f32.mrb[0].mxu0
        %v5164 = vpop.f32.mrb[0].mxu0
        %v5165 = vadd.f32 %v5004, %v5164
        %v5166 = vpop.f32.mrb[0].mxu0
        %5167 = vmatprep.mubr.bf16.mxu0 0
        %5168 = vmatmul.mubr.bf16.gmra.mrb[0].mxu0 %v3777
        %v5169 = vpop.f32.mrb[0].mxu0
        %v5170 = vadd.f32 %v5009, %v5169
        %v5171 = vpop.f32.mrb[0].mxu0
        %v5172 = vpop.f32.mrb[0].mxu0
        %v5173 = vadd.f32 %v5012, %v5172
        %v5174 = vpop.f32.mrb[0].mxu0
        %5175 = vmatprep.mubr.bf16.mxu0 0
        %5176 = vmatmul.mubr.bf16.gmra.mrb[0].mxu0 %v3786
        %v5177 = vpop.f32.mrb[0].mxu0
        %v5178 = vadd.f32 %v5017, %v5177
        %v5179 = vpop.f32.mrb[0].mxu0
        %v5180 = vpop.f32.mrb[0].mxu0
        %v5181 = vadd.f32 %v5020, %v5180
        %v5182 = vpop.f32.mrb[0].mxu0
        %5183 = vmatprep.mubr.bf16.mxu0 0
        %5184 = vmatmul.mubr.bf16.gmra.mrb[0].mxu0 %v3795
        %v5185 = vpop.f32.mrb[0].mxu0
        %v5186 = vadd.f32 %v5025, %v5185
        %v5187 = vpop.f32.mrb[0].mxu0
        %v5188 = vpop.f32.mrb[0].mxu0
        %v5189 = vadd.f32 %v5028, %v5188
        %v5190 = vpop.f32.mrb[0].mxu0
        %5191 = vmatprep.mubr.bf16.mxu0 0
        %5192 = vmatmul.mubr.bf16.gmra.mrb[0].mxu0 %v3804
        %v5193 = vpop.f32.mrb[0].mxu0
        %v5194 = vadd.f32 %v5033, %v5193
        %v5195 = vpop.f32.mrb[0].mxu0
        %v5196 = vpop.f32.mrb[0].mxu0
        %v5197 = vadd.f32 %v5036, %v5196
        %v5198 = vpop.f32.mrb[0].mxu0
        %5199 = vmatprep.mubr.bf16.mxu0 0
        %5200 = vmatmul.mubr.bf16.gmra.mrb[0].mxu0 %v3813
        %v5201 = vpop.f32.mrb[0].mxu0
        %v5202 = vadd.f32 %v5041, %v5201
        %v5203 = vpop.f32.mrb[0].mxu0
        %v5204 = vpop.f32.mrb[0].mxu0
        %v5205 = vadd.f32 %v5044, %v5204
        %v5206 = vpop.f32.mrb[0].mxu0
        %5207 = vmatprep.mubr.bf16.mxu0 0
        %5208 = vmatmul.mubr.bf16.gmra.mrb[0].mxu0 %v3822
        %v5209 = vpop.f32.mrb[0].mxu0
        %v5210 = vadd.f32 %v5049, %v5209
        %v5211 = vpop.f32.mrb[0].mxu0
        %v5212 = vpop.f32.mrb[0].mxu0
        %v5213 = vadd.f32 %v5052, %v5212
        %v5214 = vpop.f32.mrb[0].mxu0
        %5215 = vmatprep.mubr.bf16.mxu0 0
        %5216 = vmatmul.mubr.bf16.gmra.mrb[0].mxu0 %v3831
        %v5217 = vpop.f32.mrb[0].mxu0
        %v5218 = vadd.f32 %v5057, %v5217
        %v5219 = vpop.f32.mrb[0].mxu0
        %v5220 = vpop.f32.mrb[0].mxu0
        %v5221 = vadd.f32 %v5060, %v5220
        %v5222 = vpop.f32.mrb[0].mxu0
        %5223 = vmatprep.mubr.bf16.mxu0 0
        %5224 = vmatmul.mubr.bf16.gmra.mrb[0].mxu0 %v3840
        %v5225 = vpop.f32.mrb[0].mxu0
        %v5226 = vadd.f32 %v5065, %v5225
        %v5227 = vpop.f32.mrb[0].mxu0
        %v5228 = vpop.f32.mrb[0].mxu0
        %v5229 = vadd.f32 %v5068, %v5228
        %v5230 = vpop.f32.mrb[0].mxu0
        %5231 = vmatprep.mubr.bf16.mxu0 0
        %5232 = vmatmul.mubr.bf16.gmra.mrb[0].mxu0 %v3849
        %v5233 = vpop.f32.mrb[0].mxu0
        %v5234 = vadd.f32 %v5073, %v5233
        %v5235 = vpop.f32.mrb[0].mxu0
        %v5236 = vpop.f32.mrb[0].mxu0
        %v5237 = vadd.f32 %v5076, %v5236
        %v5238 = vpop.f32.mrb[0].mxu0
        %5239 = vmatprep.mubr.bf16.mxu0 0
        %5240 = vmatmul.mubr.bf16.gmra.mrb[0].mxu0 %v3858
        %v5241 = vpop.f32.mrb[0].mxu0
        %v5242 = vadd.f32 %v5081, %v5241
        %v5243 = vpop.f32.mrb[0].mxu0
        %v5244 = vpop.f32.mrb[0].mxu0
        %v5245 = vadd.f32 %v5084, %v5244
        %v5246 = vpop.f32.mrb[0].mxu0
        %5247 = vmatprep.mubr.bf16.mxu0 0
        %5248 = vmatmul.mubr.bf16.gmra.mrb[0].mxu0 %v3867
        %v5249 = vpop.f32.mrb[0].mxu0
        %v5250 = vadd.f32 %v5089, %v5249
        %v5251 = vpop.f32.mrb[0].mxu0
        %v5252 = vpop.f32.mrb[0].mxu0
        %v5253 = vadd.f32 %v5092, %v5252
        %v5254 = vpop.f32.mrb[0].mxu0
        %5255 = vdwg.mxu0
        %5256 = vst [vmem:[%s248] sm:$0xff] %v5130
        %5257 = vst [vmem:[%s248 + $0x8] sm:$0xff] %v5133
        %5258 = vst [vmem:[%s248 + $0x10] sm:$0xff] %v5138
        %5259 = vst [vmem:[%s248 + $0x18] sm:$0xff] %v5141
        %5260 = vst [vmem:[%s248 + $0x20] sm:$0xff] %v5146
        %5261 = vst [vmem:[%s248 + $0x28] sm:$0xff] %v5149
        %5262 = vst [vmem:[%s248 + $0x30] sm:$0xff] %v5154
        %5263 = vst [vmem:[%s248 + $0x38] sm:$0xff] %v5157
        %5264 = vst [vmem:[%s248 + $0x40] sm:$0xff] %v5162
        %5265 = vst [vmem:[%s248 + $0x48] sm:$0xff] %v5165
        %5266 = vst [vmem:[%s248 + $0x50] sm:$0xff] %v5170
        %5267 = vst [vmem:[%s248 + $0x58] sm:$0xff] %v5173
        %5268 = vst [vmem:[%s248 + $0x60] sm:$0xff] %v5178
        %5269 = vst [vmem:[%s248 + $0x68] sm:$0xff] %v5181
        %5270 = vst [vmem:[%s248 + $0x70] sm:$0xff] %v5186
        %5271 = vst [vmem:[%s248 + $0x78] sm:$0xff] %v5189
        %5272 = vst [vmem:[%s248 + $0x80] sm:$0xff] %v5194
        %5273 = vst [vmem:[%s248 + $0x88] sm:$0xff] %v5197
        %5274 = vst [vmem:[%s248 + $0x90] sm:$0xff] %v5202
        %5275 = vst [vmem:[%s248 + $0x98] sm:$0xff] %v5205
        %5276 = vst [vmem:[%s248 + $0xa0] sm:$0xff] %v5210
        %5277 = vst [vmem:[%s248 + $0xa8] sm:$0xff] %v5213
        %5278 = vst [vmem:[%s248 + $0xb0] sm:$0xff] %v5218
        %5279 = vst [vmem:[%s248 + $0xb8] sm:$0xff] %v5221
        %5280 = vst [vmem:[%s248 + $0xc0] sm:$0xff] %v5226
        %5281 = vst [vmem:[%s248 + $0xc8] sm:$0xff] %v5229
        %5282 = vst [vmem:[%s248 + $0xd0] sm:$0xff] %v5234
        %5283 = vst [vmem:[%s248 + $0xd8] sm:$0xff] %v5237
        %5284 = vst [vmem:[%s248 + $0xe0] sm:$0xff] %v5242
        %5285 = vst [vmem:[%s248 + $0xe8] sm:$0xff] %v5245
        %5286 = vst [vmem:[%s248 + $0xf0] sm:$0xff] %v5250
        %5287 = vst [vmem:[%s248 + $0xf8] sm:$0xff] %v5253
        %v5288 = vld [vmem:[%s2] sm:$0xff]
        %v5289 = vld [vmem:[%s2 + $0x8] sm:$0xff]
        %v5290 = vld [vmem:[%s2 + $0x10] sm:$0xff]
        %v5291 = vld [vmem:[%s2 + $0x18] sm:$0xff]
        %v5292 = vld [vmem:[%s2 + $0x20] sm:$0xff]
        %v5293 = vld [vmem:[%s2 + $0x28] sm:$0xff]
        %v5294 = vld [vmem:[%s2 + $0x30] sm:$0xff]
        %v5295 = vld [vmem:[%s2 + $0x38] sm:$0xff]
        %v5296 = vld [vmem:[%s2 + $0x40] sm:$0xff]
        %v5297 = vld [vmem:[%s2 + $0x48] sm:$0xff]
        %v5298 = vld [vmem:[%s2 + $0x50] sm:$0xff]
        %v5299 = vld [vmem:[%s2 + $0x58] sm:$0xff]
        %v5300 = vld [vmem:[%s2 + $0x60] sm:$0xff]
        %v5301 = vld [vmem:[%s2 + $0x68] sm:$0xff]
        %v5302 = vld [vmem:[%s2 + $0x70] sm:$0xff]
        %v5303 = vld [vmem:[%s2 + $0x78] sm:$0xff]
        %v5304 = vld [vmem:[%s2 + $0x80] sm:$0xff]
        %v5305 = vld [vmem:[%s2 + $0x88] sm:$0xff]
        %v5306 = vld [vmem:[%s2 + $0x90] sm:$0xff]
        %v5307 = vld [vmem:[%s2 + $0x98] sm:$0xff]
        %v5308 = vld [vmem:[%s2 + $0xa0] sm:$0xff]
        %v5309 = vld [vmem:[%s2 + $0xa8] sm:$0xff]
        %v5310 = vld [vmem:[%s2 + $0xb0] sm:$0xff]
        %v5311 = vld [vmem:[%s2 + $0xb8] sm:$0xff]
        %v5312 = vld [vmem:[%s2 + $0xc0] sm:$0xff]
        %v5313 = vld [vmem:[%s2 + $0xc8] sm:$0xff]
        %v5314 = vld [vmem:[%s2 + $0xd0] sm:$0xff]
        %v5315 = vld [vmem:[%s2 + $0xd8] sm:$0xff]
        %v5316 = vld [vmem:[%s2 + $0xe0] sm:$0xff]
        %v5317 = vld [vmem:[%s2 + $0xe8] sm:$0xff]
        %v5318 = vld [vmem:[%s2 + $0xf0] sm:$0xff]
        %v5319 = vld [vmem:[%s2 + $0xf8] sm:$0xff]
        %v5320 = vld [vmem:[%s2 + $0x100] sm:$0xff]
        %v5321 = vld [vmem:[%s2 + $0x108] sm:$0xff]
        %v5322 = vld [vmem:[%s2 + $0x110] sm:$0xff]
        %v5323 = vld [vmem:[%s2 + $0x118] sm:$0xff]
        %v5324 = vld [vmem:[%s2 + $0x120] sm:$0xff]
        %v5325 = vld [vmem:[%s2 + $0x128] sm:$0xff]
        %v5326 = vld [vmem:[%s2 + $0x130] sm:$0xff]
        %v5327 = vld [vmem:[%s2 + $0x138] sm:$0xff]
        %v5328 = vld [vmem:[%s2 + $0x140] sm:$0xff]
        %v5329 = vld [vmem:[%s2 + $0x148] sm:$0xff]
        %v5330 = vld [vmem:[%s2 + $0x150] sm:$0xff]
        %v5331 = vld [vmem:[%s2 + $0x158] sm:$0xff]
        %v5332 = vld [vmem:[%s2 + $0x160] sm:$0xff]
        %v5333 = vld [vmem:[%s2 + $0x168] sm:$0xff]
        %v5334 = vld [vmem:[%s2 + $0x170] sm:$0xff]
        %v5335 = vld [vmem:[%s2 + $0x178] sm:$0xff]
        %v5336 = vld [vmem:[%s2 + $0x180] sm:$0xff]
        %v5337 = vld [vmem:[%s2 + $0x188] sm:$0xff]
        %v5338 = vld [vmem:[%s2 + $0x190] sm:$0xff]
        %v5339 = vld [vmem:[%s2 + $0x198] sm:$0xff]
        %v5340 = vld [vmem:[%s2 + $0x1a0] sm:$0xff]
        %v5341 = vld [vmem:[%s2 + $0x1a8] sm:$0xff]
        %v5342 = vld [vmem:[%s2 + $0x1b0] sm:$0xff]
        %v5343 = vld [vmem:[%s2 + $0x1b8] sm:$0xff]
        %v5344 = vld [vmem:[%s2 + $0x1c0] sm:$0xff]
        %v5345 = vld [vmem:[%s2 + $0x1c8] sm:$0xff]
        %v5346 = vld [vmem:[%s2 + $0x1d0] sm:$0xff]
        %v5347 = vld [vmem:[%s2 + $0x1d8] sm:$0xff]
        %v5348 = vld [vmem:[%s2 + $0x1e0] sm:$0xff]
        %v5349 = vld [vmem:[%s2 + $0x1e8] sm:$0xff]
        %v5350 = vld [vmem:[%s2 + $0x1f0] sm:$0xff]
        %v5351 = vld [vmem:[%s2 + $0x1f8] sm:$0xff]
        %v5352 = vld [vmem:[%s2 + $0x200] sm:$0xff]
        %v5353 = vld [vmem:[%s2 + $0x208] sm:$0xff]
        %v5354 = vld [vmem:[%s2 + $0x210] sm:$0xff]
        %v5355 = vld [vmem:[%s2 + $0x218] sm:$0xff]
        %v5356 = vld [vmem:[%s2 + $0x220] sm:$0xff]
        %v5357 = vld [vmem:[%s2 + $0x228] sm:$0xff]
        %v5358 = vld [vmem:[%s2 + $0x230] sm:$0xff]
        %v5359 = vld [vmem:[%s2 + $0x238] sm:$0xff]
        %v5360 = vld [vmem:[%s2 + $0x240] sm:$0xff]
        %v5361 = vld [vmem:[%s2 + $0x248] sm:$0xff]
        %v5362 = vld [vmem:[%s2 + $0x250] sm:$0xff]
        %v5363 = vld [vmem:[%s2 + $0x258] sm:$0xff]
        %v5364 = vld [vmem:[%s2 + $0x260] sm:$0xff]
        %v5365 = vld [vmem:[%s2 + $0x268] sm:$0xff]
        %v5366 = vld [vmem:[%s2 + $0x270] sm:$0xff]
        %v5367 = vld [vmem:[%s2 + $0x278] sm:$0xff]
        %v5368 = vld [vmem:[%s2 + $0x280] sm:$0xff]
        %v5369 = vld [vmem:[%s2 + $0x288] sm:$0xff]
        %v5370 = vld [vmem:[%s2 + $0x290] sm:$0xff]
        %v5371 = vld [vmem:[%s2 + $0x298] sm:$0xff]
        %v5372 = vld [vmem:[%s2 + $0x2a0] sm:$0xff]
        %v5373 = vld [vmem:[%s2 + $0x2a8] sm:$0xff]
        %v5374 = vld [vmem:[%s2 + $0x2b0] sm:$0xff]
        %v5375 = vld [vmem:[%s2 + $0x2b8] sm:$0xff]
        %v5376 = vld [vmem:[%s2 + $0x2c0] sm:$0xff]
        %v5377 = vld [vmem:[%s2 + $0x2c8] sm:$0xff]
        %v5378 = vld [vmem:[%s2 + $0x2d0] sm:$0xff]
        %v5379 = vld [vmem:[%s2 + $0x2d8] sm:$0xff]
        %v5380 = vld [vmem:[%s2 + $0x2e0] sm:$0xff]
        %v5381 = vld [vmem:[%s2 + $0x2e8] sm:$0xff]
        %v5382 = vld [vmem:[%s2 + $0x2f0] sm:$0xff]
        %v5383 = vld [vmem:[%s2 + $0x2f8] sm:$0xff]
        %v5384 = vld [vmem:[%s2 + $0x300] sm:$0xff]
        %v5385 = vld [vmem:[%s2 + $0x308] sm:$0xff]
        %v5386 = vld [vmem:[%s2 + $0x310] sm:$0xff]
        %v5387 = vld [vmem:[%s2 + $0x318] sm:$0xff]
        %v5388 = vld [vmem:[%s2 + $0x320] sm:$0xff]
        %v5389 = vld [vmem:[%s2 + $0x328] sm:$0xff]
        %v5390 = vld [vmem:[%s2 + $0x330] sm:$0xff]
        %v5391 = vld [vmem:[%s2 + $0x338] sm:$0xff]
        %v5392 = vld [vmem:[%s2 + $0x340] sm:$0xff]
        %v5393 = vld [vmem:[%s2 + $0x348] sm:$0xff]
        %v5394 = vld [vmem:[%s2 + $0x350] sm:$0xff]
        %v5395 = vld [vmem:[%s2 + $0x358] sm:$0xff]
        %v5396 = vld [vmem:[%s2 + $0x360] sm:$0xff]
        %v5397 = vld [vmem:[%s2 + $0x368] sm:$0xff]
        %v5398 = vld [vmem:[%s2 + $0x370] sm:$0xff]
        %v5399 = vld [vmem:[%s2 + $0x378] sm:$0xff]
        %v5400 = vld [vmem:[%s2 + $0x380] sm:$0xff]
        %v5401 = vld [vmem:[%s2 + $0x388] sm:$0xff]
        %v5402 = vld [vmem:[%s2 + $0x390] sm:$0xff]
        %v5403 = vld [vmem:[%s2 + $0x398] sm:$0xff]
        %v5404 = vld [vmem:[%s2 + $0x3a0] sm:$0xff]
        %v5405 = vld [vmem:[%s2 + $0x3a8] sm:$0xff]
        %v5406 = vld [vmem:[%s2 + $0x3b0] sm:$0xff]
        %v5407 = vld [vmem:[%s2 + $0x3b8] sm:$0xff]
        %v5408 = vld [vmem:[%s2 + $0x3c0] sm:$0xff]
        %v5409 = vld [vmem:[%s2 + $0x3c8] sm:$0xff]
        %v5410 = vld [vmem:[%s2 + $0x3d0] sm:$0xff]
        %v5411 = vld [vmem:[%s2 + $0x3d8] sm:$0xff]
        %v5412 = vld [vmem:[%s2 + $0x3e0] sm:$0xff]
        %v5413 = vld [vmem:[%s2 + $0x3e8] sm:$0xff]
        %v5414 = vld [vmem:[%s2 + $0x3f0] sm:$0xff]
        %v5415 = vld [vmem:[%s2 + $0x3f8] sm:$0xff]
        %v5416 = vld [vmem:[%s2 + $0x400] sm:$0xff]
        %v5417 = vld [vmem:[%s2 + $0x408] sm:$0xff]
        %v5418 = vld [vmem:[%s2 + $0x410] sm:$0xff]
        %v5419 = vld [vmem:[%s2 + $0x418] sm:$0xff]
        %v5420 = vld [vmem:[%s2 + $0x420] sm:$0xff]
        %v5421 = vld [vmem:[%s2 + $0x428] sm:$0xff]
        %v5422 = vld [vmem:[%s2 + $0x430] sm:$0xff]
        %v5423 = vld [vmem:[%s2 + $0x438] sm:$0xff]
        %v5424 = vld [vmem:[%s2 + $0x440] sm:$0xff]
        %v5425 = vld [vmem:[%s2 + $0x448] sm:$0xff]
        %v5426 = vld [vmem:[%s2 + $0x450] sm:$0xff]
        %v5427 = vld [vmem:[%s2 + $0x458] sm:$0xff]
        %v5428 = vld [vmem:[%s2 + $0x460] sm:$0xff]
        %v5429 = vld [vmem:[%s2 + $0x468] sm:$0xff]
        %v5430 = vld [vmem:[%s2 + $0x470] sm:$0xff]
        %v5431 = vld [vmem:[%s2 + $0x478] sm:$0xff]
        %v5432 = vld [vmem:[%s4] sm:$0x3]
        %v5434 = vlaneseq
        %v5435 = vshrl.u32 %v5434, 7
        %v5436 = vsub.s32 0, %v5435
        %v5437 = vrot.slane %v5432, %v5436
        %v5438 = vlaneseq
        %v5439 = vshrl.u32 %v5438, 7
        %v5440 = vsub.s32 1, %v5439
        %v5441 = vrot.slane %v5432, %v5440
        %v5588 = vunpack.c.l.b16 %v5288
        %v5589 = vunpack.c.h.b16 %v5288
        %v5590 = vunpack.c.l.b16 %v5289
        %v5591 = vunpack.c.h.b16 %v5289
        %v5592 = vunpack.c.l.b16 %v5290
        %v5593 = vunpack.c.h.b16 %v5290
        %v5594 = vunpack.c.l.b16 %v5291
        %v5595 = vunpack.c.h.b16 %v5291
        %v5596 = vunpack.c.l.b16 %v5292
        %v5597 = vunpack.c.h.b16 %v5292
        %v5598 = vunpack.c.l.b16 %v5293
        %v5599 = vunpack.c.h.b16 %v5293
        %v5600 = vunpack.c.l.b16 %v5294
        %v5601 = vunpack.c.h.b16 %v5294
        %v5602 = vunpack.c.l.b16 %v5295
        %v5603 = vunpack.c.h.b16 %v5295
        %v5604 = vunpack.c.l.b16 %v5296
        %v5605 = vunpack.c.h.b16 %v5296
        %v5606 = vunpack.c.l.b16 %v5297
        %v5607 = vunpack.c.h.b16 %v5297
        %v5608 = vunpack.c.l.b16 %v5298
        %v5609 = vunpack.c.h.b16 %v5298
        %v5610 = vunpack.c.l.b16 %v5299
        %v5611 = vunpack.c.h.b16 %v5299
        %v5612 = vunpack.c.l.b16 %v5300
        %v5613 = vunpack.c.h.b16 %v5300
        %v5614 = vunpack.c.l.b16 %v5301
        %v5615 = vunpack.c.h.b16 %v5301
        %v5616 = vunpack.c.l.b16 %v5302
        %v5617 = vunpack.c.h.b16 %v5302
        %v5618 = vunpack.c.l.b16 %v5303
        %v5619 = vunpack.c.h.b16 %v5303
        %v5620 = vunpack.c.l.b16 %v5304
        %v5621 = vunpack.c.h.b16 %v5304
        %v5622 = vunpack.c.l.b16 %v5305
        %v5623 = vunpack.c.h.b16 %v5305
        %v5624 = vunpack.c.l.b16 %v5306
        %v5625 = vunpack.c.h.b16 %v5306
        %v5626 = vunpack.c.l.b16 %v5307
        %v5627 = vunpack.c.h.b16 %v5307
        %v5628 = vunpack.c.l.b16 %v5308
        %v5629 = vunpack.c.h.b16 %v5308
        %v5630 = vunpack.c.l.b16 %v5309
        %v5631 = vunpack.c.h.b16 %v5309
        %v5632 = vunpack.c.l.b16 %v5310
        %v5633 = vunpack.c.h.b16 %v5310
        %v5634 = vunpack.c.l.b16 %v5311
        %v5635 = vunpack.c.h.b16 %v5311
        %v5636 = vunpack.c.l.b16 %v5312
        %v5637 = vunpack.c.h.b16 %v5312
        %v5638 = vunpack.c.l.b16 %v5313
        %v5639 = vunpack.c.h.b16 %v5313
        %v5640 = vunpack.c.l.b16 %v5314
        %v5641 = vunpack.c.h.b16 %v5314
        %v5642 = vunpack.c.l.b16 %v5315
        %v5643 = vunpack.c.h.b16 %v5315
        %v5644 = vunpack.c.l.b16 %v5316
        %v5645 = vunpack.c.h.b16 %v5316
        %v5646 = vunpack.c.l.b16 %v5317
        %v5647 = vunpack.c.h.b16 %v5317
        %v5648 = vunpack.c.l.b16 %v5318
        %v5649 = vunpack.c.h.b16 %v5318
        %v5650 = vunpack.c.l.b16 %v5319
        %v5651 = vunpack.c.h.b16 %v5319
        %v5652 = vunpack.c.l.b16 %v5320
        %v5653 = vunpack.c.h.b16 %v5320
        %v5654 = vunpack.c.l.b16 %v5321
        %v5655 = vunpack.c.h.b16 %v5321
        %v5656 = vunpack.c.l.b16 %v5322
        %v5657 = vunpack.c.h.b16 %v5322
        %v5658 = vunpack.c.l.b16 %v5323
        %v5659 = vunpack.c.h.b16 %v5323
        %v5660 = vunpack.c.l.b16 %v5324
        %v5661 = vunpack.c.h.b16 %v5324
        %v5662 = vunpack.c.l.b16 %v5325
        %v5663 = vunpack.c.h.b16 %v5325
        %v5664 = vunpack.c.l.b16 %v5326
        %v5665 = vunpack.c.h.b16 %v5326
        %v5666 = vunpack.c.l.b16 %v5327
        %v5667 = vunpack.c.h.b16 %v5327
        %v5668 = vunpack.c.l.b16 %v5328
        %v5669 = vunpack.c.h.b16 %v5328
        %v5670 = vunpack.c.l.b16 %v5329
        %v5671 = vunpack.c.h.b16 %v5329
        %v5672 = vunpack.c.l.b16 %v5330
        %v5673 = vunpack.c.h.b16 %v5330
        %v5674 = vunpack.c.l.b16 %v5331
        %v5675 = vunpack.c.h.b16 %v5331
        %v5676 = vunpack.c.l.b16 %v5332
        %v5677 = vunpack.c.h.b16 %v5332
        %v5678 = vunpack.c.l.b16 %v5333
        %v5679 = vunpack.c.h.b16 %v5333
        %v5680 = vunpack.c.l.b16 %v5334
        %v5681 = vunpack.c.h.b16 %v5334
        %v5682 = vunpack.c.l.b16 %v5335
        %v5683 = vunpack.c.h.b16 %v5335
        %v5684 = vunpack.c.l.b16 %v5336
        %v5685 = vunpack.c.h.b16 %v5336
        %v5686 = vunpack.c.l.b16 %v5337
        %v5687 = vunpack.c.h.b16 %v5337
        %v5688 = vunpack.c.l.b16 %v5338
        %v5689 = vunpack.c.h.b16 %v5338
        %v5690 = vunpack.c.l.b16 %v5339
        %v5691 = vunpack.c.h.b16 %v5339
        %v5692 = vunpack.c.l.b16 %v5340
        %v5693 = vunpack.c.h.b16 %v5340
        %v5694 = vunpack.c.l.b16 %v5341
        %v5695 = vunpack.c.h.b16 %v5341
        %v5696 = vunpack.c.l.b16 %v5342
        %v5697 = vunpack.c.h.b16 %v5342
        %v5698 = vunpack.c.l.b16 %v5343
        %v5699 = vunpack.c.h.b16 %v5343
        %v5700 = vunpack.c.l.b16 %v5344
        %v5701 = vunpack.c.h.b16 %v5344
        %v5702 = vunpack.c.l.b16 %v5345
        %v5703 = vunpack.c.h.b16 %v5345
        %v5704 = vunpack.c.l.b16 %v5346
        %v5705 = vunpack.c.h.b16 %v5346
        %v5706 = vunpack.c.l.b16 %v5347
        %v5707 = vunpack.c.h.b16 %v5347
        %v5708 = vunpack.c.l.b16 %v5348
        %v5709 = vunpack.c.h.b16 %v5348
        %v5710 = vunpack.c.l.b16 %v5349
        %v5711 = vunpack.c.h.b16 %v5349
        %v5712 = vunpack.c.l.b16 %v5350
        %v5713 = vunpack.c.h.b16 %v5350
        %v5714 = vunpack.c.l.b16 %v5351
        %v5715 = vunpack.c.h.b16 %v5351
        %v5716 = vunpack.c.l.b16 %v5352
        %v5717 = vunpack.c.h.b16 %v5352
        %v5718 = vunpack.c.l.b16 %v5353
        %v5719 = vunpack.c.h.b16 %v5353
        %v5720 = vunpack.c.l.b16 %v5354
        %v5721 = vunpack.c.h.b16 %v5354
        %v5722 = vunpack.c.l.b16 %v5355
        %v5723 = vunpack.c.h.b16 %v5355
        %v5724 = vunpack.c.l.b16 %v5356
        %v5725 = vunpack.c.h.b16 %v5356
        %v5726 = vunpack.c.l.b16 %v5357
        %v5727 = vunpack.c.h.b16 %v5357
        %v5728 = vunpack.c.l.b16 %v5358
        %v5729 = vunpack.c.h.b16 %v5358
        %v5730 = vunpack.c.l.b16 %v5359
        %v5731 = vunpack.c.h.b16 %v5359
        %v5732 = vunpack.c.l.b16 %v5360
        %v5733 = vunpack.c.h.b16 %v5360
        %v5734 = vunpack.c.l.b16 %v5361
        %v5735 = vunpack.c.h.b16 %v5361
        %v5736 = vunpack.c.l.b16 %v5362
        %v5737 = vunpack.c.h.b16 %v5362
        %v5738 = vunpack.c.l.b16 %v5363
        %v5739 = vunpack.c.h.b16 %v5363
        %v5740 = vunpack.c.l.b16 %v5364
        %v5741 = vunpack.c.h.b16 %v5364
        %v5742 = vunpack.c.l.b16 %v5365
        %v5743 = vunpack.c.h.b16 %v5365
        %v5744 = vunpack.c.l.b16 %v5366
        %v5745 = vunpack.c.h.b16 %v5366
        %v5746 = vunpack.c.l.b16 %v5367
        %v5747 = vunpack.c.h.b16 %v5367
        %v5748 = vunpack.c.l.b16 %v5368
        %v5749 = vunpack.c.h.b16 %v5368
        %v5750 = vunpack.c.l.b16 %v5369
        %v5751 = vunpack.c.h.b16 %v5369
        %v5752 = vunpack.c.l.b16 %v5370
        %v5753 = vunpack.c.h.b16 %v5370
        %v5754 = vunpack.c.l.b16 %v5371
        %v5755 = vunpack.c.h.b16 %v5371
        %v5756 = vunpack.c.l.b16 %v5372
        %v5757 = vunpack.c.h.b16 %v5372
        %v5758 = vunpack.c.l.b16 %v5373
        %v5759 = vunpack.c.h.b16 %v5373
        %v5760 = vunpack.c.l.b16 %v5374
        %v5761 = vunpack.c.h.b16 %v5374
        %v5762 = vunpack.c.l.b16 %v5375
        %v5763 = vunpack.c.h.b16 %v5375
        %v5764 = vunpack.c.l.b16 %v5376
        %v5765 = vunpack.c.h.b16 %v5376
        %v5766 = vunpack.c.l.b16 %v5377
        %v5767 = vunpack.c.h.b16 %v5377
        %v5768 = vunpack.c.l.b16 %v5378
        %v5769 = vunpack.c.h.b16 %v5378
        %v5770 = vunpack.c.l.b16 %v5379
        %v5771 = vunpack.c.h.b16 %v5379
        %v5772 = vunpack.c.l.b16 %v5380
        %v5773 = vunpack.c.h.b16 %v5380
        %v5774 = vunpack.c.l.b16 %v5381
        %v5775 = vunpack.c.h.b16 %v5381
        %v5776 = vunpack.c.l.b16 %v5382
        %v5777 = vunpack.c.h.b16 %v5382
        %v5778 = vunpack.c.l.b16 %v5383
        %v5779 = vunpack.c.h.b16 %v5383
        %v5780 = vunpack.c.l.b16 %v5384
        %v5781 = vunpack.c.h.b16 %v5384
        %v5782 = vunpack.c.l.b16 %v5385
        %v5783 = vunpack.c.h.b16 %v5385
        %v5784 = vunpack.c.l.b16 %v5386
        %v5785 = vunpack.c.h.b16 %v5386
        %v5786 = vunpack.c.l.b16 %v5387
        %v5787 = vunpack.c.h.b16 %v5387
        %v5788 = vunpack.c.l.b16 %v5388
        %v5789 = vunpack.c.h.b16 %v5388
        %v5790 = vunpack.c.l.b16 %v5389
        %v5791 = vunpack.c.h.b16 %v5389
        %v5792 = vunpack.c.l.b16 %v5390
        %v5793 = vunpack.c.h.b16 %v5390
        %v5794 = vunpack.c.l.b16 %v5391
        %v5795 = vunpack.c.h.b16 %v5391
        %v5796 = vunpack.c.l.b16 %v5392
        %v5797 = vunpack.c.h.b16 %v5392
        %v5798 = vunpack.c.l.b16 %v5393
        %v5799 = vunpack.c.h.b16 %v5393
        %v5800 = vunpack.c.l.b16 %v5394
        %v5801 = vunpack.c.h.b16 %v5394
        %v5802 = vunpack.c.l.b16 %v5395
        %v5803 = vunpack.c.h.b16 %v5395
        %v5804 = vunpack.c.l.b16 %v5396
        %v5805 = vunpack.c.h.b16 %v5396
        %v5806 = vunpack.c.l.b16 %v5397
        %v5807 = vunpack.c.h.b16 %v5397
        %v5808 = vunpack.c.l.b16 %v5398
        %v5809 = vunpack.c.h.b16 %v5398
        %v5810 = vunpack.c.l.b16 %v5399
        %v5811 = vunpack.c.h.b16 %v5399
        %v5812 = vunpack.c.l.b16 %v5400
        %v5813 = vunpack.c.h.b16 %v5400
        %v5814 = vunpack.c.l.b16 %v5401
        %v5815 = vunpack.c.h.b16 %v5401
        %v5816 = vunpack.c.l.b16 %v5402
        %v5817 = vunpack.c.h.b16 %v5402
        %v5818 = vunpack.c.l.b16 %v5403
        %v5819 = vunpack.c.h.b16 %v5403
        %v5820 = vunpack.c.l.b16 %v5404
        %v5821 = vunpack.c.h.b16 %v5404
        %v5822 = vunpack.c.l.b16 %v5405
        %v5823 = vunpack.c.h.b16 %v5405
        %v5824 = vunpack.c.l.b16 %v5406
        %v5825 = vunpack.c.h.b16 %v5406
        %v5826 = vunpack.c.l.b16 %v5407
        %v5827 = vunpack.c.h.b16 %v5407
        %v5828 = vunpack.c.l.b16 %v5408
        %v5829 = vunpack.c.h.b16 %v5408
        %v5830 = vunpack.c.l.b16 %v5409
        %v5831 = vunpack.c.h.b16 %v5409
        %v5832 = vunpack.c.l.b16 %v5410
        %v5833 = vunpack.c.h.b16 %v5410
        %v5834 = vunpack.c.l.b16 %v5411
        %v5835 = vunpack.c.h.b16 %v5411
        %v5836 = vunpack.c.l.b16 %v5412
        %v5837 = vunpack.c.h.b16 %v5412
        %v5838 = vunpack.c.l.b16 %v5413
        %v5839 = vunpack.c.h.b16 %v5413
        %v5840 = vunpack.c.l.b16 %v5414
        %v5841 = vunpack.c.h.b16 %v5414
        %v5842 = vunpack.c.l.b16 %v5415
        %v5843 = vunpack.c.h.b16 %v5415
        %v5844 = vunpack.c.l.b16 %v5416
        %v5845 = vunpack.c.h.b16 %v5416
        %v5846 = vunpack.c.l.b16 %v5417
        %v5847 = vunpack.c.h.b16 %v5417
        %v5848 = vunpack.c.l.b16 %v5418
        %v5849 = vunpack.c.h.b16 %v5418
        %v5850 = vunpack.c.l.b16 %v5419
        %v5851 = vunpack.c.h.b16 %v5419
        %v5852 = vunpack.c.l.b16 %v5420
        %v5853 = vunpack.c.h.b16 %v5420
        %v5854 = vunpack.c.l.b16 %v5421
        %v5855 = vunpack.c.h.b16 %v5421
        %v5856 = vunpack.c.l.b16 %v5422
        %v5857 = vunpack.c.h.b16 %v5422
        %v5858 = vunpack.c.l.b16 %v5423
        %v5859 = vunpack.c.h.b16 %v5423
        %v5860 = vunpack.c.l.b16 %v5424
        %v5861 = vunpack.c.h.b16 %v5424
        %v5862 = vunpack.c.l.b16 %v5425
        %v5863 = vunpack.c.h.b16 %v5425
        %v5864 = vunpack.c.l.b16 %v5426
        %v5865 = vunpack.c.h.b16 %v5426
        %v5866 = vunpack.c.l.b16 %v5427
        %v5867 = vunpack.c.h.b16 %v5427
        %v5868 = vunpack.c.l.b16 %v5428
        %v5869 = vunpack.c.h.b16 %v5428
        %v5870 = vunpack.c.l.b16 %v5429
        %v5871 = vunpack.c.h.b16 %v5429
        %v5872 = vunpack.c.l.b16 %v5430
        %v5873 = vunpack.c.h.b16 %v5430
        %v5874 = vunpack.c.l.b16 %v5431
        %v5875 = vunpack.c.h.b16 %v5431
        %v5876 = vpack.c.b16 %v5590, %v5588
        %v5877 = vpack.c.b16 %v5591, %v5589
        %v5878 = vpack.c.b16 %v5594, %v5592
        %v5879 = vpack.c.b16 %v5595, %v5593
        %v5880 = vpack.c.b16 %v5598, %v5596
        %v5881 = vpack.c.b16 %v5599, %v5597
        %v5882 = vpack.c.b16 %v5602, %v5600
        %v5883 = vpack.c.b16 %v5603, %v5601
        %v5884 = vpack.c.b16 %v5606, %v5604
        %v5885 = vpack.c.b16 %v5607, %v5605
        %v5886 = vpack.c.b16 %v5610, %v5608
        %v5887 = vpack.c.b16 %v5611, %v5609
        %v5888 = vpack.c.b16 %v5614, %v5612
        %v5889 = vpack.c.b16 %v5615, %v5613
        %v5890 = vpack.c.b16 %v5618, %v5616
        %v5891 = vpack.c.b16 %v5619, %v5617
        %v5892 = vpack.c.b16 %v5622, %v5620
        %v5893 = vpack.c.b16 %v5623, %v5621
        %v5894 = vpack.c.b16 %v5626, %v5624
        %v5895 = vpack.c.b16 %v5627, %v5625
        %v5896 = vpack.c.b16 %v5630, %v5628
        %v5897 = vpack.c.b16 %v5631, %v5629
        %v5898 = vpack.c.b16 %v5634, %v5632
        %v5899 = vpack.c.b16 %v5635, %v5633
        %v5900 = vpack.c.b16 %v5638, %v5636
        %v5901 = vpack.c.b16 %v5639, %v5637
        %v5902 = vpack.c.b16 %v5642, %v5640
        %v5903 = vpack.c.b16 %v5643, %v5641
        %v5904 = vpack.c.b16 %v5646, %v5644
        %v5905 = vpack.c.b16 %v5647, %v5645
        %v5906 = vpack.c.b16 %v5650, %v5648
        %v5907 = vpack.c.b16 %v5651, %v5649
        %v5908 = vpack.c.b16 %v5654, %v5652
        %v5909 = vpack.c.b16 %v5655, %v5653
        %v5910 = vpack.c.b16 %v5658, %v5656
        %v5911 = vpack.c.b16 %v5659, %v5657
        %v5912 = vpack.c.b16 %v5662, %v5660
        %v5913 = vpack.c.b16 %v5663, %v5661
        %v5914 = vpack.c.b16 %v5666, %v5664
        %v5915 = vpack.c.b16 %v5667, %v5665
        %v5916 = vpack.c.b16 %v5670, %v5668
        %v5917 = vpack.c.b16 %v5671, %v5669
        %v5918 = vpack.c.b16 %v5674, %v5672
        %v5919 = vpack.c.b16 %v5675, %v5673
        %v5920 = vpack.c.b16 %v5678, %v5676
        %v5921 = vpack.c.b16 %v5679, %v5677
        %v5922 = vpack.c.b16 %v5682, %v5680
        %v5923 = vpack.c.b16 %v5683, %v5681
        %v5924 = vpack.c.b16 %v5686, %v5684
        %v5925 = vpack.c.b16 %v5687, %v5685
        %v5926 = vpack.c.b16 %v5690, %v5688
        %v5927 = vpack.c.b16 %v5691, %v5689
        %v5928 = vpack.c.b16 %v5694, %v5692
        %v5929 = vpack.c.b16 %v5695, %v5693
        %v5930 = vpack.c.b16 %v5698, %v5696
        %v5931 = vpack.c.b16 %v5699, %v5697
        %v5932 = vpack.c.b16 %v5702, %v5700
        %v5933 = vpack.c.b16 %v5703, %v5701
        %v5934 = vpack.c.b16 %v5706, %v5704
        %v5935 = vpack.c.b16 %v5707, %v5705
        %v5936 = vpack.c.b16 %v5710, %v5708
        %v5937 = vpack.c.b16 %v5711, %v5709
        %v5938 = vpack.c.b16 %v5714, %v5712
        %v5939 = vpack.c.b16 %v5715, %v5713
        %v5940 = vpack.c.b16 %v5718, %v5716
        %v5941 = vpack.c.b16 %v5719, %v5717
        %v5942 = vpack.c.b16 %v5722, %v5720
        %v5943 = vpack.c.b16 %v5723, %v5721
        %v5944 = vpack.c.b16 %v5726, %v5724
        %v5945 = vpack.c.b16 %v5727, %v5725
        %v5946 = vpack.c.b16 %v5730, %v5728
        %v5947 = vpack.c.b16 %v5731, %v5729
        %v5948 = vpack.c.b16 %v5734, %v5732
        %v5949 = vpack.c.b16 %v5735, %v5733
        %v5950 = vpack.c.b16 %v5738, %v5736
        %v5951 = vpack.c.b16 %v5739, %v5737
        %v5952 = vpack.c.b16 %v5742, %v5740
        %v5953 = vpack.c.b16 %v5743, %v5741
        %v5954 = vpack.c.b16 %v5746, %v5744
        %v5955 = vpack.c.b16 %v5747, %v5745
        %v5956 = vpack.c.b16 %v5750, %v5748
        %v5957 = vpack.c.b16 %v5751, %v5749
        %v5958 = vpack.c.b16 %v5754, %v5752
        %v5959 = vpack.c.b16 %v5755, %v5753
        %v5960 = vpack.c.b16 %v5758, %v5756
        %v5961 = vpack.c.b16 %v5759, %v5757
        %v5962 = vpack.c.b16 %v5762, %v5760
        %v5963 = vpack.c.b16 %v5763, %v5761
        %v5964 = vpack.c.b16 %v5766, %v5764
        %v5965 = vpack.c.b16 %v5767, %v5765
        %v5966 = vpack.c.b16 %v5770, %v5768
        %v5967 = vpack.c.b16 %v5771, %v5769
        %v5968 = vpack.c.b16 %v5774, %v5772
        %v5969 = vpack.c.b16 %v5775, %v5773
        %v5970 = vpack.c.b16 %v5778, %v5776
        %v5971 = vpack.c.b16 %v5779, %v5777
        %v5972 = vpack.c.b16 %v5782, %v5780
        %v5973 = vpack.c.b16 %v5783, %v5781
        %v5974 = vpack.c.b16 %v5786, %v5784
        %v5975 = vpack.c.b16 %v5787, %v5785
        %v5976 = vpack.c.b16 %v5790, %v5788
        %v5977 = vpack.c.b16 %v5791, %v5789
        %v5978 = vpack.c.b16 %v5794, %v5792
        %v5979 = vpack.c.b16 %v5795, %v5793
        %v5980 = vpack.c.b16 %v5798, %v5796
        %v5981 = vpack.c.b16 %v5799, %v5797
        %v5982 = vpack.c.b16 %v5802, %v5800
        %v5983 = vpack.c.b16 %v5803, %v5801
        %v5984 = vpack.c.b16 %v5806, %v5804
        %v5985 = vpack.c.b16 %v5807, %v5805
        %v5986 = vpack.c.b16 %v5810, %v5808
        %v5987 = vpack.c.b16 %v5811, %v5809
        %v5988 = vpack.c.b16 %v5814, %v5812
        %v5989 = vpack.c.b16 %v5815, %v5813
        %v5990 = vpack.c.b16 %v5818, %v5816
        %v5991 = vpack.c.b16 %v5819, %v5817
        %v5992 = vpack.c.b16 %v5822, %v5820
        %v5993 = vpack.c.b16 %v5823, %v5821
        %v5994 = vpack.c.b16 %v5826, %v5824
        %v5995 = vpack.c.b16 %v5827, %v5825
        %v5996 = vpack.c.b16 %v5830, %v5828
        %v5997 = vpack.c.b16 %v5831, %v5829
        %v5998 = vpack.c.b16 %v5834, %v5832
        %v5999 = vpack.c.b16 %v5835, %v5833
        %v6000 = vpack.c.b16 %v5838, %v5836
        %v6001 = vpack.c.b16 %v5839, %v5837
        %v6002 = vpack.c.b16 %v5842, %v5840
        %v6003 = vpack.c.b16 %v5843, %v5841
        %v6004 = vpack.c.b16 %v5846, %v5844
        %v6005 = vpack.c.b16 %v5847, %v5845
        %v6006 = vpack.c.b16 %v5850, %v5848
        %v6007 = vpack.c.b16 %v5851, %v5849
        %v6008 = vpack.c.b16 %v5854, %v5852
        %v6009 = vpack.c.b16 %v5855, %v5853
        %v6010 = vpack.c.b16 %v5858, %v5856
        %v6011 = vpack.c.b16 %v5859, %v5857
        %v6012 = vpack.c.b16 %v5862, %v5860
        %v6013 = vpack.c.b16 %v5863, %v5861
        %v6014 = vpack.c.b16 %v5866, %v5864
        %v6015 = vpack.c.b16 %v5867, %v5865
        %v6016 = vpack.c.b16 %v5870, %v5868
        %v6017 = vpack.c.b16 %v5871, %v5869
        %v6018 = vpack.c.b16 %v5874, %v5872
        %v6019 = vpack.c.b16 %v5875, %v5873
        %6164 = vmatprep.subr.bf16.mxu0 %v5877
        %6165 = vmatpush1.bf16.msra.mxu0 %v5876
        %6166 = vmatprep.subr.bf16.mxu0 %v5879
        %6167 = vmatpush1.bf16.msra.mxu0 %v5878
        %6168 = vmatprep.subr.bf16.mxu0 %v5881
        %6169 = vmatpush1.bf16.msra.mxu0 %v5880
        %6170 = vmatprep.subr.bf16.mxu0 %v5883
        %6171 = vmatpush1.bf16.msra.mxu0 %v5882
        %6172 = vmatprep.subr.bf16.mxu0 %v5885
        %6173 = vmatpush1.bf16.msra.mxu0 %v5884
        %6174 = vmatprep.subr.bf16.mxu0 %v5887
        %6175 = vmatpush1.bf16.msra.mxu0 %v5886
        %6176 = vmatprep.subr.bf16.mxu0 %v5889
        %6177 = vmatpush1.bf16.msra.mxu0 %v5888
        %6178 = vmatprep.subr.bf16.mxu0 %v5891
        %6179 = vmatpush1.bf16.msra.mxu0 %v5890
        %6180 = vmatprep.subr.bf16.mxu0 %v5893
        %6181 = vmatpush1.bf16.msra.mxu0 %v5892
        %6182 = vmatprep.subr.bf16.mxu0 %v5895
        %6183 = vmatpush1.bf16.msra.mxu0 %v5894
        %6184 = vmatprep.subr.bf16.mxu0 %v5897
        %6185 = vmatpush1.bf16.msra.mxu0 %v5896
        %6186 = vmatprep.subr.bf16.mxu0 %v5899
        %6187 = vmatpush1.bf16.msra.mxu0 %v5898
        %6188 = vmatprep.subr.bf16.mxu0 %v5901
        %6189 = vmatpush1.bf16.msra.mxu0 %v5900
        %6190 = vmatprep.subr.bf16.mxu0 %v5903
        %6191 = vmatpush1.bf16.msra.mxu0 %v5902
        %6192 = vmatprep.subr.bf16.mxu0 %v5905
        %6193 = vmatpush1.bf16.msra.mxu0 %v5904
        %6194 = vmatprep.subr.bf16.mxu0 %v5907
        %6195 = vmatpush1.bf16.msra.mxu0 %v5906
        %6196 = vmatprep.mubr.bf16.mxu0 %v3725
        %6197 = vmatmul.mubr.bf16.gmra.mrb[0].mxu0 %v3724
        %v6198 = vpop.f32.mrb[0].mxu0
        %v6199 = vadd.f32 %v5437, %v6198
        %v6200 = vpop.f32.mrb[0].mxu0
        %v6201 = vadd.f32 %v5441, %v6200
        %v6202 = vpop.f32.mrb[0].mxu0
        %v6203 = vadd.f32 %v5437, %v6202
        %v6204 = vpop.f32.mrb[0].mxu0
        %v6205 = vadd.f32 %v5441, %v6204
        %6206 = vmatprep.mubr.bf16.mxu0 %v3734
        %6207 = vmatmul.mubr.bf16.gmra.mrb[0].mxu0 %v3733
        %v6208 = vpop.f32.mrb[0].mxu0
        %v6209 = vadd.f32 %v5437, %v6208
        %v6210 = vpop.f32.mrb[0].mxu0
        %v6211 = vadd.f32 %v5441, %v6210
        %v6212 = vpop.f32.mrb[0].mxu0
        %v6213 = vadd.f32 %v5437, %v6212
        %v6214 = vpop.f32.mrb[0].mxu0
        %v6215 = vadd.f32 %v5441, %v6214
        %6216 = vmatprep.mubr.bf16.mxu0 %v3743
        %6217 = vmatmul.mubr.bf16.gmra.mrb[0].mxu0 %v3742
        %v6218 = vpop.f32.mrb[0].mxu0
        %v6219 = vadd.f32 %v5437, %v6218
        %v6220 = vpop.f32.mrb[0].mxu0
        %v6221 = vadd.f32 %v5441, %v6220
        %v6222 = vpop.f32.mrb[0].mxu0
        %v6223 = vadd.f32 %v5437, %v6222
        %v6224 = vpop.f32.mrb[0].mxu0
        %v6225 = vadd.f32 %v5441, %v6224
        %6226 = vmatprep.mubr.bf16.mxu0 %v3752
        %6227 = vmatmul.mubr.bf16.gmra.mrb[0].mxu0 %v3751
        %v6228 = vpop.f32.mrb[0].mxu0
        %v6229 = vadd.f32 %v5437, %v6228
        %v6230 = vpop.f32.mrb[0].mxu0
        %v6231 = vadd.f32 %v5441, %v6230
        %v6232 = vpop.f32.mrb[0].mxu0
        %v6233 = vadd.f32 %v5437, %v6232
        %v6234 = vpop.f32.mrb[0].mxu0
        %v6235 = vadd.f32 %v5441, %v6234
        %6236 = vmatprep.mubr.bf16.mxu0 %v3761
        %6237 = vmatmul.mubr.bf16.gmra.mrb[0].mxu0 %v3760
        %v6238 = vpop.f32.mrb[0].mxu0
        %v6239 = vadd.f32 %v5437, %v6238
        %v6240 = vpop.f32.mrb[0].mxu0
        %v6241 = vadd.f32 %v5441, %v6240
        %v6242 = vpop.f32.mrb[0].mxu0
        %v6243 = vadd.f32 %v5437, %v6242
        %v6244 = vpop.f32.mrb[0].mxu0
        %v6245 = vadd.f32 %v5441, %v6244
        %6246 = vmatprep.mubr.bf16.mxu0 %v3770
        %6247 = vmatmul.mubr.bf16.gmra.mrb[0].mxu0 %v3769
        %v6248 = vpop.f32.mrb[0].mxu0
        %v6249 = vadd.f32 %v5437, %v6248
        %v6250 = vpop.f32.mrb[0].mxu0
        %v6251 = vadd.f32 %v5441, %v6250
        %v6252 = vpop.f32.mrb[0].mxu0
        %v6253 = vadd.f32 %v5437, %v6252
        %v6254 = vpop.f32.mrb[0].mxu0
        %v6255 = vadd.f32 %v5441, %v6254
        %6256 = vmatprep.mubr.bf16.mxu0 %v3779
        %6257 = vmatmul.mubr.bf16.gmra.mrb[0].mxu0 %v3778
        %v6258 = vpop.f32.mrb[0].mxu0
        %v6259 = vadd.f32 %v5437, %v6258
        %v6260 = vpop.f32.mrb[0].mxu0
        %v6261 = vadd.f32 %v5441, %v6260
        %v6262 = vpop.f32.mrb[0].mxu0
        %v6263 = vadd.f32 %v5437, %v6262
        %v6264 = vpop.f32.mrb[0].mxu0
        %v6265 = vadd.f32 %v5441, %v6264
        %6266 = vmatprep.mubr.bf16.mxu0 %v3788
        %6267 = vmatmul.mubr.bf16.gmra.mrb[0].mxu0 %v3787
        %v6268 = vpop.f32.mrb[0].mxu0
        %v6269 = vadd.f32 %v5437, %v6268
        %v6270 = vpop.f32.mrb[0].mxu0
        %v6271 = vadd.f32 %v5441, %v6270
        %v6272 = vpop.f32.mrb[0].mxu0
        %v6273 = vadd.f32 %v5437, %v6272
        %v6274 = vpop.f32.mrb[0].mxu0
        %v6275 = vadd.f32 %v5441, %v6274
        %6276 = vmatprep.mubr.bf16.mxu0 %v3797
        %6277 = vmatmul.mubr.bf16.gmra.mrb[0].mxu0 %v3796
        %v6278 = vpop.f32.mrb[0].mxu0
        %v6279 = vadd.f32 %v5437, %v6278
        %v6280 = vpop.f32.mrb[0].mxu0
        %v6281 = vadd.f32 %v5441, %v6280
        %v6282 = vpop.f32.mrb[0].mxu0
        %v6283 = vadd.f32 %v5437, %v6282
        %v6284 = vpop.f32.mrb[0].mxu0
        %v6285 = vadd.f32 %v5441, %v6284
        %6286 = vmatprep.mubr.bf16.mxu0 %v3806
        %6287 = vmatmul.mubr.bf16.gmra.mrb[0].mxu0 %v3805
        %v6288 = vpop.f32.mrb[0].mxu0
        %v6289 = vadd.f32 %v5437, %v6288
        %v6290 = vpop.f32.mrb[0].mxu0
        %v6291 = vadd.f32 %v5441, %v6290
        %v6292 = vpop.f32.mrb[0].mxu0
        %v6293 = vadd.f32 %v5437, %v6292
        %v6294 = vpop.f32.mrb[0].mxu0
        %v6295 = vadd.f32 %v5441, %v6294
        %6296 = vmatprep.mubr.bf16.mxu0 %v3815
        %6297 = vmatmul.mubr.bf16.gmra.mrb[0].mxu0 %v3814
        %v6298 = vpop.f32.mrb[0].mxu0
        %v6299 = vadd.f32 %v5437, %v6298
        %v6300 = vpop.f32.mrb[0].mxu0
        %v6301 = vadd.f32 %v5441, %v6300
        %v6302 = vpop.f32.mrb[0].mxu0
        %v6303 = vadd.f32 %v5437, %v6302
        %v6304 = vpop.f32.mrb[0].mxu0
        %v6305 = vadd.f32 %v5441, %v6304
        %6306 = vmatprep.mubr.bf16.mxu0 %v3824
        %6307 = vmatmul.mubr.bf16.gmra.mrb[0].mxu0 %v3823
        %v6308 = vpop.f32.mrb[0].mxu0
        %v6309 = vadd.f32 %v5437, %v6308
        %v6310 = vpop.f32.mrb[0].mxu0
        %v6311 = vadd.f32 %v5441, %v6310
        %v6312 = vpop.f32.mrb[0].mxu0
        %v6313 = vadd.f32 %v5437, %v6312
        %v6314 = vpop.f32.mrb[0].mxu0
        %v6315 = vadd.f32 %v5441, %v6314
        %6316 = vmatprep.mubr.bf16.mxu0 %v3833
        %6317 = vmatmul.mubr.bf16.gmra.mrb[0].mxu0 %v3832
        %v6318 = vpop.f32.mrb[0].mxu0
        %v6319 = vadd.f32 %v5437, %v6318
        %v6320 = vpop.f32.mrb[0].mxu0
        %v6321 = vadd.f32 %v5441, %v6320
        %v6322 = vpop.f32.mrb[0].mxu0
        %v6323 = vadd.f32 %v5437, %v6322
        %v6324 = vpop.f32.mrb[0].mxu0
        %v6325 = vadd.f32 %v5441, %v6324
        %6326 = vmatprep.mubr.bf16.mxu0 %v3842
        %6327 = vmatmul.mubr.bf16.gmra.mrb[0].mxu0 %v3841
        %v6328 = vpop.f32.mrb[0].mxu0
        %v6329 = vadd.f32 %v5437, %v6328
        %v6330 = vpop.f32.mrb[0].mxu0
        %v6331 = vadd.f32 %v5441, %v6330
        %v6332 = vpop.f32.mrb[0].mxu0
        %v6333 = vadd.f32 %v5437, %v6332
        %v6334 = vpop.f32.mrb[0].mxu0
        %v6335 = vadd.f32 %v5441, %v6334
        %6336 = vmatprep.mubr.bf16.mxu0 %v3851
        %6337 = vmatmul.mubr.bf16.gmra.mrb[0].mxu0 %v3850
        %v6338 = vpop.f32.mrb[0].mxu0
        %v6339 = vadd.f32 %v5437, %v6338
        %v6340 = vpop.f32.mrb[0].mxu0
        %v6341 = vadd.f32 %v5441, %v6340
        %v6342 = vpop.f32.mrb[0].mxu0
        %v6343 = vadd.f32 %v5437, %v6342
        %v6344 = vpop.f32.mrb[0].mxu0
        %v6345 = vadd.f32 %v5441, %v6344
        %6346 = vmatprep.mubr.bf16.mxu0 %v3860
        %6347 = vmatmul.mubr.bf16.gmra.mrb[0].mxu0 %v3859
        %v6348 = vpop.f32.mrb[0].mxu0
        %v6349 = vadd.f32 %v5437, %v6348
        %v6350 = vpop.f32.mrb[0].mxu0
        %v6351 = vadd.f32 %v5441, %v6350
        %v6352 = vpop.f32.mrb[0].mxu0
        %v6353 = vadd.f32 %v5437, %v6352
        %v6354 = vpop.f32.mrb[0].mxu0
        %v6355 = vadd.f32 %v5441, %v6354
        %6356 = vdwg.mxu0
        %6357 = vmatprep.subr.bf16.mxu0 %v5909
        %6358 = vmatpush1.bf16.msra.mxu0 %v5908
        %6359 = vmatprep.subr.bf16.mxu0 %v5911
        %6360 = vmatpush1.bf16.msra.mxu0 %v5910
        %6361 = vmatprep.subr.bf16.mxu0 %v5913
        %6362 = vmatpush1.bf16.msra.mxu0 %v5912
        %6363 = vmatprep.subr.bf16.mxu0 %v5915
        %6364 = vmatpush1.bf16.msra.mxu0 %v5914
        %6365 = vmatprep.subr.bf16.mxu0 %v5917
        %6366 = vmatpush1.bf16.msra.mxu0 %v5916
        %6367 = vmatprep.subr.bf16.mxu0 %v5919
        %6368 = vmatpush1.bf16.msra.mxu0 %v5918
        %6369 = vmatprep.subr.bf16.mxu0 %v5921
        %6370 = vmatpush1.bf16.msra.mxu0 %v5920
        %6371 = vmatprep.subr.bf16.mxu0 %v5923
        %6372 = vmatpush1.bf16.msra.mxu0 %v5922
        %6373 = vmatprep.subr.bf16.mxu0 %v5925
        %6374 = vmatpush1.bf16.msra.mxu0 %v5924
        %6375 = vmatprep.subr.bf16.mxu0 %v5927
        %6376 = vmatpush1.bf16.msra.mxu0 %v5926
        %6377 = vmatprep.subr.bf16.mxu0 %v5929
        %6378 = vmatpush1.bf16.msra.mxu0 %v5928
        %6379 = vmatprep.subr.bf16.mxu0 %v5931
        %6380 = vmatpush1.bf16.msra.mxu0 %v5930
        %6381 = vmatprep.subr.bf16.mxu0 %v5933
        %6382 = vmatpush1.bf16.msra.mxu0 %v5932
        %6383 = vmatprep.subr.bf16.mxu0 %v5935
        %6384 = vmatpush1.bf16.msra.mxu0 %v5934
        %6385 = vmatprep.subr.bf16.mxu0 %v5937
        %6386 = vmatpush1.bf16.msra.mxu0 %v5936
        %6387 = vmatprep.subr.bf16.mxu0 %v5939
        %6388 = vmatpush1.bf16.msra.mxu0 %v5938
        %6389 = vmatprep.mubr.bf16.mxu0 %v3727
        %6390 = vmatmul.mubr.bf16.gmra.mrb[0].mxu0 %v3726
        %v6391 = vpop.f32.mrb[0].mxu0
        %v6392 = vadd.f32 %v6199, %v6391
        %v6393 = vpop.f32.mrb[0].mxu0
        %v6394 = vadd.f32 %v6201, %v6393
        %v6395 = vpop.f32.mrb[0].mxu0
        %v6396 = vadd.f32 %v6203, %v6395
        %v6397 = vpop.f32.mrb[0].mxu0
        %v6398 = vadd.f32 %v6205, %v6397
        %6399 = vmatprep.mubr.bf16.mxu0 %v3736
        %6400 = vmatmul.mubr.bf16.gmra.mrb[0].mxu0 %v3735
        %v6401 = vpop.f32.mrb[0].mxu0
        %v6402 = vadd.f32 %v6209, %v6401
        %v6403 = vpop.f32.mrb[0].mxu0
        %v6404 = vadd.f32 %v6211, %v6403
        %v6405 = vpop.f32.mrb[0].mxu0
        %v6406 = vadd.f32 %v6213, %v6405
        %v6407 = vpop.f32.mrb[0].mxu0
        %v6408 = vadd.f32 %v6215, %v6407
        %6409 = vmatprep.mubr.bf16.mxu0 %v3745
        %6410 = vmatmul.mubr.bf16.gmra.mrb[0].mxu0 %v3744
        %v6411 = vpop.f32.mrb[0].mxu0
        %v6412 = vadd.f32 %v6219, %v6411
        %v6413 = vpop.f32.mrb[0].mxu0
        %v6414 = vadd.f32 %v6221, %v6413
        %v6415 = vpop.f32.mrb[0].mxu0
        %v6416 = vadd.f32 %v6223, %v6415
        %v6417 = vpop.f32.mrb[0].mxu0
        %v6418 = vadd.f32 %v6225, %v6417
        %6419 = vmatprep.mubr.bf16.mxu0 %v3754
        %6420 = vmatmul.mubr.bf16.gmra.mrb[0].mxu0 %v3753
        %v6421 = vpop.f32.mrb[0].mxu0
        %v6422 = vadd.f32 %v6229, %v6421
        %v6423 = vpop.f32.mrb[0].mxu0
        %v6424 = vadd.f32 %v6231, %v6423
        %v6425 = vpop.f32.mrb[0].mxu0
        %v6426 = vadd.f32 %v6233, %v6425
        %v6427 = vpop.f32.mrb[0].mxu0
        %v6428 = vadd.f32 %v6235, %v6427
        %6429 = vmatprep.mubr.bf16.mxu0 %v3763
        %6430 = vmatmul.mubr.bf16.gmra.mrb[0].mxu0 %v3762
        %v6431 = vpop.f32.mrb[0].mxu0
        %v6432 = vadd.f32 %v6239, %v6431
        %v6433 = vpop.f32.mrb[0].mxu0
        %v6434 = vadd.f32 %v6241, %v6433
        %v6435 = vpop.f32.mrb[0].mxu0
        %v6436 = vadd.f32 %v6243, %v6435
        %v6437 = vpop.f32.mrb[0].mxu0
        %v6438 = vadd.f32 %v6245, %v6437
        %6439 = vmatprep.mubr.bf16.mxu0 %v3772
        %6440 = vmatmul.mubr.bf16.gmra.mrb[0].mxu0 %v3771
        %v6441 = vpop.f32.mrb[0].mxu0
        %v6442 = vadd.f32 %v6249, %v6441
        %v6443 = vpop.f32.mrb[0].mxu0
        %v6444 = vadd.f32 %v6251, %v6443
        %v6445 = vpop.f32.mrb[0].mxu0
        %v6446 = vadd.f32 %v6253, %v6445
        %v6447 = vpop.f32.mrb[0].mxu0
        %v6448 = vadd.f32 %v6255, %v6447
        %6449 = vmatprep.mubr.bf16.mxu0 %v3781
        %6450 = vmatmul.mubr.bf16.gmra.mrb[0].mxu0 %v3780
        %v6451 = vpop.f32.mrb[0].mxu0
        %v6452 = vadd.f32 %v6259, %v6451
        %v6453 = vpop.f32.mrb[0].mxu0
        %v6454 = vadd.f32 %v6261, %v6453
        %v6455 = vpop.f32.mrb[0].mxu0
        %v6456 = vadd.f32 %v6263, %v6455
        %v6457 = vpop.f32.mrb[0].mxu0
        %v6458 = vadd.f32 %v6265, %v6457
        %6459 = vmatprep.mubr.bf16.mxu0 %v3790
        %6460 = vmatmul.mubr.bf16.gmra.mrb[0].mxu0 %v3789
        %v6461 = vpop.f32.mrb[0].mxu0
        %v6462 = vadd.f32 %v6269, %v6461
        %v6463 = vpop.f32.mrb[0].mxu0
        %v6464 = vadd.f32 %v6271, %v6463
        %v6465 = vpop.f32.mrb[0].mxu0
        %v6466 = vadd.f32 %v6273, %v6465
        %v6467 = vpop.f32.mrb[0].mxu0
        %v6468 = vadd.f32 %v6275, %v6467
        %6469 = vmatprep.mubr.bf16.mxu0 %v3799
        %6470 = vmatmul.mubr.bf16.gmra.mrb[0].mxu0 %v3798
        %v6471 = vpop.f32.mrb[0].mxu0
        %v6472 = vadd.f32 %v6279, %v6471
        %v6473 = vpop.f32.mrb[0].mxu0
        %v6474 = vadd.f32 %v6281, %v6473
        %v6475 = vpop.f32.mrb[0].mxu0
        %v6476 = vadd.f32 %v6283, %v6475
        %v6477 = vpop.f32.mrb[0].mxu0
        %v6478 = vadd.f32 %v6285, %v6477
        %6479 = vmatprep.mubr.bf16.mxu0 %v3808
        %6480 = vmatmul.mubr.bf16.gmra.mrb[0].mxu0 %v3807
        %v6481 = vpop.f32.mrb[0].mxu0
        %v6482 = vadd.f32 %v6289, %v6481
        %v6483 = vpop.f32.mrb[0].mxu0
        %v6484 = vadd.f32 %v6291, %v6483
        %v6485 = vpop.f32.mrb[0].mxu0
        %v6486 = vadd.f32 %v6293, %v6485
        %v6487 = vpop.f32.mrb[0].mxu0
        %v6488 = vadd.f32 %v6295, %v6487
        %6489 = vmatprep.mubr.bf16.mxu0 %v3817
        %6490 = vmatmul.mubr.bf16.gmra.mrb[0].mxu0 %v3816
        %v6491 = vpop.f32.mrb[0].mxu0
        %v6492 = vadd.f32 %v6299, %v6491
        %v6493 = vpop.f32.mrb[0].mxu0
        %v6494 = vadd.f32 %v6301, %v6493
        %v6495 = vpop.f32.mrb[0].mxu0
        %v6496 = vadd.f32 %v6303, %v6495
        %v6497 = vpop.f32.mrb[0].mxu0
        %v6498 = vadd.f32 %v6305, %v6497
        %6499 = vmatprep.mubr.bf16.mxu0 %v3826
        %6500 = vmatmul.mubr.bf16.gmra.mrb[0].mxu0 %v3825
        %v6501 = vpop.f32.mrb[0].mxu0
        %v6502 = vadd.f32 %v6309, %v6501
        %v6503 = vpop.f32.mrb[0].mxu0
        %v6504 = vadd.f32 %v6311, %v6503
        %v6505 = vpop.f32.mrb[0].mxu0
        %v6506 = vadd.f32 %v6313, %v6505
        %v6507 = vpop.f32.mrb[0].mxu0
        %v6508 = vadd.f32 %v6315, %v6507
        %6509 = vmatprep.mubr.bf16.mxu0 %v3835
        %6510 = vmatmul.mubr.bf16.gmra.mrb[0].mxu0 %v3834
        %v6511 = vpop.f32.mrb[0].mxu0
        %v6512 = vadd.f32 %v6319, %v6511
        %v6513 = vpop.f32.mrb[0].mxu0
        %v6514 = vadd.f32 %v6321, %v6513
        %v6515 = vpop.f32.mrb[0].mxu0
        %v6516 = vadd.f32 %v6323, %v6515
        %v6517 = vpop.f32.mrb[0].mxu0
        %v6518 = vadd.f32 %v6325, %v6517
        %6519 = vmatprep.mubr.bf16.mxu0 %v3844
        %6520 = vmatmul.mubr.bf16.gmra.mrb[0].mxu0 %v3843
        %v6521 = vpop.f32.mrb[0].mxu0
        %v6522 = vadd.f32 %v6329, %v6521
        %v6523 = vpop.f32.mrb[0].mxu0
        %v6524 = vadd.f32 %v6331, %v6523
        %v6525 = vpop.f32.mrb[0].mxu0
        %v6526 = vadd.f32 %v6333, %v6525
        %v6527 = vpop.f32.mrb[0].mxu0
        %v6528 = vadd.f32 %v6335, %v6527
        %6529 = vmatprep.mubr.bf16.mxu0 %v3853
        %6530 = vmatmul.mubr.bf16.gmra.mrb[0].mxu0 %v3852
        %v6531 = vpop.f32.mrb[0].mxu0
        %v6532 = vadd.f32 %v6339, %v6531
        %v6533 = vpop.f32.mrb[0].mxu0
        %v6534 = vadd.f32 %v6341, %v6533
        %v6535 = vpop.f32.mrb[0].mxu0
        %v6536 = vadd.f32 %v6343, %v6535
        %v6537 = vpop.f32.mrb[0].mxu0
        %v6538 = vadd.f32 %v6345, %v6537
        %6539 = vmatprep.mubr.bf16.mxu0 %v3862
        %6540 = vmatmul.mubr.bf16.gmra.mrb[0].mxu0 %v3861
        %v6541 = vpop.f32.mrb[0].mxu0
        %v6542 = vadd.f32 %v6349, %v6541
        %v6543 = vpop.f32.mrb[0].mxu0
        %v6544 = vadd.f32 %v6351, %v6543
        %v6545 = vpop.f32.mrb[0].mxu0
        %v6546 = vadd.f32 %v6353, %v6545
        %v6547 = vpop.f32.mrb[0].mxu0
        %v6548 = vadd.f32 %v6355, %v6547
        %6549 = vdwg.mxu0
        %6550 = vmatprep.subr.bf16.mxu0 %v5941
        %6551 = vmatpush1.bf16.msra.mxu0 %v5940
        %6552 = vmatprep.subr.bf16.mxu0 %v5943
        %6553 = vmatpush1.bf16.msra.mxu0 %v5942
        %6554 = vmatprep.subr.bf16.mxu0 %v5945
        %6555 = vmatpush1.bf16.msra.mxu0 %v5944
        %6556 = vmatprep.subr.bf16.mxu0 %v5947
        %6557 = vmatpush1.bf16.msra.mxu0 %v5946
        %6558 = vmatprep.subr.bf16.mxu0 %v5949
        %6559 = vmatpush1.bf16.msra.mxu0 %v5948
        %6560 = vmatprep.subr.bf16.mxu0 %v5951
        %6561 = vmatpush1.bf16.msra.mxu0 %v5950
        %6562 = vmatprep.subr.bf16.mxu0 %v5953
        %6563 = vmatpush1.bf16.msra.mxu0 %v5952
        %6564 = vmatprep.subr.bf16.mxu0 %v5955
        %6565 = vmatpush1.bf16.msra.mxu0 %v5954
        %6566 = vmatprep.subr.bf16.mxu0 %v5957
        %6567 = vmatpush1.bf16.msra.mxu0 %v5956
        %6568 = vmatprep.subr.bf16.mxu0 %v5959
        %6569 = vmatpush1.bf16.msra.mxu0 %v5958
        %6570 = vmatprep.subr.bf16.mxu0 %v5961
        %6571 = vmatpush1.bf16.msra.mxu0 %v5960
        %6572 = vmatprep.subr.bf16.mxu0 %v5963
        %6573 = vmatpush1.bf16.msra.mxu0 %v5962
        %6574 = vmatprep.subr.bf16.mxu0 %v5965
        %6575 = vmatpush1.bf16.msra.mxu0 %v5964
        %6576 = vmatprep.subr.bf16.mxu0 %v5967
        %6577 = vmatpush1.bf16.msra.mxu0 %v5966
        %6578 = vmatprep.subr.bf16.mxu0 %v5969
        %6579 = vmatpush1.bf16.msra.mxu0 %v5968
        %6580 = vmatprep.subr.bf16.mxu0 %v5971
        %6581 = vmatpush1.bf16.msra.mxu0 %v5970
        %6582 = vmatprep.mubr.bf16.mxu0 %v3729
        %6583 = vmatmul.mubr.bf16.gmra.mrb[0].mxu0 %v3728
        %v6584 = vpop.f32.mrb[0].mxu0
        %v6585 = vadd.f32 %v6392, %v6584
        %v6586 = vpop.f32.mrb[0].mxu0
        %v6587 = vadd.f32 %v6394, %v6586
        %v6588 = vpop.f32.mrb[0].mxu0
        %v6589 = vadd.f32 %v6396, %v6588
        %v6590 = vpop.f32.mrb[0].mxu0
        %v6591 = vadd.f32 %v6398, %v6590
        %6592 = vmatprep.mubr.bf16.mxu0 %v3738
        %6593 = vmatmul.mubr.bf16.gmra.mrb[0].mxu0 %v3737
        %v6594 = vpop.f32.mrb[0].mxu0
        %v6595 = vadd.f32 %v6402, %v6594
        %v6596 = vpop.f32.mrb[0].mxu0
        %v6597 = vadd.f32 %v6404, %v6596
        %v6598 = vpop.f32.mrb[0].mxu0
        %v6599 = vadd.f32 %v6406, %v6598
        %v6600 = vpop.f32.mrb[0].mxu0
        %v6601 = vadd.f32 %v6408, %v6600
        %6602 = vmatprep.mubr.bf16.mxu0 %v3747
        %6603 = vmatmul.mubr.bf16.gmra.mrb[0].mxu0 %v3746
        %v6604 = vpop.f32.mrb[0].mxu0
        %v6605 = vadd.f32 %v6412, %v6604
        %v6606 = vpop.f32.mrb[0].mxu0
        %v6607 = vadd.f32 %v6414, %v6606
        %v6608 = vpop.f32.mrb[0].mxu0
        %v6609 = vadd.f32 %v6416, %v6608
        %v6610 = vpop.f32.mrb[0].mxu0
        %v6611 = vadd.f32 %v6418, %v6610
        %6612 = vmatprep.mubr.bf16.mxu0 %v3756
        %6613 = vmatmul.mubr.bf16.gmra.mrb[0].mxu0 %v3755
        %v6614 = vpop.f32.mrb[0].mxu0
        %v6615 = vadd.f32 %v6422, %v6614
        %v6616 = vpop.f32.mrb[0].mxu0
        %v6617 = vadd.f32 %v6424, %v6616
        %v6618 = vpop.f32.mrb[0].mxu0
        %v6619 = vadd.f32 %v6426, %v6618
        %v6620 = vpop.f32.mrb[0].mxu0
        %v6621 = vadd.f32 %v6428, %v6620
        %6622 = vmatprep.mubr.bf16.mxu0 %v3765
        %6623 = vmatmul.mubr.bf16.gmra.mrb[0].mxu0 %v3764
        %v6624 = vpop.f32.mrb[0].mxu0
        %v6625 = vadd.f32 %v6432, %v6624
        %v6626 = vpop.f32.mrb[0].mxu0
        %v6627 = vadd.f32 %v6434, %v6626
        %v6628 = vpop.f32.mrb[0].mxu0
        %v6629 = vadd.f32 %v6436, %v6628
        %v6630 = vpop.f32.mrb[0].mxu0
        %v6631 = vadd.f32 %v6438, %v6630
        %6632 = vmatprep.mubr.bf16.mxu0 %v3774
        %6633 = vmatmul.mubr.bf16.gmra.mrb[0].mxu0 %v3773
        %v6634 = vpop.f32.mrb[0].mxu0
        %v6635 = vadd.f32 %v6442, %v6634
        %v6636 = vpop.f32.mrb[0].mxu0
        %v6637 = vadd.f32 %v6444, %v6636
        %v6638 = vpop.f32.mrb[0].mxu0
        %v6639 = vadd.f32 %v6446, %v6638
        %v6640 = vpop.f32.mrb[0].mxu0
        %v6641 = vadd.f32 %v6448, %v6640
        %6642 = vmatprep.mubr.bf16.mxu0 %v3783
        %6643 = vmatmul.mubr.bf16.gmra.mrb[0].mxu0 %v3782
        %v6644 = vpop.f32.mrb[0].mxu0
        %v6645 = vadd.f32 %v6452, %v6644
        %v6646 = vpop.f32.mrb[0].mxu0
        %v6647 = vadd.f32 %v6454, %v6646
        %v6648 = vpop.f32.mrb[0].mxu0
        %v6649 = vadd.f32 %v6456, %v6648
        %v6650 = vpop.f32.mrb[0].mxu0
        %v6651 = vadd.f32 %v6458, %v6650
        %6652 = vmatprep.mubr.bf16.mxu0 %v3792
        %6653 = vmatmul.mubr.bf16.gmra.mrb[0].mxu0 %v3791
        %v6654 = vpop.f32.mrb[0].mxu0
        %v6655 = vadd.f32 %v6462, %v6654
        %v6656 = vpop.f32.mrb[0].mxu0
        %v6657 = vadd.f32 %v6464, %v6656
        %v6658 = vpop.f32.mrb[0].mxu0
        %v6659 = vadd.f32 %v6466, %v6658
        %v6660 = vpop.f32.mrb[0].mxu0
        %v6661 = vadd.f32 %v6468, %v6660
        %6662 = vmatprep.mubr.bf16.mxu0 %v3801
        %6663 = vmatmul.mubr.bf16.gmra.mrb[0].mxu0 %v3800
        %v6664 = vpop.f32.mrb[0].mxu0
        %v6665 = vadd.f32 %v6472, %v6664
        %v6666 = vpop.f32.mrb[0].mxu0
        %v6667 = vadd.f32 %v6474, %v6666
        %v6668 = vpop.f32.mrb[0].mxu0
        %v6669 = vadd.f32 %v6476, %v6668
        %v6670 = vpop.f32.mrb[0].mxu0
        %v6671 = vadd.f32 %v6478, %v6670
        %6672 = vmatprep.mubr.bf16.mxu0 %v3810
        %6673 = vmatmul.mubr.bf16.gmra.mrb[0].mxu0 %v3809
        %v6674 = vpop.f32.mrb[0].mxu0
        %v6675 = vadd.f32 %v6482, %v6674
        %v6676 = vpop.f32.mrb[0].mxu0
        %v6677 = vadd.f32 %v6484, %v6676
        %v6678 = vpop.f32.mrb[0].mxu0
        %v6679 = vadd.f32 %v6486, %v6678
        %v6680 = vpop.f32.mrb[0].mxu0
        %v6681 = vadd.f32 %v6488, %v6680
        %6682 = vmatprep.mubr.bf16.mxu0 %v3819
        %6683 = vmatmul.mubr.bf16.gmra.mrb[0].mxu0 %v3818
        %v6684 = vpop.f32.mrb[0].mxu0
        %v6685 = vadd.f32 %v6492, %v6684
        %v6686 = vpop.f32.mrb[0].mxu0
        %v6687 = vadd.f32 %v6494, %v6686
        %v6688 = vpop.f32.mrb[0].mxu0
        %v6689 = vadd.f32 %v6496, %v6688
        %v6690 = vpop.f32.mrb[0].mxu0
        %v6691 = vadd.f32 %v6498, %v6690
        %6692 = vmatprep.mubr.bf16.mxu0 %v3828
        %6693 = vmatmul.mubr.bf16.gmra.mrb[0].mxu0 %v3827
        %v6694 = vpop.f32.mrb[0].mxu0
        %v6695 = vadd.f32 %v6502, %v6694
        %v6696 = vpop.f32.mrb[0].mxu0
        %v6697 = vadd.f32 %v6504, %v6696
        %v6698 = vpop.f32.mrb[0].mxu0
        %v6699 = vadd.f32 %v6506, %v6698
        %v6700 = vpop.f32.mrb[0].mxu0
        %v6701 = vadd.f32 %v6508, %v6700
        %6702 = vmatprep.mubr.bf16.mxu0 %v3837
        %6703 = vmatmul.mubr.bf16.gmra.mrb[0].mxu0 %v3836
        %v6704 = vpop.f32.mrb[0].mxu0
        %v6705 = vadd.f32 %v6512, %v6704
        %v6706 = vpop.f32.mrb[0].mxu0
        %v6707 = vadd.f32 %v6514, %v6706
        %v6708 = vpop.f32.mrb[0].mxu0
        %v6709 = vadd.f32 %v6516, %v6708
        %v6710 = vpop.f32.mrb[0].mxu0
        %v6711 = vadd.f32 %v6518, %v6710
        %6712 = vmatprep.mubr.bf16.mxu0 %v3846
        %6713 = vmatmul.mubr.bf16.gmra.mrb[0].mxu0 %v3845
        %v6714 = vpop.f32.mrb[0].mxu0
        %v6715 = vadd.f32 %v6522, %v6714
        %v6716 = vpop.f32.mrb[0].mxu0
        %v6717 = vadd.f32 %v6524, %v6716
        %v6718 = vpop.f32.mrb[0].mxu0
        %v6719 = vadd.f32 %v6526, %v6718
        %v6720 = vpop.f32.mrb[0].mxu0
        %v6721 = vadd.f32 %v6528, %v6720
        %6722 = vmatprep.mubr.bf16.mxu0 %v3855
        %6723 = vmatmul.mubr.bf16.gmra.mrb[0].mxu0 %v3854
        %v6724 = vpop.f32.mrb[0].mxu0
        %v6725 = vadd.f32 %v6532, %v6724
        %v6726 = vpop.f32.mrb[0].mxu0
        %v6727 = vadd.f32 %v6534, %v6726
        %v6728 = vpop.f32.mrb[0].mxu0
        %v6729 = vadd.f32 %v6536, %v6728
        %v6730 = vpop.f32.mrb[0].mxu0
        %v6731 = vadd.f32 %v6538, %v6730
        %6732 = vmatprep.mubr.bf16.mxu0 %v3864
        %6733 = vmatmul.mubr.bf16.gmra.mrb[0].mxu0 %v3863
        %v6734 = vpop.f32.mrb[0].mxu0
        %v6735 = vadd.f32 %v6542, %v6734
        %v6736 = vpop.f32.mrb[0].mxu0
        %v6737 = vadd.f32 %v6544, %v6736
        %v6738 = vpop.f32.mrb[0].mxu0
        %v6739 = vadd.f32 %v6546, %v6738
        %v6740 = vpop.f32.mrb[0].mxu0
        %v6741 = vadd.f32 %v6548, %v6740
        %6742 = vdwg.mxu0
        %6743 = vmatprep.subr.bf16.mxu0 %v5973
        %6744 = vmatpush1.bf16.msra.mxu0 %v5972
        %6745 = vmatprep.subr.bf16.mxu0 %v5975
        %6746 = vmatpush1.bf16.msra.mxu0 %v5974
        %6747 = vmatprep.subr.bf16.mxu0 %v5977
        %6748 = vmatpush1.bf16.msra.mxu0 %v5976
        %6749 = vmatprep.subr.bf16.mxu0 %v5979
        %6750 = vmatpush1.bf16.msra.mxu0 %v5978
        %6751 = vmatprep.subr.bf16.mxu0 %v5981
        %6752 = vmatpush1.bf16.msra.mxu0 %v5980
        %6753 = vmatprep.subr.bf16.mxu0 %v5983
        %6754 = vmatpush1.bf16.msra.mxu0 %v5982
        %6755 = vmatprep.subr.bf16.mxu0 %v5985
        %6756 = vmatpush1.bf16.msra.mxu0 %v5984
        %6757 = vmatprep.subr.bf16.mxu0 %v5987
        %6758 = vmatpush1.bf16.msra.mxu0 %v5986
        %6759 = vmatprep.subr.bf16.mxu0 %v5989
        %6760 = vmatpush1.bf16.msra.mxu0 %v5988
        %6761 = vmatprep.subr.bf16.mxu0 %v5991
        %6762 = vmatpush1.bf16.msra.mxu0 %v5990
        %6763 = vmatprep.subr.bf16.mxu0 %v5993
        %6764 = vmatpush1.bf16.msra.mxu0 %v5992
        %6765 = vmatprep.subr.bf16.mxu0 %v5995
        %6766 = vmatpush1.bf16.msra.mxu0 %v5994
        %6767 = vmatprep.subr.bf16.mxu0 %v5997
        %6768 = vmatpush1.bf16.msra.mxu0 %v5996
        %6769 = vmatprep.subr.bf16.mxu0 %v5999
        %6770 = vmatpush1.bf16.msra.mxu0 %v5998
        %6771 = vmatprep.subr.bf16.mxu0 %v6001
        %6772 = vmatpush1.bf16.msra.mxu0 %v6000
        %6773 = vmatprep.subr.bf16.mxu0 %v6003
        %6774 = vmatpush1.bf16.msra.mxu0 %v6002
        %6775 = vmatprep.mubr.bf16.mxu0 %v3731
        %6776 = vmatmul.mubr.bf16.gmra.mrb[0].mxu0 %v3730
        %v6777 = vpop.f32.mrb[0].mxu0
        %v6778 = vadd.f32 %v6585, %v6777
        %v6779 = vpop.f32.mrb[0].mxu0
        %v6780 = vadd.f32 %v6587, %v6779
        %v6781 = vpop.f32.mrb[0].mxu0
        %v6782 = vadd.f32 %v6589, %v6781
        %v6783 = vpop.f32.mrb[0].mxu0
        %v6784 = vadd.f32 %v6591, %v6783
        %6785 = vmatprep.mubr.bf16.mxu0 %v3740
        %6786 = vmatmul.mubr.bf16.gmra.mrb[0].mxu0 %v3739
        %v6787 = vpop.f32.mrb[0].mxu0
        %v6788 = vadd.f32 %v6595, %v6787
        %v6789 = vpop.f32.mrb[0].mxu0
        %v6790 = vadd.f32 %v6597, %v6789
        %v6791 = vpop.f32.mrb[0].mxu0
        %v6792 = vadd.f32 %v6599, %v6791
        %v6793 = vpop.f32.mrb[0].mxu0
        %v6794 = vadd.f32 %v6601, %v6793
        %6795 = vmatprep.mubr.bf16.mxu0 %v3749
        %6796 = vmatmul.mubr.bf16.gmra.mrb[0].mxu0 %v3748
        %v6797 = vpop.f32.mrb[0].mxu0
        %v6798 = vadd.f32 %v6605, %v6797
        %v6799 = vpop.f32.mrb[0].mxu0
        %v6800 = vadd.f32 %v6607, %v6799
        %v6801 = vpop.f32.mrb[0].mxu0
        %v6802 = vadd.f32 %v6609, %v6801
        %v6803 = vpop.f32.mrb[0].mxu0
        %v6804 = vadd.f32 %v6611, %v6803
        %6805 = vmatprep.mubr.bf16.mxu0 %v3758
        %6806 = vmatmul.mubr.bf16.gmra.mrb[0].mxu0 %v3757
        %v6807 = vpop.f32.mrb[0].mxu0
        %v6808 = vadd.f32 %v6615, %v6807
        %v6809 = vpop.f32.mrb[0].mxu0
        %v6810 = vadd.f32 %v6617, %v6809
        %v6811 = vpop.f32.mrb[0].mxu0
        %v6812 = vadd.f32 %v6619, %v6811
        %v6813 = vpop.f32.mrb[0].mxu0
        %v6814 = vadd.f32 %v6621, %v6813
        %6815 = vmatprep.mubr.bf16.mxu0 %v3767
        %6816 = vmatmul.mubr.bf16.gmra.mrb[0].mxu0 %v3766
        %v6817 = vpop.f32.mrb[0].mxu0
        %v6818 = vadd.f32 %v6625, %v6817
        %v6819 = vpop.f32.mrb[0].mxu0
        %v6820 = vadd.f32 %v6627, %v6819
        %v6821 = vpop.f32.mrb[0].mxu0
        %v6822 = vadd.f32 %v6629, %v6821
        %v6823 = vpop.f32.mrb[0].mxu0
        %v6824 = vadd.f32 %v6631, %v6823
        %6825 = vmatprep.mubr.bf16.mxu0 %v3776
        %6826 = vmatmul.mubr.bf16.gmra.mrb[0].mxu0 %v3775
        %v6827 = vpop.f32.mrb[0].mxu0
        %v6828 = vadd.f32 %v6635, %v6827
        %v6829 = vpop.f32.mrb[0].mxu0
        %v6830 = vadd.f32 %v6637, %v6829
        %v6831 = vpop.f32.mrb[0].mxu0
        %v6832 = vadd.f32 %v6639, %v6831
        %v6833 = vpop.f32.mrb[0].mxu0
        %v6834 = vadd.f32 %v6641, %v6833
        %6835 = vmatprep.mubr.bf16.mxu0 %v3785
        %6836 = vmatmul.mubr.bf16.gmra.mrb[0].mxu0 %v3784
        %v6837 = vpop.f32.mrb[0].mxu0
        %v6838 = vadd.f32 %v6645, %v6837
        %v6839 = vpop.f32.mrb[0].mxu0
        %v6840 = vadd.f32 %v6647, %v6839
        %v6841 = vpop.f32.mrb[0].mxu0
        %v6842 = vadd.f32 %v6649, %v6841
        %v6843 = vpop.f32.mrb[0].mxu0
        %v6844 = vadd.f32 %v6651, %v6843
        %6845 = vmatprep.mubr.bf16.mxu0 %v3794
        %6846 = vmatmul.mubr.bf16.gmra.mrb[0].mxu0 %v3793
        %v6847 = vpop.f32.mrb[0].mxu0
        %v6848 = vadd.f32 %v6655, %v6847
        %v6849 = vpop.f32.mrb[0].mxu0
        %v6850 = vadd.f32 %v6657, %v6849
        %v6851 = vpop.f32.mrb[0].mxu0
        %v6852 = vadd.f32 %v6659, %v6851
        %v6853 = vpop.f32.mrb[0].mxu0
        %v6854 = vadd.f32 %v6661, %v6853
        %6855 = vmatprep.mubr.bf16.mxu0 %v3803
        %6856 = vmatmul.mubr.bf16.gmra.mrb[0].mxu0 %v3802
        %v6857 = vpop.f32.mrb[0].mxu0
        %v6858 = vadd.f32 %v6665, %v6857
        %v6859 = vpop.f32.mrb[0].mxu0
        %v6860 = vadd.f32 %v6667, %v6859
        %v6861 = vpop.f32.mrb[0].mxu0
        %v6862 = vadd.f32 %v6669, %v6861
        %v6863 = vpop.f32.mrb[0].mxu0
        %v6864 = vadd.f32 %v6671, %v6863
        %6865 = vmatprep.mubr.bf16.mxu0 %v3812
        %6866 = vmatmul.mubr.bf16.gmra.mrb[0].mxu0 %v3811
        %v6867 = vpop.f32.mrb[0].mxu0
        %v6868 = vadd.f32 %v6675, %v6867
        %v6869 = vpop.f32.mrb[0].mxu0
        %v6870 = vadd.f32 %v6677, %v6869
        %v6871 = vpop.f32.mrb[0].mxu0
        %v6872 = vadd.f32 %v6679, %v6871
        %v6873 = vpop.f32.mrb[0].mxu0
        %v6874 = vadd.f32 %v6681, %v6873
        %6875 = vmatprep.mubr.bf16.mxu0 %v3821
        %6876 = vmatmul.mubr.bf16.gmra.mrb[0].mxu0 %v3820
        %v6877 = vpop.f32.mrb[0].mxu0
        %v6878 = vadd.f32 %v6685, %v6877
        %v6879 = vpop.f32.mrb[0].mxu0
        %v6880 = vadd.f32 %v6687, %v6879
        %v6881 = vpop.f32.mrb[0].mxu0
        %v6882 = vadd.f32 %v6689, %v6881
        %v6883 = vpop.f32.mrb[0].mxu0
        %v6884 = vadd.f32 %v6691, %v6883
        %6885 = vmatprep.mubr.bf16.mxu0 %v3830
        %6886 = vmatmul.mubr.bf16.gmra.mrb[0].mxu0 %v3829
        %v6887 = vpop.f32.mrb[0].mxu0
        %v6888 = vadd.f32 %v6695, %v6887
        %v6889 = vpop.f32.mrb[0].mxu0
        %v6890 = vadd.f32 %v6697, %v6889
        %v6891 = vpop.f32.mrb[0].mxu0
        %v6892 = vadd.f32 %v6699, %v6891
        %v6893 = vpop.f32.mrb[0].mxu0
        %v6894 = vadd.f32 %v6701, %v6893
        %6895 = vmatprep.mubr.bf16.mxu0 %v3839
        %6896 = vmatmul.mubr.bf16.gmra.mrb[0].mxu0 %v3838
        %v6897 = vpop.f32.mrb[0].mxu0
        %v6898 = vadd.f32 %v6705, %v6897
        %v6899 = vpop.f32.mrb[0].mxu0
        %v6900 = vadd.f32 %v6707, %v6899
        %v6901 = vpop.f32.mrb[0].mxu0
        %v6902 = vadd.f32 %v6709, %v6901
        %v6903 = vpop.f32.mrb[0].mxu0
        %v6904 = vadd.f32 %v6711, %v6903
        %6905 = vmatprep.mubr.bf16.mxu0 %v3848
        %6906 = vmatmul.mubr.bf16.gmra.mrb[0].mxu0 %v3847
        %v6907 = vpop.f32.mrb[0].mxu0
        %v6908 = vadd.f32 %v6715, %v6907
        %v6909 = vpop.f32.mrb[0].mxu0
        %v6910 = vadd.f32 %v6717, %v6909
        %v6911 = vpop.f32.mrb[0].mxu0
        %v6912 = vadd.f32 %v6719, %v6911
        %v6913 = vpop.f32.mrb[0].mxu0
        %v6914 = vadd.f32 %v6721, %v6913
        %6915 = vmatprep.mubr.bf16.mxu0 %v3857
        %6916 = vmatmul.mubr.bf16.gmra.mrb[0].mxu0 %v3856
        %v6917 = vpop.f32.mrb[0].mxu0
        %v6918 = vadd.f32 %v6725, %v6917
        %v6919 = vpop.f32.mrb[0].mxu0
        %v6920 = vadd.f32 %v6727, %v6919
        %v6921 = vpop.f32.mrb[0].mxu0
        %v6922 = vadd.f32 %v6729, %v6921
        %v6923 = vpop.f32.mrb[0].mxu0
        %v6924 = vadd.f32 %v6731, %v6923
        %6925 = vmatprep.mubr.bf16.mxu0 %v3866
        %6926 = vmatmul.mubr.bf16.gmra.mrb[0].mxu0 %v3865
        %v6927 = vpop.f32.mrb[0].mxu0
        %v6928 = vadd.f32 %v6735, %v6927
        %v6929 = vpop.f32.mrb[0].mxu0
        %v6930 = vadd.f32 %v6737, %v6929
        %v6931 = vpop.f32.mrb[0].mxu0
        %v6932 = vadd.f32 %v6739, %v6931
        %v6933 = vpop.f32.mrb[0].mxu0
        %v6934 = vadd.f32 %v6741, %v6933
        %6935 = vdwg.mxu0
        %6936 = vmatprep.subr.bf16.mxu0 %v6005
        %6937 = vmatpush1.bf16.msra.mxu0 %v6004
        %6938 = vmatprep.subr.bf16.mxu0 %v6007
        %6939 = vmatpush1.bf16.msra.mxu0 %v6006
        %6940 = vmatprep.subr.bf16.mxu0 %v6009
        %6941 = vmatpush1.bf16.msra.mxu0 %v6008
        %6942 = vmatprep.subr.bf16.mxu0 %v6011
        %6943 = vmatpush1.bf16.msra.mxu0 %v6010
        %6944 = vmatprep.subr.bf16.mxu0 %v6013
        %6945 = vmatpush1.bf16.msra.mxu0 %v6012
        %6946 = vmatprep.subr.bf16.mxu0 %v6015
        %6947 = vmatpush1.bf16.msra.mxu0 %v6014
        %6948 = vmatprep.subr.bf16.mxu0 %v6017
        %6949 = vmatpush1.bf16.msra.mxu0 %v6016
        %6950 = vmatprep.subr.bf16.mxu0 %v6019
        %6951 = vmatpush1.bf16.msra.mxu0 %v6018
        %6952 = vmatprep.subr.bf16.mxu0 0
        %6953 = vmatpush1.bf16.msra.mxu0 0
        %6954 = vmatprep.subr.bf16.mxu0 0
        %6955 = vmatpush1.bf16.msra.mxu0 0
        %6956 = vmatprep.subr.bf16.mxu0 0
        %6957 = vmatpush1.bf16.msra.mxu0 0
        %6958 = vmatprep.subr.bf16.mxu0 0
        %6959 = vmatpush1.bf16.msra.mxu0 0
        %6960 = vmatprep.subr.bf16.mxu0 0
        %6961 = vmatpush1.bf16.msra.mxu0 0
        %6962 = vmatprep.subr.bf16.mxu0 0
        %6963 = vmatpush1.bf16.msra.mxu0 0
        %6964 = vmatprep.subr.bf16.mxu0 0
        %6965 = vmatpush1.bf16.msra.mxu0 0
        %6966 = vmatprep.subr.bf16.mxu0 0
        %6967 = vmatpush1.bf16.msra.mxu0 0
        %6968 = vmatprep.mubr.bf16.mxu0 0
        %6969 = vmatmul.mubr.bf16.gmra.mrb[0].mxu0 %v3732
        %v6970 = vpop.f32.mrb[0].mxu0
        %v6971 = vadd.f32 %v6778, %v6970
        %v6972 = vpop.f32.mrb[0].mxu0
        %v6973 = vadd.f32 %v6780, %v6972
        %v6974 = vpop.f32.mrb[0].mxu0
        %v6975 = vadd.f32 %v6782, %v6974
        %v6976 = vpop.f32.mrb[0].mxu0
        %v6977 = vadd.f32 %v6784, %v6976
        %6978 = vmatprep.mubr.bf16.mxu0 0
        %6979 = vmatmul.mubr.bf16.gmra.mrb[0].mxu0 %v3741
        %v6980 = vpop.f32.mrb[0].mxu0
        %v6981 = vadd.f32 %v6788, %v6980
        %v6982 = vpop.f32.mrb[0].mxu0
        %v6983 = vadd.f32 %v6790, %v6982
        %v6984 = vpop.f32.mrb[0].mxu0
        %v6985 = vadd.f32 %v6792, %v6984
        %v6986 = vpop.f32.mrb[0].mxu0
        %v6987 = vadd.f32 %v6794, %v6986
        %6988 = vmatprep.mubr.bf16.mxu0 0
        %6989 = vmatmul.mubr.bf16.gmra.mrb[0].mxu0 %v3750
        %v6990 = vpop.f32.mrb[0].mxu0
        %v6991 = vadd.f32 %v6798, %v6990
        %v6992 = vpop.f32.mrb[0].mxu0
        %v6993 = vadd.f32 %v6800, %v6992
        %v6994 = vpop.f32.mrb[0].mxu0
        %v6995 = vadd.f32 %v6802, %v6994
        %v6996 = vpop.f32.mrb[0].mxu0
        %v6997 = vadd.f32 %v6804, %v6996
        %6998 = vmatprep.mubr.bf16.mxu0 0
        %6999 = vmatmul.mubr.bf16.gmra.mrb[0].mxu0 %v3759
        %v7000 = vpop.f32.mrb[0].mxu0
        %v7001 = vadd.f32 %v6808, %v7000
        %v7002 = vpop.f32.mrb[0].mxu0
        %v7003 = vadd.f32 %v6810, %v7002
        %v7004 = vpop.f32.mrb[0].mxu0
        %v7005 = vadd.f32 %v6812, %v7004
        %v7006 = vpop.f32.mrb[0].mxu0
        %v7007 = vadd.f32 %v6814, %v7006
        %7008 = vmatprep.mubr.bf16.mxu0 0
        %7009 = vmatmul.mubr.bf16.gmra.mrb[0].mxu0 %v3768
        %v7010 = vpop.f32.mrb[0].mxu0
        %v7011 = vadd.f32 %v6818, %v7010
        %v7012 = vpop.f32.mrb[0].mxu0
        %v7013 = vadd.f32 %v6820, %v7012
        %v7014 = vpop.f32.mrb[0].mxu0
        %v7015 = vadd.f32 %v6822, %v7014
        %v7016 = vpop.f32.mrb[0].mxu0
        %v7017 = vadd.f32 %v6824, %v7016
        %7018 = vmatprep.mubr.bf16.mxu0 0
        %7019 = vmatmul.mubr.bf16.gmra.mrb[0].mxu0 %v3777
        %v7020 = vpop.f32.mrb[0].mxu0
        %v7021 = vadd.f32 %v6828, %v7020
        %v7022 = vpop.f32.mrb[0].mxu0
        %v7023 = vadd.f32 %v6830, %v7022
        %v7024 = vpop.f32.mrb[0].mxu0
        %v7025 = vadd.f32 %v6832, %v7024
        %v7026 = vpop.f32.mrb[0].mxu0
        %v7027 = vadd.f32 %v6834, %v7026
        %7028 = vmatprep.mubr.bf16.mxu0 0
        %7029 = vmatmul.mubr.bf16.gmra.mrb[0].mxu0 %v3786
        %v7030 = vpop.f32.mrb[0].mxu0
        %v7031 = vadd.f32 %v6838, %v7030
        %v7032 = vpop.f32.mrb[0].mxu0
        %v7033 = vadd.f32 %v6840, %v7032
        %v7034 = vpop.f32.mrb[0].mxu0
        %v7035 = vadd.f32 %v6842, %v7034
        %v7036 = vpop.f32.mrb[0].mxu0
        %v7037 = vadd.f32 %v6844, %v7036
        %7038 = vmatprep.mubr.bf16.mxu0 0
        %7039 = vmatmul.mubr.bf16.gmra.mrb[0].mxu0 %v3795
        %v7040 = vpop.f32.mrb[0].mxu0
        %v7041 = vadd.f32 %v6848, %v7040
        %v7042 = vpop.f32.mrb[0].mxu0
        %v7043 = vadd.f32 %v6850, %v7042
        %v7044 = vpop.f32.mrb[0].mxu0
        %v7045 = vadd.f32 %v6852, %v7044
        %v7046 = vpop.f32.mrb[0].mxu0
        %v7047 = vadd.f32 %v6854, %v7046
        %7048 = vmatprep.mubr.bf16.mxu0 0
        %7049 = vmatmul.mubr.bf16.gmra.mrb[0].mxu0 %v3804
        %v7050 = vpop.f32.mrb[0].mxu0
        %v7051 = vadd.f32 %v6858, %v7050
        %v7052 = vpop.f32.mrb[0].mxu0
        %v7053 = vadd.f32 %v6860, %v7052
        %v7054 = vpop.f32.mrb[0].mxu0
        %v7055 = vadd.f32 %v6862, %v7054
        %v7056 = vpop.f32.mrb[0].mxu0
        %v7057 = vadd.f32 %v6864, %v7056
        %7058 = vmatprep.mubr.bf16.mxu0 0
        %7059 = vmatmul.mubr.bf16.gmra.mrb[0].mxu0 %v3813
        %v7060 = vpop.f32.mrb[0].mxu0
        %v7061 = vadd.f32 %v6868, %v7060
        %v7062 = vpop.f32.mrb[0].mxu0
        %v7063 = vadd.f32 %v6870, %v7062
        %v7064 = vpop.f32.mrb[0].mxu0
        %v7065 = vadd.f32 %v6872, %v7064
        %v7066 = vpop.f32.mrb[0].mxu0
        %v7067 = vadd.f32 %v6874, %v7066
        %7068 = vmatprep.mubr.bf16.mxu0 0
        %7069 = vmatmul.mubr.bf16.gmra.mrb[0].mxu0 %v3822
        %v7070 = vpop.f32.mrb[0].mxu0
        %v7071 = vadd.f32 %v6878, %v7070
        %v7072 = vpop.f32.mrb[0].mxu0
        %v7073 = vadd.f32 %v6880, %v7072
        %v7074 = vpop.f32.mrb[0].mxu0
        %v7075 = vadd.f32 %v6882, %v7074
        %v7076 = vpop.f32.mrb[0].mxu0
        %v7077 = vadd.f32 %v6884, %v7076
        %7078 = vmatprep.mubr.bf16.mxu0 0
        %7079 = vmatmul.mubr.bf16.gmra.mrb[0].mxu0 %v3831
        %v7080 = vpop.f32.mrb[0].mxu0
        %v7081 = vadd.f32 %v6888, %v7080
        %v7082 = vpop.f32.mrb[0].mxu0
        %v7083 = vadd.f32 %v6890, %v7082
        %v7084 = vpop.f32.mrb[0].mxu0
        %v7085 = vadd.f32 %v6892, %v7084
        %v7086 = vpop.f32.mrb[0].mxu0
        %v7087 = vadd.f32 %v6894, %v7086
        %7088 = vmatprep.mubr.bf16.mxu0 0
        %7089 = vmatmul.mubr.bf16.gmra.mrb[0].mxu0 %v3840
        %v7090 = vpop.f32.mrb[0].mxu0
        %v7091 = vadd.f32 %v6898, %v7090
        %v7092 = vpop.f32.mrb[0].mxu0
        %v7093 = vadd.f32 %v6900, %v7092
        %v7094 = vpop.f32.mrb[0].mxu0
        %v7095 = vadd.f32 %v6902, %v7094
        %v7096 = vpop.f32.mrb[0].mxu0
        %v7097 = vadd.f32 %v6904, %v7096
        %7098 = vmatprep.mubr.bf16.mxu0 0
        %7099 = vmatmul.mubr.bf16.gmra.mrb[0].mxu0 %v3849
        %v7100 = vpop.f32.mrb[0].mxu0
        %v7101 = vadd.f32 %v6908, %v7100
        %v7102 = vpop.f32.mrb[0].mxu0
        %v7103 = vadd.f32 %v6910, %v7102
        %v7104 = vpop.f32.mrb[0].mxu0
        %v7105 = vadd.f32 %v6912, %v7104
        %v7106 = vpop.f32.mrb[0].mxu0
        %v7107 = vadd.f32 %v6914, %v7106
        %7108 = vmatprep.mubr.bf16.mxu0 0
        %7109 = vmatmul.mubr.bf16.gmra.mrb[0].mxu0 %v3858
        %v7110 = vpop.f32.mrb[0].mxu0
        %v7111 = vadd.f32 %v6918, %v7110
        %v7112 = vpop.f32.mrb[0].mxu0
        %v7113 = vadd.f32 %v6920, %v7112
        %v7114 = vpop.f32.mrb[0].mxu0
        %v7115 = vadd.f32 %v6922, %v7114
        %v7116 = vpop.f32.mrb[0].mxu0
        %v7117 = vadd.f32 %v6924, %v7116
        %7118 = vmatprep.mubr.bf16.mxu0 0
        %7119 = vmatmul.mubr.bf16.gmra.mrb[0].mxu0 %v3867
        %v7120 = vpop.f32.mrb[0].mxu0
        %v7121 = vadd.f32 %v6928, %v7120
        %v7122 = vpop.f32.mrb[0].mxu0
        %v7123 = vadd.f32 %v6930, %v7122
        %v7124 = vpop.f32.mrb[0].mxu0
        %v7125 = vadd.f32 %v6932, %v7124
        %v7126 = vpop.f32.mrb[0].mxu0
        %v7127 = vadd.f32 %v6934, %v7126
        %7128 = vdwg.mxu0
        %7129 = vst [vmem:[%s255] sm:$0xff] %v6971
        %7130 = vst [vmem:[%s255 + $0x8] sm:$0xff] %v6973
        %7131 = vst [vmem:[%s255 + $0x10] sm:$0xff] %v6975
        %7132 = vst [vmem:[%s255 + $0x18] sm:$0xff] %v6977
        %7133 = vst [vmem:[%s255 + $0x20] sm:$0xff] %v6981
        %7134 = vst [vmem:[%s255 + $0x28] sm:$0xff] %v6983
        %7135 = vst [vmem:[%s255 + $0x30] sm:$0xff] %v6985
        %7136 = vst [vmem:[%s255 + $0x38] sm:$0xff] %v6987
        %7137 = vst [vmem:[%s255 + $0x40] sm:$0xff] %v6991
        %7138 = vst [vmem:[%s255 + $0x48] sm:$0xff] %v6993
        %7139 = vst [vmem:[%s255 + $0x50] sm:$0xff] %v6995
        %7140 = vst [vmem:[%s255 + $0x58] sm:$0xff] %v6997
        %7141 = vst [vmem:[%s255 + $0x60] sm:$0xff] %v7001
        %7142 = vst [vmem:[%s255 + $0x68] sm:$0xff] %v7003
        %7143 = vst [vmem:[%s255 + $0x70] sm:$0xff] %v7005
        %7144 = vst [vmem:[%s255 + $0x78] sm:$0xff] %v7007
        %7145 = vst [vmem:[%s255 + $0x80] sm:$0xff] %v7011
        %7146 = vst [vmem:[%s255 + $0x88] sm:$0xff] %v7013
        %7147 = vst [vmem:[%s255 + $0x90] sm:$0xff] %v7015
        %7148 = vst [vmem:[%s255 + $0x98] sm:$0xff] %v7017
        %7149 = vst [vmem:[%s255 + $0xa0] sm:$0xff] %v7021
        %7150 = vst [vmem:[%s255 + $0xa8] sm:$0xff] %v7023
        %7151 = vst [vmem:[%s255 + $0xb0] sm:$0xff] %v7025
        %7152 = vst [vmem:[%s255 + $0xb8] sm:$0xff] %v7027
        %7153 = vst [vmem:[%s255 + $0xc0] sm:$0xff] %v7031
        %7154 = vst [vmem:[%s255 + $0xc8] sm:$0xff] %v7033
        %7155 = vst [vmem:[%s255 + $0xd0] sm:$0xff] %v7035
        %7156 = vst [vmem:[%s255 + $0xd8] sm:$0xff] %v7037
        %7157 = vst [vmem:[%s255 + $0xe0] sm:$0xff] %v7041
        %7158 = vst [vmem:[%s255 + $0xe8] sm:$0xff] %v7043
        %7159 = vst [vmem:[%s255 + $0xf0] sm:$0xff] %v7045
        %7160 = vst [vmem:[%s255 + $0xf8] sm:$0xff] %v7047
        %7161 = vst [vmem:[%s255 + $0x100] sm:$0xff] %v7051
        %7162 = vst [vmem:[%s255 + $0x108] sm:$0xff] %v7053
        %7163 = vst [vmem:[%s255 + $0x110] sm:$0xff] %v7055
        %7164 = vst [vmem:[%s255 + $0x118] sm:$0xff] %v7057
        %7165 = vst [vmem:[%s255 + $0x120] sm:$0xff] %v7061
        %7166 = vst [vmem:[%s255 + $0x128] sm:$0xff] %v7063
        %7167 = vst [vmem:[%s255 + $0x130] sm:$0xff] %v7065
        %7168 = vst [vmem:[%s255 + $0x138] sm:$0xff] %v7067
        %7169 = vst [vmem:[%s255 + $0x140] sm:$0xff] %v7071
        %7170 = vst [vmem:[%s255 + $0x148] sm:$0xff] %v7073
        %7171 = vst [vmem:[%s255 + $0x150] sm:$0xff] %v7075
        %7172 = vst [vmem:[%s255 + $0x158] sm:$0xff] %v7077
        %7173 = vst [vmem:[%s255 + $0x160] sm:$0xff] %v7081
        %7174 = vst [vmem:[%s255 + $0x168] sm:$0xff] %v7083
        %7175 = vst [vmem:[%s255 + $0x170] sm:$0xff] %v7085
        %7176 = vst [vmem:[%s255 + $0x178] sm:$0xff] %v7087
        %7177 = vst [vmem:[%s255 + $0x180] sm:$0xff] %v7091
        %7178 = vst [vmem:[%s255 + $0x188] sm:$0xff] %v7093
        %7179 = vst [vmem:[%s255 + $0x190] sm:$0xff] %v7095
        %7180 = vst [vmem:[%s255 + $0x198] sm:$0xff] %v7097
        %7181 = vst [vmem:[%s255 + $0x1a0] sm:$0xff] %v7101
        %7182 = vst [vmem:[%s255 + $0x1a8] sm:$0xff] %v7103
        %7183 = vst [vmem:[%s255 + $0x1b0] sm:$0xff] %v7105
        %7184 = vst [vmem:[%s255 + $0x1b8] sm:$0xff] %v7107
        %7185 = vst [vmem:[%s255 + $0x1c0] sm:$0xff] %v7111
        %7186 = vst [vmem:[%s255 + $0x1c8] sm:$0xff] %v7113
        %7187 = vst [vmem:[%s255 + $0x1d0] sm:$0xff] %v7115
        %7188 = vst [vmem:[%s255 + $0x1d8] sm:$0xff] %v7117
        %7189 = vst [vmem:[%s255 + $0x1e0] sm:$0xff] %v7121
        %7190 = vst [vmem:[%s255 + $0x1e8] sm:$0xff] %v7123
        %7191 = vst [vmem:[%s255 + $0x1f0] sm:$0xff] %v7125
        %7192 = vst [vmem:[%s255 + $0x1f8] sm:$0xff] %v7127
        %s7193 = sand.u32 %s142, 1
        %s7194 = scalar_lea.sflag [#allocation5], %s7193
        %s7195 = sand.u32 %s142, 1
        %s7196 = smul.addr %s7195, 256
        %s7197 = scalar_lea.vmem [#allocation4], %s7196
        %s7198 = sand.u32 %s168, 1
        %s7199 = scalar_lea.sflag [#allocation7], %s7198
        %s7200 = sand.u32 %s168, 1
        %s7201 = smul.addr %s7200, 512
        %s7202 = scalar_lea.vmem [#allocation6], %s7201
        // Predicated region
        $region41: #{key_value_fwd.1} parent=39 // pred_check
          %p7203 = pneg %p152
        $region42: #{key_value_fwd.1} parent=39 // pred_check_branch
          %7205 = sbr.rel (%p7203) target = $region44
        $region43: #{key_value_fwd.1} parent=39 // pred_region
          %s7207 = ssub.s32 4096, 4096
          %7208 = vsyncadd %s7194, %s7207
          %s7209 = smul.addr %s24, 32
          %s7210 = smul.addr %s7209, 128
          %s7211 = scalar_lea.hbm %s5, %s7210
          %s7212 = sshll.u32 %s7197, 4
          %s7213 = int_to_ptr.vmem [resolvable:$true] %s7212
          %7218 = dma.vmem_to_hbm [thread:$0]  %s7213, 4096, %s7211, %s7194, 128, 128, 8
        $region44: #{key_value_fwd.1} parent=39 // pred_fallthru
          _
        // Predicated region
        $region45: #{key_value_fwd.1} parent=39 // pred_check
          %p7219 = pneg %p178
        $region46: #{key_value_fwd.1} parent=39 // pred_check_branch
          %7221 = sbr.rel (%p7219) target = $region48
        $region47: #{key_value_fwd.1} parent=39 // pred_region
          %s7223 = ssub.s32 8192, 8192
          %7224 = vsyncadd %s7199, %s7223
          %s7225 = smul.addr %s24, 64
          %s7226 = smul.addr %s7225, 128
          %s7227 = scalar_lea.hbm %s6, %s7226
          %s7228 = sshll.u32 %s7202, 4
          %s7229 = int_to_ptr.vmem [resolvable:$true] %s7228
          %7234 = dma.vmem_to_hbm [thread:$0]  %s7229, 8192, %s7227, %s7199, 256, 256, 16
        $region48: #{key_value_fwd.1} parent=39 // pred_fallthru
          _
      $region40: #{key_value_fwd.1} parent=5 // pred_fallthru
        _
      %p7235 = scmp.le.s32.totalorder 2, %s19
      // Predicated region
      $region49: #{key_value_fwd.1} parent=5 // pred_check
        %p7236 = pneg %p7235
      $region50: #{key_value_fwd.1} parent=5 // pred_check_branch
        %7238 = sbr.rel (%p7236) target = $region52
      $region51: #{key_value_fwd.1} parent=5 // pred_region
        %s7239 = ssub.s32 %s19, 2
        // Predicated region
        $region53: #{key_value_fwd.1} parent=51 // pred_check
          %p7240 = pneg %p158
        $region54: #{key_value_fwd.1} parent=51 // pred_check_branch
          %7242 = sbr.rel (%p7240) target = $region56
        $region55: #{key_value_fwd.1} parent=51 // pred_region
          %s7243 = sand.u32 %s143, 1
          %s7244 = scalar_lea.sflag [#allocation5], %s7243
          %s7245 = sand.u32 %s143, 1
          %s7246 = smul.addr %s7245, 256
          %s7247 = scalar_lea.vmem [#allocation4], %s7246
          %7248 = dma.done %s7244, 4096
        $region56: #{key_value_fwd.1} parent=51 // pred_fallthru
          _
        // Predicated region
        $region57: #{key_value_fwd.1} parent=51 // pred_check
          %p7249 = pneg %p184
        $region58: #{key_value_fwd.1} parent=51 // pred_check_branch
          %7251 = sbr.rel (%p7249) target = $region60
        $region59: #{key_value_fwd.1} parent=51 // pred_region
          %s7252 = sand.u32 %s169, 1
          %s7253 = scalar_lea.sflag [#allocation7], %s7252
          %s7254 = sand.u32 %s169, 1
          %s7255 = smul.addr %s7254, 512
          %s7256 = scalar_lea.vmem [#allocation6], %s7255
          %7257 = dma.done %s7253, 8192
        $region60: #{key_value_fwd.1} parent=51 // pred_fallthru
          _
      $region52: #{key_value_fwd.1} parent=5 // pred_fallthru
        _
    $region6: #{key_value_fwd.1} parent=1 // loop_footer
      %s23 = sadd.s32 1, %s19
    $region7: #{key_value_fwd.1} parent=1 // loop_footer_branch
      %18 = sbr.rel target = $region3
    $region8: #{key_value_fwd.1} parent=1 // loop_exit
      _
    %7258 = vsyncpa [#allocation5], 1
    %s7259 = scalar_lea.sflag [#allocation5], 1
    %7260 = vsyncpa %s7259, 1
    %7261 = vsyncpa [#allocation7], 1
    %s7262 = scalar_lea.sflag [#allocation7], 1
    %7263 = vsyncpa %s7262, 1

</llo_original>
